<compile_context>
chip_gen: v7x
topology: tpu7x:2x2x1
jax: 0.10.0
libtpu: 0.0.40
codegen_flags: <defaults>
</compile_context>

<pallas_src>
import functools

import jax
import jax.numpy as jnp
import numpy as np
from jax.experimental import pallas as pl
from jax.experimental.pallas import tpu as pltpu


# ----------------------------- fused Pallas kernel --------------------------------

def _make_rdb_kernel(h, w, cin, g, n_dense):
    """Builds the fused ResidualDenseBlock kernel for static (h, w, cin, g, n_dense)."""
    hp, wp = h + 2, w + 2
    base = wp + 1                       # flat index of first valid (interior) pixel
    n_out = (h - 1) * wp + w            # contiguous span covering all valid pixels

    def kernel(*refs):
        # inputs: x, mask, (w3_0, b3_0, ..., w3_{L-1}, b3_{L-1}), w1, b1
        x_ref, mask_ref = refs[0], refs[1]
        layer_refs = refs[2:2 + 2 * n_dense]
        w1_ref = refs[2 + 2 * n_dense]
        b1_ref = refs[3 + 2 * n_dense]
        out_ref = refs[4 + 2 * n_dense]
        fp_ref = refs[5 + 2 * n_dense]   # VMEM scratch: (hp*wp, cin + n_dense*g) f32

        # Fresh feature scratch for this batch element: zero pad ring, x in channels [:cin].
        fp_ref[...] = jnp.zeros_like(fp_ref)
        fp_ref[:, :cin] = x_ref[...]
        mask = mask_ref[...]             # (n_out, 1) f32 — zeros on pad columns

        c_l = cin
        for l in range(n_dense):         # static unroll over dense layers
            w3_ref = layer_refs[2 * l]   # (9, c_l, g) bf16
            b3_ref = layer_refs[2 * l + 1]  # (1, g) f32
            acc = jnp.zeros((n_out, g), jnp.float32)
            for t in range(9):           # static unroll over the 3x3 taps
                dy, dx = divmod(t, 3)
                window = fp_ref[pl.ds(dy * wp + dx, n_out), :c_l]   # (n_out, c_l) f32
                acc = acc + jnp.dot(window.astype(jnp.bfloat16), w3_ref[t],
                                    preferred_element_type=jnp.float32)
            y = jnp.maximum(acc + b3_ref[...], 0.0) * mask          # f32 elementwise
            fp_ref[pl.ds(base, n_out), c_l:c_l + g] = y             # dense "concat" in VMEM
            c_l += g

        # Final 1x1 conv + bias + residual (x lives in channels [:cin] of the scratch).
        feat = fp_ref[...]                                          # (hp*wp, c_l) f32
        out = jnp.dot(feat.astype(jnp.bfloat16), w1_ref[...],
                      preferred_element_type=jnp.float32)
        out_ref[...] = out + b1_ref[...] + feat[:, :cin]            # cin == g

    return kernel


# ----------------------------- wrapper --------------------------------

@jax.jit
def residual_dense_block_pallas(x_nchw, params):
    n, cin, h, w = x_nchw.shape
    g = params["final"][0].shape[1]
    n_dense = len(params["dense"])
    assert cin == g, "residual add requires inChannels == growthRate (as in the PyTorch module)"

    hp, wp = h + 2, w + 2
    base = wp + 1
    n_out = (h - 1) * wp + w
    ctot = cin + n_dense * g

    # NCHW -> zero-padded, spatially flattened NHWC (single cheap XLA pad/reshape pass).
    x_nhwc = jnp.transpose(x_nchw, (0, 2, 3, 1))
    x_flat = jnp.pad(x_nhwc, ((0, 0), (1, 1), (1, 1), (0, 0))).reshape(n, hp * wp, cin)

    # 0/1 mask over the contiguous output span: 0 on padding columns between image rows.
    cols = (base + np.arange(n_out)) % wp
    mask = jnp.asarray(((cols >= 1) & (cols <= w)).astype(np.float32).reshape(n_out, 1))

    # Pack operands: conv weights in bf16 (MXU inputs), biases in f32.
    operands = [x_flat, mask]
    in_specs = [
        pl.BlockSpec((pl.Squeezed(), hp * wp, cin), lambda i: (i, 0, 0)),
        pl.BlockSpec((n_out, 1), lambda i: (0, 0)),
    ]
    for (w3, b3) in params["dense"]:
        c_l = w3.shape[2]
        operands.append(w3.reshape(9, c_l, g).astype(jnp.bfloat16))   # tap-major
        operands.append(b3.reshape(1, g).astype(jnp.float32))
        in_specs.append(pl.BlockSpec((9, c_l, g), lambda i: (0, 0, 0)))
        in_specs.append(pl.BlockSpec((1, g), lambda i: (0, 0)))
    w1, b1 = params["final"]
    operands.append(w1.astype(jnp.bfloat16))
    operands.append(b1.reshape(1, g).astype(jnp.float32))
    in_specs.append(pl.BlockSpec((ctot, g), lambda i: (0, 0)))
    in_specs.append(pl.BlockSpec((1, g), lambda i: (0, 0)))

    # Whole (padded) image per batch element is VMEM-resident.
    # TODO(synk): for large H*W, tile H across the grid with halo re-compute instead of
    # whole-image blocks (re-derive tile sizes for v7x's 64 MiB VMEM).
    fp_bytes = hp * wp * ctot * 4
    assert fp_bytes < 8 * 1024 * 1024, "spatial extent too large for whole-image VMEM scratch"

    out_flat = pl.pallas_call(
        _make_rdb_kernel(h, w, cin, g, n_dense),
        out_shape=jax.ShapeDtypeStruct((n, hp * wp, g), jnp.float32),
        grid=(n,),
        in_specs=in_specs,
        out_specs=pl.BlockSpec((pl.Squeezed(), hp * wp, g), lambda i: (i, 0, 0)),
        scratch_shapes=[pltpu.VMEM((hp * wp, ctot), jnp.float32)],
        compiler_params=pltpu.CompilerParams(
            dimension_semantics=("parallel",),
            vmem_limit_bytes=32 * 1024 * 1024,
        ),
    )(*operands)

    out = out_flat.reshape(n, hp, wp, g)[:, 1:h + 1, 1:w + 1, :]
    return jnp.transpose(out, (0, 3, 1, 2))     # back to NCHW


# ----------------------------- init & reference --------------------------------

def init_params(key, in_channels, growth_rate, n_dense):
    """Deterministic synthetic init (uniform +-1/sqrt(fan_in)), PyTorch-like scales."""
    params = {"dense": [], "final": None}
    c = in_channels
    for _ in range(n_dense):
        key, kw, kb = jax.random.split(key, 3)
        bound = 1.0 / np.sqrt(9 * c)
        w3 = jax.random.uniform(kw, (3, 3, c, growth_rate), jnp.float32, -bound, bound)
        b3 = jax.random.uniform(kb, (growth_rate,), jnp.float32, -bound, bound)
        params["dense"].append((w3, b3))
        c += growth_rate
    key, kw, kb = jax.random.split(key, 3)
    bound = 1.0 / np.sqrt(c)
    w1 = jax.random.uniform(kw, (c, growth_rate), jnp.float32, -bound, bound)
    b1 = jax.random.uniform(kb, (growth_rate,), jnp.float32, -bound, bound)
    params["final"] = (w1, b1)
    return params


def residual_dense_block_reference(x_nchw, params):
    """Pure-JAX reference (lax conv, full f32 precision) mirroring the PyTorch forward."""
    x_nhwc = jnp.transpose(x_nchw, (0, 2, 3, 1))
    feat = x_nhwc
    for (w3, b3) in params["dense"]:
        y = jax.lax.conv_general_dilated(
            feat, w3, window_strides=(1, 1), padding="SAME",
            dimension_numbers=("NHWC", "HWIO", "NHWC"),
            precision=jax.lax.Precision.HIGHEST,
        ) + b3.reshape(1, 1, 1, -1)
        feat = jnp.concatenate([feat, jnp.maximum(y, 0.0)], axis=-1)
    w1, b1 = params["final"]
    out = jnp.einsum("nhwc,cd->nhwd", feat, w1,
                     precision=jax.lax.Precision.HIGHEST) + b1.reshape(1, 1, 1, -1)
    out = out + x_nhwc
    return jnp.transpose(out, (0, 3, 1, 2))


# ----------------------------- main --------------------------------

if __name__ == "__main__":
    in_channels = 4       # must equal growth_rate so that `out + x` is well-formed
    growth_rate = 4
    n_dense = 3
    batch, height, width = 2, 16, 16

    key = jax.random.PRNGKey(0)
    key, kx, kp = jax.random.split(key, 3)
    x = jax.random.normal(kx, (batch, in_channels, height, width), dtype=jnp.float32)
    params = init_params(kp, in_channels, growth_rate, n_dense)

    out = residual_dense_block_pallas(x, params)
    out = jax.block_until_ready(out)

    ref = jax.block_until_ready(residual_dense_block_reference(x, params))
    assert out.shape == (batch, growth_rate, height, width), out.shape
    np.testing.assert_allclose(np.asarray(out), np.asarray(ref), atol=5e-2, rtol=5e-2)

    print("KERNEL_OK")
</pallas_src>

<mosaic_0001>
module attributes {stable_mosaic.version = 11 : i64} {
  func.func @kernel(%arg0: i32, %arg1: memref<1x324x4xf32, #tpu.memory_space<vmem>>, %arg2: memref<286x1xf32, #tpu.memory_space<vmem>>, %arg3: memref<9x4x4xbf16, #tpu.memory_space<vmem>>, %arg4: memref<1x4xf32, #tpu.memory_space<vmem>>, %arg5: memref<9x8x4xbf16, #tpu.memory_space<vmem>>, %arg6: memref<1x4xf32, #tpu.memory_space<vmem>>, %arg7: memref<9x12x4xbf16, #tpu.memory_space<vmem>>, %arg8: memref<1x4xf32, #tpu.memory_space<vmem>>, %arg9: memref<16x4xbf16, #tpu.memory_space<vmem>>, %arg10: memref<1x4xf32, #tpu.memory_space<vmem>>, %arg11: memref<1x324x4xf32, #tpu.memory_space<vmem>>, %arg12: memref<324x16xf32, #tpu.memory_space<vmem>>) attributes {dimension_semantics = [#tpu.dimension_semantics<parallel>], iteration_bounds = array<i64: 2>, scalar_prefetch = 0 : i64, scratch_operands = 1 : i64, tpu.core_type = #tpu.core_type<tc>, window_params = [{transform_indices = @transform_0, window_bounds = array<i64: 1, 324, 4>}, {pipeline_mode = #tpu.pipeline_mode<synchronous>, transform_indices = @transform_1, window_bounds = array<i64: 286, 1>}, {pipeline_mode = #tpu.pipeline_mode<synchronous>, transform_indices = @transform_2, window_bounds = array<i64: 9, 4, 4>}, {pipeline_mode = #tpu.pipeline_mode<synchronous>, transform_indices = @transform_3, window_bounds = array<i64: 1, 4>}, {pipeline_mode = #tpu.pipeline_mode<synchronous>, transform_indices = @transform_4, window_bounds = array<i64: 9, 8, 4>}, {pipeline_mode = #tpu.pipeline_mode<synchronous>, transform_indices = @transform_5, window_bounds = array<i64: 1, 4>}, {pipeline_mode = #tpu.pipeline_mode<synchronous>, transform_indices = @transform_6, window_bounds = array<i64: 9, 12, 4>}, {pipeline_mode = #tpu.pipeline_mode<synchronous>, transform_indices = @transform_7, window_bounds = array<i64: 1, 4>}, {pipeline_mode = #tpu.pipeline_mode<synchronous>, transform_indices = @transform_8, window_bounds = array<i64: 16, 4>}, {pipeline_mode = #tpu.pipeline_mode<synchronous>, transform_indices = @transform_9, window_bounds = array<i64: 1, 4>}, {transform_indices = @transform_10, window_bounds = array<i64: 1, 324, 4>}]} {
    %cst = arith.constant 0.000000e+00 : f32
    %0 = vector.broadcast %cst : f32 to vector<324x16xf32>
    %c0 = arith.constant 0 : index
    %c0_0 = arith.constant 0 : index
    %1 = vector.load %arg12[%c0, %c0_0] : memref<324x16xf32, #tpu.memory_space<vmem>>, vector<324x16xf32>
    tpu.vector_store %arg12[%c0, %c0_0], %0 {strides = array<i32>} : memref<324x16xf32, #tpu.memory_space<vmem>>, vector<324x16xf32>,
    %c0_1 = arith.constant 0 : index
    %c0_2 = arith.constant 0 : index
    %c0_3 = arith.constant 0 : index
    %2 = vector.load %arg1[%c0_1, %c0_2, %c0_3] : memref<1x324x4xf32, #tpu.memory_space<vmem>>, vector<1x324x4xf32>
    %3 = vector.shape_cast %2 : vector<1x324x4xf32> to vector<324x4xf32>
    %c0_4 = arith.constant 0 : index
    %c0_5 = arith.constant 0 : index
    %4 = vector.load %arg12[%c0_4, %c0_5] : memref<324x16xf32, #tpu.memory_space<vmem>>, vector<324x4xf32>
    tpu.vector_store %arg12[%c0_4, %c0_5], %3 {strides = array<i32>} : memref<324x16xf32, #tpu.memory_space<vmem>>, vector<324x4xf32>,
    %c0_6 = arith.constant 0 : index
    %c0_7 = arith.constant 0 : index
    %5 = vector.load %arg2[%c0_6, %c0_7] : memref<286x1xf32, #tpu.memory_space<vmem>>, vector<286x1xf32>
    %cst_8 = arith.constant 0.000000e+00 : f32
    %6 = vector.broadcast %cst_8 : f32 to vector<286x4xf32>
    %c0_9 = arith.constant 0 : index
    %c0_10 = arith.constant 0 : index
    %7 = vector.load %arg12[%c0_9, %c0_10] : memref<324x16xf32, #tpu.memory_space<vmem>>, vector<286x4xf32>
    %8 = arith.truncf %7 : vector<286x4xf32> to vector<286x4xbf16>
    %c0_11 = arith.constant 0 : index
    %c0_12 = arith.constant 0 : index
    %c0_13 = arith.constant 0 : index
    %9 = vector.load %arg3[%c0_11, %c0_12, %c0_13] : memref<9x4x4xbf16, #tpu.memory_space<vmem>>, vector<1x4x4xbf16>
    %10 = vector.shape_cast %9 : vector<1x4x4xbf16> to vector<4x4xbf16>
    %cst_14 = arith.constant dense<0.000000e+00> : vector<286x4xf32>
    %11 = tpu.matmul %8, %10, %cst_14 {dimension_numbers = #tpu.dot_dimension_numbers<[1], [0], [0], [1], [0, 0, 1, 1], [], []>} : vector<286x4xbf16>, vector<4x4xbf16>, vector<286x4xf32> -> vector<286x4xf32>
    %12 = arith.addf %6, %11 : vector<286x4xf32>
    %c1 = arith.constant 1 : index
    %c0_15 = arith.constant 0 : index
    %13 = vector.load %arg12[%c1, %c0_15] : memref<324x16xf32, #tpu.memory_space<vmem>>, vector<286x4xf32>
    %14 = arith.truncf %13 : vector<286x4xf32> to vector<286x4xbf16>
    %c1_16 = arith.constant 1 : index
    %c0_17 = arith.constant 0 : index
    %c0_18 = arith.constant 0 : index
    %15 = vector.load %arg3[%c1_16, %c0_17, %c0_18] : memref<9x4x4xbf16, #tpu.memory_space<vmem>>, vector<1x4x4xbf16>
    %16 = vector.shape_cast %15 : vector<1x4x4xbf16> to vector<4x4xbf16>
    %cst_19 = arith.constant dense<0.000000e+00> : vector<286x4xf32>
    %17 = tpu.matmul %14, %16, %cst_19 {dimension_numbers = #tpu.dot_dimension_numbers<[1], [0], [0], [1], [0, 0, 1, 1], [], []>} : vector<286x4xbf16>, vector<4x4xbf16>, vector<286x4xf32> -> vector<286x4xf32>
    %18 = arith.addf %12, %17 : vector<286x4xf32>
    %c2 = arith.constant 2 : index
    %c0_20 = arith.constant 0 : index
    %19 = vector.load %arg12[%c2, %c0_20] : memref<324x16xf32, #tpu.memory_space<vmem>>, vector<286x4xf32>
    %20 = arith.truncf %19 : vector<286x4xf32> to vector<286x4xbf16>
    %c2_21 = arith.constant 2 : index
    %c0_22 = arith.constant 0 : index
    %c0_23 = arith.constant 0 : index
    %21 = vector.load %arg3[%c2_21, %c0_22, %c0_23] : memref<9x4x4xbf16, #tpu.memory_space<vmem>>, vector<1x4x4xbf16>
    %22 = vector.shape_cast %21 : vector<1x4x4xbf16> to vector<4x4xbf16>
    %cst_24 = arith.constant dense<0.000000e+00> : vector<286x4xf32>
    %23 = tpu.matmul %20, %22, %cst_24 {dimension_numbers = #tpu.dot_dimension_numbers<[1], [0], [0], [1], [0, 0, 1, 1], [], []>} : vector<286x4xbf16>, vector<4x4xbf16>, vector<286x4xf32> -> vector<286x4xf32>
    %24 = arith.addf %18, %23 : vector<286x4xf32>
    %c18 = arith.constant 18 : index
    %c0_25 = arith.constant 0 : index
    %25 = vector.load %arg12[%c18, %c0_25] : memref<324x16xf32, #tpu.memory_space<vmem>>, vector<286x4xf32>
    %26 = arith.truncf %25 : vector<286x4xf32> to vector<286x4xbf16>
    %c3 = arith.constant 3 : index
    %c0_26 = arith.constant 0 : index
    %c0_27 = arith.constant 0 : index
    %27 = vector.load %arg3[%c3, %c0_26, %c0_27] : memref<9x4x4xbf16, #tpu.memory_space<vmem>>, vector<1x4x4xbf16>
    %28 = vector.shape_cast %27 : vector<1x4x4xbf16> to vector<4x4xbf16>
    %cst_28 = arith.constant dense<0.000000e+00> : vector<286x4xf32>
    %29 = tpu.matmul %26, %28, %cst_28 {dimension_numbers = #tpu.dot_dimension_numbers<[1], [0], [0], [1], [0, 0, 1, 1], [], []>} : vector<286x4xbf16>, vector<4x4xbf16>, vector<286x4xf32> -> vector<286x4xf32>
    %30 = arith.addf %24, %29 : vector<286x4xf32>
    %c19 = arith.constant 19 : index
    %c0_29 = arith.constant 0 : index
    %31 = vector.load %arg12[%c19, %c0_29] : memref<324x16xf32, #tpu.memory_space<vmem>>, vector<286x4xf32>
    %32 = arith.truncf %31 : vector<286x4xf32> to vector<286x4xbf16>
    %c4 = arith.constant 4 : index
    %c0_30 = arith.constant 0 : index
    %c0_31 = arith.constant 0 : index
    %33 = vector.load %arg3[%c4, %c0_30, %c0_31] : memref<9x4x4xbf16, #tpu.memory_space<vmem>>, vector<1x4x4xbf16>
    %34 = vector.shape_cast %33 : vector<1x4x4xbf16> to vector<4x4xbf16>
    %cst_32 = arith.constant dense<0.000000e+00> : vector<286x4xf32>
    %35 = tpu.matmul %32, %34, %cst_32 {dimension_numbers = #tpu.dot_dimension_numbers<[1], [0], [0], [1], [0, 0, 1, 1], [], []>} : vector<286x4xbf16>, vector<4x4xbf16>, vector<286x4xf32> -> vector<286x4xf32>
    %36 = arith.addf %30, %35 : vector<286x4xf32>
    %c20 = arith.constant 20 : index
    %c0_33 = arith.constant 0 : index
    %37 = vector.load %arg12[%c20, %c0_33] : memref<324x16xf32, #tpu.memory_space<vmem>>, vector<286x4xf32>
    %38 = arith.truncf %37 : vector<286x4xf32> to vector<286x4xbf16>
    %c5 = arith.constant 5 : index
    %c0_34 = arith.constant 0 : index
    %c0_35 = arith.constant 0 : index
    %39 = vector.load %arg3[%c5, %c0_34, %c0_35] : memref<9x4x4xbf16, #tpu.memory_space<vmem>>, vector<1x4x4xbf16>
    %40 = vector.shape_cast %39 : vector<1x4x4xbf16> to vector<4x4xbf16>
    %cst_36 = arith.constant dense<0.000000e+00> : vector<286x4xf32>
    %41 = tpu.matmul %38, %40, %cst_36 {dimension_numbers = #tpu.dot_dimension_numbers<[1], [0], [0], [1], [0, 0, 1, 1], [], []>} : vector<286x4xbf16>, vector<4x4xbf16>, vector<286x4xf32> -> vector<286x4xf32>
    %42 = arith.addf %36, %41 : vector<286x4xf32>
    %c36 = arith.constant 36 : index
    %c0_37 = arith.constant 0 : index
    %43 = vector.load %arg12[%c36, %c0_37] : memref<324x16xf32, #tpu.memory_space<vmem>>, vector<286x4xf32>
    %44 = arith.truncf %43 : vector<286x4xf32> to vector<286x4xbf16>
    %c6 = arith.constant 6 : index
    %c0_38 = arith.constant 0 : index
    %c0_39 = arith.constant 0 : index
    %45 = vector.load %arg3[%c6, %c0_38, %c0_39] : memref<9x4x4xbf16, #tpu.memory_space<vmem>>, vector<1x4x4xbf16>
    %46 = vector.shape_cast %45 : vector<1x4x4xbf16> to vector<4x4xbf16>
    %cst_40 = arith.constant dense<0.000000e+00> : vector<286x4xf32>
    %47 = tpu.matmul %44, %46, %cst_40 {dimension_numbers = #tpu.dot_dimension_numbers<[1], [0], [0], [1], [0, 0, 1, 1], [], []>} : vector<286x4xbf16>, vector<4x4xbf16>, vector<286x4xf32> -> vector<286x4xf32>
    %48 = arith.addf %42, %47 : vector<286x4xf32>
    %c37 = arith.constant 37 : index
    %c0_41 = arith.constant 0 : index
    %49 = vector.load %arg12[%c37, %c0_41] : memref<324x16xf32, #tpu.memory_space<vmem>>, vector<286x4xf32>
    %50 = arith.truncf %49 : vector<286x4xf32> to vector<286x4xbf16>
    %c7 = arith.constant 7 : index
    %c0_42 = arith.constant 0 : index
    %c0_43 = arith.constant 0 : index
    %51 = vector.load %arg3[%c7, %c0_42, %c0_43] : memref<9x4x4xbf16, #tpu.memory_space<vmem>>, vector<1x4x4xbf16>
    %52 = vector.shape_cast %51 : vector<1x4x4xbf16> to vector<4x4xbf16>
    %cst_44 = arith.constant dense<0.000000e+00> : vector<286x4xf32>
    %53 = tpu.matmul %50, %52, %cst_44 {dimension_numbers = #tpu.dot_dimension_numbers<[1], [0], [0], [1], [0, 0, 1, 1], [], []>} : vector<286x4xbf16>, vector<4x4xbf16>, vector<286x4xf32> -> vector<286x4xf32>
    %54 = arith.addf %48, %53 : vector<286x4xf32>
    %c38 = arith.constant 38 : index
    %c0_45 = arith.constant 0 : index
    %55 = vector.load %arg12[%c38, %c0_45] : memref<324x16xf32, #tpu.memory_space<vmem>>, vector<286x4xf32>
    %56 = arith.truncf %55 : vector<286x4xf32> to vector<286x4xbf16>
    %c8 = arith.constant 8 : index
    %c0_46 = arith.constant 0 : index
    %c0_47 = arith.constant 0 : index
    %57 = vector.load %arg3[%c8, %c0_46, %c0_47] : memref<9x4x4xbf16, #tpu.memory_space<vmem>>, vector<1x4x4xbf16>
    %58 = vector.shape_cast %57 : vector<1x4x4xbf16> to vector<4x4xbf16>
    %cst_48 = arith.constant dense<0.000000e+00> : vector<286x4xf32>
    %59 = tpu.matmul %56, %58, %cst_48 {dimension_numbers = #tpu.dot_dimension_numbers<[1], [0], [0], [1], [0, 0, 1, 1], [], []>} : vector<286x4xbf16>, vector<4x4xbf16>, vector<286x4xf32> -> vector<286x4xf32>
    %60 = arith.addf %54, %59 : vector<286x4xf32>
    %c0_49 = arith.constant 0 : index
    %c0_50 = arith.constant 0 : index
    %61 = vector.load %arg4[%c0_49, %c0_50] : memref<1x4xf32, #tpu.memory_space<vmem>>, vector<1x4xf32>
    %62 = vector.broadcast %61 : vector<1x4xf32> to vector<286x4xf32>
    %63 = arith.addf %60, %62 : vector<286x4xf32>
    %cst_51 = arith.constant 0.000000e+00 : f32
    %64 = vector.broadcast %cst_51 : f32 to vector<286x4xf32>
    %65 = arith.maximumf %63, %64 : vector<286x4xf32>
    %66 = vector.broadcast %5 : vector<286x1xf32> to vector<286x4xf32>
    %67 = arith.mulf %65, %66 : vector<286x4xf32>
    %c19_52 = arith.constant 19 : index
    %c4_53 = arith.constant 4 : index
    %68 = vector.load %arg12[%c19_52, %c4_53] : memref<324x16xf32, #tpu.memory_space<vmem>>, vector<286x4xf32>
    tpu.vector_store %arg12[%c19_52, %c4_53], %67 {strides = array<i32>} : memref<324x16xf32, #tpu.memory_space<vmem>>, vector<286x4xf32>,
    %cst_54 = arith.constant 0.000000e+00 : f32
    %69 = vector.broadcast %cst_54 : f32 to vector<286x4xf32>
    %c0_55 = arith.constant 0 : index
    %c0_56 = arith.constant 0 : index
    %70 = vector.load %arg12[%c0_55, %c0_56] : memref<324x16xf32, #tpu.memory_space<vmem>>, vector<286x8xf32>
    %71 = arith.truncf %70 : vector<286x8xf32> to vector<286x8xbf16>
    %c0_57 = arith.constant 0 : index
    %c0_58 = arith.constant 0 : index
    %c0_59 = arith.constant 0 : index
    %72 = vector.load %arg5[%c0_57, %c0_58, %c0_59] : memref<9x8x4xbf16, #tpu.memory_space<vmem>>, vector<1x8x4xbf16>
    %73 = vector.shape_cast %72 : vector<1x8x4xbf16> to vector<8x4xbf16>
    %cst_60 = arith.constant dense<0.000000e+00> : vector<286x4xf32>
    %74 = tpu.matmul %71, %73, %cst_60 {dimension_numbers = #tpu.dot_dimension_numbers<[1], [0], [0], [1], [0, 0, 1, 1], [], []>} : vector<286x8xbf16>, vector<8x4xbf16>, vector<286x4xf32> -> vector<286x4xf32>
    %75 = arith.addf %69, %74 : vector<286x4xf32>
    %c1_61 = arith.constant 1 : index
    %c0_62 = arith.constant 0 : index
    %76 = vector.load %arg12[%c1_61, %c0_62] : memref<324x16xf32, #tpu.memory_space<vmem>>, vector<286x8xf32>
    %77 = arith.truncf %76 : vector<286x8xf32> to vector<286x8xbf16>
    %c1_63 = arith.constant 1 : index
    %c0_64 = arith.constant 0 : index
    %c0_65 = arith.constant 0 : index
    %78 = vector.load %arg5[%c1_63, %c0_64, %c0_65] : memref<9x8x4xbf16, #tpu.memory_space<vmem>>, vector<1x8x4xbf16>
    %79 = vector.shape_cast %78 : vector<1x8x4xbf16> to vector<8x4xbf16>
    %cst_66 = arith.constant dense<0.000000e+00> : vector<286x4xf32>
    %80 = tpu.matmul %77, %79, %cst_66 {dimension_numbers = #tpu.dot_dimension_numbers<[1], [0], [0], [1], [0, 0, 1, 1], [], []>} : vector<286x8xbf16>, vector<8x4xbf16>, vector<286x4xf32> -> vector<286x4xf32>
    %81 = arith.addf %75, %80 : vector<286x4xf32>
    %c2_67 = arith.constant 2 : index
    %c0_68 = arith.constant 0 : index
    %82 = vector.load %arg12[%c2_67, %c0_68] : memref<324x16xf32, #tpu.memory_space<vmem>>, vector<286x8xf32>
    %83 = arith.truncf %82 : vector<286x8xf32> to vector<286x8xbf16>
    %c2_69 = arith.constant 2 : index
    %c0_70 = arith.constant 0 : index
    %c0_71 = arith.constant 0 : index
    %84 = vector.load %arg5[%c2_69, %c0_70, %c0_71] : memref<9x8x4xbf16, #tpu.memory_space<vmem>>, vector<1x8x4xbf16>
    %85 = vector.shape_cast %84 : vector<1x8x4xbf16> to vector<8x4xbf16>
    %cst_72 = arith.constant dense<0.000000e+00> : vector<286x4xf32>
    %86 = tpu.matmul %83, %85, %cst_72 {dimension_numbers = #tpu.dot_dimension_numbers<[1], [0], [0], [1], [0, 0, 1, 1], [], []>} : vector<286x8xbf16>, vector<8x4xbf16>, vector<286x4xf32> -> vector<286x4xf32>
    %87 = arith.addf %81, %86 : vector<286x4xf32>
    %c18_73 = arith.constant 18 : index
    %c0_74 = arith.constant 0 : index
    %88 = vector.load %arg12[%c18_73, %c0_74] : memref<324x16xf32, #tpu.memory_space<vmem>>, vector<286x8xf32>
    %89 = arith.truncf %88 : vector<286x8xf32> to vector<286x8xbf16>
    %c3_75 = arith.constant 3 : index
    %c0_76 = arith.constant 0 : index
    %c0_77 = arith.constant 0 : index
    %90 = vector.load %arg5[%c3_75, %c0_76, %c0_77] : memref<9x8x4xbf16, #tpu.memory_space<vmem>>, vector<1x8x4xbf16>
    %91 = vector.shape_cast %90 : vector<1x8x4xbf16> to vector<8x4xbf16>
    %cst_78 = arith.constant dense<0.000000e+00> : vector<286x4xf32>
    %92 = tpu.matmul %89, %91, %cst_78 {dimension_numbers = #tpu.dot_dimension_numbers<[1], [0], [0], [1], [0, 0, 1, 1], [], []>} : vector<286x8xbf16>, vector<8x4xbf16>, vector<286x4xf32> -> vector<286x4xf32>
    %93 = arith.addf %87, %92 : vector<286x4xf32>
    %c19_79 = arith.constant 19 : index
    %c0_80 = arith.constant 0 : index
    %94 = vector.load %arg12[%c19_79, %c0_80] : memref<324x16xf32, #tpu.memory_space<vmem>>, vector<286x8xf32>
    %95 = arith.truncf %94 : vector<286x8xf32> to vector<286x8xbf16>
    %c4_81 = arith.constant 4 : index
    %c0_82 = arith.constant 0 : index
    %c0_83 = arith.constant 0 : index
    %96 = vector.load %arg5[%c4_81, %c0_82, %c0_83] : memref<9x8x4xbf16, #tpu.memory_space<vmem>>, vector<1x8x4xbf16>
    %97 = vector.shape_cast %96 : vector<1x8x4xbf16> to vector<8x4xbf16>
    %cst_84 = arith.constant dense<0.000000e+00> : vector<286x4xf32>
    %98 = tpu.matmul %95, %97, %cst_84 {dimension_numbers = #tpu.dot_dimension_numbers<[1], [0], [0], [1], [0, 0, 1, 1], [], []>} : vector<286x8xbf16>, vector<8x4xbf16>, vector<286x4xf32> -> vector<286x4xf32>
    %99 = arith.addf %93, %98 : vector<286x4xf32>
    %c20_85 = arith.constant 20 : index
    %c0_86 = arith.constant 0 : index
    %100 = vector.load %arg12[%c20_85, %c0_86] : memref<324x16xf32, #tpu.memory_space<vmem>>, vector<286x8xf32>
    %101 = arith.truncf %100 : vector<286x8xf32> to vector<286x8xbf16>
    %c5_87 = arith.constant 5 : index
    %c0_88 = arith.constant 0 : index
    %c0_89 = arith.constant 0 : index
    %102 = vector.load %arg5[%c5_87, %c0_88, %c0_89] : memref<9x8x4xbf16, #tpu.memory_space<vmem>>, vector<1x8x4xbf16>
    %103 = vector.shape_cast %102 : vector<1x8x4xbf16> to vector<8x4xbf16>
    %cst_90 = arith.constant dense<0.000000e+00> : vector<286x4xf32>
    %104 = tpu.matmul %101, %103, %cst_90 {dimension_numbers = #tpu.dot_dimension_numbers<[1], [0], [0], [1], [0, 0, 1, 1], [], []>} : vector<286x8xbf16>, vector<8x4xbf16>, vector<286x4xf32> -> vector<286x4xf32>
    %105 = arith.addf %99, %104 : vector<286x4xf32>
    %c36_91 = arith.constant 36 : index
    %c0_92 = arith.constant 0 : index
    %106 = vector.load %arg12[%c36_91, %c0_92] : memref<324x16xf32, #tpu.memory_space<vmem>>, vector<286x8xf32>
    %107 = arith.truncf %106 : vector<286x8xf32> to vector<286x8xbf16>
    %c6_93 = arith.constant 6 : index
    %c0_94 = arith.constant 0 : index
    %c0_95 = arith.constant 0 : index
    %108 = vector.load %arg5[%c6_93, %c0_94, %c0_95] : memref<9x8x4xbf16, #tpu.memory_space<vmem>>, vector<1x8x4xbf16>
    %109 = vector.shape_cast %108 : vector<1x8x4xbf16> to vector<8x4xbf16>
    %cst_96 = arith.constant dense<0.000000e+00> : vector<286x4xf32>
    %110 = tpu.matmul %107, %109, %cst_96 {dimension_numbers = #tpu.dot_dimension_numbers<[1], [0], [0], [1], [0, 0, 1, 1], [], []>} : vector<286x8xbf16>, vector<8x4xbf16>, vector<286x4xf32> -> vector<286x4xf32>
    %111 = arith.addf %105, %110 : vector<286x4xf32>
    %c37_97 = arith.constant 37 : index
    %c0_98 = arith.constant 0 : index
    %112 = vector.load %arg12[%c37_97, %c0_98] : memref<324x16xf32, #tpu.memory_space<vmem>>, vector<286x8xf32>
    %113 = arith.truncf %112 : vector<286x8xf32> to vector<286x8xbf16>
    %c7_99 = arith.constant 7 : index
    %c0_100 = arith.constant 0 : index
    %c0_101 = arith.constant 0 : index
    %114 = vector.load %arg5[%c7_99, %c0_100, %c0_101] : memref<9x8x4xbf16, #tpu.memory_space<vmem>>, vector<1x8x4xbf16>
    %115 = vector.shape_cast %114 : vector<1x8x4xbf16> to vector<8x4xbf16>
    %cst_102 = arith.constant dense<0.000000e+00> : vector<286x4xf32>
    %116 = tpu.matmul %113, %115, %cst_102 {dimension_numbers = #tpu.dot_dimension_numbers<[1], [0], [0], [1], [0, 0, 1, 1], [], []>} : vector<286x8xbf16>, vector<8x4xbf16>, vector<286x4xf32> -> vector<286x4xf32>
    %117 = arith.addf %111, %116 : vector<286x4xf32>
    %c38_103 = arith.constant 38 : index
    %c0_104 = arith.constant 0 : index
    %118 = vector.load %arg12[%c38_103, %c0_104] : memref<324x16xf32, #tpu.memory_space<vmem>>, vector<286x8xf32>
    %119 = arith.truncf %118 : vector<286x8xf32> to vector<286x8xbf16>
    %c8_105 = arith.constant 8 : index
    %c0_106 = arith.constant 0 : index
    %c0_107 = arith.constant 0 : index
    %120 = vector.load %arg5[%c8_105, %c0_106, %c0_107] : memref<9x8x4xbf16, #tpu.memory_space<vmem>>, vector<1x8x4xbf16>
    %121 = vector.shape_cast %120 : vector<1x8x4xbf16> to vector<8x4xbf16>
    %cst_108 = arith.constant dense<0.000000e+00> : vector<286x4xf32>
    %122 = tpu.matmul %119, %121, %cst_108 {dimension_numbers = #tpu.dot_dimension_numbers<[1], [0], [0], [1], [0, 0, 1, 1], [], []>} : vector<286x8xbf16>, vector<8x4xbf16>, vector<286x4xf32> -> vector<286x4xf32>
    %123 = arith.addf %117, %122 : vector<286x4xf32>
    %c0_109 = arith.constant 0 : index
    %c0_110 = arith.constant 0 : index
    %124 = vector.load %arg6[%c0_109, %c0_110] : memref<1x4xf32, #tpu.memory_space<vmem>>, vector<1x4xf32>
    %125 = vector.broadcast %124 : vector<1x4xf32> to vector<286x4xf32>
    %126 = arith.addf %123, %125 : vector<286x4xf32>
    %cst_111 = arith.constant 0.000000e+00 : f32
    %127 = vector.broadcast %cst_111 : f32 to vector<286x4xf32>
    %128 = arith.maximumf %126, %127 : vector<286x4xf32>
    %129 = vector.broadcast %5 : vector<286x1xf32> to vector<286x4xf32>
    %130 = arith.mulf %128, %129 : vector<286x4xf32>
    %c19_112 = arith.constant 19 : index
    %c8_113 = arith.constant 8 : index
    %131 = vector.load %arg12[%c19_112, %c8_113] : memref<324x16xf32, #tpu.memory_space<vmem>>, vector<286x4xf32>
    tpu.vector_store %arg12[%c19_112, %c8_113], %130 {strides = array<i32>} : memref<324x16xf32, #tpu.memory_space<vmem>>, vector<286x4xf32>,
    %cst_114 = arith.constant 0.000000e+00 : f32
    %132 = vector.broadcast %cst_114 : f32 to vector<286x4xf32>
    %c0_115 = arith.constant 0 : index
    %c0_116 = arith.constant 0 : index
    %133 = vector.load %arg12[%c0_115, %c0_116] : memref<324x16xf32, #tpu.memory_space<vmem>>, vector<286x12xf32>
    %134 = arith.truncf %133 : vector<286x12xf32> to vector<286x12xbf16>
    %c0_117 = arith.constant 0 : index
    %c0_118 = arith.constant 0 : index
    %c0_119 = arith.constant 0 : index
    %135 = vector.load %arg7[%c0_117, %c0_118, %c0_119] : memref<9x12x4xbf16, #tpu.memory_space<vmem>>, vector<1x12x4xbf16>
    %136 = vector.shape_cast %135 : vector<1x12x4xbf16> to vector<12x4xbf16>
    %cst_120 = arith.constant dense<0.000000e+00> : vector<286x4xf32>
    %137 = tpu.matmul %134, %136, %cst_120 {dimension_numbers = #tpu.dot_dimension_numbers<[1], [0], [0], [1], [0, 0, 1, 1], [], []>} : vector<286x12xbf16>, vector<12x4xbf16>, vector<286x4xf32> -> vector<286x4xf32>
    %138 = arith.addf %132, %137 : vector<286x4xf32>
    %c1_121 = arith.constant 1 : index
    %c0_122 = arith.constant 0 : index
    %139 = vector.load %arg12[%c1_121, %c0_122] : memref<324x16xf32, #tpu.memory_space<vmem>>, vector<286x12xf32>
    %140 = arith.truncf %139 : vector<286x12xf32> to vector<286x12xbf16>
    %c1_123 = arith.constant 1 : index
    %c0_124 = arith.constant 0 : index
    %c0_125 = arith.constant 0 : index
    %141 = vector.load %arg7[%c1_123, %c0_124, %c0_125] : memref<9x12x4xbf16, #tpu.memory_space<vmem>>, vector<1x12x4xbf16>
    %142 = vector.shape_cast %141 : vector<1x12x4xbf16> to vector<12x4xbf16>
    %cst_126 = arith.constant dense<0.000000e+00> : vector<286x4xf32>
    %143 = tpu.matmul %140, %142, %cst_126 {dimension_numbers = #tpu.dot_dimension_numbers<[1], [0], [0], [1], [0, 0, 1, 1], [], []>} : vector<286x12xbf16>, vector<12x4xbf16>, vector<286x4xf32> -> vector<286x4xf32>
    %144 = arith.addf %138, %143 : vector<286x4xf32>
    %c2_127 = arith.constant 2 : index
    %c0_128 = arith.constant 0 : index
    %145 = vector.load %arg12[%c2_127, %c0_128] : memref<324x16xf32, #tpu.memory_space<vmem>>, vector<286x12xf32>
    %146 = arith.truncf %145 : vector<286x12xf32> to vector<286x12xbf16>
    %c2_129 = arith.constant 2 : index
    %c0_130 = arith.constant 0 : index
    %c0_131 = arith.constant 0 : index
    %147 = vector.load %arg7[%c2_129, %c0_130, %c0_131] : memref<9x12x4xbf16, #tpu.memory_space<vmem>>, vector<1x12x4xbf16>
    %148 = vector.shape_cast %147 : vector<1x12x4xbf16> to vector<12x4xbf16>
    %cst_132 = arith.constant dense<0.000000e+00> : vector<286x4xf32>
    %149 = tpu.matmul %146, %148, %cst_132 {dimension_numbers = #tpu.dot_dimension_numbers<[1], [0], [0], [1], [0, 0, 1, 1], [], []>} : vector<286x12xbf16>, vector<12x4xbf16>, vector<286x4xf32> -> vector<286x4xf32>
    %150 = arith.addf %144, %149 : vector<286x4xf32>
    %c18_133 = arith.constant 18 : index
    %c0_134 = arith.constant 0 : index
    %151 = vector.load %arg12[%c18_133, %c0_134] : memref<324x16xf32, #tpu.memory_space<vmem>>, vector<286x12xf32>
    %152 = arith.truncf %151 : vector<286x12xf32> to vector<286x12xbf16>
    %c3_135 = arith.constant 3 : index
    %c0_136 = arith.constant 0 : index
    %c0_137 = arith.constant 0 : index
    %153 = vector.load %arg7[%c3_135, %c0_136, %c0_137] : memref<9x12x4xbf16, #tpu.memory_space<vmem>>, vector<1x12x4xbf16>
    %154 = vector.shape_cast %153 : vector<1x12x4xbf16> to vector<12x4xbf16>
    %cst_138 = arith.constant dense<0.000000e+00> : vector<286x4xf32>
    %155 = tpu.matmul %152, %154, %cst_138 {dimension_numbers = #tpu.dot_dimension_numbers<[1], [0], [0], [1], [0, 0, 1, 1], [], []>} : vector<286x12xbf16>, vector<12x4xbf16>, vector<286x4xf32> -> vector<286x4xf32>
    %156 = arith.addf %150, %155 : vector<286x4xf32>
    %c19_139 = arith.constant 19 : index
    %c0_140 = arith.constant 0 : index
    %157 = vector.load %arg12[%c19_139, %c0_140] : memref<324x16xf32, #tpu.memory_space<vmem>>, vector<286x12xf32>
    %158 = arith.truncf %157 : vector<286x12xf32> to vector<286x12xbf16>
    %c4_141 = arith.constant 4 : index
    %c0_142 = arith.constant 0 : index
    %c0_143 = arith.constant 0 : index
    %159 = vector.load %arg7[%c4_141, %c0_142, %c0_143] : memref<9x12x4xbf16, #tpu.memory_space<vmem>>, vector<1x12x4xbf16>
    %160 = vector.shape_cast %159 : vector<1x12x4xbf16> to vector<12x4xbf16>
    %cst_144 = arith.constant dense<0.000000e+00> : vector<286x4xf32>
    %161 = tpu.matmul %158, %160, %cst_144 {dimension_numbers = #tpu.dot_dimension_numbers<[1], [0], [0], [1], [0, 0, 1, 1], [], []>} : vector<286x12xbf16>, vector<12x4xbf16>, vector<286x4xf32> -> vector<286x4xf32>
    %162 = arith.addf %156, %161 : vector<286x4xf32>
    %c20_145 = arith.constant 20 : index
    %c0_146 = arith.constant 0 : index
    %163 = vector.load %arg12[%c20_145, %c0_146] : memref<324x16xf32, #tpu.memory_space<vmem>>, vector<286x12xf32>
    %164 = arith.truncf %163 : vector<286x12xf32> to vector<286x12xbf16>
    %c5_147 = arith.constant 5 : index
    %c0_148 = arith.constant 0 : index
    %c0_149 = arith.constant 0 : index
    %165 = vector.load %arg7[%c5_147, %c0_148, %c0_149] : memref<9x12x4xbf16, #tpu.memory_space<vmem>>, vector<1x12x4xbf16>
    %166 = vector.shape_cast %165 : vector<1x12x4xbf16> to vector<12x4xbf16>
    %cst_150 = arith.constant dense<0.000000e+00> : vector<286x4xf32>
    %167 = tpu.matmul %164, %166, %cst_150 {dimension_numbers = #tpu.dot_dimension_numbers<[1], [0], [0], [1], [0, 0, 1, 1], [], []>} : vector<286x12xbf16>, vector<12x4xbf16>, vector<286x4xf32> -> vector<286x4xf32>
    %168 = arith.addf %162, %167 : vector<286x4xf32>
    %c36_151 = arith.constant 36 : index
    %c0_152 = arith.constant 0 : index
    %169 = vector.load %arg12[%c36_151, %c0_152] : memref<324x16xf32, #tpu.memory_space<vmem>>, vector<286x12xf32>
    %170 = arith.truncf %169 : vector<286x12xf32> to vector<286x12xbf16>
    %c6_153 = arith.constant 6 : index
    %c0_154 = arith.constant 0 : index
    %c0_155 = arith.constant 0 : index
    %171 = vector.load %arg7[%c6_153, %c0_154, %c0_155] : memref<9x12x4xbf16, #tpu.memory_space<vmem>>, vector<1x12x4xbf16>
    %172 = vector.shape_cast %171 : vector<1x12x4xbf16> to vector<12x4xbf16>
    %cst_156 = arith.constant dense<0.000000e+00> : vector<286x4xf32>
    %173 = tpu.matmul %170, %172, %cst_156 {dimension_numbers = #tpu.dot_dimension_numbers<[1], [0], [0], [1], [0, 0, 1, 1], [], []>} : vector<286x12xbf16>, vector<12x4xbf16>, vector<286x4xf32> -> vector<286x4xf32>
    %174 = arith.addf %168, %173 : vector<286x4xf32>
    %c37_157 = arith.constant 37 : index
    %c0_158 = arith.constant 0 : index
    %175 = vector.load %arg12[%c37_157, %c0_158] : memref<324x16xf32, #tpu.memory_space<vmem>>, vector<286x12xf32>
    %176 = arith.truncf %175 : vector<286x12xf32> to vector<286x12xbf16>
    %c7_159 = arith.constant 7 : index
    %c0_160 = arith.constant 0 : index
    %c0_161 = arith.constant 0 : index
    %177 = vector.load %arg7[%c7_159, %c0_160, %c0_161] : memref<9x12x4xbf16, #tpu.memory_space<vmem>>, vector<1x12x4xbf16>
    %178 = vector.shape_cast %177 : vector<1x12x4xbf16> to vector<12x4xbf16>
    %cst_162 = arith.constant dense<0.000000e+00> : vector<286x4xf32>
    %179 = tpu.matmul %176, %178, %cst_162 {dimension_numbers = #tpu.dot_dimension_numbers<[1], [0], [0], [1], [0, 0, 1, 1], [], []>} : vector<286x12xbf16>, vector<12x4xbf16>, vector<286x4xf32> -> vector<286x4xf32>
    %180 = arith.addf %174, %179 : vector<286x4xf32>
    %c38_163 = arith.constant 38 : index
    %c0_164 = arith.constant 0 : index
    %181 = vector.load %arg12[%c38_163, %c0_164] : memref<324x16xf32, #tpu.memory_space<vmem>>, vector<286x12xf32>
    %182 = arith.truncf %181 : vector<286x12xf32> to vector<286x12xbf16>
    %c8_165 = arith.constant 8 : index
    %c0_166 = arith.constant 0 : index
    %c0_167 = arith.constant 0 : index
    %183 = vector.load %arg7[%c8_165, %c0_166, %c0_167] : memref<9x12x4xbf16, #tpu.memory_space<vmem>>, vector<1x12x4xbf16>
    %184 = vector.shape_cast %183 : vector<1x12x4xbf16> to vector<12x4xbf16>
    %cst_168 = arith.constant dense<0.000000e+00> : vector<286x4xf32>
    %185 = tpu.matmul %182, %184, %cst_168 {dimension_numbers = #tpu.dot_dimension_numbers<[1], [0], [0], [1], [0, 0, 1, 1], [], []>} : vector<286x12xbf16>, vector<12x4xbf16>, vector<286x4xf32> -> vector<286x4xf32>
    %186 = arith.addf %180, %185 : vector<286x4xf32>
    %c0_169 = arith.constant 0 : index
    %c0_170 = arith.constant 0 : index
    %187 = vector.load %arg8[%c0_169, %c0_170] : memref<1x4xf32, #tpu.memory_space<vmem>>, vector<1x4xf32>
    %188 = vector.broadcast %187 : vector<1x4xf32> to vector<286x4xf32>
    %189 = arith.addf %186, %188 : vector<286x4xf32>
    %cst_171 = arith.constant 0.000000e+00 : f32
    %190 = vector.broadcast %cst_171 : f32 to vector<286x4xf32>
    %191 = arith.maximumf %189, %190 : vector<286x4xf32>
    %192 = vector.broadcast %5 : vector<286x1xf32> to vector<286x4xf32>
    %193 = arith.mulf %191, %192 : vector<286x4xf32>
    %c19_172 = arith.constant 19 : index
    %c12 = arith.constant 12 : index
    %194 = vector.load %arg12[%c19_172, %c12] : memref<324x16xf32, #tpu.memory_space<vmem>>, vector<286x4xf32>
    tpu.vector_store %arg12[%c19_172, %c12], %193 {strides = array<i32>} : memref<324x16xf32, #tpu.memory_space<vmem>>, vector<286x4xf32>,
    %c0_173 = arith.constant 0 : index
    %c0_174 = arith.constant 0 : index
    %195 = vector.load %arg12[%c0_173, %c0_174] : memref<324x16xf32, #tpu.memory_space<vmem>>, vector<324x16xf32>
    %196 = arith.truncf %195 : vector<324x16xf32> to vector<324x16xbf16>
    %c0_175 = arith.constant 0 : index
    %c0_176 = arith.constant 0 : index
    %197 = vector.load %arg9[%c0_175, %c0_176] : memref<16x4xbf16, #tpu.memory_space<vmem>>, vector<16x4xbf16>
    %cst_177 = arith.constant dense<0.000000e+00> : vector<324x4xf32>
    %198 = tpu.matmul %196, %197, %cst_177 {dimension_numbers = #tpu.dot_dimension_numbers<[1], [0], [0], [1], [0, 0, 1, 1], [], []>} : vector<324x16xbf16>, vector<16x4xbf16>, vector<324x4xf32> -> vector<324x4xf32>
    %c0_178 = arith.constant 0 : index
    %c0_179 = arith.constant 0 : index
    %199 = vector.load %arg10[%c0_178, %c0_179] : memref<1x4xf32, #tpu.memory_space<vmem>>, vector<1x4xf32>
    %200 = vector.broadcast %199 : vector<1x4xf32> to vector<324x4xf32>
    %201 = arith.addf %198, %200 : vector<324x4xf32>
    %202 = vector.extract_strided_slice %195 {offsets = [0, 0], sizes = [324, 4], strides = [1, 1]} : vector<324x16xf32> to vector<324x4xf32>
    %203 = arith.addf %201, %202 : vector<324x4xf32>
    %c0_180 = arith.constant 0 : index
    %c0_181 = arith.constant 0 : index
    %c0_182 = arith.constant 0 : index
    %204 = vector.load %arg11[%c0_180, %c0_181, %c0_182] : memref<1x324x4xf32, #tpu.memory_space<vmem>>, vector<1x324x4xf32>
    %205 = vector.shape_cast %204 : vector<1x324x4xf32> to vector<324x4xf32>
    %206 = vector.shape_cast %203 : vector<324x4xf32> to vector<1x324x4xf32>
    tpu.vector_store %arg11[%c0_180, %c0_181, %c0_182], %206 {strides = array<i32>} : memref<1x324x4xf32, #tpu.memory_space<vmem>>, vector<1x324x4xf32>,
    return
  }
  func.func @transform_0(%arg0: i32) -> (i32, i32, i32) {
    %c0_i32 = arith.constant 0 : i32
    %c0_i32_0 = arith.constant 0 : i32
    %c0_i32_1 = arith.constant 0 : i32
    return %arg0, %c0_i32, %c0_i32_0 : i32, i32, i32
  }
  func.func @transform_1(%arg0: i32) -> (i32, i32) {
    %c0_i32 = arith.constant 0 : i32
    %c0_i32_0 = arith.constant 0 : i32
    %c0_i32_1 = arith.constant 0 : i32
    return %c0_i32, %c0_i32_0 : i32, i32
  }
  func.func @transform_2(%arg0: i32) -> (i32, i32, i32) {
    %c0_i32 = arith.constant 0 : i32
    %c0_i32_0 = arith.constant 0 : i32
    %c0_i32_1 = arith.constant 0 : i32
    %c0_i32_2 = arith.constant 0 : i32
    return %c0_i32, %c0_i32_0, %c0_i32_1 : i32, i32, i32
  }
  func.func @transform_3(%arg0: i32) -> (i32, i32) {
    %c0_i32 = arith.constant 0 : i32
    %c0_i32_0 = arith.constant 0 : i32
    %c0_i32_1 = arith.constant 0 : i32
    return %c0_i32, %c0_i32_0 : i32, i32
  }
  func.func @transform_4(%arg0: i32) -> (i32, i32, i32) {
    %c0_i32 = arith.constant 0 : i32
    %c0_i32_0 = arith.constant 0 : i32
    %c0_i32_1 = arith.constant 0 : i32
    %c0_i32_2 = arith.constant 0 : i32
    return %c0_i32, %c0_i32_0, %c0_i32_1 : i32, i32, i32
  }
  func.func @transform_5(%arg0: i32) -> (i32, i32) {
    %c0_i32 = arith.constant 0 : i32
    %c0_i32_0 = arith.constant 0 : i32
    %c0_i32_1 = arith.constant 0 : i32
    return %c0_i32, %c0_i32_0 : i32, i32
  }
  func.func @transform_6(%arg0: i32) -> (i32, i32, i32) {
    %c0_i32 = arith.constant 0 : i32
    %c0_i32_0 = arith.constant 0 : i32
    %c0_i32_1 = arith.constant 0 : i32
    %c0_i32_2 = arith.constant 0 : i32
    return %c0_i32, %c0_i32_0, %c0_i32_1 : i32, i32, i32
  }
  func.func @transform_7(%arg0: i32) -> (i32, i32) {
    %c0_i32 = arith.constant 0 : i32
    %c0_i32_0 = arith.constant 0 : i32
    %c0_i32_1 = arith.constant 0 : i32
    return %c0_i32, %c0_i32_0 : i32, i32
  }
  func.func @transform_8(%arg0: i32) -> (i32, i32) {
    %c0_i32 = arith.constant 0 : i32
    %c0_i32_0 = arith.constant 0 : i32
    %c0_i32_1 = arith.constant 0 : i32
    return %c0_i32, %c0_i32_0 : i32, i32
  }
  func.func @transform_9(%arg0: i32) -> (i32, i32) {
    %c0_i32 = arith.constant 0 : i32
    %c0_i32_0 = arith.constant 0 : i32
    %c0_i32_1 = arith.constant 0 : i32
    return %c0_i32, %c0_i32_0 : i32, i32
  }
  func.func @transform_10(%arg0: i32) -> (i32, i32, i32) {
    %c0_i32 = arith.constant 0 : i32
    %c0_i32_0 = arith.constant 0 : i32
    %c0_i32_1 = arith.constant 0 : i32
    return %arg0, %c0_i32, %c0_i32_0 : i32, i32, i32
  }
}

</mosaic_0001>

<llo_original>
// kernel: residual_dense_block_pallas.1
$region0: #{residual_dense_block_pallas.1}
  #allocation0 [shape = 'u32[]', space=smem, size = 0x4, offset = 0x4, fixed_abs, tag = 'smem constant byte address 0x4 - core index']
  #allocation1 [shape = 'u32[144,128]{1,0:T(1,128)}', space=vmem, size = 0x12000, scoped, tag = 'internal scratch']
  #allocation2 [shape = 'f32[324,16]{1,0:T(8,128)}', space=vmem, size = 0x29000, scoped, tag = 'scratch operand']
  %s0 = inlined_call_operand.vmem [shape: f32[2,324,4], index: 0, kind: input, shape index: {}]
  %s1 = inlined_call_operand.vmem [shape: f32[286,1], index: 1, kind: input, shape index: {}]
  %s2 = inlined_call_operand.vmem [shape: bf16[9,4,4], index: 2, kind: input, shape index: {}]
  %s3 = inlined_call_operand.vmem [shape: f32[1,4], index: 3, kind: input, shape index: {}]
  %s4 = inlined_call_operand.vmem [shape: bf16[9,8,4], index: 4, kind: input, shape index: {}]
  %s5 = inlined_call_operand.vmem [shape: f32[1,4], index: 5, kind: input, shape index: {}]
  %s6 = inlined_call_operand.vmem [shape: bf16[9,12,4], index: 6, kind: input, shape index: {}]
  %s7 = inlined_call_operand.vmem [shape: f32[1,4], index: 7, kind: input, shape index: {}]
  %s8 = inlined_call_operand.vmem [shape: bf16[16,4], index: 8, kind: input, shape index: {}]
  %s9 = inlined_call_operand.vmem [shape: f32[1,4], index: 9, kind: input, shape index: {}]
  %s10 = inlined_call_operand.vmem [shape: f32[2,324,4], index: 10, kind: output, shape index: {}]
  %s11 = sld [smem:[#allocation0]]
  $region73: #{residual_dense_block_pallas.1} parent=0
    _
  %s13 = ssub.s32 1, %s11
  %s14 = scalar_select 0, %s13, %s11
  loop: start=0, step=1, limit=4
  $region2: #{residual_dense_block_pallas.1} parent=0 // loop_pre_header
    _
  $region3: #{residual_dense_block_pallas.1} parent=0 // loop_header
    %s16 = sphi 0, %s20
    %p17 = scmp.ge.s32.totalorder %s16, 4
    %s26 = sphi 0, %s28
    %s29 = sphi 0, %s26
    %s30 = sphi 0, %s29
    %s46 = sphi 0, %s30
    %s50 = sphi 0, %s50
    %s52 = sphi 0, %s50
    %s53 = sphi 0, %s52
    %s67 = sphi 0, %s53
    %s71 = sphi 0, %s71
    %s73 = sphi 0, %s71
    %s74 = sphi 0, %s73
    %s88 = sphi 0, %s74
    %s92 = sphi 0, %s92
    %s94 = sphi 0, %s92
    %s95 = sphi 0, %s94
    %s109 = sphi 0, %s95
    %s113 = sphi 0, %s113
    %s115 = sphi 0, %s113
    %s116 = sphi 0, %s115
    %s130 = sphi 0, %s116
    %s134 = sphi 0, %s134
    %s136 = sphi 0, %s134
    %s137 = sphi 0, %s136
    %s151 = sphi 0, %s137
    %s155 = sphi 0, %s155
    %s157 = sphi 0, %s155
    %s158 = sphi 0, %s157
    %s172 = sphi 0, %s158
    %s176 = sphi 0, %s176
    %s178 = sphi 0, %s176
    %s179 = sphi 0, %s178
    %s193 = sphi 0, %s179
    %s197 = sphi 0, %s197
    %s199 = sphi 0, %s197
    %s200 = sphi 0, %s199
    %s214 = sphi 0, %s200
    %s218 = sphi 0, %s218
    %s220 = sphi 0, %s218
    %s221 = sphi 0, %s220
    %s235 = sphi 0, %s221
    %s241 = sphi 0, %s243
    %s244 = sphi 0, %s241
    %s245 = sphi 0, %s244
    %s261 = sphi 0, %s245
  $region4: #{residual_dense_block_pallas.1} parent=0 // loop_header_branch
    %19 = sbr.rel (%p17) target = $region8
  $region5: #{residual_dense_block_pallas.1} parent=0 // loop_body
    %s21 = ssub.s32 %s16, 1
    %s22 = ssub.s32 %s16, 2
    %s23 = sadd.s32 %s16, 1
    %s24 = ssub.s32 %s16, %s23
    %p25 = scmp.eq.s32.totalorder %s24, 0
    %s27 = sadd.s32 %s26, 1
    %s28 = scalar_select %p25, %s26, %s27
    %p31 = pneg %p25
    %p32 = scmp.eq.s32.totalorder %s16, 1
    %p33 = por %p31, %p32
    %p34 = scmp.ne.s32.totalorder %s26, %s29
    %p35 = scmp.eq.s32.totalorder %s16, 0
    %p36 = por %p34, %p35
    %p37 = scmp.ne.s32.totalorder %s26, %s29
    %p38 = scmp.eq.s32.totalorder %s21, 1
    %p39 = por %p37, %p38
    %p40 = scmp.ne.s32.totalorder %s29, %s30
    %p41 = scmp.eq.s32.totalorder %s21, 0
    %p42 = por %p40, %p41
    %p43 = scmp.ne.s32.totalorder %s29, %s30
    %p44 = scmp.eq.s32.totalorder %s22, 1
    %p45 = por %p43, %p44
    %p47 = scmp.ne.s32.totalorder %s30, %s46
    %p48 = scmp.eq.s32.totalorder %s22, 0
    %p49 = por %p47, %p48
    %s51 = sadd.s32 %s50, 1
    %p54 = scmp.eq.s32.totalorder %s16, 1
    %p55 = scmp.ne.s32.totalorder %s50, %s52
    %p56 = scmp.eq.s32.totalorder %s16, 0
    %p57 = por %p55, %p56
    %p58 = scmp.ne.s32.totalorder %s50, %s52
    %p59 = scmp.eq.s32.totalorder %s21, 1
    %p60 = por %p58, %p59
    %p61 = scmp.ne.s32.totalorder %s52, %s53
    %p62 = scmp.eq.s32.totalorder %s21, 0
    %p63 = por %p61, %p62
    %p64 = scmp.ne.s32.totalorder %s52, %s53
    %p65 = scmp.eq.s32.totalorder %s22, 1
    %p66 = por %p64, %p65
    %p68 = scmp.ne.s32.totalorder %s53, %s67
    %p69 = scmp.eq.s32.totalorder %s22, 0
    %p70 = por %p68, %p69
    %s72 = sadd.s32 %s71, 1
    %p75 = scmp.eq.s32.totalorder %s16, 1
    %p76 = scmp.ne.s32.totalorder %s71, %s73
    %p77 = scmp.eq.s32.totalorder %s16, 0
    %p78 = por %p76, %p77
    %p79 = scmp.ne.s32.totalorder %s71, %s73
    %p80 = scmp.eq.s32.totalorder %s21, 1
    %p81 = por %p79, %p80
    %p82 = scmp.ne.s32.totalorder %s73, %s74
    %p83 = scmp.eq.s32.totalorder %s21, 0
    %p84 = por %p82, %p83
    %p85 = scmp.ne.s32.totalorder %s73, %s74
    %p86 = scmp.eq.s32.totalorder %s22, 1
    %p87 = por %p85, %p86
    %p89 = scmp.ne.s32.totalorder %s74, %s88
    %p90 = scmp.eq.s32.totalorder %s22, 0
    %p91 = por %p89, %p90
    %s93 = sadd.s32 %s92, 1
    %p96 = scmp.eq.s32.totalorder %s16, 1
    %p97 = scmp.ne.s32.totalorder %s92, %s94
    %p98 = scmp.eq.s32.totalorder %s16, 0
    %p99 = por %p97, %p98
    %p100 = scmp.ne.s32.totalorder %s92, %s94
    %p101 = scmp.eq.s32.totalorder %s21, 1
    %p102 = por %p100, %p101
    %p103 = scmp.ne.s32.totalorder %s94, %s95
    %p104 = scmp.eq.s32.totalorder %s21, 0
    %p105 = por %p103, %p104
    %p106 = scmp.ne.s32.totalorder %s94, %s95
    %p107 = scmp.eq.s32.totalorder %s22, 1
    %p108 = por %p106, %p107
    %p110 = scmp.ne.s32.totalorder %s95, %s109
    %p111 = scmp.eq.s32.totalorder %s22, 0
    %p112 = por %p110, %p111
    %s114 = sadd.s32 %s113, 1
    %p117 = scmp.eq.s32.totalorder %s16, 1
    %p118 = scmp.ne.s32.totalorder %s113, %s115
    %p119 = scmp.eq.s32.totalorder %s16, 0
    %p120 = por %p118, %p119
    %p121 = scmp.ne.s32.totalorder %s113, %s115
    %p122 = scmp.eq.s32.totalorder %s21, 1
    %p123 = por %p121, %p122
    %p124 = scmp.ne.s32.totalorder %s115, %s116
    %p125 = scmp.eq.s32.totalorder %s21, 0
    %p126 = por %p124, %p125
    %p127 = scmp.ne.s32.totalorder %s115, %s116
    %p128 = scmp.eq.s32.totalorder %s22, 1
    %p129 = por %p127, %p128
    %p131 = scmp.ne.s32.totalorder %s116, %s130
    %p132 = scmp.eq.s32.totalorder %s22, 0
    %p133 = por %p131, %p132
    %s135 = sadd.s32 %s134, 1
    %p138 = scmp.eq.s32.totalorder %s16, 1
    %p139 = scmp.ne.s32.totalorder %s134, %s136
    %p140 = scmp.eq.s32.totalorder %s16, 0
    %p141 = por %p139, %p140
    %p142 = scmp.ne.s32.totalorder %s134, %s136
    %p143 = scmp.eq.s32.totalorder %s21, 1
    %p144 = por %p142, %p143
    %p145 = scmp.ne.s32.totalorder %s136, %s137
    %p146 = scmp.eq.s32.totalorder %s21, 0
    %p147 = por %p145, %p146
    %p148 = scmp.ne.s32.totalorder %s136, %s137
    %p149 = scmp.eq.s32.totalorder %s22, 1
    %p150 = por %p148, %p149
    %p152 = scmp.ne.s32.totalorder %s137, %s151
    %p153 = scmp.eq.s32.totalorder %s22, 0
    %p154 = por %p152, %p153
    %s156 = sadd.s32 %s155, 1
    %p159 = scmp.eq.s32.totalorder %s16, 1
    %p160 = scmp.ne.s32.totalorder %s155, %s157
    %p161 = scmp.eq.s32.totalorder %s16, 0
    %p162 = por %p160, %p161
    %p163 = scmp.ne.s32.totalorder %s155, %s157
    %p164 = scmp.eq.s32.totalorder %s21, 1
    %p165 = por %p163, %p164
    %p166 = scmp.ne.s32.totalorder %s157, %s158
    %p167 = scmp.eq.s32.totalorder %s21, 0
    %p168 = por %p166, %p167
    %p169 = scmp.ne.s32.totalorder %s157, %s158
    %p170 = scmp.eq.s32.totalorder %s22, 1
    %p171 = por %p169, %p170
    %p173 = scmp.ne.s32.totalorder %s158, %s172
    %p174 = scmp.eq.s32.totalorder %s22, 0
    %p175 = por %p173, %p174
    %s177 = sadd.s32 %s176, 1
    %p180 = scmp.eq.s32.totalorder %s16, 1
    %p181 = scmp.ne.s32.totalorder %s176, %s178
    %p182 = scmp.eq.s32.totalorder %s16, 0
    %p183 = por %p181, %p182
    %p184 = scmp.ne.s32.totalorder %s176, %s178
    %p185 = scmp.eq.s32.totalorder %s21, 1
    %p186 = por %p184, %p185
    %p187 = scmp.ne.s32.totalorder %s178, %s179
    %p188 = scmp.eq.s32.totalorder %s21, 0
    %p189 = por %p187, %p188
    %p190 = scmp.ne.s32.totalorder %s178, %s179
    %p191 = scmp.eq.s32.totalorder %s22, 1
    %p192 = por %p190, %p191
    %p194 = scmp.ne.s32.totalorder %s179, %s193
    %p195 = scmp.eq.s32.totalorder %s22, 0
    %p196 = por %p194, %p195
    %s198 = sadd.s32 %s197, 1
    %p201 = scmp.eq.s32.totalorder %s16, 1
    %p202 = scmp.ne.s32.totalorder %s197, %s199
    %p203 = scmp.eq.s32.totalorder %s16, 0
    %p204 = por %p202, %p203
    %p205 = scmp.ne.s32.totalorder %s197, %s199
    %p206 = scmp.eq.s32.totalorder %s21, 1
    %p207 = por %p205, %p206
    %p208 = scmp.ne.s32.totalorder %s199, %s200
    %p209 = scmp.eq.s32.totalorder %s21, 0
    %p210 = por %p208, %p209
    %p211 = scmp.ne.s32.totalorder %s199, %s200
    %p212 = scmp.eq.s32.totalorder %s22, 1
    %p213 = por %p211, %p212
    %p215 = scmp.ne.s32.totalorder %s200, %s214
    %p216 = scmp.eq.s32.totalorder %s22, 0
    %p217 = por %p215, %p216
    %s219 = sadd.s32 %s218, 1
    %p222 = scmp.eq.s32.totalorder %s16, 1
    %p223 = scmp.ne.s32.totalorder %s218, %s220
    %p224 = scmp.eq.s32.totalorder %s16, 0
    %p225 = por %p223, %p224
    %p226 = scmp.ne.s32.totalorder %s218, %s220
    %p227 = scmp.eq.s32.totalorder %s21, 1
    %p228 = por %p226, %p227
    %p229 = scmp.ne.s32.totalorder %s220, %s221
    %p230 = scmp.eq.s32.totalorder %s21, 0
    %p231 = por %p229, %p230
    %p232 = scmp.ne.s32.totalorder %s220, %s221
    %p233 = scmp.eq.s32.totalorder %s22, 1
    %p234 = por %p232, %p233
    %p236 = scmp.ne.s32.totalorder %s221, %s235
    %p237 = scmp.eq.s32.totalorder %s22, 0
    %p238 = por %p236, %p237
    %s239 = ssub.s32 %s16, %s23
    %p240 = scmp.eq.s32.totalorder %s239, 0
    %s242 = sadd.s32 %s241, 1
    %s243 = scalar_select %p240, %s241, %s242
    %p246 = pneg %p240
    %p247 = scmp.eq.s32.totalorder %s16, 1
    %p248 = por %p246, %p247
    %p249 = scmp.ne.s32.totalorder %s241, %s244
    %p250 = scmp.eq.s32.totalorder %s16, 0
    %p251 = por %p249, %p250
    %p252 = scmp.ne.s32.totalorder %s241, %s244
    %p253 = scmp.eq.s32.totalorder %s21, 1
    %p254 = por %p252, %p253
    %p255 = scmp.ne.s32.totalorder %s244, %s245
    %p256 = scmp.eq.s32.totalorder %s21, 0
    %p257 = por %p255, %p256
    %p258 = scmp.ne.s32.totalorder %s244, %s245
    %p259 = scmp.eq.s32.totalorder %s22, 1
    %p260 = por %p258, %p259
    %p262 = scmp.ne.s32.totalorder %s245, %s261
    %p263 = scmp.eq.s32.totalorder %s22, 0
    %p264 = por %p262, %p263
    %p265 = scmp.le.s32.totalorder 1, %s16
    %p266 = scmp.lt.s32.totalorder %s16, 3
    %p267 = pnand %p265, %p266
    %p268 = pneg %p267
    // Predicated region
    $region9: #{residual_dense_block_pallas.1} parent=5 // pred_check
      _
    $region10: #{residual_dense_block_pallas.1} parent=5 // pred_check_branch
      %270 = sbr.rel (%p267) target = $region12
    $region11: #{residual_dense_block_pallas.1} parent=5 // pred_region
      %s271 = ssub.s32 %s16, 1
      // Predicated region
      $region13: #{residual_dense_block_pallas.1} parent=11 // pred_check
        %p272 = pneg %p63
      $region14: #{residual_dense_block_pallas.1} parent=11 // pred_check_branch
        %274 = sbr.rel (%p272) target = $region16
      $region15: #{residual_dense_block_pallas.1} parent=11 // pred_region
        _
      $region16: #{residual_dense_block_pallas.1} parent=11 // pred_fallthru
        _
      // Predicated region
      $region17: #{residual_dense_block_pallas.1} parent=11 // pred_check
        %p275 = pneg %p84
      $region18: #{residual_dense_block_pallas.1} parent=11 // pred_check_branch
        %277 = sbr.rel (%p275) target = $region20
      $region19: #{residual_dense_block_pallas.1} parent=11 // pred_region
        _
      $region20: #{residual_dense_block_pallas.1} parent=11 // pred_fallthru
        _
      // Predicated region
      $region21: #{residual_dense_block_pallas.1} parent=11 // pred_check
        %p278 = pneg %p105
      $region22: #{residual_dense_block_pallas.1} parent=11 // pred_check_branch
        %280 = sbr.rel (%p278) target = $region24
      $region23: #{residual_dense_block_pallas.1} parent=11 // pred_region
        _
      $region24: #{residual_dense_block_pallas.1} parent=11 // pred_fallthru
        _
      // Predicated region
      $region25: #{residual_dense_block_pallas.1} parent=11 // pred_check
        %p281 = pneg %p126
      $region26: #{residual_dense_block_pallas.1} parent=11 // pred_check_branch
        %283 = sbr.rel (%p281) target = $region28
      $region27: #{residual_dense_block_pallas.1} parent=11 // pred_region
        _
      $region28: #{residual_dense_block_pallas.1} parent=11 // pred_fallthru
        _
      // Predicated region
      $region29: #{residual_dense_block_pallas.1} parent=11 // pred_check
        %p284 = pneg %p147
      $region30: #{residual_dense_block_pallas.1} parent=11 // pred_check_branch
        %286 = sbr.rel (%p284) target = $region32
      $region31: #{residual_dense_block_pallas.1} parent=11 // pred_region
        _
      $region32: #{residual_dense_block_pallas.1} parent=11 // pred_fallthru
        _
      // Predicated region
      $region33: #{residual_dense_block_pallas.1} parent=11 // pred_check
        %p287 = pneg %p168
      $region34: #{residual_dense_block_pallas.1} parent=11 // pred_check_branch
        %289 = sbr.rel (%p287) target = $region36
      $region35: #{residual_dense_block_pallas.1} parent=11 // pred_region
        _
      $region36: #{residual_dense_block_pallas.1} parent=11 // pred_fallthru
        _
      // Predicated region
      $region37: #{residual_dense_block_pallas.1} parent=11 // pred_check
        %p290 = pneg %p189
      $region38: #{residual_dense_block_pallas.1} parent=11 // pred_check_branch
        %292 = sbr.rel (%p290) target = $region40
      $region39: #{residual_dense_block_pallas.1} parent=11 // pred_region
        _
      $region40: #{residual_dense_block_pallas.1} parent=11 // pred_fallthru
        _
      // Predicated region
      $region41: #{residual_dense_block_pallas.1} parent=11 // pred_check
        %p293 = pneg %p210
      $region42: #{residual_dense_block_pallas.1} parent=11 // pred_check_branch
        %295 = sbr.rel (%p293) target = $region44
      $region43: #{residual_dense_block_pallas.1} parent=11 // pred_region
        _
      $region44: #{residual_dense_block_pallas.1} parent=11 // pred_fallthru
        _
      // Predicated region
      $region45: #{residual_dense_block_pallas.1} parent=11 // pred_check
        %p296 = pneg %p231
      $region46: #{residual_dense_block_pallas.1} parent=11 // pred_check_branch
        %298 = sbr.rel (%p296) target = $region48
      $region47: #{residual_dense_block_pallas.1} parent=11 // pred_region
        _
      $region48: #{residual_dense_block_pallas.1} parent=11 // pred_fallthru
        _
    $region12: #{residual_dense_block_pallas.1} parent=5 // pred_fallthru
      _
    %p299 = scmp.lt.s32.totalorder %s16, 2
    // Predicated region
    $region49: #{residual_dense_block_pallas.1} parent=5 // pred_check
      %p300 = pneg %p299
    $region50: #{residual_dense_block_pallas.1} parent=5 // pred_check_branch
      %302 = sbr.rel (%p300) target = $region52
    $region51: #{residual_dense_block_pallas.1} parent=5 // pred_region
      // Predicated region
      $region53: #{residual_dense_block_pallas.1} parent=51 // pred_check
        %p303 = pneg %p36
      $region54: #{residual_dense_block_pallas.1} parent=51 // pred_check_branch
        %305 = sbr.rel (%p303) target = $region56
      $region55: #{residual_dense_block_pallas.1} parent=51 // pred_region
        %p306 = scmp.lt.s32.totalorder %s16, 1
        %s307 = scalar_select %p306, %s16, 1
        %s308 = smul.addr %s307, 41
        %s309 = smul.addr %s308, 8
        %s310 = scalar_lea.vmem %s0, %s309
      $region56: #{residual_dense_block_pallas.1} parent=51 // pred_fallthru
        _
    $region52: #{residual_dense_block_pallas.1} parent=5 // pred_fallthru
      _
    %p311 = scmp.le.s32.totalorder 1, %s16
    %p312 = scmp.lt.s32.totalorder %s16, 3
    %p313 = pnand %p311, %p312
    %p314 = pneg %p313
    // Predicated region
    $region57: #{residual_dense_block_pallas.1} parent=5 // pred_check
      _
    $region58: #{residual_dense_block_pallas.1} parent=5 // pred_check_branch
      %316 = sbr.rel (%p313) target = $region60
    $region59: #{residual_dense_block_pallas.1} parent=5 // pred_region
      %s317 = ssub.s32 %s16, 1
      %p318 = scmp.lt.s32.totalorder %s21, 1
      %s319 = scalar_select %p318, %s21, 1
      %s320 = smul.addr %s319, 41
      %s321 = smul.addr %s320, 8
      %s322 = scalar_lea.vmem %s0, %s321
      %p323 = pneg %p42
      %p324 = pneg %p39
      %p325 = pneg %p63
      %p326 = pneg %p60
      %p327 = pneg %p84
      %p328 = pneg %p81
      %p329 = pneg %p105
      %p330 = pneg %p102
      %p331 = pneg %p126
      %p332 = pneg %p123
      %p333 = pneg %p147
      %p334 = pneg %p144
      %p335 = pneg %p168
      %p336 = pneg %p165
      %p337 = pneg %p189
      %p338 = pneg %p186
      %p339 = pneg %p210
      %p340 = pneg %p207
      %p341 = pneg %p231
      %p342 = pneg %p228
      %p343 = pneg %p257
      %p344 = pneg %p254
      %p345 = scmp.lt.s32.totalorder %s21, 1
      %s346 = scalar_select %p345, %s21, 1
      %s347 = smul.addr %s346, 41
      %s348 = smul.addr %s347, 8
      %s349 = scalar_lea.vmem %s10, %s348
      %p350 = scmp.lt.s32.totalorder %s21, 1
      %s351 = scalar_select %p350, %s21, 1
      %s352 = smul.addr %s351, 41
      %s353 = smul.addr %s352, 8
      %s354 = scalar_lea.vmem %s0, %s353
      %p355 = scmp.lt.s32.totalorder %s21, 1
      %s356 = scalar_select %p355, %s21, 1
      %s357 = smul.addr %s356, 41
      %s358 = smul.addr %s357, 8
      %s359 = scalar_lea.vmem %s10, %s358
      %vm361 = vcmask 130048
      %362 = vst.msk [vmem:[#allocation2] sm:$0xff] %vm361, 0.0
      %363 = vst.msk [vmem:[#allocation2 + $0x8] sm:$0xff] %vm361, 0.0
      %364 = vst.msk [vmem:[#allocation2 + $0x10] sm:$0xff] %vm361, 0.0
      %365 = vst.msk [vmem:[#allocation2 + $0x18] sm:$0xff] %vm361, 0.0
      %366 = vst.msk [vmem:[#allocation2 + $0x20] sm:$0xff] %vm361, 0.0
      %367 = vst.msk [vmem:[#allocation2 + $0x28] sm:$0xff] %vm361, 0.0
      %368 = vst.msk [vmem:[#allocation2 + $0x30] sm:$0xff] %vm361, 0.0
      %369 = vst.msk [vmem:[#allocation2 + $0x38] sm:$0xff] %vm361, 0.0
      %370 = vst.msk [vmem:[#allocation2 + $0x40] sm:$0xff] %vm361, 0.0
      %371 = vst.msk [vmem:[#allocation2 + $0x48] sm:$0xff] %vm361, 0.0
      %372 = vst.msk [vmem:[#allocation2 + $0x50] sm:$0xff] %vm361, 0.0
      %373 = vst.msk [vmem:[#allocation2 + $0x58] sm:$0xff] %vm361, 0.0
      %374 = vst.msk [vmem:[#allocation2 + $0x60] sm:$0xff] %vm361, 0.0
      %375 = vst.msk [vmem:[#allocation2 + $0x68] sm:$0xff] %vm361, 0.0
      %376 = vst.msk [vmem:[#allocation2 + $0x70] sm:$0xff] %vm361, 0.0
      %377 = vst.msk [vmem:[#allocation2 + $0x78] sm:$0xff] %vm361, 0.0
      %378 = vst.msk [vmem:[#allocation2 + $0x80] sm:$0xff] %vm361, 0.0
      %379 = vst.msk [vmem:[#allocation2 + $0x88] sm:$0xff] %vm361, 0.0
      %380 = vst.msk [vmem:[#allocation2 + $0x90] sm:$0xff] %vm361, 0.0
      %381 = vst.msk [vmem:[#allocation2 + $0x98] sm:$0xff] %vm361, 0.0
      %382 = vst.msk [vmem:[#allocation2 + $0xa0] sm:$0xff] %vm361, 0.0
      %383 = vst.msk [vmem:[#allocation2 + $0xa8] sm:$0xff] %vm361, 0.0
      %384 = vst.msk [vmem:[#allocation2 + $0xb0] sm:$0xff] %vm361, 0.0
      %385 = vst.msk [vmem:[#allocation2 + $0xb8] sm:$0xff] %vm361, 0.0
      %386 = vst.msk [vmem:[#allocation2 + $0xc0] sm:$0xff] %vm361, 0.0
      %387 = vst.msk [vmem:[#allocation2 + $0xc8] sm:$0xff] %vm361, 0.0
      %388 = vst.msk [vmem:[#allocation2 + $0xd0] sm:$0xff] %vm361, 0.0
      %389 = vst.msk [vmem:[#allocation2 + $0xd8] sm:$0xff] %vm361, 0.0
      %390 = vst.msk [vmem:[#allocation2 + $0xe0] sm:$0xff] %vm361, 0.0
      %391 = vst.msk [vmem:[#allocation2 + $0xe8] sm:$0xff] %vm361, 0.0
      %392 = vst.msk [vmem:[#allocation2 + $0xf0] sm:$0xff] %vm361, 0.0
      %393 = vst.msk [vmem:[#allocation2 + $0xf8] sm:$0xff] %vm361, 0.0
      %394 = vst.msk [vmem:[#allocation2 + $0x100] sm:$0xff] %vm361, 0.0
      %395 = vst.msk [vmem:[#allocation2 + $0x108] sm:$0xff] %vm361, 0.0
      %396 = vst.msk [vmem:[#allocation2 + $0x110] sm:$0xff] %vm361, 0.0
      %397 = vst.msk [vmem:[#allocation2 + $0x118] sm:$0xff] %vm361, 0.0
      %398 = vst.msk [vmem:[#allocation2 + $0x120] sm:$0xff] %vm361, 0.0
      %399 = vst.msk [vmem:[#allocation2 + $0x128] sm:$0xff] %vm361, 0.0
      %400 = vst.msk [vmem:[#allocation2 + $0x130] sm:$0xff] %vm361, 0.0
      %401 = vst.msk [vmem:[#allocation2 + $0x138] sm:$0xff] %vm361, 0.0
      %vm402 = vcmask 125952
      %403 = vst.msk [vmem:[#allocation2 + $0x140] sm:$0xf] %vm402, 0.0
      %v404 = vld [vmem:[%s354] sm:$0xff]
      %v405 = vld [vmem:[%s354 + $0x8] sm:$0xff]
      %v406 = vld [vmem:[%s354 + $0x10] sm:$0xff]
      %v407 = vld [vmem:[%s354 + $0x18] sm:$0xff]
      %v408 = vld [vmem:[%s354 + $0x20] sm:$0xff]
      %v409 = vld [vmem:[%s354 + $0x28] sm:$0xff]
      %v410 = vld [vmem:[%s354 + $0x30] sm:$0xff]
      %v411 = vld [vmem:[%s354 + $0x38] sm:$0xff]
      %v412 = vld [vmem:[%s354 + $0x40] sm:$0xff]
      %v413 = vld [vmem:[%s354 + $0x48] sm:$0xff]
      %v414 = vld [vmem:[%s354 + $0x50] sm:$0xff]
      %v415 = vld [vmem:[%s354 + $0x58] sm:$0xff]
      %v416 = vld [vmem:[%s354 + $0x60] sm:$0xff]
      %v417 = vld [vmem:[%s354 + $0x68] sm:$0xff]
      %v418 = vld [vmem:[%s354 + $0x70] sm:$0xff]
      %v419 = vld [vmem:[%s354 + $0x78] sm:$0xff]
      %v420 = vld [vmem:[%s354 + $0x80] sm:$0xff]
      %v421 = vld [vmem:[%s354 + $0x88] sm:$0xff]
      %v422 = vld [vmem:[%s354 + $0x90] sm:$0xff]
      %v423 = vld [vmem:[%s354 + $0x98] sm:$0xff]
      %v424 = vld [vmem:[%s354 + $0xa0] sm:$0xff]
      %v425 = vld [vmem:[%s354 + $0xa8] sm:$0xff]
      %v426 = vld [vmem:[%s354 + $0xb0] sm:$0xff]
      %v427 = vld [vmem:[%s354 + $0xb8] sm:$0xff]
      %v428 = vld [vmem:[%s354 + $0xc0] sm:$0xff]
      %v429 = vld [vmem:[%s354 + $0xc8] sm:$0xff]
      %v430 = vld [vmem:[%s354 + $0xd0] sm:$0xff]
      %v431 = vld [vmem:[%s354 + $0xd8] sm:$0xff]
      %v432 = vld [vmem:[%s354 + $0xe0] sm:$0xff]
      %v433 = vld [vmem:[%s354 + $0xe8] sm:$0xff]
      %v434 = vld [vmem:[%s354 + $0xf0] sm:$0xff]
      %v435 = vld [vmem:[%s354 + $0xf8] sm:$0xff]
      %v436 = vld [vmem:[%s354 + $0x100] sm:$0xff]
      %v437 = vld [vmem:[%s354 + $0x108] sm:$0xff]
      %v438 = vld [vmem:[%s354 + $0x110] sm:$0xff]
      %v439 = vld [vmem:[%s354 + $0x118] sm:$0xff]
      %v440 = vld [vmem:[%s354 + $0x120] sm:$0xff]
      %v441 = vld [vmem:[%s354 + $0x128] sm:$0xff]
      %v442 = vld [vmem:[%s354 + $0x130] sm:$0xff]
      %v443 = vld [vmem:[%s354 + $0x138] sm:$0xff]
      %v444 = vld [vmem:[%s354 + $0x140] sm:$0xf]
      %vm445 = vcmask 31744
      %446 = vst.msk [vmem:[#allocation2] sm:$0xff] %vm445, %v404
      %447 = vst.msk [vmem:[#allocation2 + $0x8] sm:$0xff] %vm445, %v405
      %448 = vst.msk [vmem:[#allocation2 + $0x10] sm:$0xff] %vm445, %v406
      %449 = vst.msk [vmem:[#allocation2 + $0x18] sm:$0xff] %vm445, %v407
      %450 = vst.msk [vmem:[#allocation2 + $0x20] sm:$0xff] %vm445, %v408
      %451 = vst.msk [vmem:[#allocation2 + $0x28] sm:$0xff] %vm445, %v409
      %452 = vst.msk [vmem:[#allocation2 + $0x30] sm:$0xff] %vm445, %v410
      %453 = vst.msk [vmem:[#allocation2 + $0x38] sm:$0xff] %vm445, %v411
      %454 = vst.msk [vmem:[#allocation2 + $0x40] sm:$0xff] %vm445, %v412
      %455 = vst.msk [vmem:[#allocation2 + $0x48] sm:$0xff] %vm445, %v413
      %456 = vst.msk [vmem:[#allocation2 + $0x50] sm:$0xff] %vm445, %v414
      %457 = vst.msk [vmem:[#allocation2 + $0x58] sm:$0xff] %vm445, %v415
      %458 = vst.msk [vmem:[#allocation2 + $0x60] sm:$0xff] %vm445, %v416
      %459 = vst.msk [vmem:[#allocation2 + $0x68] sm:$0xff] %vm445, %v417
      %460 = vst.msk [vmem:[#allocation2 + $0x70] sm:$0xff] %vm445, %v418
      %461 = vst.msk [vmem:[#allocation2 + $0x78] sm:$0xff] %vm445, %v419
      %462 = vst.msk [vmem:[#allocation2 + $0x80] sm:$0xff] %vm445, %v420
      %463 = vst.msk [vmem:[#allocation2 + $0x88] sm:$0xff] %vm445, %v421
      %464 = vst.msk [vmem:[#allocation2 + $0x90] sm:$0xff] %vm445, %v422
      %465 = vst.msk [vmem:[#allocation2 + $0x98] sm:$0xff] %vm445, %v423
      %466 = vst.msk [vmem:[#allocation2 + $0xa0] sm:$0xff] %vm445, %v424
      %467 = vst.msk [vmem:[#allocation2 + $0xa8] sm:$0xff] %vm445, %v425
      %468 = vst.msk [vmem:[#allocation2 + $0xb0] sm:$0xff] %vm445, %v426
      %469 = vst.msk [vmem:[#allocation2 + $0xb8] sm:$0xff] %vm445, %v427
      %470 = vst.msk [vmem:[#allocation2 + $0xc0] sm:$0xff] %vm445, %v428
      %471 = vst.msk [vmem:[#allocation2 + $0xc8] sm:$0xff] %vm445, %v429
      %472 = vst.msk [vmem:[#allocation2 + $0xd0] sm:$0xff] %vm445, %v430
      %473 = vst.msk [vmem:[#allocation2 + $0xd8] sm:$0xff] %vm445, %v431
      %474 = vst.msk [vmem:[#allocation2 + $0xe0] sm:$0xff] %vm445, %v432
      %475 = vst.msk [vmem:[#allocation2 + $0xe8] sm:$0xff] %vm445, %v433
      %476 = vst.msk [vmem:[#allocation2 + $0xf0] sm:$0xff] %vm445, %v434
      %477 = vst.msk [vmem:[#allocation2 + $0xf8] sm:$0xff] %vm445, %v435
      %478 = vst.msk [vmem:[#allocation2 + $0x100] sm:$0xff] %vm445, %v436
      %479 = vst.msk [vmem:[#allocation2 + $0x108] sm:$0xff] %vm445, %v437
      %480 = vst.msk [vmem:[#allocation2 + $0x110] sm:$0xff] %vm445, %v438
      %481 = vst.msk [vmem:[#allocation2 + $0x118] sm:$0xff] %vm445, %v439
      %482 = vst.msk [vmem:[#allocation2 + $0x120] sm:$0xff] %vm445, %v440
      %483 = vst.msk [vmem:[#allocation2 + $0x128] sm:$0xff] %vm445, %v441
      %484 = vst.msk [vmem:[#allocation2 + $0x130] sm:$0xff] %vm445, %v442
      %485 = vst.msk [vmem:[#allocation2 + $0x138] sm:$0xff] %vm445, %v443
      %vm486 = vcmask 27648
      %487 = vst.msk [vmem:[#allocation2 + $0x140] sm:$0xf] %vm486, %v444
      %v488 = vld [vmem:[%s1] sm:$0xff]
      %v489 = vld [vmem:[%s1 + $0x8] sm:$0xff]
      %v490 = vld [vmem:[%s1 + $0x10] sm:$0xff]
      %v491 = vld [vmem:[%s1 + $0x18] sm:$0xff]
      %v492 = vld [vmem:[%s1 + $0x20] sm:$0xff]
      %v493 = vld [vmem:[%s1 + $0x28] sm:$0xff]
      %v494 = vld [vmem:[%s1 + $0x30] sm:$0xff]
      %v495 = vld [vmem:[%s1 + $0x38] sm:$0xff]
      %v496 = vld [vmem:[%s1 + $0x40] sm:$0xff]
      %v497 = vld [vmem:[%s1 + $0x48] sm:$0xff]
      %v498 = vld [vmem:[%s1 + $0x50] sm:$0xff]
      %v499 = vld [vmem:[%s1 + $0x58] sm:$0xff]
      %v500 = vld [vmem:[%s1 + $0x60] sm:$0xff]
      %v501 = vld [vmem:[%s1 + $0x68] sm:$0xff]
      %v502 = vld [vmem:[%s1 + $0x70] sm:$0xff]
      %v503 = vld [vmem:[%s1 + $0x78] sm:$0xff]
      %v504 = vld [vmem:[%s1 + $0x80] sm:$0xff]
      %v505 = vld [vmem:[%s1 + $0x88] sm:$0xff]
      %v506 = vld [vmem:[%s1 + $0x90] sm:$0xff]
      %v507 = vld [vmem:[%s1 + $0x98] sm:$0xff]
      %v508 = vld [vmem:[%s1 + $0xa0] sm:$0xff]
      %v509 = vld [vmem:[%s1 + $0xa8] sm:$0xff]
      %v510 = vld [vmem:[%s1 + $0xb0] sm:$0xff]
      %v511 = vld [vmem:[%s1 + $0xb8] sm:$0xff]
      %v512 = vld [vmem:[%s1 + $0xc0] sm:$0xff]
      %v513 = vld [vmem:[%s1 + $0xc8] sm:$0xff]
      %v514 = vld [vmem:[%s1 + $0xd0] sm:$0xff]
      %v515 = vld [vmem:[%s1 + $0xd8] sm:$0xff]
      %v516 = vld [vmem:[%s1 + $0xe0] sm:$0xff]
      %v517 = vld [vmem:[%s1 + $0xe8] sm:$0xff]
      %v518 = vld [vmem:[%s1 + $0xf0] sm:$0xff]
      %v519 = vld [vmem:[%s1 + $0xf8] sm:$0xff]
      %v520 = vld [vmem:[%s1 + $0x100] sm:$0xff]
      %v521 = vld [vmem:[%s1 + $0x108] sm:$0xff]
      %v522 = vld [vmem:[%s1 + $0x110] sm:$0xff]
      %v523 = vld [vmem:[%s1 + $0x118] sm:$0x3f]
      %v524 = vld [vmem:[#allocation2] sm:$0xff]
      %v525 = vld [vmem:[#allocation2 + $0x8] sm:$0xff]
      %v526 = vld [vmem:[#allocation2 + $0x10] sm:$0xff]
      %v527 = vld [vmem:[#allocation2 + $0x18] sm:$0xff]
      %v528 = vld [vmem:[#allocation2 + $0x20] sm:$0xff]
      %v529 = vld [vmem:[#allocation2 + $0x28] sm:$0xff]
      %v530 = vld [vmem:[#allocation2 + $0x30] sm:$0xff]
      %v531 = vld [vmem:[#allocation2 + $0x38] sm:$0xff]
      %v532 = vld [vmem:[#allocation2 + $0x40] sm:$0xff]
      %v533 = vld [vmem:[#allocation2 + $0x48] sm:$0xff]
      %v534 = vld [vmem:[#allocation2 + $0x50] sm:$0xff]
      %v535 = vld [vmem:[#allocation2 + $0x58] sm:$0xff]
      %v536 = vld [vmem:[#allocation2 + $0x60] sm:$0xff]
      %v537 = vld [vmem:[#allocation2 + $0x68] sm:$0xff]
      %v538 = vld [vmem:[#allocation2 + $0x70] sm:$0xff]
      %v539 = vld [vmem:[#allocation2 + $0x78] sm:$0xff]
      %v540 = vld [vmem:[#allocation2 + $0x80] sm:$0xff]
      %v541 = vld [vmem:[#allocation2 + $0x88] sm:$0xff]
      %v542 = vld [vmem:[#allocation2 + $0x90] sm:$0xff]
      %v543 = vld [vmem:[#allocation2 + $0x98] sm:$0xff]
      %v544 = vld [vmem:[#allocation2 + $0xa0] sm:$0xff]
      %v545 = vld [vmem:[#allocation2 + $0xa8] sm:$0xff]
      %v546 = vld [vmem:[#allocation2 + $0xb0] sm:$0xff]
      %v547 = vld [vmem:[#allocation2 + $0xb8] sm:$0xff]
      %v548 = vld [vmem:[#allocation2 + $0xc0] sm:$0xff]
      %v549 = vld [vmem:[#allocation2 + $0xc8] sm:$0xff]
      %v550 = vld [vmem:[#allocation2 + $0xd0] sm:$0xff]
      %v551 = vld [vmem:[#allocation2 + $0xd8] sm:$0xff]
      %v552 = vld [vmem:[#allocation2 + $0xe0] sm:$0xff]
      %v553 = vld [vmem:[#allocation2 + $0xe8] sm:$0xff]
      %v554 = vld [vmem:[#allocation2 + $0xf0] sm:$0xff]
      %v555 = vld [vmem:[#allocation2 + $0xf8] sm:$0xff]
      %v556 = vld [vmem:[#allocation2 + $0x100] sm:$0xff]
      %v557 = vld [vmem:[#allocation2 + $0x108] sm:$0xff]
      %v558 = vld [vmem:[#allocation2 + $0x110] sm:$0xff]
      %v559 = vld [vmem:[#allocation2 + $0x118] sm:$0x3f]
      %v560 = vpack.c.bf16 %v525, %v524
      %v561 = vpack.c.bf16 %v527, %v526
      %v562 = vpack.c.bf16 %v529, %v528
      %v563 = vpack.c.bf16 %v531, %v530
      %v564 = vpack.c.bf16 %v533, %v532
      %v565 = vpack.c.bf16 %v535, %v534
      %v566 = vpack.c.bf16 %v537, %v536
      %v567 = vpack.c.bf16 %v539, %v538
      %v568 = vpack.c.bf16 %v541, %v540
      %v569 = vpack.c.bf16 %v543, %v542
      %v570 = vpack.c.bf16 %v545, %v544
      %v571 = vpack.c.bf16 %v547, %v546
      %v572 = vpack.c.bf16 %v549, %v548
      %v573 = vpack.c.bf16 %v551, %v550
      %v574 = vpack.c.bf16 %v553, %v552
      %v575 = vpack.c.bf16 %v555, %v554
      %v576 = vpack.c.bf16 %v557, %v556
      %v577 = vpack.c.bf16 %v559, %v558
      %v578 = vld [vmem:[%s2] sm:$0x3]
      %v579 = vld [vmem:[#allocation2 + $0x1] sm:$0xff]
      %v580 = vld [vmem:[#allocation2 + $0x9] sm:$0xff]
      %v581 = vld [vmem:[#allocation2 + $0x11] sm:$0xff]
      %v582 = vld [vmem:[#allocation2 + $0x19] sm:$0xff]
      %v583 = vld [vmem:[#allocation2 + $0x21] sm:$0xff]
      %v584 = vld [vmem:[#allocation2 + $0x29] sm:$0xff]
      %v585 = vld [vmem:[#allocation2 + $0x31] sm:$0xff]
      %v586 = vld [vmem:[#allocation2 + $0x39] sm:$0xff]
      %v587 = vld [vmem:[#allocation2 + $0x41] sm:$0xff]
      %v588 = vld [vmem:[#allocation2 + $0x49] sm:$0xff]
      %v589 = vld [vmem:[#allocation2 + $0x51] sm:$0xff]
      %v590 = vld [vmem:[#allocation2 + $0x59] sm:$0xff]
      %v591 = vld [vmem:[#allocation2 + $0x61] sm:$0xff]
      %v592 = vld [vmem:[#allocation2 + $0x69] sm:$0xff]
      %v593 = vld [vmem:[#allocation2 + $0x71] sm:$0xff]
      %v594 = vld [vmem:[#allocation2 + $0x79] sm:$0xff]
      %v595 = vld [vmem:[#allocation2 + $0x81] sm:$0xff]
      %v596 = vld [vmem:[#allocation2 + $0x89] sm:$0xff]
      %v597 = vld [vmem:[#allocation2 + $0x91] sm:$0xff]
      %v598 = vld [vmem:[#allocation2 + $0x99] sm:$0xff]
      %v599 = vld [vmem:[#allocation2 + $0xa1] sm:$0xff]
      %v600 = vld [vmem:[#allocation2 + $0xa9] sm:$0xff]
      %v601 = vld [vmem:[#allocation2 + $0xb1] sm:$0xff]
      %v602 = vld [vmem:[#allocation2 + $0xb9] sm:$0xff]
      %v603 = vld [vmem:[#allocation2 + $0xc1] sm:$0xff]
      %v604 = vld [vmem:[#allocation2 + $0xc9] sm:$0xff]
      %v605 = vld [vmem:[#allocation2 + $0xd1] sm:$0xff]
      %v606 = vld [vmem:[#allocation2 + $0xd9] sm:$0xff]
      %v607 = vld [vmem:[#allocation2 + $0xe1] sm:$0xff]
      %v608 = vld [vmem:[#allocation2 + $0xe9] sm:$0xff]
      %v609 = vld [vmem:[#allocation2 + $0xf1] sm:$0xff]
      %v610 = vld [vmem:[#allocation2 + $0xf9] sm:$0xff]
      %v611 = vld [vmem:[#allocation2 + $0x101] sm:$0xff]
      %v612 = vld [vmem:[#allocation2 + $0x109] sm:$0xff]
      %v613 = vld [vmem:[#allocation2 + $0x111] sm:$0xff]
      %v614 = vld [vmem:[#allocation2 + $0x119] sm:$0x3f]
      %v615 = vpack.c.bf16 %v580, %v579
      %v616 = vpack.c.bf16 %v582, %v581
      %v617 = vpack.c.bf16 %v584, %v583
      %v618 = vpack.c.bf16 %v586, %v585
      %v619 = vpack.c.bf16 %v588, %v587
      %v620 = vpack.c.bf16 %v590, %v589
      %v621 = vpack.c.bf16 %v592, %v591
      %v622 = vpack.c.bf16 %v594, %v593
      %v623 = vpack.c.bf16 %v596, %v595
      %v624 = vpack.c.bf16 %v598, %v597
      %v625 = vpack.c.bf16 %v600, %v599
      %v626 = vpack.c.bf16 %v602, %v601
      %v627 = vpack.c.bf16 %v604, %v603
      %v628 = vpack.c.bf16 %v606, %v605
      %v629 = vpack.c.bf16 %v608, %v607
      %v630 = vpack.c.bf16 %v610, %v609
      %v631 = vpack.c.bf16 %v612, %v611
      %v632 = vpack.c.bf16 %v614, %v613
      %s633 = scalar_lea.vmem %s2, 2
      %v634 = vld [vmem:[%s633] sm:$0x3]
      %v636 = vsel %vm445, %v615, 0
      %v639 = vsel %vm445, %v616, 0
      %v642 = vsel %vm445, %v617, 0
      %v645 = vsel %vm445, %v618, 0
      %v648 = vsel %vm445, %v619, 0
      %v651 = vsel %vm445, %v620, 0
      %v654 = vsel %vm445, %v621, 0
      %v657 = vsel %vm445, %v622, 0
      %v660 = vsel %vm445, %v623, 0
      %v663 = vsel %vm445, %v624, 0
      %v666 = vsel %vm445, %v625, 0
      %v669 = vsel %vm445, %v626, 0
      %v672 = vsel %vm445, %v627, 0
      %v675 = vsel %vm445, %v628, 0
      %v678 = vsel %vm445, %v629, 0
      %v681 = vsel %vm445, %v630, 0
      %v684 = vsel %vm445, %v631, 0
      %v687 = vsel %vm445, %v632, 0
      %vm689 = vcmask 1041408
      %v691 = vsel %vm689, %v634, 0
      %693 = vmatprep.subr.bf16.mxu0 0
      %694 = vmatpush1.bf16.msra.mxu0 %v691
      %695 = vmatprep.subr.bf16.mxu0 0
      %696 = vmatpush1.bf16.msra.mxu0 0
      %697 = vmatprep.subr.bf16.mxu0 0
      %698 = vmatpush1.bf16.msra.mxu0 0
      %699 = vmatprep.subr.bf16.mxu0 0
      %700 = vmatpush1.bf16.msra.mxu0 0
      %701 = vmatprep.subr.bf16.mxu0 0
      %702 = vmatpush1.bf16.msra.mxu0 0
      %703 = vmatprep.subr.bf16.mxu0 0
      %704 = vmatpush1.bf16.msra.mxu0 0
      %705 = vmatprep.subr.bf16.mxu0 0
      %706 = vmatpush1.bf16.msra.mxu0 0
      %707 = vmatprep.subr.bf16.mxu0 0
      %708 = vmatpush1.bf16.msra.mxu0 0
      %709 = vmatprep.subr.bf16.mxu0 0
      %710 = vmatpush1.bf16.msra.mxu0 0
      %711 = vmatprep.subr.bf16.mxu0 0
      %712 = vmatpush1.bf16.msra.mxu0 0
      %713 = vmatprep.subr.bf16.mxu0 0
      %714 = vmatpush1.bf16.msra.mxu0 0
      %715 = vmatprep.subr.bf16.mxu0 0
      %716 = vmatpush1.bf16.msra.mxu0 0
      %717 = vmatprep.subr.bf16.mxu0 0
      %718 = vmatpush1.bf16.msra.mxu0 0
      %719 = vmatprep.subr.bf16.mxu0 0
      %720 = vmatpush1.bf16.msra.mxu0 0
      %721 = vmatprep.subr.bf16.mxu0 0
      %722 = vmatpush1.bf16.msra.mxu0 0
      %723 = vmatprep.subr.bf16.mxu0 0
      %724 = vmatpush1.bf16.msra.mxu0 0
      %725 = vmatprep.mubr.bf16.mxu0 0
      %726 = vmatmul.mubr.bf16.gmra.mrb[0].mxu0 %v636
      %v727 = vpop.f32.mrb[0].mxu0
      %v728 = vadd.f32 0.0, %v727
      %v729 = vpop.f32.mrb[0].mxu0
      %v730 = vpop.f32.mrb[0].mxu0
      %v731 = vadd.f32 0.0, %v730
      %v732 = vpop.f32.mrb[0].mxu0
      %733 = vmatprep.mubr.bf16.mxu0 0
      %734 = vmatmul.mubr.bf16.gmra.mrb[0].mxu0 %v639
      %v735 = vpop.f32.mrb[0].mxu0
      %v736 = vadd.f32 0.0, %v735
      %v737 = vpop.f32.mrb[0].mxu0
      %v738 = vpop.f32.mrb[0].mxu0
      %v739 = vadd.f32 0.0, %v738
      %v740 = vpop.f32.mrb[0].mxu0
      %741 = vmatprep.mubr.bf16.mxu0 0
      %742 = vmatmul.mubr.bf16.gmra.mrb[0].mxu0 %v642
      %v743 = vpop.f32.mrb[0].mxu0
      %v744 = vadd.f32 0.0, %v743
      %v745 = vpop.f32.mrb[0].mxu0
      %v746 = vpop.f32.mrb[0].mxu0
      %v747 = vadd.f32 0.0, %v746
      %v748 = vpop.f32.mrb[0].mxu0
      %749 = vmatprep.mubr.bf16.mxu0 0
      %750 = vmatmul.mubr.bf16.gmra.mrb[0].mxu0 %v645
      %v751 = vpop.f32.mrb[0].mxu0
      %v752 = vadd.f32 0.0, %v751
      %v753 = vpop.f32.mrb[0].mxu0
      %v754 = vpop.f32.mrb[0].mxu0
      %v755 = vadd.f32 0.0, %v754
      %v756 = vpop.f32.mrb[0].mxu0
      %757 = vmatprep.mubr.bf16.mxu0 0
      %758 = vmatmul.mubr.bf16.gmra.mrb[0].mxu0 %v648
      %v759 = vpop.f32.mrb[0].mxu0
      %v760 = vadd.f32 0.0, %v759
      %v761 = vpop.f32.mrb[0].mxu0
      %v762 = vpop.f32.mrb[0].mxu0
      %v763 = vadd.f32 0.0, %v762
      %v764 = vpop.f32.mrb[0].mxu0
      %765 = vmatprep.mubr.bf16.mxu0 0
      %766 = vmatmul.mubr.bf16.gmra.mrb[0].mxu0 %v651
      %v767 = vpop.f32.mrb[0].mxu0
      %v768 = vadd.f32 0.0, %v767
      %v769 = vpop.f32.mrb[0].mxu0
      %v770 = vpop.f32.mrb[0].mxu0
      %v771 = vadd.f32 0.0, %v770
      %v772 = vpop.f32.mrb[0].mxu0
      %773 = vmatprep.mubr.bf16.mxu0 0
      %774 = vmatmul.mubr.bf16.gmra.mrb[0].mxu0 %v654
      %v775 = vpop.f32.mrb[0].mxu0
      %v776 = vadd.f32 0.0, %v775
      %v777 = vpop.f32.mrb[0].mxu0
      %v778 = vpop.f32.mrb[0].mxu0
      %v779 = vadd.f32 0.0, %v778
      %v780 = vpop.f32.mrb[0].mxu0
      %781 = vmatprep.mubr.bf16.mxu0 0
      %782 = vmatmul.mubr.bf16.gmra.mrb[0].mxu0 %v657
      %v783 = vpop.f32.mrb[0].mxu0
      %v784 = vadd.f32 0.0, %v783
      %v785 = vpop.f32.mrb[0].mxu0
      %v786 = vpop.f32.mrb[0].mxu0
      %v787 = vadd.f32 0.0, %v786
      %v788 = vpop.f32.mrb[0].mxu0
      %789 = vmatprep.mubr.bf16.mxu0 0
      %790 = vmatmul.mubr.bf16.gmra.mrb[0].mxu0 %v660
      %v791 = vpop.f32.mrb[0].mxu0
      %v792 = vadd.f32 0.0, %v791
      %v793 = vpop.f32.mrb[0].mxu0
      %v794 = vpop.f32.mrb[0].mxu0
      %v795 = vadd.f32 0.0, %v794
      %v796 = vpop.f32.mrb[0].mxu0
      %797 = vmatprep.mubr.bf16.mxu0 0
      %798 = vmatmul.mubr.bf16.gmra.mrb[0].mxu0 %v663
      %v799 = vpop.f32.mrb[0].mxu0
      %v800 = vadd.f32 0.0, %v799
      %v801 = vpop.f32.mrb[0].mxu0
      %v802 = vpop.f32.mrb[0].mxu0
      %v803 = vadd.f32 0.0, %v802
      %v804 = vpop.f32.mrb[0].mxu0
      %805 = vmatprep.mubr.bf16.mxu0 0
      %806 = vmatmul.mubr.bf16.gmra.mrb[0].mxu0 %v666
      %v807 = vpop.f32.mrb[0].mxu0
      %v808 = vadd.f32 0.0, %v807
      %v809 = vpop.f32.mrb[0].mxu0
      %v810 = vpop.f32.mrb[0].mxu0
      %v811 = vadd.f32 0.0, %v810
      %v812 = vpop.f32.mrb[0].mxu0
      %813 = vmatprep.mubr.bf16.mxu0 0
      %814 = vmatmul.mubr.bf16.gmra.mrb[0].mxu0 %v669
      %v815 = vpop.f32.mrb[0].mxu0
      %v816 = vadd.f32 0.0, %v815
      %v817 = vpop.f32.mrb[0].mxu0
      %v818 = vpop.f32.mrb[0].mxu0
      %v819 = vadd.f32 0.0, %v818
      %v820 = vpop.f32.mrb[0].mxu0
      %821 = vmatprep.mubr.bf16.mxu0 0
      %822 = vmatmul.mubr.bf16.gmra.mrb[0].mxu0 %v672
      %v823 = vpop.f32.mrb[0].mxu0
      %v824 = vadd.f32 0.0, %v823
      %v825 = vpop.f32.mrb[0].mxu0
      %v826 = vpop.f32.mrb[0].mxu0
      %v827 = vadd.f32 0.0, %v826
      %v828 = vpop.f32.mrb[0].mxu0
      %829 = vmatprep.mubr.bf16.mxu0 0
      %830 = vmatmul.mubr.bf16.gmra.mrb[0].mxu0 %v675
      %v831 = vpop.f32.mrb[0].mxu0
      %v832 = vadd.f32 0.0, %v831
      %v833 = vpop.f32.mrb[0].mxu0
      %v834 = vpop.f32.mrb[0].mxu0
      %v835 = vadd.f32 0.0, %v834
      %v836 = vpop.f32.mrb[0].mxu0
      %837 = vmatprep.mubr.bf16.mxu0 0
      %838 = vmatmul.mubr.bf16.gmra.mrb[0].mxu0 %v678
      %v839 = vpop.f32.mrb[0].mxu0
      %v840 = vadd.f32 0.0, %v839
      %v841 = vpop.f32.mrb[0].mxu0
      %v842 = vpop.f32.mrb[0].mxu0
      %v843 = vadd.f32 0.0, %v842
      %v844 = vpop.f32.mrb[0].mxu0
      %845 = vmatprep.mubr.bf16.mxu0 0
      %846 = vmatmul.mubr.bf16.gmra.mrb[0].mxu0 %v681
      %v847 = vpop.f32.mrb[0].mxu0
      %v848 = vadd.f32 0.0, %v847
      %v849 = vpop.f32.mrb[0].mxu0
      %v850 = vpop.f32.mrb[0].mxu0
      %v851 = vadd.f32 0.0, %v850
      %v852 = vpop.f32.mrb[0].mxu0
      %853 = vmatprep.mubr.bf16.mxu0 0
      %854 = vmatmul.mubr.bf16.gmra.mrb[0].mxu0 %v684
      %v855 = vpop.f32.mrb[0].mxu0
      %v856 = vadd.f32 0.0, %v855
      %v857 = vpop.f32.mrb[0].mxu0
      %v858 = vpop.f32.mrb[0].mxu0
      %v859 = vadd.f32 0.0, %v858
      %v860 = vpop.f32.mrb[0].mxu0
      %861 = vmatprep.mubr.bf16.mxu0 0
      %862 = vmatmul.mubr.bf16.gmra.mrb[0].mxu0 %v687
      %v863 = vpop.f32.mrb[0].mxu0
      %v864 = vadd.f32 0.0, %v863
      %v865 = vpop.f32.mrb[0].mxu0
      %v866 = vpop.f32.mrb[0].mxu0
      %v867 = vadd.f32 0.0, %v866
      %v868 = vpop.f32.mrb[0].mxu0
      %869 = vdwg.mxu0
      %v871 = vsel %vm445, %v560, 0
      %v874 = vsel %vm445, %v561, 0
      %v877 = vsel %vm445, %v562, 0
      %v880 = vsel %vm445, %v563, 0
      %v883 = vsel %vm445, %v564, 0
      %v886 = vsel %vm445, %v565, 0
      %v889 = vsel %vm445, %v566, 0
      %v892 = vsel %vm445, %v567, 0
      %v895 = vsel %vm445, %v568, 0
      %v898 = vsel %vm445, %v569, 0
      %v901 = vsel %vm445, %v570, 0
      %v904 = vsel %vm445, %v571, 0
      %v907 = vsel %vm445, %v572, 0
      %v910 = vsel %vm445, %v573, 0
      %v913 = vsel %vm445, %v574, 0
      %v916 = vsel %vm445, %v575, 0
      %v919 = vsel %vm445, %v576, 0
      %v922 = vsel %vm445, %v577, 0
      %v925 = vsel %vm689, %v578, 0
      %927 = vmatprep.subr.bf16.mxu0 0
      %928 = vmatpush1.bf16.msra.mxu0 %v925
      %929 = vmatprep.subr.bf16.mxu0 0
      %930 = vmatpush1.bf16.msra.mxu0 0
      %931 = vmatprep.subr.bf16.mxu0 0
      %932 = vmatpush1.bf16.msra.mxu0 0
      %933 = vmatprep.subr.bf16.mxu0 0
      %934 = vmatpush1.bf16.msra.mxu0 0
      %935 = vmatprep.subr.bf16.mxu0 0
      %936 = vmatpush1.bf16.msra.mxu0 0
      %937 = vmatprep.subr.bf16.mxu0 0
      %938 = vmatpush1.bf16.msra.mxu0 0
      %939 = vmatprep.subr.bf16.mxu0 0
      %940 = vmatpush1.bf16.msra.mxu0 0
      %941 = vmatprep.subr.bf16.mxu0 0
      %942 = vmatpush1.bf16.msra.mxu0 0
      %943 = vmatprep.subr.bf16.mxu0 0
      %944 = vmatpush1.bf16.msra.mxu0 0
      %945 = vmatprep.subr.bf16.mxu0 0
      %946 = vmatpush1.bf16.msra.mxu0 0
      %947 = vmatprep.subr.bf16.mxu0 0
      %948 = vmatpush1.bf16.msra.mxu0 0
      %949 = vmatprep.subr.bf16.mxu0 0
      %950 = vmatpush1.bf16.msra.mxu0 0
      %951 = vmatprep.subr.bf16.mxu0 0
      %952 = vmatpush1.bf16.msra.mxu0 0
      %953 = vmatprep.subr.bf16.mxu0 0
      %954 = vmatpush1.bf16.msra.mxu0 0
      %955 = vmatprep.subr.bf16.mxu0 0
      %956 = vmatpush1.bf16.msra.mxu0 0
      %957 = vmatprep.subr.bf16.mxu0 0
      %958 = vmatpush1.bf16.msra.mxu0 0
      %959 = vmatprep.mubr.bf16.mxu0 0
      %960 = vmatmul.mubr.bf16.gmra.mrb[0].mxu0 %v871
      %v961 = vpop.f32.mrb[0].mxu0
      %v962 = vadd.f32 %v728, %v961
      %v963 = vpop.f32.mrb[0].mxu0
      %v964 = vpop.f32.mrb[0].mxu0
      %v965 = vadd.f32 %v731, %v964
      %v966 = vpop.f32.mrb[0].mxu0
      %967 = vmatprep.mubr.bf16.mxu0 0
      %968 = vmatmul.mubr.bf16.gmra.mrb[0].mxu0 %v874
      %v969 = vpop.f32.mrb[0].mxu0
      %v970 = vadd.f32 %v736, %v969
      %v971 = vpop.f32.mrb[0].mxu0
      %v972 = vpop.f32.mrb[0].mxu0
      %v973 = vadd.f32 %v739, %v972
      %v974 = vpop.f32.mrb[0].mxu0
      %975 = vmatprep.mubr.bf16.mxu0 0
      %976 = vmatmul.mubr.bf16.gmra.mrb[0].mxu0 %v877
      %v977 = vpop.f32.mrb[0].mxu0
      %v978 = vadd.f32 %v744, %v977
      %v979 = vpop.f32.mrb[0].mxu0
      %v980 = vpop.f32.mrb[0].mxu0
      %v981 = vadd.f32 %v747, %v980
      %v982 = vpop.f32.mrb[0].mxu0
      %983 = vmatprep.mubr.bf16.mxu0 0
      %984 = vmatmul.mubr.bf16.gmra.mrb[0].mxu0 %v880
      %v985 = vpop.f32.mrb[0].mxu0
      %v986 = vadd.f32 %v752, %v985
      %v987 = vpop.f32.mrb[0].mxu0
      %v988 = vpop.f32.mrb[0].mxu0
      %v989 = vadd.f32 %v755, %v988
      %v990 = vpop.f32.mrb[0].mxu0
      %991 = vmatprep.mubr.bf16.mxu0 0
      %992 = vmatmul.mubr.bf16.gmra.mrb[0].mxu0 %v883
      %v993 = vpop.f32.mrb[0].mxu0
      %v994 = vadd.f32 %v760, %v993
      %v995 = vpop.f32.mrb[0].mxu0
      %v996 = vpop.f32.mrb[0].mxu0
      %v997 = vadd.f32 %v763, %v996
      %v998 = vpop.f32.mrb[0].mxu0
      %999 = vmatprep.mubr.bf16.mxu0 0
      %1000 = vmatmul.mubr.bf16.gmra.mrb[0].mxu0 %v886
      %v1001 = vpop.f32.mrb[0].mxu0
      %v1002 = vadd.f32 %v768, %v1001
      %v1003 = vpop.f32.mrb[0].mxu0
      %v1004 = vpop.f32.mrb[0].mxu0
      %v1005 = vadd.f32 %v771, %v1004
      %v1006 = vpop.f32.mrb[0].mxu0
      %1007 = vmatprep.mubr.bf16.mxu0 0
      %1008 = vmatmul.mubr.bf16.gmra.mrb[0].mxu0 %v889
      %v1009 = vpop.f32.mrb[0].mxu0
      %v1010 = vadd.f32 %v776, %v1009
      %v1011 = vpop.f32.mrb[0].mxu0
      %v1012 = vpop.f32.mrb[0].mxu0
      %v1013 = vadd.f32 %v779, %v1012
      %v1014 = vpop.f32.mrb[0].mxu0
      %1015 = vmatprep.mubr.bf16.mxu0 0
      %1016 = vmatmul.mubr.bf16.gmra.mrb[0].mxu0 %v892
      %v1017 = vpop.f32.mrb[0].mxu0
      %v1018 = vadd.f32 %v784, %v1017
      %v1019 = vpop.f32.mrb[0].mxu0
      %v1020 = vpop.f32.mrb[0].mxu0
      %v1021 = vadd.f32 %v787, %v1020
      %v1022 = vpop.f32.mrb[0].mxu0
      %1023 = vmatprep.mubr.bf16.mxu0 0
      %1024 = vmatmul.mubr.bf16.gmra.mrb[0].mxu0 %v895
      %v1025 = vpop.f32.mrb[0].mxu0
      %v1026 = vadd.f32 %v792, %v1025
      %v1027 = vpop.f32.mrb[0].mxu0
      %v1028 = vpop.f32.mrb[0].mxu0
      %v1029 = vadd.f32 %v795, %v1028
      %v1030 = vpop.f32.mrb[0].mxu0
      %1031 = vmatprep.mubr.bf16.mxu0 0
      %1032 = vmatmul.mubr.bf16.gmra.mrb[0].mxu0 %v898
      %v1033 = vpop.f32.mrb[0].mxu0
      %v1034 = vadd.f32 %v800, %v1033
      %v1035 = vpop.f32.mrb[0].mxu0
      %v1036 = vpop.f32.mrb[0].mxu0
      %v1037 = vadd.f32 %v803, %v1036
      %v1038 = vpop.f32.mrb[0].mxu0
      %1039 = vmatprep.mubr.bf16.mxu0 0
      %1040 = vmatmul.mubr.bf16.gmra.mrb[0].mxu0 %v901
      %v1041 = vpop.f32.mrb[0].mxu0
      %v1042 = vadd.f32 %v808, %v1041
      %v1043 = vpop.f32.mrb[0].mxu0
      %v1044 = vpop.f32.mrb[0].mxu0
      %v1045 = vadd.f32 %v811, %v1044
      %v1046 = vpop.f32.mrb[0].mxu0
      %1047 = vmatprep.mubr.bf16.mxu0 0
      %1048 = vmatmul.mubr.bf16.gmra.mrb[0].mxu0 %v904
      %v1049 = vpop.f32.mrb[0].mxu0
      %v1050 = vadd.f32 %v816, %v1049
      %v1051 = vpop.f32.mrb[0].mxu0
      %v1052 = vpop.f32.mrb[0].mxu0
      %v1053 = vadd.f32 %v819, %v1052
      %v1054 = vpop.f32.mrb[0].mxu0
      %1055 = vmatprep.mubr.bf16.mxu0 0
      %1056 = vmatmul.mubr.bf16.gmra.mrb[0].mxu0 %v907
      %v1057 = vpop.f32.mrb[0].mxu0
      %v1058 = vadd.f32 %v824, %v1057
      %v1059 = vpop.f32.mrb[0].mxu0
      %v1060 = vpop.f32.mrb[0].mxu0
      %v1061 = vadd.f32 %v827, %v1060
      %v1062 = vpop.f32.mrb[0].mxu0
      %1063 = vmatprep.mubr.bf16.mxu0 0
      %1064 = vmatmul.mubr.bf16.gmra.mrb[0].mxu0 %v910
      %v1065 = vpop.f32.mrb[0].mxu0
      %v1066 = vadd.f32 %v832, %v1065
      %v1067 = vpop.f32.mrb[0].mxu0
      %v1068 = vpop.f32.mrb[0].mxu0
      %v1069 = vadd.f32 %v835, %v1068
      %v1070 = vpop.f32.mrb[0].mxu0
      %1071 = vmatprep.mubr.bf16.mxu0 0
      %1072 = vmatmul.mubr.bf16.gmra.mrb[0].mxu0 %v913
      %v1073 = vpop.f32.mrb[0].mxu0
      %v1074 = vadd.f32 %v840, %v1073
      %v1075 = vpop.f32.mrb[0].mxu0
      %v1076 = vpop.f32.mrb[0].mxu0
      %v1077 = vadd.f32 %v843, %v1076
      %v1078 = vpop.f32.mrb[0].mxu0
      %1079 = vmatprep.mubr.bf16.mxu0 0
      %1080 = vmatmul.mubr.bf16.gmra.mrb[0].mxu0 %v916
      %v1081 = vpop.f32.mrb[0].mxu0
      %v1082 = vadd.f32 %v848, %v1081
      %v1083 = vpop.f32.mrb[0].mxu0
      %v1084 = vpop.f32.mrb[0].mxu0
      %v1085 = vadd.f32 %v851, %v1084
      %v1086 = vpop.f32.mrb[0].mxu0
      %1087 = vmatprep.mubr.bf16.mxu0 0
      %1088 = vmatmul.mubr.bf16.gmra.mrb[0].mxu0 %v919
      %v1089 = vpop.f32.mrb[0].mxu0
      %v1090 = vadd.f32 %v856, %v1089
      %v1091 = vpop.f32.mrb[0].mxu0
      %v1092 = vpop.f32.mrb[0].mxu0
      %v1093 = vadd.f32 %v859, %v1092
      %v1094 = vpop.f32.mrb[0].mxu0
      %1095 = vmatprep.mubr.bf16.mxu0 0
      %1096 = vmatmul.mubr.bf16.gmra.mrb[0].mxu0 %v922
      %v1097 = vpop.f32.mrb[0].mxu0
      %v1098 = vadd.f32 %v864, %v1097
      %v1099 = vpop.f32.mrb[0].mxu0
      %v1100 = vpop.f32.mrb[0].mxu0
      %v1101 = vadd.f32 %v867, %v1100
      %v1102 = vpop.f32.mrb[0].mxu0
      %1103 = vdwg.mxu0
      %v1104 = vld [vmem:[#allocation2 + $0x2] sm:$0xff]
      %v1105 = vld [vmem:[#allocation2 + $0xa] sm:$0xff]
      %v1106 = vld [vmem:[#allocation2 + $0x12] sm:$0xff]
      %v1107 = vld [vmem:[#allocation2 + $0x1a] sm:$0xff]
      %v1108 = vld [vmem:[#allocation2 + $0x22] sm:$0xff]
      %v1109 = vld [vmem:[#allocation2 + $0x2a] sm:$0xff]
      %v1110 = vld [vmem:[#allocation2 + $0x32] sm:$0xff]
      %v1111 = vld [vmem:[#allocation2 + $0x3a] sm:$0xff]
      %v1112 = vld [vmem:[#allocation2 + $0x42] sm:$0xff]
      %v1113 = vld [vmem:[#allocation2 + $0x4a] sm:$0xff]
      %v1114 = vld [vmem:[#allocation2 + $0x52] sm:$0xff]
      %v1115 = vld [vmem:[#allocation2 + $0x5a] sm:$0xff]
      %v1116 = vld [vmem:[#allocation2 + $0x62] sm:$0xff]
      %v1117 = vld [vmem:[#allocation2 + $0x6a] sm:$0xff]
      %v1118 = vld [vmem:[#allocation2 + $0x72] sm:$0xff]
      %v1119 = vld [vmem:[#allocation2 + $0x7a] sm:$0xff]
      %v1120 = vld [vmem:[#allocation2 + $0x82] sm:$0xff]
      %v1121 = vld [vmem:[#allocation2 + $0x8a] sm:$0xff]
      %v1122 = vld [vmem:[#allocation2 + $0x92] sm:$0xff]
      %v1123 = vld [vmem:[#allocation2 + $0x9a] sm:$0xff]
      %v1124 = vld [vmem:[#allocation2 + $0xa2] sm:$0xff]
      %v1125 = vld [vmem:[#allocation2 + $0xaa] sm:$0xff]
      %v1126 = vld [vmem:[#allocation2 + $0xb2] sm:$0xff]
      %v1127 = vld [vmem:[#allocation2 + $0xba] sm:$0xff]
      %v1128 = vld [vmem:[#allocation2 + $0xc2] sm:$0xff]
      %v1129 = vld [vmem:[#allocation2 + $0xca] sm:$0xff]
      %v1130 = vld [vmem:[#allocation2 + $0xd2] sm:$0xff]
      %v1131 = vld [vmem:[#allocation2 + $0xda] sm:$0xff]
      %v1132 = vld [vmem:[#allocation2 + $0xe2] sm:$0xff]
      %v1133 = vld [vmem:[#allocation2 + $0xea] sm:$0xff]
      %v1134 = vld [vmem:[#allocation2 + $0xf2] sm:$0xff]
      %v1135 = vld [vmem:[#allocation2 + $0xfa] sm:$0xff]
      %v1136 = vld [vmem:[#allocation2 + $0x102] sm:$0xff]
      %v1137 = vld [vmem:[#allocation2 + $0x10a] sm:$0xff]
      %v1138 = vld [vmem:[#allocation2 + $0x112] sm:$0xff]
      %v1139 = vld [vmem:[#allocation2 + $0x11a] sm:$0x3f]
      %v1140 = vpack.c.bf16 %v1105, %v1104
      %v1141 = vpack.c.bf16 %v1107, %v1106
      %v1142 = vpack.c.bf16 %v1109, %v1108
      %v1143 = vpack.c.bf16 %v1111, %v1110
      %v1144 = vpack.c.bf16 %v1113, %v1112
      %v1145 = vpack.c.bf16 %v1115, %v1114
      %v1146 = vpack.c.bf16 %v1117, %v1116
      %v1147 = vpack.c.bf16 %v1119, %v1118
      %v1148 = vpack.c.bf16 %v1121, %v1120
      %v1149 = vpack.c.bf16 %v1123, %v1122
      %v1150 = vpack.c.bf16 %v1125, %v1124
      %v1151 = vpack.c.bf16 %v1127, %v1126
      %v1152 = vpack.c.bf16 %v1129, %v1128
      %v1153 = vpack.c.bf16 %v1131, %v1130
      %v1154 = vpack.c.bf16 %v1133, %v1132
      %v1155 = vpack.c.bf16 %v1135, %v1134
      %v1156 = vpack.c.bf16 %v1137, %v1136
      %v1157 = vpack.c.bf16 %v1139, %v1138
      %s1158 = scalar_lea.vmem %s2, 4
      %v1159 = vld [vmem:[%s1158] sm:$0x3]
      %v1161 = vsel %vm445, %v1140, 0
      %v1164 = vsel %vm445, %v1141, 0
      %v1167 = vsel %vm445, %v1142, 0
      %v1170 = vsel %vm445, %v1143, 0
      %v1173 = vsel %vm445, %v1144, 0
      %v1176 = vsel %vm445, %v1145, 0
      %v1179 = vsel %vm445, %v1146, 0
      %v1182 = vsel %vm445, %v1147, 0
      %v1185 = vsel %vm445, %v1148, 0
      %v1188 = vsel %vm445, %v1149, 0
      %v1191 = vsel %vm445, %v1150, 0
      %v1194 = vsel %vm445, %v1151, 0
      %v1197 = vsel %vm445, %v1152, 0
      %v1200 = vsel %vm445, %v1153, 0
      %v1203 = vsel %vm445, %v1154, 0
      %v1206 = vsel %vm445, %v1155, 0
      %v1209 = vsel %vm445, %v1156, 0
      %v1212 = vsel %vm445, %v1157, 0
      %v1215 = vsel %vm689, %v1159, 0
      %1217 = vmatprep.subr.bf16.mxu0 0
      %1218 = vmatpush1.bf16.msra.mxu0 %v1215
      %1219 = vmatprep.subr.bf16.mxu0 0
      %1220 = vmatpush1.bf16.msra.mxu0 0
      %1221 = vmatprep.subr.bf16.mxu0 0
      %1222 = vmatpush1.bf16.msra.mxu0 0
      %1223 = vmatprep.subr.bf16.mxu0 0
      %1224 = vmatpush1.bf16.msra.mxu0 0
      %1225 = vmatprep.subr.bf16.mxu0 0
      %1226 = vmatpush1.bf16.msra.mxu0 0
      %1227 = vmatprep.subr.bf16.mxu0 0
      %1228 = vmatpush1.bf16.msra.mxu0 0
      %1229 = vmatprep.subr.bf16.mxu0 0
      %1230 = vmatpush1.bf16.msra.mxu0 0
      %1231 = vmatprep.subr.bf16.mxu0 0
      %1232 = vmatpush1.bf16.msra.mxu0 0
      %1233 = vmatprep.subr.bf16.mxu0 0
      %1234 = vmatpush1.bf16.msra.mxu0 0
      %1235 = vmatprep.subr.bf16.mxu0 0
      %1236 = vmatpush1.bf16.msra.mxu0 0
      %1237 = vmatprep.subr.bf16.mxu0 0
      %1238 = vmatpush1.bf16.msra.mxu0 0
      %1239 = vmatprep.subr.bf16.mxu0 0
      %1240 = vmatpush1.bf16.msra.mxu0 0
      %1241 = vmatprep.subr.bf16.mxu0 0
      %1242 = vmatpush1.bf16.msra.mxu0 0
      %1243 = vmatprep.subr.bf16.mxu0 0
      %1244 = vmatpush1.bf16.msra.mxu0 0
      %1245 = vmatprep.subr.bf16.mxu0 0
      %1246 = vmatpush1.bf16.msra.mxu0 0
      %1247 = vmatprep.subr.bf16.mxu0 0
      %1248 = vmatpush1.bf16.msra.mxu0 0
      %1249 = vmatprep.mubr.bf16.mxu0 0
      %1250 = vmatmul.mubr.bf16.gmra.mrb[0].mxu0 %v1161
      %v1251 = vpop.f32.mrb[0].mxu0
      %v1252 = vadd.f32 0.0, %v1251
      %v1253 = vpop.f32.mrb[0].mxu0
      %v1254 = vpop.f32.mrb[0].mxu0
      %v1255 = vadd.f32 0.0, %v1254
      %v1256 = vpop.f32.mrb[0].mxu0
      %1257 = vmatprep.mubr.bf16.mxu0 0
      %1258 = vmatmul.mubr.bf16.gmra.mrb[0].mxu0 %v1164
      %v1259 = vpop.f32.mrb[0].mxu0
      %v1260 = vadd.f32 0.0, %v1259
      %v1261 = vpop.f32.mrb[0].mxu0
      %v1262 = vpop.f32.mrb[0].mxu0
      %v1263 = vadd.f32 0.0, %v1262
      %v1264 = vpop.f32.mrb[0].mxu0
      %1265 = vmatprep.mubr.bf16.mxu0 0
      %1266 = vmatmul.mubr.bf16.gmra.mrb[0].mxu0 %v1167
      %v1267 = vpop.f32.mrb[0].mxu0
      %v1268 = vadd.f32 0.0, %v1267
      %v1269 = vpop.f32.mrb[0].mxu0
      %v1270 = vpop.f32.mrb[0].mxu0
      %v1271 = vadd.f32 0.0, %v1270
      %v1272 = vpop.f32.mrb[0].mxu0
      %1273 = vmatprep.mubr.bf16.mxu0 0
      %1274 = vmatmul.mubr.bf16.gmra.mrb[0].mxu0 %v1170
      %v1275 = vpop.f32.mrb[0].mxu0
      %v1276 = vadd.f32 0.0, %v1275
      %v1277 = vpop.f32.mrb[0].mxu0
      %v1278 = vpop.f32.mrb[0].mxu0
      %v1279 = vadd.f32 0.0, %v1278
      %v1280 = vpop.f32.mrb[0].mxu0
      %1281 = vmatprep.mubr.bf16.mxu0 0
      %1282 = vmatmul.mubr.bf16.gmra.mrb[0].mxu0 %v1173
      %v1283 = vpop.f32.mrb[0].mxu0
      %v1284 = vadd.f32 0.0, %v1283
      %v1285 = vpop.f32.mrb[0].mxu0
      %v1286 = vpop.f32.mrb[0].mxu0
      %v1287 = vadd.f32 0.0, %v1286
      %v1288 = vpop.f32.mrb[0].mxu0
      %1289 = vmatprep.mubr.bf16.mxu0 0
      %1290 = vmatmul.mubr.bf16.gmra.mrb[0].mxu0 %v1176
      %v1291 = vpop.f32.mrb[0].mxu0
      %v1292 = vadd.f32 0.0, %v1291
      %v1293 = vpop.f32.mrb[0].mxu0
      %v1294 = vpop.f32.mrb[0].mxu0
      %v1295 = vadd.f32 0.0, %v1294
      %v1296 = vpop.f32.mrb[0].mxu0
      %1297 = vmatprep.mubr.bf16.mxu0 0
      %1298 = vmatmul.mubr.bf16.gmra.mrb[0].mxu0 %v1179
      %v1299 = vpop.f32.mrb[0].mxu0
      %v1300 = vadd.f32 0.0, %v1299
      %v1301 = vpop.f32.mrb[0].mxu0
      %v1302 = vpop.f32.mrb[0].mxu0
      %v1303 = vadd.f32 0.0, %v1302
      %v1304 = vpop.f32.mrb[0].mxu0
      %1305 = vmatprep.mubr.bf16.mxu0 0
      %1306 = vmatmul.mubr.bf16.gmra.mrb[0].mxu0 %v1182
      %v1307 = vpop.f32.mrb[0].mxu0
      %v1308 = vadd.f32 0.0, %v1307
      %v1309 = vpop.f32.mrb[0].mxu0
      %v1310 = vpop.f32.mrb[0].mxu0
      %v1311 = vadd.f32 0.0, %v1310
      %v1312 = vpop.f32.mrb[0].mxu0
      %1313 = vmatprep.mubr.bf16.mxu0 0
      %1314 = vmatmul.mubr.bf16.gmra.mrb[0].mxu0 %v1185
      %v1315 = vpop.f32.mrb[0].mxu0
      %v1316 = vadd.f32 0.0, %v1315
      %v1317 = vpop.f32.mrb[0].mxu0
      %v1318 = vpop.f32.mrb[0].mxu0
      %v1319 = vadd.f32 0.0, %v1318
      %v1320 = vpop.f32.mrb[0].mxu0
      %1321 = vmatprep.mubr.bf16.mxu0 0
      %1322 = vmatmul.mubr.bf16.gmra.mrb[0].mxu0 %v1188
      %v1323 = vpop.f32.mrb[0].mxu0
      %v1324 = vadd.f32 0.0, %v1323
      %v1325 = vpop.f32.mrb[0].mxu0
      %v1326 = vpop.f32.mrb[0].mxu0
      %v1327 = vadd.f32 0.0, %v1326
      %v1328 = vpop.f32.mrb[0].mxu0
      %1329 = vmatprep.mubr.bf16.mxu0 0
      %1330 = vmatmul.mubr.bf16.gmra.mrb[0].mxu0 %v1191
      %v1331 = vpop.f32.mrb[0].mxu0
      %v1332 = vadd.f32 0.0, %v1331
      %v1333 = vpop.f32.mrb[0].mxu0
      %v1334 = vpop.f32.mrb[0].mxu0
      %v1335 = vadd.f32 0.0, %v1334
      %v1336 = vpop.f32.mrb[0].mxu0
      %1337 = vmatprep.mubr.bf16.mxu0 0
      %1338 = vmatmul.mubr.bf16.gmra.mrb[0].mxu0 %v1194
      %v1339 = vpop.f32.mrb[0].mxu0
      %v1340 = vadd.f32 0.0, %v1339
      %v1341 = vpop.f32.mrb[0].mxu0
      %v1342 = vpop.f32.mrb[0].mxu0
      %v1343 = vadd.f32 0.0, %v1342
      %v1344 = vpop.f32.mrb[0].mxu0
      %1345 = vmatprep.mubr.bf16.mxu0 0
      %1346 = vmatmul.mubr.bf16.gmra.mrb[0].mxu0 %v1197
      %v1347 = vpop.f32.mrb[0].mxu0
      %v1348 = vadd.f32 0.0, %v1347
      %v1349 = vpop.f32.mrb[0].mxu0
      %v1350 = vpop.f32.mrb[0].mxu0
      %v1351 = vadd.f32 0.0, %v1350
      %v1352 = vpop.f32.mrb[0].mxu0
      %1353 = vmatprep.mubr.bf16.mxu0 0
      %1354 = vmatmul.mubr.bf16.gmra.mrb[0].mxu0 %v1200
      %v1355 = vpop.f32.mrb[0].mxu0
      %v1356 = vadd.f32 0.0, %v1355
      %v1357 = vpop.f32.mrb[0].mxu0
      %v1358 = vpop.f32.mrb[0].mxu0
      %v1359 = vadd.f32 0.0, %v1358
      %v1360 = vpop.f32.mrb[0].mxu0
      %1361 = vmatprep.mubr.bf16.mxu0 0
      %1362 = vmatmul.mubr.bf16.gmra.mrb[0].mxu0 %v1203
      %v1363 = vpop.f32.mrb[0].mxu0
      %v1364 = vadd.f32 0.0, %v1363
      %v1365 = vpop.f32.mrb[0].mxu0
      %v1366 = vpop.f32.mrb[0].mxu0
      %v1367 = vadd.f32 0.0, %v1366
      %v1368 = vpop.f32.mrb[0].mxu0
      %1369 = vmatprep.mubr.bf16.mxu0 0
      %1370 = vmatmul.mubr.bf16.gmra.mrb[0].mxu0 %v1206
      %v1371 = vpop.f32.mrb[0].mxu0
      %v1372 = vadd.f32 0.0, %v1371
      %v1373 = vpop.f32.mrb[0].mxu0
      %v1374 = vpop.f32.mrb[0].mxu0
      %v1375 = vadd.f32 0.0, %v1374
      %v1376 = vpop.f32.mrb[0].mxu0
      %1377 = vmatprep.mubr.bf16.mxu0 0
      %1378 = vmatmul.mubr.bf16.gmra.mrb[0].mxu0 %v1209
      %v1379 = vpop.f32.mrb[0].mxu0
      %v1380 = vadd.f32 0.0, %v1379
      %v1381 = vpop.f32.mrb[0].mxu0
      %v1382 = vpop.f32.mrb[0].mxu0
      %v1383 = vadd.f32 0.0, %v1382
      %v1384 = vpop.f32.mrb[0].mxu0
      %1385 = vmatprep.mubr.bf16.mxu0 0
      %1386 = vmatmul.mubr.bf16.gmra.mrb[0].mxu0 %v1212
      %v1387 = vpop.f32.mrb[0].mxu0
      %v1388 = vadd.f32 0.0, %v1387
      %v1389 = vpop.f32.mrb[0].mxu0
      %v1390 = vpop.f32.mrb[0].mxu0
      %v1391 = vadd.f32 0.0, %v1390
      %v1392 = vpop.f32.mrb[0].mxu0
      %1393 = vdwg.mxu0
      %v1394 = vadd.f32 %v962, %v1252
      %v1395 = vadd.f32 %v965, %v1255
      %v1396 = vadd.f32 %v970, %v1260
      %v1397 = vadd.f32 %v973, %v1263
      %v1398 = vadd.f32 %v978, %v1268
      %v1399 = vadd.f32 %v981, %v1271
      %v1400 = vadd.f32 %v986, %v1276
      %v1401 = vadd.f32 %v989, %v1279
      %v1402 = vadd.f32 %v994, %v1284
      %v1403 = vadd.f32 %v997, %v1287
      %v1404 = vadd.f32 %v1002, %v1292
      %v1405 = vadd.f32 %v1005, %v1295
      %v1406 = vadd.f32 %v1010, %v1300
      %v1407 = vadd.f32 %v1013, %v1303
      %v1408 = vadd.f32 %v1018, %v1308
      %v1409 = vadd.f32 %v1021, %v1311
      %v1410 = vadd.f32 %v1026, %v1316
      %v1411 = vadd.f32 %v1029, %v1319
      %v1412 = vadd.f32 %v1034, %v1324
      %v1413 = vadd.f32 %v1037, %v1327
      %v1414 = vadd.f32 %v1042, %v1332
      %v1415 = vadd.f32 %v1045, %v1335
      %v1416 = vadd.f32 %v1050, %v1340
      %v1417 = vadd.f32 %v1053, %v1343
      %v1418 = vadd.f32 %v1058, %v1348
      %v1419 = vadd.f32 %v1061, %v1351
      %v1420 = vadd.f32 %v1066, %v1356
      %v1421 = vadd.f32 %v1069, %v1359
      %v1422 = vadd.f32 %v1074, %v1364
      %v1423 = vadd.f32 %v1077, %v1367
      %v1424 = vadd.f32 %v1082, %v1372
      %v1425 = vadd.f32 %v1085, %v1375
      %v1426 = vadd.f32 %v1090, %v1380
      %v1427 = vadd.f32 %v1093, %v1383
      %v1428 = vadd.f32 %v1098, %v1388
      %v1429 = vadd.f32 %v1101, %v1391
      %v1430 = vld [vmem:[#allocation2 + $0x12] sm:$0xff]
      %v1431 = vld [vmem:[#allocation2 + $0x1a] sm:$0xff]
      %v1432 = vld [vmem:[#allocation2 + $0x22] sm:$0xff]
      %v1433 = vld [vmem:[#allocation2 + $0x2a] sm:$0xff]
      %v1434 = vld [vmem:[#allocation2 + $0x32] sm:$0xff]
      %v1435 = vld [vmem:[#allocation2 + $0x3a] sm:$0xff]
      %v1436 = vld [vmem:[#allocation2 + $0x42] sm:$0xff]
      %v1437 = vld [vmem:[#allocation2 + $0x4a] sm:$0xff]
      %v1438 = vld [vmem:[#allocation2 + $0x52] sm:$0xff]
      %v1439 = vld [vmem:[#allocation2 + $0x5a] sm:$0xff]
      %v1440 = vld [vmem:[#allocation2 + $0x62] sm:$0xff]
      %v1441 = vld [vmem:[#allocation2 + $0x6a] sm:$0xff]
      %v1442 = vld [vmem:[#allocation2 + $0x72] sm:$0xff]
      %v1443 = vld [vmem:[#allocation2 + $0x7a] sm:$0xff]
      %v1444 = vld [vmem:[#allocation2 + $0x82] sm:$0xff]
      %v1445 = vld [vmem:[#allocation2 + $0x8a] sm:$0xff]
      %v1446 = vld [vmem:[#allocation2 + $0x92] sm:$0xff]
      %v1447 = vld [vmem:[#allocation2 + $0x9a] sm:$0xff]
      %v1448 = vld [vmem:[#allocation2 + $0xa2] sm:$0xff]
      %v1449 = vld [vmem:[#allocation2 + $0xaa] sm:$0xff]
      %v1450 = vld [vmem:[#allocation2 + $0xb2] sm:$0xff]
      %v1451 = vld [vmem:[#allocation2 + $0xba] sm:$0xff]
      %v1452 = vld [vmem:[#allocation2 + $0xc2] sm:$0xff]
      %v1453 = vld [vmem:[#allocation2 + $0xca] sm:$0xff]
      %v1454 = vld [vmem:[#allocation2 + $0xd2] sm:$0xff]
      %v1455 = vld [vmem:[#allocation2 + $0xda] sm:$0xff]
      %v1456 = vld [vmem:[#allocation2 + $0xe2] sm:$0xff]
      %v1457 = vld [vmem:[#allocation2 + $0xea] sm:$0xff]
      %v1458 = vld [vmem:[#allocation2 + $0xf2] sm:$0xff]
      %v1459 = vld [vmem:[#allocation2 + $0xfa] sm:$0xff]
      %v1460 = vld [vmem:[#allocation2 + $0x102] sm:$0xff]
      %v1461 = vld [vmem:[#allocation2 + $0x10a] sm:$0xff]
      %v1462 = vld [vmem:[#allocation2 + $0x112] sm:$0xff]
      %v1463 = vld [vmem:[#allocation2 + $0x11a] sm:$0xff]
      %v1464 = vld [vmem:[#allocation2 + $0x122] sm:$0xff]
      %v1465 = vld [vmem:[#allocation2 + $0x12a] sm:$0x3f]
      %v1466 = vpack.c.bf16 %v1431, %v1430
      %v1467 = vpack.c.bf16 %v1433, %v1432
      %v1468 = vpack.c.bf16 %v1435, %v1434
      %v1469 = vpack.c.bf16 %v1437, %v1436
      %v1470 = vpack.c.bf16 %v1439, %v1438
      %v1471 = vpack.c.bf16 %v1441, %v1440
      %v1472 = vpack.c.bf16 %v1443, %v1442
      %v1473 = vpack.c.bf16 %v1445, %v1444
      %v1474 = vpack.c.bf16 %v1447, %v1446
      %v1475 = vpack.c.bf16 %v1449, %v1448
      %v1476 = vpack.c.bf16 %v1451, %v1450
      %v1477 = vpack.c.bf16 %v1453, %v1452
      %v1478 = vpack.c.bf16 %v1455, %v1454
      %v1479 = vpack.c.bf16 %v1457, %v1456
      %v1480 = vpack.c.bf16 %v1459, %v1458
      %v1481 = vpack.c.bf16 %v1461, %v1460
      %v1482 = vpack.c.bf16 %v1463, %v1462
      %v1483 = vpack.c.bf16 %v1465, %v1464
      %s1484 = scalar_lea.vmem %s2, 6
      %v1485 = vld [vmem:[%s1484] sm:$0x3]
      %v1487 = vsel %vm445, %v1466, 0
      %v1490 = vsel %vm445, %v1467, 0
      %v1493 = vsel %vm445, %v1468, 0
      %v1496 = vsel %vm445, %v1469, 0
      %v1499 = vsel %vm445, %v1470, 0
      %v1502 = vsel %vm445, %v1471, 0
      %v1505 = vsel %vm445, %v1472, 0
      %v1508 = vsel %vm445, %v1473, 0
      %v1511 = vsel %vm445, %v1474, 0
      %v1514 = vsel %vm445, %v1475, 0
      %v1517 = vsel %vm445, %v1476, 0
      %v1520 = vsel %vm445, %v1477, 0
      %v1523 = vsel %vm445, %v1478, 0
      %v1526 = vsel %vm445, %v1479, 0
      %v1529 = vsel %vm445, %v1480, 0
      %v1532 = vsel %vm445, %v1481, 0
      %v1535 = vsel %vm445, %v1482, 0
      %v1538 = vsel %vm445, %v1483, 0
      %v1541 = vsel %vm689, %v1485, 0
      %1543 = vmatprep.subr.bf16.mxu0 0
      %1544 = vmatpush1.bf16.msra.mxu0 %v1541
      %1545 = vmatprep.subr.bf16.mxu0 0
      %1546 = vmatpush1.bf16.msra.mxu0 0
      %1547 = vmatprep.subr.bf16.mxu0 0
      %1548 = vmatpush1.bf16.msra.mxu0 0
      %1549 = vmatprep.subr.bf16.mxu0 0
      %1550 = vmatpush1.bf16.msra.mxu0 0
      %1551 = vmatprep.subr.bf16.mxu0 0
      %1552 = vmatpush1.bf16.msra.mxu0 0
      %1553 = vmatprep.subr.bf16.mxu0 0
      %1554 = vmatpush1.bf16.msra.mxu0 0
      %1555 = vmatprep.subr.bf16.mxu0 0
      %1556 = vmatpush1.bf16.msra.mxu0 0
      %1557 = vmatprep.subr.bf16.mxu0 0
      %1558 = vmatpush1.bf16.msra.mxu0 0
      %1559 = vmatprep.subr.bf16.mxu0 0
      %1560 = vmatpush1.bf16.msra.mxu0 0
      %1561 = vmatprep.subr.bf16.mxu0 0
      %1562 = vmatpush1.bf16.msra.mxu0 0
      %1563 = vmatprep.subr.bf16.mxu0 0
      %1564 = vmatpush1.bf16.msra.mxu0 0
      %1565 = vmatprep.subr.bf16.mxu0 0
      %1566 = vmatpush1.bf16.msra.mxu0 0
      %1567 = vmatprep.subr.bf16.mxu0 0
      %1568 = vmatpush1.bf16.msra.mxu0 0
      %1569 = vmatprep.subr.bf16.mxu0 0
      %1570 = vmatpush1.bf16.msra.mxu0 0
      %1571 = vmatprep.subr.bf16.mxu0 0
      %1572 = vmatpush1.bf16.msra.mxu0 0
      %1573 = vmatprep.subr.bf16.mxu0 0
      %1574 = vmatpush1.bf16.msra.mxu0 0
      %1575 = vmatprep.mubr.bf16.mxu0 0
      %1576 = vmatmul.mubr.bf16.gmra.mrb[0].mxu0 %v1487
      %v1577 = vpop.f32.mrb[0].mxu0
      %v1578 = vadd.f32 0.0, %v1577
      %v1579 = vpop.f32.mrb[0].mxu0
      %v1580 = vpop.f32.mrb[0].mxu0
      %v1581 = vadd.f32 0.0, %v1580
      %v1582 = vpop.f32.mrb[0].mxu0
      %1583 = vmatprep.mubr.bf16.mxu0 0
      %1584 = vmatmul.mubr.bf16.gmra.mrb[0].mxu0 %v1490
      %v1585 = vpop.f32.mrb[0].mxu0
      %v1586 = vadd.f32 0.0, %v1585
      %v1587 = vpop.f32.mrb[0].mxu0
      %v1588 = vpop.f32.mrb[0].mxu0
      %v1589 = vadd.f32 0.0, %v1588
      %v1590 = vpop.f32.mrb[0].mxu0
      %1591 = vmatprep.mubr.bf16.mxu0 0
      %1592 = vmatmul.mubr.bf16.gmra.mrb[0].mxu0 %v1493
      %v1593 = vpop.f32.mrb[0].mxu0
      %v1594 = vadd.f32 0.0, %v1593
      %v1595 = vpop.f32.mrb[0].mxu0
      %v1596 = vpop.f32.mrb[0].mxu0
      %v1597 = vadd.f32 0.0, %v1596
      %v1598 = vpop.f32.mrb[0].mxu0
      %1599 = vmatprep.mubr.bf16.mxu0 0
      %1600 = vmatmul.mubr.bf16.gmra.mrb[0].mxu0 %v1496
      %v1601 = vpop.f32.mrb[0].mxu0
      %v1602 = vadd.f32 0.0, %v1601
      %v1603 = vpop.f32.mrb[0].mxu0
      %v1604 = vpop.f32.mrb[0].mxu0
      %v1605 = vadd.f32 0.0, %v1604
      %v1606 = vpop.f32.mrb[0].mxu0
      %1607 = vmatprep.mubr.bf16.mxu0 0
      %1608 = vmatmul.mubr.bf16.gmra.mrb[0].mxu0 %v1499
      %v1609 = vpop.f32.mrb[0].mxu0
      %v1610 = vadd.f32 0.0, %v1609
      %v1611 = vpop.f32.mrb[0].mxu0
      %v1612 = vpop.f32.mrb[0].mxu0
      %v1613 = vadd.f32 0.0, %v1612
      %v1614 = vpop.f32.mrb[0].mxu0
      %1615 = vmatprep.mubr.bf16.mxu0 0
      %1616 = vmatmul.mubr.bf16.gmra.mrb[0].mxu0 %v1502
      %v1617 = vpop.f32.mrb[0].mxu0
      %v1618 = vadd.f32 0.0, %v1617
      %v1619 = vpop.f32.mrb[0].mxu0
      %v1620 = vpop.f32.mrb[0].mxu0
      %v1621 = vadd.f32 0.0, %v1620
      %v1622 = vpop.f32.mrb[0].mxu0
      %1623 = vmatprep.mubr.bf16.mxu0 0
      %1624 = vmatmul.mubr.bf16.gmra.mrb[0].mxu0 %v1505
      %v1625 = vpop.f32.mrb[0].mxu0
      %v1626 = vadd.f32 0.0, %v1625
      %v1627 = vpop.f32.mrb[0].mxu0
      %v1628 = vpop.f32.mrb[0].mxu0
      %v1629 = vadd.f32 0.0, %v1628
      %v1630 = vpop.f32.mrb[0].mxu0
      %1631 = vmatprep.mubr.bf16.mxu0 0
      %1632 = vmatmul.mubr.bf16.gmra.mrb[0].mxu0 %v1508
      %v1633 = vpop.f32.mrb[0].mxu0
      %v1634 = vadd.f32 0.0, %v1633
      %v1635 = vpop.f32.mrb[0].mxu0
      %v1636 = vpop.f32.mrb[0].mxu0
      %v1637 = vadd.f32 0.0, %v1636
      %v1638 = vpop.f32.mrb[0].mxu0
      %1639 = vmatprep.mubr.bf16.mxu0 0
      %1640 = vmatmul.mubr.bf16.gmra.mrb[0].mxu0 %v1511
      %v1641 = vpop.f32.mrb[0].mxu0
      %v1642 = vadd.f32 0.0, %v1641
      %v1643 = vpop.f32.mrb[0].mxu0
      %v1644 = vpop.f32.mrb[0].mxu0
      %v1645 = vadd.f32 0.0, %v1644
      %v1646 = vpop.f32.mrb[0].mxu0
      %1647 = vmatprep.mubr.bf16.mxu0 0
      %1648 = vmatmul.mubr.bf16.gmra.mrb[0].mxu0 %v1514
      %v1649 = vpop.f32.mrb[0].mxu0
      %v1650 = vadd.f32 0.0, %v1649
      %v1651 = vpop.f32.mrb[0].mxu0
      %v1652 = vpop.f32.mrb[0].mxu0
      %v1653 = vadd.f32 0.0, %v1652
      %v1654 = vpop.f32.mrb[0].mxu0
      %1655 = vmatprep.mubr.bf16.mxu0 0
      %1656 = vmatmul.mubr.bf16.gmra.mrb[0].mxu0 %v1517
      %v1657 = vpop.f32.mrb[0].mxu0
      %v1658 = vadd.f32 0.0, %v1657
      %v1659 = vpop.f32.mrb[0].mxu0
      %v1660 = vpop.f32.mrb[0].mxu0
      %v1661 = vadd.f32 0.0, %v1660
      %v1662 = vpop.f32.mrb[0].mxu0
      %1663 = vmatprep.mubr.bf16.mxu0 0
      %1664 = vmatmul.mubr.bf16.gmra.mrb[0].mxu0 %v1520
      %v1665 = vpop.f32.mrb[0].mxu0
      %v1666 = vadd.f32 0.0, %v1665
      %v1667 = vpop.f32.mrb[0].mxu0
      %v1668 = vpop.f32.mrb[0].mxu0
      %v1669 = vadd.f32 0.0, %v1668
      %v1670 = vpop.f32.mrb[0].mxu0
      %1671 = vmatprep.mubr.bf16.mxu0 0
      %1672 = vmatmul.mubr.bf16.gmra.mrb[0].mxu0 %v1523
      %v1673 = vpop.f32.mrb[0].mxu0
      %v1674 = vadd.f32 0.0, %v1673
      %v1675 = vpop.f32.mrb[0].mxu0
      %v1676 = vpop.f32.mrb[0].mxu0
      %v1677 = vadd.f32 0.0, %v1676
      %v1678 = vpop.f32.mrb[0].mxu0
      %1679 = vmatprep.mubr.bf16.mxu0 0
      %1680 = vmatmul.mubr.bf16.gmra.mrb[0].mxu0 %v1526
      %v1681 = vpop.f32.mrb[0].mxu0
      %v1682 = vadd.f32 0.0, %v1681
      %v1683 = vpop.f32.mrb[0].mxu0
      %v1684 = vpop.f32.mrb[0].mxu0
      %v1685 = vadd.f32 0.0, %v1684
      %v1686 = vpop.f32.mrb[0].mxu0
      %1687 = vmatprep.mubr.bf16.mxu0 0
      %1688 = vmatmul.mubr.bf16.gmra.mrb[0].mxu0 %v1529
      %v1689 = vpop.f32.mrb[0].mxu0
      %v1690 = vadd.f32 0.0, %v1689
      %v1691 = vpop.f32.mrb[0].mxu0
      %v1692 = vpop.f32.mrb[0].mxu0
      %v1693 = vadd.f32 0.0, %v1692
      %v1694 = vpop.f32.mrb[0].mxu0
      %1695 = vmatprep.mubr.bf16.mxu0 0
      %1696 = vmatmul.mubr.bf16.gmra.mrb[0].mxu0 %v1532
      %v1697 = vpop.f32.mrb[0].mxu0
      %v1698 = vadd.f32 0.0, %v1697
      %v1699 = vpop.f32.mrb[0].mxu0
      %v1700 = vpop.f32.mrb[0].mxu0
      %v1701 = vadd.f32 0.0, %v1700
      %v1702 = vpop.f32.mrb[0].mxu0
      %1703 = vmatprep.mubr.bf16.mxu0 0
      %1704 = vmatmul.mubr.bf16.gmra.mrb[0].mxu0 %v1535
      %v1705 = vpop.f32.mrb[0].mxu0
      %v1706 = vadd.f32 0.0, %v1705
      %v1707 = vpop.f32.mrb[0].mxu0
      %v1708 = vpop.f32.mrb[0].mxu0
      %v1709 = vadd.f32 0.0, %v1708
      %v1710 = vpop.f32.mrb[0].mxu0
      %1711 = vmatprep.mubr.bf16.mxu0 0
      %1712 = vmatmul.mubr.bf16.gmra.mrb[0].mxu0 %v1538
      %v1713 = vpop.f32.mrb[0].mxu0
      %v1714 = vadd.f32 0.0, %v1713
      %v1715 = vpop.f32.mrb[0].mxu0
      %v1716 = vpop.f32.mrb[0].mxu0
      %v1717 = vadd.f32 0.0, %v1716
      %v1718 = vpop.f32.mrb[0].mxu0
      %1719 = vdwg.mxu0
      %v1720 = vadd.f32 %v1394, %v1578
      %v1721 = vadd.f32 %v1395, %v1581
      %v1722 = vadd.f32 %v1396, %v1586
      %v1723 = vadd.f32 %v1397, %v1589
      %v1724 = vadd.f32 %v1398, %v1594
      %v1725 = vadd.f32 %v1399, %v1597
      %v1726 = vadd.f32 %v1400, %v1602
      %v1727 = vadd.f32 %v1401, %v1605
      %v1728 = vadd.f32 %v1402, %v1610
      %v1729 = vadd.f32 %v1403, %v1613
      %v1730 = vadd.f32 %v1404, %v1618
      %v1731 = vadd.f32 %v1405, %v1621
      %v1732 = vadd.f32 %v1406, %v1626
      %v1733 = vadd.f32 %v1407, %v1629
      %v1734 = vadd.f32 %v1408, %v1634
      %v1735 = vadd.f32 %v1409, %v1637
      %v1736 = vadd.f32 %v1410, %v1642
      %v1737 = vadd.f32 %v1411, %v1645
      %v1738 = vadd.f32 %v1412, %v1650
      %v1739 = vadd.f32 %v1413, %v1653
      %v1740 = vadd.f32 %v1414, %v1658
      %v1741 = vadd.f32 %v1415, %v1661
      %v1742 = vadd.f32 %v1416, %v1666
      %v1743 = vadd.f32 %v1417, %v1669
      %v1744 = vadd.f32 %v1418, %v1674
      %v1745 = vadd.f32 %v1419, %v1677
      %v1746 = vadd.f32 %v1420, %v1682
      %v1747 = vadd.f32 %v1421, %v1685
      %v1748 = vadd.f32 %v1422, %v1690
      %v1749 = vadd.f32 %v1423, %v1693
      %v1750 = vadd.f32 %v1424, %v1698
      %v1751 = vadd.f32 %v1425, %v1701
      %v1752 = vadd.f32 %v1426, %v1706
      %v1753 = vadd.f32 %v1427, %v1709
      %v1754 = vadd.f32 %v1428, %v1714
      %v1755 = vadd.f32 %v1429, %v1717
      %v1756 = vld [vmem:[#allocation2 + $0x13] sm:$0xff]
      %v1757 = vld [vmem:[#allocation2 + $0x1b] sm:$0xff]
      %v1758 = vld [vmem:[#allocation2 + $0x23] sm:$0xff]
      %v1759 = vld [vmem:[#allocation2 + $0x2b] sm:$0xff]
      %v1760 = vld [vmem:[#allocation2 + $0x33] sm:$0xff]
      %v1761 = vld [vmem:[#allocation2 + $0x3b] sm:$0xff]
      %v1762 = vld [vmem:[#allocation2 + $0x43] sm:$0xff]
      %v1763 = vld [vmem:[#allocation2 + $0x4b] sm:$0xff]
      %v1764 = vld [vmem:[#allocation2 + $0x53] sm:$0xff]
      %v1765 = vld [vmem:[#allocation2 + $0x5b] sm:$0xff]
      %v1766 = vld [vmem:[#allocation2 + $0x63] sm:$0xff]
      %v1767 = vld [vmem:[#allocation2 + $0x6b] sm:$0xff]
      %v1768 = vld [vmem:[#allocation2 + $0x73] sm:$0xff]
      %v1769 = vld [vmem:[#allocation2 + $0x7b] sm:$0xff]
      %v1770 = vld [vmem:[#allocation2 + $0x83] sm:$0xff]
      %v1771 = vld [vmem:[#allocation2 + $0x8b] sm:$0xff]
      %v1772 = vld [vmem:[#allocation2 + $0x93] sm:$0xff]
      %v1773 = vld [vmem:[#allocation2 + $0x9b] sm:$0xff]
      %v1774 = vld [vmem:[#allocation2 + $0xa3] sm:$0xff]
      %v1775 = vld [vmem:[#allocation2 + $0xab] sm:$0xff]
      %v1776 = vld [vmem:[#allocation2 + $0xb3] sm:$0xff]
      %v1777 = vld [vmem:[#allocation2 + $0xbb] sm:$0xff]
      %v1778 = vld [vmem:[#allocation2 + $0xc3] sm:$0xff]
      %v1779 = vld [vmem:[#allocation2 + $0xcb] sm:$0xff]
      %v1780 = vld [vmem:[#allocation2 + $0xd3] sm:$0xff]
      %v1781 = vld [vmem:[#allocation2 + $0xdb] sm:$0xff]
      %v1782 = vld [vmem:[#allocation2 + $0xe3] sm:$0xff]
      %v1783 = vld [vmem:[#allocation2 + $0xeb] sm:$0xff]
      %v1784 = vld [vmem:[#allocation2 + $0xf3] sm:$0xff]
      %v1785 = vld [vmem:[#allocation2 + $0xfb] sm:$0xff]
      %v1786 = vld [vmem:[#allocation2 + $0x103] sm:$0xff]
      %v1787 = vld [vmem:[#allocation2 + $0x10b] sm:$0xff]
      %v1788 = vld [vmem:[#allocation2 + $0x113] sm:$0xff]
      %v1789 = vld [vmem:[#allocation2 + $0x11b] sm:$0xff]
      %v1790 = vld [vmem:[#allocation2 + $0x123] sm:$0xff]
      %v1791 = vld [vmem:[#allocation2 + $0x12b] sm:$0x3f]
      %v1792 = vpack.c.bf16 %v1757, %v1756
      %v1793 = vpack.c.bf16 %v1759, %v1758
      %v1794 = vpack.c.bf16 %v1761, %v1760
      %v1795 = vpack.c.bf16 %v1763, %v1762
      %v1796 = vpack.c.bf16 %v1765, %v1764
      %v1797 = vpack.c.bf16 %v1767, %v1766
      %v1798 = vpack.c.bf16 %v1769, %v1768
      %v1799 = vpack.c.bf16 %v1771, %v1770
      %v1800 = vpack.c.bf16 %v1773, %v1772
      %v1801 = vpack.c.bf16 %v1775, %v1774
      %v1802 = vpack.c.bf16 %v1777, %v1776
      %v1803 = vpack.c.bf16 %v1779, %v1778
      %v1804 = vpack.c.bf16 %v1781, %v1780
      %v1805 = vpack.c.bf16 %v1783, %v1782
      %v1806 = vpack.c.bf16 %v1785, %v1784
      %v1807 = vpack.c.bf16 %v1787, %v1786
      %v1808 = vpack.c.bf16 %v1789, %v1788
      %v1809 = vpack.c.bf16 %v1791, %v1790
      %s1810 = scalar_lea.vmem %s2, 8
      %v1811 = vld [vmem:[%s1810] sm:$0x3]
      %v1813 = vsel %vm445, %v1792, 0
      %v1816 = vsel %vm445, %v1793, 0
      %v1819 = vsel %vm445, %v1794, 0
      %v1822 = vsel %vm445, %v1795, 0
      %v1825 = vsel %vm445, %v1796, 0
      %v1828 = vsel %vm445, %v1797, 0
      %v1831 = vsel %vm445, %v1798, 0
      %v1834 = vsel %vm445, %v1799, 0
      %v1837 = vsel %vm445, %v1800, 0
      %v1840 = vsel %vm445, %v1801, 0
      %v1843 = vsel %vm445, %v1802, 0
      %v1846 = vsel %vm445, %v1803, 0
      %v1849 = vsel %vm445, %v1804, 0
      %v1852 = vsel %vm445, %v1805, 0
      %v1855 = vsel %vm445, %v1806, 0
      %v1858 = vsel %vm445, %v1807, 0
      %v1861 = vsel %vm445, %v1808, 0
      %v1864 = vsel %vm445, %v1809, 0
      %v1867 = vsel %vm689, %v1811, 0
      %1869 = vmatprep.subr.bf16.mxu0 0
      %1870 = vmatpush1.bf16.msra.mxu0 %v1867
      %1871 = vmatprep.subr.bf16.mxu0 0
      %1872 = vmatpush1.bf16.msra.mxu0 0
      %1873 = vmatprep.subr.bf16.mxu0 0
      %1874 = vmatpush1.bf16.msra.mxu0 0
      %1875 = vmatprep.subr.bf16.mxu0 0
      %1876 = vmatpush1.bf16.msra.mxu0 0
      %1877 = vmatprep.subr.bf16.mxu0 0
      %1878 = vmatpush1.bf16.msra.mxu0 0
      %1879 = vmatprep.subr.bf16.mxu0 0
      %1880 = vmatpush1.bf16.msra.mxu0 0
      %1881 = vmatprep.subr.bf16.mxu0 0
      %1882 = vmatpush1.bf16.msra.mxu0 0
      %1883 = vmatprep.subr.bf16.mxu0 0
      %1884 = vmatpush1.bf16.msra.mxu0 0
      %1885 = vmatprep.subr.bf16.mxu0 0
      %1886 = vmatpush1.bf16.msra.mxu0 0
      %1887 = vmatprep.subr.bf16.mxu0 0
      %1888 = vmatpush1.bf16.msra.mxu0 0
      %1889 = vmatprep.subr.bf16.mxu0 0
      %1890 = vmatpush1.bf16.msra.mxu0 0
      %1891 = vmatprep.subr.bf16.mxu0 0
      %1892 = vmatpush1.bf16.msra.mxu0 0
      %1893 = vmatprep.subr.bf16.mxu0 0
      %1894 = vmatpush1.bf16.msra.mxu0 0
      %1895 = vmatprep.subr.bf16.mxu0 0
      %1896 = vmatpush1.bf16.msra.mxu0 0
      %1897 = vmatprep.subr.bf16.mxu0 0
      %1898 = vmatpush1.bf16.msra.mxu0 0
      %1899 = vmatprep.subr.bf16.mxu0 0
      %1900 = vmatpush1.bf16.msra.mxu0 0
      %1901 = vmatprep.mubr.bf16.mxu0 0
      %1902 = vmatmul.mubr.bf16.gmra.mrb[0].mxu0 %v1813
      %v1903 = vpop.f32.mrb[0].mxu0
      %v1904 = vadd.f32 0.0, %v1903
      %v1905 = vpop.f32.mrb[0].mxu0
      %v1906 = vpop.f32.mrb[0].mxu0
      %v1907 = vadd.f32 0.0, %v1906
      %v1908 = vpop.f32.mrb[0].mxu0
      %1909 = vmatprep.mubr.bf16.mxu0 0
      %1910 = vmatmul.mubr.bf16.gmra.mrb[0].mxu0 %v1816
      %v1911 = vpop.f32.mrb[0].mxu0
      %v1912 = vadd.f32 0.0, %v1911
      %v1913 = vpop.f32.mrb[0].mxu0
      %v1914 = vpop.f32.mrb[0].mxu0
      %v1915 = vadd.f32 0.0, %v1914
      %v1916 = vpop.f32.mrb[0].mxu0
      %1917 = vmatprep.mubr.bf16.mxu0 0
      %1918 = vmatmul.mubr.bf16.gmra.mrb[0].mxu0 %v1819
      %v1919 = vpop.f32.mrb[0].mxu0
      %v1920 = vadd.f32 0.0, %v1919
      %v1921 = vpop.f32.mrb[0].mxu0
      %v1922 = vpop.f32.mrb[0].mxu0
      %v1923 = vadd.f32 0.0, %v1922
      %v1924 = vpop.f32.mrb[0].mxu0
      %1925 = vmatprep.mubr.bf16.mxu0 0
      %1926 = vmatmul.mubr.bf16.gmra.mrb[0].mxu0 %v1822
      %v1927 = vpop.f32.mrb[0].mxu0
      %v1928 = vadd.f32 0.0, %v1927
      %v1929 = vpop.f32.mrb[0].mxu0
      %v1930 = vpop.f32.mrb[0].mxu0
      %v1931 = vadd.f32 0.0, %v1930
      %v1932 = vpop.f32.mrb[0].mxu0
      %1933 = vmatprep.mubr.bf16.mxu0 0
      %1934 = vmatmul.mubr.bf16.gmra.mrb[0].mxu0 %v1825
      %v1935 = vpop.f32.mrb[0].mxu0
      %v1936 = vadd.f32 0.0, %v1935
      %v1937 = vpop.f32.mrb[0].mxu0
      %v1938 = vpop.f32.mrb[0].mxu0
      %v1939 = vadd.f32 0.0, %v1938
      %v1940 = vpop.f32.mrb[0].mxu0
      %1941 = vmatprep.mubr.bf16.mxu0 0
      %1942 = vmatmul.mubr.bf16.gmra.mrb[0].mxu0 %v1828
      %v1943 = vpop.f32.mrb[0].mxu0
      %v1944 = vadd.f32 0.0, %v1943
      %v1945 = vpop.f32.mrb[0].mxu0
      %v1946 = vpop.f32.mrb[0].mxu0
      %v1947 = vadd.f32 0.0, %v1946
      %v1948 = vpop.f32.mrb[0].mxu0
      %1949 = vmatprep.mubr.bf16.mxu0 0
      %1950 = vmatmul.mubr.bf16.gmra.mrb[0].mxu0 %v1831
      %v1951 = vpop.f32.mrb[0].mxu0
      %v1952 = vadd.f32 0.0, %v1951
      %v1953 = vpop.f32.mrb[0].mxu0
      %v1954 = vpop.f32.mrb[0].mxu0
      %v1955 = vadd.f32 0.0, %v1954
      %v1956 = vpop.f32.mrb[0].mxu0
      %1957 = vmatprep.mubr.bf16.mxu0 0
      %1958 = vmatmul.mubr.bf16.gmra.mrb[0].mxu0 %v1834
      %v1959 = vpop.f32.mrb[0].mxu0
      %v1960 = vadd.f32 0.0, %v1959
      %v1961 = vpop.f32.mrb[0].mxu0
      %v1962 = vpop.f32.mrb[0].mxu0
      %v1963 = vadd.f32 0.0, %v1962
      %v1964 = vpop.f32.mrb[0].mxu0
      %1965 = vmatprep.mubr.bf16.mxu0 0
      %1966 = vmatmul.mubr.bf16.gmra.mrb[0].mxu0 %v1837
      %v1967 = vpop.f32.mrb[0].mxu0
      %v1968 = vadd.f32 0.0, %v1967
      %v1969 = vpop.f32.mrb[0].mxu0
      %v1970 = vpop.f32.mrb[0].mxu0
      %v1971 = vadd.f32 0.0, %v1970
      %v1972 = vpop.f32.mrb[0].mxu0
      %1973 = vmatprep.mubr.bf16.mxu0 0
      %1974 = vmatmul.mubr.bf16.gmra.mrb[0].mxu0 %v1840
      %v1975 = vpop.f32.mrb[0].mxu0
      %v1976 = vadd.f32 0.0, %v1975
      %v1977 = vpop.f32.mrb[0].mxu0
      %v1978 = vpop.f32.mrb[0].mxu0
      %v1979 = vadd.f32 0.0, %v1978
      %v1980 = vpop.f32.mrb[0].mxu0
      %1981 = vmatprep.mubr.bf16.mxu0 0
      %1982 = vmatmul.mubr.bf16.gmra.mrb[0].mxu0 %v1843
      %v1983 = vpop.f32.mrb[0].mxu0
      %v1984 = vadd.f32 0.0, %v1983
      %v1985 = vpop.f32.mrb[0].mxu0
      %v1986 = vpop.f32.mrb[0].mxu0
      %v1987 = vadd.f32 0.0, %v1986
      %v1988 = vpop.f32.mrb[0].mxu0
      %1989 = vmatprep.mubr.bf16.mxu0 0
      %1990 = vmatmul.mubr.bf16.gmra.mrb[0].mxu0 %v1846
      %v1991 = vpop.f32.mrb[0].mxu0
      %v1992 = vadd.f32 0.0, %v1991
      %v1993 = vpop.f32.mrb[0].mxu0
      %v1994 = vpop.f32.mrb[0].mxu0
      %v1995 = vadd.f32 0.0, %v1994
      %v1996 = vpop.f32.mrb[0].mxu0
      %1997 = vmatprep.mubr.bf16.mxu0 0
      %1998 = vmatmul.mubr.bf16.gmra.mrb[0].mxu0 %v1849
      %v1999 = vpop.f32.mrb[0].mxu0
      %v2000 = vadd.f32 0.0, %v1999
      %v2001 = vpop.f32.mrb[0].mxu0
      %v2002 = vpop.f32.mrb[0].mxu0
      %v2003 = vadd.f32 0.0, %v2002
      %v2004 = vpop.f32.mrb[0].mxu0
      %2005 = vmatprep.mubr.bf16.mxu0 0
      %2006 = vmatmul.mubr.bf16.gmra.mrb[0].mxu0 %v1852
      %v2007 = vpop.f32.mrb[0].mxu0
      %v2008 = vadd.f32 0.0, %v2007
      %v2009 = vpop.f32.mrb[0].mxu0
      %v2010 = vpop.f32.mrb[0].mxu0
      %v2011 = vadd.f32 0.0, %v2010
      %v2012 = vpop.f32.mrb[0].mxu0
      %2013 = vmatprep.mubr.bf16.mxu0 0
      %2014 = vmatmul.mubr.bf16.gmra.mrb[0].mxu0 %v1855
      %v2015 = vpop.f32.mrb[0].mxu0
      %v2016 = vadd.f32 0.0, %v2015
      %v2017 = vpop.f32.mrb[0].mxu0
      %v2018 = vpop.f32.mrb[0].mxu0
      %v2019 = vadd.f32 0.0, %v2018
      %v2020 = vpop.f32.mrb[0].mxu0
      %2021 = vmatprep.mubr.bf16.mxu0 0
      %2022 = vmatmul.mubr.bf16.gmra.mrb[0].mxu0 %v1858
      %v2023 = vpop.f32.mrb[0].mxu0
      %v2024 = vadd.f32 0.0, %v2023
      %v2025 = vpop.f32.mrb[0].mxu0
      %v2026 = vpop.f32.mrb[0].mxu0
      %v2027 = vadd.f32 0.0, %v2026
      %v2028 = vpop.f32.mrb[0].mxu0
      %2029 = vmatprep.mubr.bf16.mxu0 0
      %2030 = vmatmul.mubr.bf16.gmra.mrb[0].mxu0 %v1861
      %v2031 = vpop.f32.mrb[0].mxu0
      %v2032 = vadd.f32 0.0, %v2031
      %v2033 = vpop.f32.mrb[0].mxu0
      %v2034 = vpop.f32.mrb[0].mxu0
      %v2035 = vadd.f32 0.0, %v2034
      %v2036 = vpop.f32.mrb[0].mxu0
      %2037 = vmatprep.mubr.bf16.mxu0 0
      %2038 = vmatmul.mubr.bf16.gmra.mrb[0].mxu0 %v1864
      %v2039 = vpop.f32.mrb[0].mxu0
      %v2040 = vadd.f32 0.0, %v2039
      %v2041 = vpop.f32.mrb[0].mxu0
      %v2042 = vpop.f32.mrb[0].mxu0
      %v2043 = vadd.f32 0.0, %v2042
      %v2044 = vpop.f32.mrb[0].mxu0
      %2045 = vdwg.mxu0
      %v2046 = vadd.f32 %v1720, %v1904
      %v2047 = vadd.f32 %v1721, %v1907
      %v2048 = vadd.f32 %v1722, %v1912
      %v2049 = vadd.f32 %v1723, %v1915
      %v2050 = vadd.f32 %v1724, %v1920
      %v2051 = vadd.f32 %v1725, %v1923
      %v2052 = vadd.f32 %v1726, %v1928
      %v2053 = vadd.f32 %v1727, %v1931
      %v2054 = vadd.f32 %v1728, %v1936
      %v2055 = vadd.f32 %v1729, %v1939
      %v2056 = vadd.f32 %v1730, %v1944
      %v2057 = vadd.f32 %v1731, %v1947
      %v2058 = vadd.f32 %v1732, %v1952
      %v2059 = vadd.f32 %v1733, %v1955
      %v2060 = vadd.f32 %v1734, %v1960
      %v2061 = vadd.f32 %v1735, %v1963
      %v2062 = vadd.f32 %v1736, %v1968
      %v2063 = vadd.f32 %v1737, %v1971
      %v2064 = vadd.f32 %v1738, %v1976
      %v2065 = vadd.f32 %v1739, %v1979
      %v2066 = vadd.f32 %v1740, %v1984
      %v2067 = vadd.f32 %v1741, %v1987
      %v2068 = vadd.f32 %v1742, %v1992
      %v2069 = vadd.f32 %v1743, %v1995
      %v2070 = vadd.f32 %v1744, %v2000
      %v2071 = vadd.f32 %v1745, %v2003
      %v2072 = vadd.f32 %v1746, %v2008
      %v2073 = vadd.f32 %v1747, %v2011
      %v2074 = vadd.f32 %v1748, %v2016
      %v2075 = vadd.f32 %v1749, %v2019
      %v2076 = vadd.f32 %v1750, %v2024
      %v2077 = vadd.f32 %v1751, %v2027
      %v2078 = vadd.f32 %v1752, %v2032
      %v2079 = vadd.f32 %v1753, %v2035
      %v2080 = vadd.f32 %v1754, %v2040
      %v2081 = vadd.f32 %v1755, %v2043
      %v2082 = vld [vmem:[#allocation2 + $0x14] sm:$0xff]
      %v2083 = vld [vmem:[#allocation2 + $0x1c] sm:$0xff]
      %v2084 = vld [vmem:[#allocation2 + $0x24] sm:$0xff]
      %v2085 = vld [vmem:[#allocation2 + $0x2c] sm:$0xff]
      %v2086 = vld [vmem:[#allocation2 + $0x34] sm:$0xff]
      %v2087 = vld [vmem:[#allocation2 + $0x3c] sm:$0xff]
      %v2088 = vld [vmem:[#allocation2 + $0x44] sm:$0xff]
      %v2089 = vld [vmem:[#allocation2 + $0x4c] sm:$0xff]
      %v2090 = vld [vmem:[#allocation2 + $0x54] sm:$0xff]
      %v2091 = vld [vmem:[#allocation2 + $0x5c] sm:$0xff]
      %v2092 = vld [vmem:[#allocation2 + $0x64] sm:$0xff]
      %v2093 = vld [vmem:[#allocation2 + $0x6c] sm:$0xff]
      %v2094 = vld [vmem:[#allocation2 + $0x74] sm:$0xff]
      %v2095 = vld [vmem:[#allocation2 + $0x7c] sm:$0xff]
      %v2096 = vld [vmem:[#allocation2 + $0x84] sm:$0xff]
      %v2097 = vld [vmem:[#allocation2 + $0x8c] sm:$0xff]
      %v2098 = vld [vmem:[#allocation2 + $0x94] sm:$0xff]
      %v2099 = vld [vmem:[#allocation2 + $0x9c] sm:$0xff]
      %v2100 = vld [vmem:[#allocation2 + $0xa4] sm:$0xff]
      %v2101 = vld [vmem:[#allocation2 + $0xac] sm:$0xff]
      %v2102 = vld [vmem:[#allocation2 + $0xb4] sm:$0xff]
      %v2103 = vld [vmem:[#allocation2 + $0xbc] sm:$0xff]
      %v2104 = vld [vmem:[#allocation2 + $0xc4] sm:$0xff]
      %v2105 = vld [vmem:[#allocation2 + $0xcc] sm:$0xff]
      %v2106 = vld [vmem:[#allocation2 + $0xd4] sm:$0xff]
      %v2107 = vld [vmem:[#allocation2 + $0xdc] sm:$0xff]
      %v2108 = vld [vmem:[#allocation2 + $0xe4] sm:$0xff]
      %v2109 = vld [vmem:[#allocation2 + $0xec] sm:$0xff]
      %v2110 = vld [vmem:[#allocation2 + $0xf4] sm:$0xff]
      %v2111 = vld [vmem:[#allocation2 + $0xfc] sm:$0xff]
      %v2112 = vld [vmem:[#allocation2 + $0x104] sm:$0xff]
      %v2113 = vld [vmem:[#allocation2 + $0x10c] sm:$0xff]
      %v2114 = vld [vmem:[#allocation2 + $0x114] sm:$0xff]
      %v2115 = vld [vmem:[#allocation2 + $0x11c] sm:$0xff]
      %v2116 = vld [vmem:[#allocation2 + $0x124] sm:$0xff]
      %v2117 = vld [vmem:[#allocation2 + $0x12c] sm:$0x3f]
      %v2118 = vpack.c.bf16 %v2083, %v2082
      %v2119 = vpack.c.bf16 %v2085, %v2084
      %v2120 = vpack.c.bf16 %v2087, %v2086
      %v2121 = vpack.c.bf16 %v2089, %v2088
      %v2122 = vpack.c.bf16 %v2091, %v2090
      %v2123 = vpack.c.bf16 %v2093, %v2092
      %v2124 = vpack.c.bf16 %v2095, %v2094
      %v2125 = vpack.c.bf16 %v2097, %v2096
      %v2126 = vpack.c.bf16 %v2099, %v2098
      %v2127 = vpack.c.bf16 %v2101, %v2100
      %v2128 = vpack.c.bf16 %v2103, %v2102
      %v2129 = vpack.c.bf16 %v2105, %v2104
      %v2130 = vpack.c.bf16 %v2107, %v2106
      %v2131 = vpack.c.bf16 %v2109, %v2108
      %v2132 = vpack.c.bf16 %v2111, %v2110
      %v2133 = vpack.c.bf16 %v2113, %v2112
      %v2134 = vpack.c.bf16 %v2115, %v2114
      %v2135 = vpack.c.bf16 %v2117, %v2116
      %s2136 = scalar_lea.vmem %s2, 10
      %v2137 = vld [vmem:[%s2136] sm:$0x3]
      %v2139 = vsel %vm445, %v2118, 0
      %v2142 = vsel %vm445, %v2119, 0
      %v2145 = vsel %vm445, %v2120, 0
      %v2148 = vsel %vm445, %v2121, 0
      %v2151 = vsel %vm445, %v2122, 0
      %v2154 = vsel %vm445, %v2123, 0
      %v2157 = vsel %vm445, %v2124, 0
      %v2160 = vsel %vm445, %v2125, 0
      %v2163 = vsel %vm445, %v2126, 0
      %v2166 = vsel %vm445, %v2127, 0
      %v2169 = vsel %vm445, %v2128, 0
      %v2172 = vsel %vm445, %v2129, 0
      %v2175 = vsel %vm445, %v2130, 0
      %v2178 = vsel %vm445, %v2131, 0
      %v2181 = vsel %vm445, %v2132, 0
      %v2184 = vsel %vm445, %v2133, 0
      %v2187 = vsel %vm445, %v2134, 0
      %v2190 = vsel %vm445, %v2135, 0
      %v2193 = vsel %vm689, %v2137, 0
      %2195 = vmatprep.subr.bf16.mxu0 0
      %2196 = vmatpush1.bf16.msra.mxu0 %v2193
      %2197 = vmatprep.subr.bf16.mxu0 0
      %2198 = vmatpush1.bf16.msra.mxu0 0
      %2199 = vmatprep.subr.bf16.mxu0 0
      %2200 = vmatpush1.bf16.msra.mxu0 0
      %2201 = vmatprep.subr.bf16.mxu0 0
      %2202 = vmatpush1.bf16.msra.mxu0 0
      %2203 = vmatprep.subr.bf16.mxu0 0
      %2204 = vmatpush1.bf16.msra.mxu0 0
      %2205 = vmatprep.subr.bf16.mxu0 0
      %2206 = vmatpush1.bf16.msra.mxu0 0
      %2207 = vmatprep.subr.bf16.mxu0 0
      %2208 = vmatpush1.bf16.msra.mxu0 0
      %2209 = vmatprep.subr.bf16.mxu0 0
      %2210 = vmatpush1.bf16.msra.mxu0 0
      %2211 = vmatprep.subr.bf16.mxu0 0
      %2212 = vmatpush1.bf16.msra.mxu0 0
      %2213 = vmatprep.subr.bf16.mxu0 0
      %2214 = vmatpush1.bf16.msra.mxu0 0
      %2215 = vmatprep.subr.bf16.mxu0 0
      %2216 = vmatpush1.bf16.msra.mxu0 0
      %2217 = vmatprep.subr.bf16.mxu0 0
      %2218 = vmatpush1.bf16.msra.mxu0 0
      %2219 = vmatprep.subr.bf16.mxu0 0
      %2220 = vmatpush1.bf16.msra.mxu0 0
      %2221 = vmatprep.subr.bf16.mxu0 0
      %2222 = vmatpush1.bf16.msra.mxu0 0
      %2223 = vmatprep.subr.bf16.mxu0 0
      %2224 = vmatpush1.bf16.msra.mxu0 0
      %2225 = vmatprep.subr.bf16.mxu0 0
      %2226 = vmatpush1.bf16.msra.mxu0 0
      %2227 = vmatprep.mubr.bf16.mxu0 0
      %2228 = vmatmul.mubr.bf16.gmra.mrb[0].mxu0 %v2139
      %v2229 = vpop.f32.mrb[0].mxu0
      %v2230 = vadd.f32 0.0, %v2229
      %v2231 = vpop.f32.mrb[0].mxu0
      %v2232 = vpop.f32.mrb[0].mxu0
      %v2233 = vadd.f32 0.0, %v2232
      %v2234 = vpop.f32.mrb[0].mxu0
      %2235 = vmatprep.mubr.bf16.mxu0 0
      %2236 = vmatmul.mubr.bf16.gmra.mrb[0].mxu0 %v2142
      %v2237 = vpop.f32.mrb[0].mxu0
      %v2238 = vadd.f32 0.0, %v2237
      %v2239 = vpop.f32.mrb[0].mxu0
      %v2240 = vpop.f32.mrb[0].mxu0
      %v2241 = vadd.f32 0.0, %v2240
      %v2242 = vpop.f32.mrb[0].mxu0
      %2243 = vmatprep.mubr.bf16.mxu0 0
      %2244 = vmatmul.mubr.bf16.gmra.mrb[0].mxu0 %v2145
      %v2245 = vpop.f32.mrb[0].mxu0
      %v2246 = vadd.f32 0.0, %v2245
      %v2247 = vpop.f32.mrb[0].mxu0
      %v2248 = vpop.f32.mrb[0].mxu0
      %v2249 = vadd.f32 0.0, %v2248
      %v2250 = vpop.f32.mrb[0].mxu0
      %2251 = vmatprep.mubr.bf16.mxu0 0
      %2252 = vmatmul.mubr.bf16.gmra.mrb[0].mxu0 %v2148
      %v2253 = vpop.f32.mrb[0].mxu0
      %v2254 = vadd.f32 0.0, %v2253
      %v2255 = vpop.f32.mrb[0].mxu0
      %v2256 = vpop.f32.mrb[0].mxu0
      %v2257 = vadd.f32 0.0, %v2256
      %v2258 = vpop.f32.mrb[0].mxu0
      %2259 = vmatprep.mubr.bf16.mxu0 0
      %2260 = vmatmul.mubr.bf16.gmra.mrb[0].mxu0 %v2151
      %v2261 = vpop.f32.mrb[0].mxu0
      %v2262 = vadd.f32 0.0, %v2261
      %v2263 = vpop.f32.mrb[0].mxu0
      %v2264 = vpop.f32.mrb[0].mxu0
      %v2265 = vadd.f32 0.0, %v2264
      %v2266 = vpop.f32.mrb[0].mxu0
      %2267 = vmatprep.mubr.bf16.mxu0 0
      %2268 = vmatmul.mubr.bf16.gmra.mrb[0].mxu0 %v2154
      %v2269 = vpop.f32.mrb[0].mxu0
      %v2270 = vadd.f32 0.0, %v2269
      %v2271 = vpop.f32.mrb[0].mxu0
      %v2272 = vpop.f32.mrb[0].mxu0
      %v2273 = vadd.f32 0.0, %v2272
      %v2274 = vpop.f32.mrb[0].mxu0
      %2275 = vmatprep.mubr.bf16.mxu0 0
      %2276 = vmatmul.mubr.bf16.gmra.mrb[0].mxu0 %v2157
      %v2277 = vpop.f32.mrb[0].mxu0
      %v2278 = vadd.f32 0.0, %v2277
      %v2279 = vpop.f32.mrb[0].mxu0
      %v2280 = vpop.f32.mrb[0].mxu0
      %v2281 = vadd.f32 0.0, %v2280
      %v2282 = vpop.f32.mrb[0].mxu0
      %2283 = vmatprep.mubr.bf16.mxu0 0
      %2284 = vmatmul.mubr.bf16.gmra.mrb[0].mxu0 %v2160
      %v2285 = vpop.f32.mrb[0].mxu0
      %v2286 = vadd.f32 0.0, %v2285
      %v2287 = vpop.f32.mrb[0].mxu0
      %v2288 = vpop.f32.mrb[0].mxu0
      %v2289 = vadd.f32 0.0, %v2288
      %v2290 = vpop.f32.mrb[0].mxu0
      %2291 = vmatprep.mubr.bf16.mxu0 0
      %2292 = vmatmul.mubr.bf16.gmra.mrb[0].mxu0 %v2163
      %v2293 = vpop.f32.mrb[0].mxu0
      %v2294 = vadd.f32 0.0, %v2293
      %v2295 = vpop.f32.mrb[0].mxu0
      %v2296 = vpop.f32.mrb[0].mxu0
      %v2297 = vadd.f32 0.0, %v2296
      %v2298 = vpop.f32.mrb[0].mxu0
      %2299 = vmatprep.mubr.bf16.mxu0 0
      %2300 = vmatmul.mubr.bf16.gmra.mrb[0].mxu0 %v2166
      %v2301 = vpop.f32.mrb[0].mxu0
      %v2302 = vadd.f32 0.0, %v2301
      %v2303 = vpop.f32.mrb[0].mxu0
      %v2304 = vpop.f32.mrb[0].mxu0
      %v2305 = vadd.f32 0.0, %v2304
      %v2306 = vpop.f32.mrb[0].mxu0
      %2307 = vmatprep.mubr.bf16.mxu0 0
      %2308 = vmatmul.mubr.bf16.gmra.mrb[0].mxu0 %v2169
      %v2309 = vpop.f32.mrb[0].mxu0
      %v2310 = vadd.f32 0.0, %v2309
      %v2311 = vpop.f32.mrb[0].mxu0
      %v2312 = vpop.f32.mrb[0].mxu0
      %v2313 = vadd.f32 0.0, %v2312
      %v2314 = vpop.f32.mrb[0].mxu0
      %2315 = vmatprep.mubr.bf16.mxu0 0
      %2316 = vmatmul.mubr.bf16.gmra.mrb[0].mxu0 %v2172
      %v2317 = vpop.f32.mrb[0].mxu0
      %v2318 = vadd.f32 0.0, %v2317
      %v2319 = vpop.f32.mrb[0].mxu0
      %v2320 = vpop.f32.mrb[0].mxu0
      %v2321 = vadd.f32 0.0, %v2320
      %v2322 = vpop.f32.mrb[0].mxu0
      %2323 = vmatprep.mubr.bf16.mxu0 0
      %2324 = vmatmul.mubr.bf16.gmra.mrb[0].mxu0 %v2175
      %v2325 = vpop.f32.mrb[0].mxu0
      %v2326 = vadd.f32 0.0, %v2325
      %v2327 = vpop.f32.mrb[0].mxu0
      %v2328 = vpop.f32.mrb[0].mxu0
      %v2329 = vadd.f32 0.0, %v2328
      %v2330 = vpop.f32.mrb[0].mxu0
      %2331 = vmatprep.mubr.bf16.mxu0 0
      %2332 = vmatmul.mubr.bf16.gmra.mrb[0].mxu0 %v2178
      %v2333 = vpop.f32.mrb[0].mxu0
      %v2334 = vadd.f32 0.0, %v2333
      %v2335 = vpop.f32.mrb[0].mxu0
      %v2336 = vpop.f32.mrb[0].mxu0
      %v2337 = vadd.f32 0.0, %v2336
      %v2338 = vpop.f32.mrb[0].mxu0
      %2339 = vmatprep.mubr.bf16.mxu0 0
      %2340 = vmatmul.mubr.bf16.gmra.mrb[0].mxu0 %v2181
      %v2341 = vpop.f32.mrb[0].mxu0
      %v2342 = vadd.f32 0.0, %v2341
      %v2343 = vpop.f32.mrb[0].mxu0
      %v2344 = vpop.f32.mrb[0].mxu0
      %v2345 = vadd.f32 0.0, %v2344
      %v2346 = vpop.f32.mrb[0].mxu0
      %2347 = vmatprep.mubr.bf16.mxu0 0
      %2348 = vmatmul.mubr.bf16.gmra.mrb[0].mxu0 %v2184
      %v2349 = vpop.f32.mrb[0].mxu0
      %v2350 = vadd.f32 0.0, %v2349
      %v2351 = vpop.f32.mrb[0].mxu0
      %v2352 = vpop.f32.mrb[0].mxu0
      %v2353 = vadd.f32 0.0, %v2352
      %v2354 = vpop.f32.mrb[0].mxu0
      %2355 = vmatprep.mubr.bf16.mxu0 0
      %2356 = vmatmul.mubr.bf16.gmra.mrb[0].mxu0 %v2187
      %v2357 = vpop.f32.mrb[0].mxu0
      %v2358 = vadd.f32 0.0, %v2357
      %v2359 = vpop.f32.mrb[0].mxu0
      %v2360 = vpop.f32.mrb[0].mxu0
      %v2361 = vadd.f32 0.0, %v2360
      %v2362 = vpop.f32.mrb[0].mxu0
      %2363 = vmatprep.mubr.bf16.mxu0 0
      %2364 = vmatmul.mubr.bf16.gmra.mrb[0].mxu0 %v2190
      %v2365 = vpop.f32.mrb[0].mxu0
      %v2366 = vadd.f32 0.0, %v2365
      %v2367 = vpop.f32.mrb[0].mxu0
      %v2368 = vpop.f32.mrb[0].mxu0
      %v2369 = vadd.f32 0.0, %v2368
      %v2370 = vpop.f32.mrb[0].mxu0
      %2371 = vdwg.mxu0
      %v2372 = vadd.f32 %v2046, %v2230
      %v2373 = vadd.f32 %v2047, %v2233
      %v2374 = vadd.f32 %v2048, %v2238
      %v2375 = vadd.f32 %v2049, %v2241
      %v2376 = vadd.f32 %v2050, %v2246
      %v2377 = vadd.f32 %v2051, %v2249
      %v2378 = vadd.f32 %v2052, %v2254
      %v2379 = vadd.f32 %v2053, %v2257
      %v2380 = vadd.f32 %v2054, %v2262
      %v2381 = vadd.f32 %v2055, %v2265
      %v2382 = vadd.f32 %v2056, %v2270
      %v2383 = vadd.f32 %v2057, %v2273
      %v2384 = vadd.f32 %v2058, %v2278
      %v2385 = vadd.f32 %v2059, %v2281
      %v2386 = vadd.f32 %v2060, %v2286
      %v2387 = vadd.f32 %v2061, %v2289
      %v2388 = vadd.f32 %v2062, %v2294
      %v2389 = vadd.f32 %v2063, %v2297
      %v2390 = vadd.f32 %v2064, %v2302
      %v2391 = vadd.f32 %v2065, %v2305
      %v2392 = vadd.f32 %v2066, %v2310
      %v2393 = vadd.f32 %v2067, %v2313
      %v2394 = vadd.f32 %v2068, %v2318
      %v2395 = vadd.f32 %v2069, %v2321
      %v2396 = vadd.f32 %v2070, %v2326
      %v2397 = vadd.f32 %v2071, %v2329
      %v2398 = vadd.f32 %v2072, %v2334
      %v2399 = vadd.f32 %v2073, %v2337
      %v2400 = vadd.f32 %v2074, %v2342
      %v2401 = vadd.f32 %v2075, %v2345
      %v2402 = vadd.f32 %v2076, %v2350
      %v2403 = vadd.f32 %v2077, %v2353
      %v2404 = vadd.f32 %v2078, %v2358
      %v2405 = vadd.f32 %v2079, %v2361
      %v2406 = vadd.f32 %v2080, %v2366
      %v2407 = vadd.f32 %v2081, %v2369
      %v2408 = vld [vmem:[#allocation2 + $0x24] sm:$0xff]
      %v2409 = vld [vmem:[#allocation2 + $0x2c] sm:$0xff]
      %v2410 = vld [vmem:[#allocation2 + $0x34] sm:$0xff]
      %v2411 = vld [vmem:[#allocation2 + $0x3c] sm:$0xff]
      %v2412 = vld [vmem:[#allocation2 + $0x44] sm:$0xff]
      %v2413 = vld [vmem:[#allocation2 + $0x4c] sm:$0xff]
      %v2414 = vld [vmem:[#allocation2 + $0x54] sm:$0xff]
      %v2415 = vld [vmem:[#allocation2 + $0x5c] sm:$0xff]
      %v2416 = vld [vmem:[#allocation2 + $0x64] sm:$0xff]
      %v2417 = vld [vmem:[#allocation2 + $0x6c] sm:$0xff]
      %v2418 = vld [vmem:[#allocation2 + $0x74] sm:$0xff]
      %v2419 = vld [vmem:[#allocation2 + $0x7c] sm:$0xff]
      %v2420 = vld [vmem:[#allocation2 + $0x84] sm:$0xff]
      %v2421 = vld [vmem:[#allocation2 + $0x8c] sm:$0xff]
      %v2422 = vld [vmem:[#allocation2 + $0x94] sm:$0xff]
      %v2423 = vld [vmem:[#allocation2 + $0x9c] sm:$0xff]
      %v2424 = vld [vmem:[#allocation2 + $0xa4] sm:$0xff]
      %v2425 = vld [vmem:[#allocation2 + $0xac] sm:$0xff]
      %v2426 = vld [vmem:[#allocation2 + $0xb4] sm:$0xff]
      %v2427 = vld [vmem:[#allocation2 + $0xbc] sm:$0xff]
      %v2428 = vld [vmem:[#allocation2 + $0xc4] sm:$0xff]
      %v2429 = vld [vmem:[#allocation2 + $0xcc] sm:$0xff]
      %v2430 = vld [vmem:[#allocation2 + $0xd4] sm:$0xff]
      %v2431 = vld [vmem:[#allocation2 + $0xdc] sm:$0xff]
      %v2432 = vld [vmem:[#allocation2 + $0xe4] sm:$0xff]
      %v2433 = vld [vmem:[#allocation2 + $0xec] sm:$0xff]
      %v2434 = vld [vmem:[#allocation2 + $0xf4] sm:$0xff]
      %v2435 = vld [vmem:[#allocation2 + $0xfc] sm:$0xff]
      %v2436 = vld [vmem:[#allocation2 + $0x104] sm:$0xff]
      %v2437 = vld [vmem:[#allocation2 + $0x10c] sm:$0xff]
      %v2438 = vld [vmem:[#allocation2 + $0x114] sm:$0xff]
      %v2439 = vld [vmem:[#allocation2 + $0x11c] sm:$0xff]
      %v2440 = vld [vmem:[#allocation2 + $0x124] sm:$0xff]
      %v2441 = vld [vmem:[#allocation2 + $0x12c] sm:$0xff]
      %v2442 = vld [vmem:[#allocation2 + $0x134] sm:$0xff]
      %v2443 = vld [vmem:[#allocation2 + $0x13c] sm:$0x3f]
      %v2444 = vpack.c.bf16 %v2409, %v2408
      %v2445 = vpack.c.bf16 %v2411, %v2410
      %v2446 = vpack.c.bf16 %v2413, %v2412
      %v2447 = vpack.c.bf16 %v2415, %v2414
      %v2448 = vpack.c.bf16 %v2417, %v2416
      %v2449 = vpack.c.bf16 %v2419, %v2418
      %v2450 = vpack.c.bf16 %v2421, %v2420
      %v2451 = vpack.c.bf16 %v2423, %v2422
      %v2452 = vpack.c.bf16 %v2425, %v2424
      %v2453 = vpack.c.bf16 %v2427, %v2426
      %v2454 = vpack.c.bf16 %v2429, %v2428
      %v2455 = vpack.c.bf16 %v2431, %v2430
      %v2456 = vpack.c.bf16 %v2433, %v2432
      %v2457 = vpack.c.bf16 %v2435, %v2434
      %v2458 = vpack.c.bf16 %v2437, %v2436
      %v2459 = vpack.c.bf16 %v2439, %v2438
      %v2460 = vpack.c.bf16 %v2441, %v2440
      %v2461 = vpack.c.bf16 %v2443, %v2442
      %s2462 = scalar_lea.vmem %s2, 12
      %v2463 = vld [vmem:[%s2462] sm:$0x3]
      %v2465 = vsel %vm445, %v2444, 0
      %v2468 = vsel %vm445, %v2445, 0
      %v2471 = vsel %vm445, %v2446, 0
      %v2474 = vsel %vm445, %v2447, 0
      %v2477 = vsel %vm445, %v2448, 0
      %v2480 = vsel %vm445, %v2449, 0
      %v2483 = vsel %vm445, %v2450, 0
      %v2486 = vsel %vm445, %v2451, 0
      %v2489 = vsel %vm445, %v2452, 0
      %v2492 = vsel %vm445, %v2453, 0
      %v2495 = vsel %vm445, %v2454, 0
      %v2498 = vsel %vm445, %v2455, 0
      %v2501 = vsel %vm445, %v2456, 0
      %v2504 = vsel %vm445, %v2457, 0
      %v2507 = vsel %vm445, %v2458, 0
      %v2510 = vsel %vm445, %v2459, 0
      %v2513 = vsel %vm445, %v2460, 0
      %v2516 = vsel %vm445, %v2461, 0
      %v2519 = vsel %vm689, %v2463, 0
      %2521 = vmatprep.subr.bf16.mxu0 0
      %2522 = vmatpush1.bf16.msra.mxu0 %v2519
      %2523 = vmatprep.subr.bf16.mxu0 0
      %2524 = vmatpush1.bf16.msra.mxu0 0
      %2525 = vmatprep.subr.bf16.mxu0 0
      %2526 = vmatpush1.bf16.msra.mxu0 0
      %2527 = vmatprep.subr.bf16.mxu0 0
      %2528 = vmatpush1.bf16.msra.mxu0 0
      %2529 = vmatprep.subr.bf16.mxu0 0
      %2530 = vmatpush1.bf16.msra.mxu0 0
      %2531 = vmatprep.subr.bf16.mxu0 0
      %2532 = vmatpush1.bf16.msra.mxu0 0
      %2533 = vmatprep.subr.bf16.mxu0 0
      %2534 = vmatpush1.bf16.msra.mxu0 0
      %2535 = vmatprep.subr.bf16.mxu0 0
      %2536 = vmatpush1.bf16.msra.mxu0 0
      %2537 = vmatprep.subr.bf16.mxu0 0
      %2538 = vmatpush1.bf16.msra.mxu0 0
      %2539 = vmatprep.subr.bf16.mxu0 0
      %2540 = vmatpush1.bf16.msra.mxu0 0
      %2541 = vmatprep.subr.bf16.mxu0 0
      %2542 = vmatpush1.bf16.msra.mxu0 0
      %2543 = vmatprep.subr.bf16.mxu0 0
      %2544 = vmatpush1.bf16.msra.mxu0 0
      %2545 = vmatprep.subr.bf16.mxu0 0
      %2546 = vmatpush1.bf16.msra.mxu0 0
      %2547 = vmatprep.subr.bf16.mxu0 0
      %2548 = vmatpush1.bf16.msra.mxu0 0
      %2549 = vmatprep.subr.bf16.mxu0 0
      %2550 = vmatpush1.bf16.msra.mxu0 0
      %2551 = vmatprep.subr.bf16.mxu0 0
      %2552 = vmatpush1.bf16.msra.mxu0 0
      %2553 = vmatprep.mubr.bf16.mxu0 0
      %2554 = vmatmul.mubr.bf16.gmra.mrb[0].mxu0 %v2465
      %v2555 = vpop.f32.mrb[0].mxu0
      %v2556 = vadd.f32 0.0, %v2555
      %v2557 = vpop.f32.mrb[0].mxu0
      %v2558 = vpop.f32.mrb[0].mxu0
      %v2559 = vadd.f32 0.0, %v2558
      %v2560 = vpop.f32.mrb[0].mxu0
      %2561 = vmatprep.mubr.bf16.mxu0 0
      %2562 = vmatmul.mubr.bf16.gmra.mrb[0].mxu0 %v2468
      %v2563 = vpop.f32.mrb[0].mxu0
      %v2564 = vadd.f32 0.0, %v2563
      %v2565 = vpop.f32.mrb[0].mxu0
      %v2566 = vpop.f32.mrb[0].mxu0
      %v2567 = vadd.f32 0.0, %v2566
      %v2568 = vpop.f32.mrb[0].mxu0
      %2569 = vmatprep.mubr.bf16.mxu0 0
      %2570 = vmatmul.mubr.bf16.gmra.mrb[0].mxu0 %v2471
      %v2571 = vpop.f32.mrb[0].mxu0
      %v2572 = vadd.f32 0.0, %v2571
      %v2573 = vpop.f32.mrb[0].mxu0
      %v2574 = vpop.f32.mrb[0].mxu0
      %v2575 = vadd.f32 0.0, %v2574
      %v2576 = vpop.f32.mrb[0].mxu0
      %2577 = vmatprep.mubr.bf16.mxu0 0
      %2578 = vmatmul.mubr.bf16.gmra.mrb[0].mxu0 %v2474
      %v2579 = vpop.f32.mrb[0].mxu0
      %v2580 = vadd.f32 0.0, %v2579
      %v2581 = vpop.f32.mrb[0].mxu0
      %v2582 = vpop.f32.mrb[0].mxu0
      %v2583 = vadd.f32 0.0, %v2582
      %v2584 = vpop.f32.mrb[0].mxu0
      %2585 = vmatprep.mubr.bf16.mxu0 0
      %2586 = vmatmul.mubr.bf16.gmra.mrb[0].mxu0 %v2477
      %v2587 = vpop.f32.mrb[0].mxu0
      %v2588 = vadd.f32 0.0, %v2587
      %v2589 = vpop.f32.mrb[0].mxu0
      %v2590 = vpop.f32.mrb[0].mxu0
      %v2591 = vadd.f32 0.0, %v2590
      %v2592 = vpop.f32.mrb[0].mxu0
      %2593 = vmatprep.mubr.bf16.mxu0 0
      %2594 = vmatmul.mubr.bf16.gmra.mrb[0].mxu0 %v2480
      %v2595 = vpop.f32.mrb[0].mxu0
      %v2596 = vadd.f32 0.0, %v2595
      %v2597 = vpop.f32.mrb[0].mxu0
      %v2598 = vpop.f32.mrb[0].mxu0
      %v2599 = vadd.f32 0.0, %v2598
      %v2600 = vpop.f32.mrb[0].mxu0
      %2601 = vmatprep.mubr.bf16.mxu0 0
      %2602 = vmatmul.mubr.bf16.gmra.mrb[0].mxu0 %v2483
      %v2603 = vpop.f32.mrb[0].mxu0
      %v2604 = vadd.f32 0.0, %v2603
      %v2605 = vpop.f32.mrb[0].mxu0
      %v2606 = vpop.f32.mrb[0].mxu0
      %v2607 = vadd.f32 0.0, %v2606
      %v2608 = vpop.f32.mrb[0].mxu0
      %2609 = vmatprep.mubr.bf16.mxu0 0
      %2610 = vmatmul.mubr.bf16.gmra.mrb[0].mxu0 %v2486
      %v2611 = vpop.f32.mrb[0].mxu0
      %v2612 = vadd.f32 0.0, %v2611
      %v2613 = vpop.f32.mrb[0].mxu0
      %v2614 = vpop.f32.mrb[0].mxu0
      %v2615 = vadd.f32 0.0, %v2614
      %v2616 = vpop.f32.mrb[0].mxu0
      %2617 = vmatprep.mubr.bf16.mxu0 0
      %2618 = vmatmul.mubr.bf16.gmra.mrb[0].mxu0 %v2489
      %v2619 = vpop.f32.mrb[0].mxu0
      %v2620 = vadd.f32 0.0, %v2619
      %v2621 = vpop.f32.mrb[0].mxu0
      %v2622 = vpop.f32.mrb[0].mxu0
      %v2623 = vadd.f32 0.0, %v2622
      %v2624 = vpop.f32.mrb[0].mxu0
      %2625 = vmatprep.mubr.bf16.mxu0 0
      %2626 = vmatmul.mubr.bf16.gmra.mrb[0].mxu0 %v2492
      %v2627 = vpop.f32.mrb[0].mxu0
      %v2628 = vadd.f32 0.0, %v2627
      %v2629 = vpop.f32.mrb[0].mxu0
      %v2630 = vpop.f32.mrb[0].mxu0
      %v2631 = vadd.f32 0.0, %v2630
      %v2632 = vpop.f32.mrb[0].mxu0
      %2633 = vmatprep.mubr.bf16.mxu0 0
      %2634 = vmatmul.mubr.bf16.gmra.mrb[0].mxu0 %v2495
      %v2635 = vpop.f32.mrb[0].mxu0
      %v2636 = vadd.f32 0.0, %v2635
      %v2637 = vpop.f32.mrb[0].mxu0
      %v2638 = vpop.f32.mrb[0].mxu0
      %v2639 = vadd.f32 0.0, %v2638
      %v2640 = vpop.f32.mrb[0].mxu0
      %2641 = vmatprep.mubr.bf16.mxu0 0
      %2642 = vmatmul.mubr.bf16.gmra.mrb[0].mxu0 %v2498
      %v2643 = vpop.f32.mrb[0].mxu0
      %v2644 = vadd.f32 0.0, %v2643
      %v2645 = vpop.f32.mrb[0].mxu0
      %v2646 = vpop.f32.mrb[0].mxu0
      %v2647 = vadd.f32 0.0, %v2646
      %v2648 = vpop.f32.mrb[0].mxu0
      %2649 = vmatprep.mubr.bf16.mxu0 0
      %2650 = vmatmul.mubr.bf16.gmra.mrb[0].mxu0 %v2501
      %v2651 = vpop.f32.mrb[0].mxu0
      %v2652 = vadd.f32 0.0, %v2651
      %v2653 = vpop.f32.mrb[0].mxu0
      %v2654 = vpop.f32.mrb[0].mxu0
      %v2655 = vadd.f32 0.0, %v2654
      %v2656 = vpop.f32.mrb[0].mxu0
      %2657 = vmatprep.mubr.bf16.mxu0 0
      %2658 = vmatmul.mubr.bf16.gmra.mrb[0].mxu0 %v2504
      %v2659 = vpop.f32.mrb[0].mxu0
      %v2660 = vadd.f32 0.0, %v2659
      %v2661 = vpop.f32.mrb[0].mxu0
      %v2662 = vpop.f32.mrb[0].mxu0
      %v2663 = vadd.f32 0.0, %v2662
      %v2664 = vpop.f32.mrb[0].mxu0
      %2665 = vmatprep.mubr.bf16.mxu0 0
      %2666 = vmatmul.mubr.bf16.gmra.mrb[0].mxu0 %v2507
      %v2667 = vpop.f32.mrb[0].mxu0
      %v2668 = vadd.f32 0.0, %v2667
      %v2669 = vpop.f32.mrb[0].mxu0
      %v2670 = vpop.f32.mrb[0].mxu0
      %v2671 = vadd.f32 0.0, %v2670
      %v2672 = vpop.f32.mrb[0].mxu0
      %2673 = vmatprep.mubr.bf16.mxu0 0
      %2674 = vmatmul.mubr.bf16.gmra.mrb[0].mxu0 %v2510
      %v2675 = vpop.f32.mrb[0].mxu0
      %v2676 = vadd.f32 0.0, %v2675
      %v2677 = vpop.f32.mrb[0].mxu0
      %v2678 = vpop.f32.mrb[0].mxu0
      %v2679 = vadd.f32 0.0, %v2678
      %v2680 = vpop.f32.mrb[0].mxu0
      %2681 = vmatprep.mubr.bf16.mxu0 0
      %2682 = vmatmul.mubr.bf16.gmra.mrb[0].mxu0 %v2513
      %v2683 = vpop.f32.mrb[0].mxu0
      %v2684 = vadd.f32 0.0, %v2683
      %v2685 = vpop.f32.mrb[0].mxu0
      %v2686 = vpop.f32.mrb[0].mxu0
      %v2687 = vadd.f32 0.0, %v2686
      %v2688 = vpop.f32.mrb[0].mxu0
      %2689 = vmatprep.mubr.bf16.mxu0 0
      %2690 = vmatmul.mubr.bf16.gmra.mrb[0].mxu0 %v2516
      %v2691 = vpop.f32.mrb[0].mxu0
      %v2692 = vadd.f32 0.0, %v2691
      %v2693 = vpop.f32.mrb[0].mxu0
      %v2694 = vpop.f32.mrb[0].mxu0
      %v2695 = vadd.f32 0.0, %v2694
      %v2696 = vpop.f32.mrb[0].mxu0
      %2697 = vdwg.mxu0
      %v2698 = vadd.f32 %v2372, %v2556
      %v2699 = vadd.f32 %v2373, %v2559
      %v2700 = vadd.f32 %v2374, %v2564
      %v2701 = vadd.f32 %v2375, %v2567
      %v2702 = vadd.f32 %v2376, %v2572
      %v2703 = vadd.f32 %v2377, %v2575
      %v2704 = vadd.f32 %v2378, %v2580
      %v2705 = vadd.f32 %v2379, %v2583
      %v2706 = vadd.f32 %v2380, %v2588
      %v2707 = vadd.f32 %v2381, %v2591
      %v2708 = vadd.f32 %v2382, %v2596
      %v2709 = vadd.f32 %v2383, %v2599
      %v2710 = vadd.f32 %v2384, %v2604
      %v2711 = vadd.f32 %v2385, %v2607
      %v2712 = vadd.f32 %v2386, %v2612
      %v2713 = vadd.f32 %v2387, %v2615
      %v2714 = vadd.f32 %v2388, %v2620
      %v2715 = vadd.f32 %v2389, %v2623
      %v2716 = vadd.f32 %v2390, %v2628
      %v2717 = vadd.f32 %v2391, %v2631
      %v2718 = vadd.f32 %v2392, %v2636
      %v2719 = vadd.f32 %v2393, %v2639
      %v2720 = vadd.f32 %v2394, %v2644
      %v2721 = vadd.f32 %v2395, %v2647
      %v2722 = vadd.f32 %v2396, %v2652
      %v2723 = vadd.f32 %v2397, %v2655
      %v2724 = vadd.f32 %v2398, %v2660
      %v2725 = vadd.f32 %v2399, %v2663
      %v2726 = vadd.f32 %v2400, %v2668
      %v2727 = vadd.f32 %v2401, %v2671
      %v2728 = vadd.f32 %v2402, %v2676
      %v2729 = vadd.f32 %v2403, %v2679
      %v2730 = vadd.f32 %v2404, %v2684
      %v2731 = vadd.f32 %v2405, %v2687
      %v2732 = vadd.f32 %v2406, %v2692
      %v2733 = vadd.f32 %v2407, %v2695
      %v2734 = vld [vmem:[#allocation2 + $0x25] sm:$0xff]
      %v2735 = vld [vmem:[#allocation2 + $0x2d] sm:$0xff]
      %v2736 = vld [vmem:[#allocation2 + $0x35] sm:$0xff]
      %v2737 = vld [vmem:[#allocation2 + $0x3d] sm:$0xff]
      %v2738 = vld [vmem:[#allocation2 + $0x45] sm:$0xff]
      %v2739 = vld [vmem:[#allocation2 + $0x4d] sm:$0xff]
      %v2740 = vld [vmem:[#allocation2 + $0x55] sm:$0xff]
      %v2741 = vld [vmem:[#allocation2 + $0x5d] sm:$0xff]
      %v2742 = vld [vmem:[#allocation2 + $0x65] sm:$0xff]
      %v2743 = vld [vmem:[#allocation2 + $0x6d] sm:$0xff]
      %v2744 = vld [vmem:[#allocation2 + $0x75] sm:$0xff]
      %v2745 = vld [vmem:[#allocation2 + $0x7d] sm:$0xff]
      %v2746 = vld [vmem:[#allocation2 + $0x85] sm:$0xff]
      %v2747 = vld [vmem:[#allocation2 + $0x8d] sm:$0xff]
      %v2748 = vld [vmem:[#allocation2 + $0x95] sm:$0xff]
      %v2749 = vld [vmem:[#allocation2 + $0x9d] sm:$0xff]
      %v2750 = vld [vmem:[#allocation2 + $0xa5] sm:$0xff]
      %v2751 = vld [vmem:[#allocation2 + $0xad] sm:$0xff]
      %v2752 = vld [vmem:[#allocation2 + $0xb5] sm:$0xff]
      %v2753 = vld [vmem:[#allocation2 + $0xbd] sm:$0xff]
      %v2754 = vld [vmem:[#allocation2 + $0xc5] sm:$0xff]
      %v2755 = vld [vmem:[#allocation2 + $0xcd] sm:$0xff]
      %v2756 = vld [vmem:[#allocation2 + $0xd5] sm:$0xff]
      %v2757 = vld [vmem:[#allocation2 + $0xdd] sm:$0xff]
      %v2758 = vld [vmem:[#allocation2 + $0xe5] sm:$0xff]
      %v2759 = vld [vmem:[#allocation2 + $0xed] sm:$0xff]
      %v2760 = vld [vmem:[#allocation2 + $0xf5] sm:$0xff]
      %v2761 = vld [vmem:[#allocation2 + $0xfd] sm:$0xff]
      %v2762 = vld [vmem:[#allocation2 + $0x105] sm:$0xff]
      %v2763 = vld [vmem:[#allocation2 + $0x10d] sm:$0xff]
      %v2764 = vld [vmem:[#allocation2 + $0x115] sm:$0xff]
      %v2765 = vld [vmem:[#allocation2 + $0x11d] sm:$0xff]
      %v2766 = vld [vmem:[#allocation2 + $0x125] sm:$0xff]
      %v2767 = vld [vmem:[#allocation2 + $0x12d] sm:$0xff]
      %v2768 = vld [vmem:[#allocation2 + $0x135] sm:$0xff]
      %v2769 = vld [vmem:[#allocation2 + $0x13d] sm:$0x3f]
      %v2770 = vpack.c.bf16 %v2735, %v2734
      %v2771 = vpack.c.bf16 %v2737, %v2736
      %v2772 = vpack.c.bf16 %v2739, %v2738
      %v2773 = vpack.c.bf16 %v2741, %v2740
      %v2774 = vpack.c.bf16 %v2743, %v2742
      %v2775 = vpack.c.bf16 %v2745, %v2744
      %v2776 = vpack.c.bf16 %v2747, %v2746
      %v2777 = vpack.c.bf16 %v2749, %v2748
      %v2778 = vpack.c.bf16 %v2751, %v2750
      %v2779 = vpack.c.bf16 %v2753, %v2752
      %v2780 = vpack.c.bf16 %v2755, %v2754
      %v2781 = vpack.c.bf16 %v2757, %v2756
      %v2782 = vpack.c.bf16 %v2759, %v2758
      %v2783 = vpack.c.bf16 %v2761, %v2760
      %v2784 = vpack.c.bf16 %v2763, %v2762
      %v2785 = vpack.c.bf16 %v2765, %v2764
      %v2786 = vpack.c.bf16 %v2767, %v2766
      %v2787 = vpack.c.bf16 %v2769, %v2768
      %s2788 = scalar_lea.vmem %s2, 14
      %v2789 = vld [vmem:[%s2788] sm:$0x3]
      %v2791 = vsel %vm445, %v2770, 0
      %v2794 = vsel %vm445, %v2771, 0
      %v2797 = vsel %vm445, %v2772, 0
      %v2800 = vsel %vm445, %v2773, 0
      %v2803 = vsel %vm445, %v2774, 0
      %v2806 = vsel %vm445, %v2775, 0
      %v2809 = vsel %vm445, %v2776, 0
      %v2812 = vsel %vm445, %v2777, 0
      %v2815 = vsel %vm445, %v2778, 0
      %v2818 = vsel %vm445, %v2779, 0
      %v2821 = vsel %vm445, %v2780, 0
      %v2824 = vsel %vm445, %v2781, 0
      %v2827 = vsel %vm445, %v2782, 0
      %v2830 = vsel %vm445, %v2783, 0
      %v2833 = vsel %vm445, %v2784, 0
      %v2836 = vsel %vm445, %v2785, 0
      %v2839 = vsel %vm445, %v2786, 0
      %v2842 = vsel %vm445, %v2787, 0
      %v2845 = vsel %vm689, %v2789, 0
      %2847 = vmatprep.subr.bf16.mxu0 0
      %2848 = vmatpush1.bf16.msra.mxu0 %v2845
      %2849 = vmatprep.subr.bf16.mxu0 0
      %2850 = vmatpush1.bf16.msra.mxu0 0
      %2851 = vmatprep.subr.bf16.mxu0 0
      %2852 = vmatpush1.bf16.msra.mxu0 0
      %2853 = vmatprep.subr.bf16.mxu0 0
      %2854 = vmatpush1.bf16.msra.mxu0 0
      %2855 = vmatprep.subr.bf16.mxu0 0
      %2856 = vmatpush1.bf16.msra.mxu0 0
      %2857 = vmatprep.subr.bf16.mxu0 0
      %2858 = vmatpush1.bf16.msra.mxu0 0
      %2859 = vmatprep.subr.bf16.mxu0 0
      %2860 = vmatpush1.bf16.msra.mxu0 0
      %2861 = vmatprep.subr.bf16.mxu0 0
      %2862 = vmatpush1.bf16.msra.mxu0 0
      %2863 = vmatprep.subr.bf16.mxu0 0
      %2864 = vmatpush1.bf16.msra.mxu0 0
      %2865 = vmatprep.subr.bf16.mxu0 0
      %2866 = vmatpush1.bf16.msra.mxu0 0
      %2867 = vmatprep.subr.bf16.mxu0 0
      %2868 = vmatpush1.bf16.msra.mxu0 0
      %2869 = vmatprep.subr.bf16.mxu0 0
      %2870 = vmatpush1.bf16.msra.mxu0 0
      %2871 = vmatprep.subr.bf16.mxu0 0
      %2872 = vmatpush1.bf16.msra.mxu0 0
      %2873 = vmatprep.subr.bf16.mxu0 0
      %2874 = vmatpush1.bf16.msra.mxu0 0
      %2875 = vmatprep.subr.bf16.mxu0 0
      %2876 = vmatpush1.bf16.msra.mxu0 0
      %2877 = vmatprep.subr.bf16.mxu0 0
      %2878 = vmatpush1.bf16.msra.mxu0 0
      %2879 = vmatprep.mubr.bf16.mxu0 0
      %2880 = vmatmul.mubr.bf16.gmra.mrb[0].mxu0 %v2791
      %v2881 = vpop.f32.mrb[0].mxu0
      %v2882 = vadd.f32 0.0, %v2881
      %v2883 = vpop.f32.mrb[0].mxu0
      %v2884 = vpop.f32.mrb[0].mxu0
      %v2885 = vadd.f32 0.0, %v2884
      %v2886 = vpop.f32.mrb[0].mxu0
      %2887 = vmatprep.mubr.bf16.mxu0 0
      %2888 = vmatmul.mubr.bf16.gmra.mrb[0].mxu0 %v2794
      %v2889 = vpop.f32.mrb[0].mxu0
      %v2890 = vadd.f32 0.0, %v2889
      %v2891 = vpop.f32.mrb[0].mxu0
      %v2892 = vpop.f32.mrb[0].mxu0
      %v2893 = vadd.f32 0.0, %v2892
      %v2894 = vpop.f32.mrb[0].mxu0
      %2895 = vmatprep.mubr.bf16.mxu0 0
      %2896 = vmatmul.mubr.bf16.gmra.mrb[0].mxu0 %v2797
      %v2897 = vpop.f32.mrb[0].mxu0
      %v2898 = vadd.f32 0.0, %v2897
      %v2899 = vpop.f32.mrb[0].mxu0
      %v2900 = vpop.f32.mrb[0].mxu0
      %v2901 = vadd.f32 0.0, %v2900
      %v2902 = vpop.f32.mrb[0].mxu0
      %2903 = vmatprep.mubr.bf16.mxu0 0
      %2904 = vmatmul.mubr.bf16.gmra.mrb[0].mxu0 %v2800
      %v2905 = vpop.f32.mrb[0].mxu0
      %v2906 = vadd.f32 0.0, %v2905
      %v2907 = vpop.f32.mrb[0].mxu0
      %v2908 = vpop.f32.mrb[0].mxu0
      %v2909 = vadd.f32 0.0, %v2908
      %v2910 = vpop.f32.mrb[0].mxu0
      %2911 = vmatprep.mubr.bf16.mxu0 0
      %2912 = vmatmul.mubr.bf16.gmra.mrb[0].mxu0 %v2803
      %v2913 = vpop.f32.mrb[0].mxu0
      %v2914 = vadd.f32 0.0, %v2913
      %v2915 = vpop.f32.mrb[0].mxu0
      %v2916 = vpop.f32.mrb[0].mxu0
      %v2917 = vadd.f32 0.0, %v2916
      %v2918 = vpop.f32.mrb[0].mxu0
      %2919 = vmatprep.mubr.bf16.mxu0 0
      %2920 = vmatmul.mubr.bf16.gmra.mrb[0].mxu0 %v2806
      %v2921 = vpop.f32.mrb[0].mxu0
      %v2922 = vadd.f32 0.0, %v2921
      %v2923 = vpop.f32.mrb[0].mxu0
      %v2924 = vpop.f32.mrb[0].mxu0
      %v2925 = vadd.f32 0.0, %v2924
      %v2926 = vpop.f32.mrb[0].mxu0
      %2927 = vmatprep.mubr.bf16.mxu0 0
      %2928 = vmatmul.mubr.bf16.gmra.mrb[0].mxu0 %v2809
      %v2929 = vpop.f32.mrb[0].mxu0
      %v2930 = vadd.f32 0.0, %v2929
      %v2931 = vpop.f32.mrb[0].mxu0
      %v2932 = vpop.f32.mrb[0].mxu0
      %v2933 = vadd.f32 0.0, %v2932
      %v2934 = vpop.f32.mrb[0].mxu0
      %2935 = vmatprep.mubr.bf16.mxu0 0
      %2936 = vmatmul.mubr.bf16.gmra.mrb[0].mxu0 %v2812
      %v2937 = vpop.f32.mrb[0].mxu0
      %v2938 = vadd.f32 0.0, %v2937
      %v2939 = vpop.f32.mrb[0].mxu0
      %v2940 = vpop.f32.mrb[0].mxu0
      %v2941 = vadd.f32 0.0, %v2940
      %v2942 = vpop.f32.mrb[0].mxu0
      %2943 = vmatprep.mubr.bf16.mxu0 0
      %2944 = vmatmul.mubr.bf16.gmra.mrb[0].mxu0 %v2815
      %v2945 = vpop.f32.mrb[0].mxu0
      %v2946 = vadd.f32 0.0, %v2945
      %v2947 = vpop.f32.mrb[0].mxu0
      %v2948 = vpop.f32.mrb[0].mxu0
      %v2949 = vadd.f32 0.0, %v2948
      %v2950 = vpop.f32.mrb[0].mxu0
      %2951 = vmatprep.mubr.bf16.mxu0 0
      %2952 = vmatmul.mubr.bf16.gmra.mrb[0].mxu0 %v2818
      %v2953 = vpop.f32.mrb[0].mxu0
      %v2954 = vadd.f32 0.0, %v2953
      %v2955 = vpop.f32.mrb[0].mxu0
      %v2956 = vpop.f32.mrb[0].mxu0
      %v2957 = vadd.f32 0.0, %v2956
      %v2958 = vpop.f32.mrb[0].mxu0
      %2959 = vmatprep.mubr.bf16.mxu0 0
      %2960 = vmatmul.mubr.bf16.gmra.mrb[0].mxu0 %v2821
      %v2961 = vpop.f32.mrb[0].mxu0
      %v2962 = vadd.f32 0.0, %v2961
      %v2963 = vpop.f32.mrb[0].mxu0
      %v2964 = vpop.f32.mrb[0].mxu0
      %v2965 = vadd.f32 0.0, %v2964
      %v2966 = vpop.f32.mrb[0].mxu0
      %2967 = vmatprep.mubr.bf16.mxu0 0
      %2968 = vmatmul.mubr.bf16.gmra.mrb[0].mxu0 %v2824
      %v2969 = vpop.f32.mrb[0].mxu0
      %v2970 = vadd.f32 0.0, %v2969
      %v2971 = vpop.f32.mrb[0].mxu0
      %v2972 = vpop.f32.mrb[0].mxu0
      %v2973 = vadd.f32 0.0, %v2972
      %v2974 = vpop.f32.mrb[0].mxu0
      %2975 = vmatprep.mubr.bf16.mxu0 0
      %2976 = vmatmul.mubr.bf16.gmra.mrb[0].mxu0 %v2827
      %v2977 = vpop.f32.mrb[0].mxu0
      %v2978 = vadd.f32 0.0, %v2977
      %v2979 = vpop.f32.mrb[0].mxu0
      %v2980 = vpop.f32.mrb[0].mxu0
      %v2981 = vadd.f32 0.0, %v2980
      %v2982 = vpop.f32.mrb[0].mxu0
      %2983 = vmatprep.mubr.bf16.mxu0 0
      %2984 = vmatmul.mubr.bf16.gmra.mrb[0].mxu0 %v2830
      %v2985 = vpop.f32.mrb[0].mxu0
      %v2986 = vadd.f32 0.0, %v2985
      %v2987 = vpop.f32.mrb[0].mxu0
      %v2988 = vpop.f32.mrb[0].mxu0
      %v2989 = vadd.f32 0.0, %v2988
      %v2990 = vpop.f32.mrb[0].mxu0
      %2991 = vmatprep.mubr.bf16.mxu0 0
      %2992 = vmatmul.mubr.bf16.gmra.mrb[0].mxu0 %v2833
      %v2993 = vpop.f32.mrb[0].mxu0
      %v2994 = vadd.f32 0.0, %v2993
      %v2995 = vpop.f32.mrb[0].mxu0
      %v2996 = vpop.f32.mrb[0].mxu0
      %v2997 = vadd.f32 0.0, %v2996
      %v2998 = vpop.f32.mrb[0].mxu0
      %2999 = vmatprep.mubr.bf16.mxu0 0
      %3000 = vmatmul.mubr.bf16.gmra.mrb[0].mxu0 %v2836
      %v3001 = vpop.f32.mrb[0].mxu0
      %v3002 = vadd.f32 0.0, %v3001
      %v3003 = vpop.f32.mrb[0].mxu0
      %v3004 = vpop.f32.mrb[0].mxu0
      %v3005 = vadd.f32 0.0, %v3004
      %v3006 = vpop.f32.mrb[0].mxu0
      %3007 = vmatprep.mubr.bf16.mxu0 0
      %3008 = vmatmul.mubr.bf16.gmra.mrb[0].mxu0 %v2839
      %v3009 = vpop.f32.mrb[0].mxu0
      %v3010 = vadd.f32 0.0, %v3009
      %v3011 = vpop.f32.mrb[0].mxu0
      %v3012 = vpop.f32.mrb[0].mxu0
      %v3013 = vadd.f32 0.0, %v3012
      %v3014 = vpop.f32.mrb[0].mxu0
      %3015 = vmatprep.mubr.bf16.mxu0 0
      %3016 = vmatmul.mubr.bf16.gmra.mrb[0].mxu0 %v2842
      %v3017 = vpop.f32.mrb[0].mxu0
      %v3018 = vadd.f32 0.0, %v3017
      %v3019 = vpop.f32.mrb[0].mxu0
      %v3020 = vpop.f32.mrb[0].mxu0
      %v3021 = vadd.f32 0.0, %v3020
      %v3022 = vpop.f32.mrb[0].mxu0
      %3023 = vdwg.mxu0
      %v3024 = vadd.f32 %v2698, %v2882
      %v3025 = vadd.f32 %v2699, %v2885
      %v3026 = vadd.f32 %v2700, %v2890
      %v3027 = vadd.f32 %v2701, %v2893
      %v3028 = vadd.f32 %v2702, %v2898
      %v3029 = vadd.f32 %v2703, %v2901
      %v3030 = vadd.f32 %v2704, %v2906
      %v3031 = vadd.f32 %v2705, %v2909
      %v3032 = vadd.f32 %v2706, %v2914
      %v3033 = vadd.f32 %v2707, %v2917
      %v3034 = vadd.f32 %v2708, %v2922
      %v3035 = vadd.f32 %v2709, %v2925
      %v3036 = vadd.f32 %v2710, %v2930
      %v3037 = vadd.f32 %v2711, %v2933
      %v3038 = vadd.f32 %v2712, %v2938
      %v3039 = vadd.f32 %v2713, %v2941
      %v3040 = vadd.f32 %v2714, %v2946
      %v3041 = vadd.f32 %v2715, %v2949
      %v3042 = vadd.f32 %v2716, %v2954
      %v3043 = vadd.f32 %v2717, %v2957
      %v3044 = vadd.f32 %v2718, %v2962
      %v3045 = vadd.f32 %v2719, %v2965
      %v3046 = vadd.f32 %v2720, %v2970
      %v3047 = vadd.f32 %v2721, %v2973
      %v3048 = vadd.f32 %v2722, %v2978
      %v3049 = vadd.f32 %v2723, %v2981
      %v3050 = vadd.f32 %v2724, %v2986
      %v3051 = vadd.f32 %v2725, %v2989
      %v3052 = vadd.f32 %v2726, %v2994
      %v3053 = vadd.f32 %v2727, %v2997
      %v3054 = vadd.f32 %v2728, %v3002
      %v3055 = vadd.f32 %v2729, %v3005
      %v3056 = vadd.f32 %v2730, %v3010
      %v3057 = vadd.f32 %v2731, %v3013
      %v3058 = vadd.f32 %v2732, %v3018
      %v3059 = vadd.f32 %v2733, %v3021
      %v3060 = vld [vmem:[#allocation2 + $0x26] sm:$0xff]
      %v3061 = vld [vmem:[#allocation2 + $0x2e] sm:$0xff]
      %v3062 = vld [vmem:[#allocation2 + $0x36] sm:$0xff]
      %v3063 = vld [vmem:[#allocation2 + $0x3e] sm:$0xff]
      %v3064 = vld [vmem:[#allocation2 + $0x46] sm:$0xff]
      %v3065 = vld [vmem:[#allocation2 + $0x4e] sm:$0xff]
      %v3066 = vld [vmem:[#allocation2 + $0x56] sm:$0xff]
      %v3067 = vld [vmem:[#allocation2 + $0x5e] sm:$0xff]
      %v3068 = vld [vmem:[#allocation2 + $0x66] sm:$0xff]
      %v3069 = vld [vmem:[#allocation2 + $0x6e] sm:$0xff]
      %v3070 = vld [vmem:[#allocation2 + $0x76] sm:$0xff]
      %v3071 = vld [vmem:[#allocation2 + $0x7e] sm:$0xff]
      %v3072 = vld [vmem:[#allocation2 + $0x86] sm:$0xff]
      %v3073 = vld [vmem:[#allocation2 + $0x8e] sm:$0xff]
      %v3074 = vld [vmem:[#allocation2 + $0x96] sm:$0xff]
      %v3075 = vld [vmem:[#allocation2 + $0x9e] sm:$0xff]
      %v3076 = vld [vmem:[#allocation2 + $0xa6] sm:$0xff]
      %v3077 = vld [vmem:[#allocation2 + $0xae] sm:$0xff]
      %v3078 = vld [vmem:[#allocation2 + $0xb6] sm:$0xff]
      %v3079 = vld [vmem:[#allocation2 + $0xbe] sm:$0xff]
      %v3080 = vld [vmem:[#allocation2 + $0xc6] sm:$0xff]
      %v3081 = vld [vmem:[#allocation2 + $0xce] sm:$0xff]
      %v3082 = vld [vmem:[#allocation2 + $0xd6] sm:$0xff]
      %v3083 = vld [vmem:[#allocation2 + $0xde] sm:$0xff]
      %v3084 = vld [vmem:[#allocation2 + $0xe6] sm:$0xff]
      %v3085 = vld [vmem:[#allocation2 + $0xee] sm:$0xff]
      %v3086 = vld [vmem:[#allocation2 + $0xf6] sm:$0xff]
      %v3087 = vld [vmem:[#allocation2 + $0xfe] sm:$0xff]
      %v3088 = vld [vmem:[#allocation2 + $0x106] sm:$0xff]
      %v3089 = vld [vmem:[#allocation2 + $0x10e] sm:$0xff]
      %v3090 = vld [vmem:[#allocation2 + $0x116] sm:$0xff]
      %v3091 = vld [vmem:[#allocation2 + $0x11e] sm:$0xff]
      %v3092 = vld [vmem:[#allocation2 + $0x126] sm:$0xff]
      %v3093 = vld [vmem:[#allocation2 + $0x12e] sm:$0xff]
      %v3094 = vld [vmem:[#allocation2 + $0x136] sm:$0xff]
      %v3095 = vld [vmem:[#allocation2 + $0x13e] sm:$0x3f]
      %v3096 = vpack.c.bf16 %v3061, %v3060
      %v3097 = vpack.c.bf16 %v3063, %v3062
      %v3098 = vpack.c.bf16 %v3065, %v3064
      %v3099 = vpack.c.bf16 %v3067, %v3066
      %v3100 = vpack.c.bf16 %v3069, %v3068
      %v3101 = vpack.c.bf16 %v3071, %v3070
      %v3102 = vpack.c.bf16 %v3073, %v3072
      %v3103 = vpack.c.bf16 %v3075, %v3074
      %v3104 = vpack.c.bf16 %v3077, %v3076
      %v3105 = vpack.c.bf16 %v3079, %v3078
      %v3106 = vpack.c.bf16 %v3081, %v3080
      %v3107 = vpack.c.bf16 %v3083, %v3082
      %v3108 = vpack.c.bf16 %v3085, %v3084
      %v3109 = vpack.c.bf16 %v3087, %v3086
      %v3110 = vpack.c.bf16 %v3089, %v3088
      %v3111 = vpack.c.bf16 %v3091, %v3090
      %v3112 = vpack.c.bf16 %v3093, %v3092
      %v3113 = vpack.c.bf16 %v3095, %v3094
      %s3114 = scalar_lea.vmem %s2, 16
      %v3115 = vld [vmem:[%s3114] sm:$0x3]
      %v3117 = vsel %vm445, %v3096, 0
      %v3120 = vsel %vm445, %v3097, 0
      %v3123 = vsel %vm445, %v3098, 0
      %v3126 = vsel %vm445, %v3099, 0
      %v3129 = vsel %vm445, %v3100, 0
      %v3132 = vsel %vm445, %v3101, 0
      %v3135 = vsel %vm445, %v3102, 0
      %v3138 = vsel %vm445, %v3103, 0
      %v3141 = vsel %vm445, %v3104, 0
      %v3144 = vsel %vm445, %v3105, 0
      %v3147 = vsel %vm445, %v3106, 0
      %v3150 = vsel %vm445, %v3107, 0
      %v3153 = vsel %vm445, %v3108, 0
      %v3156 = vsel %vm445, %v3109, 0
      %v3159 = vsel %vm445, %v3110, 0
      %v3162 = vsel %vm445, %v3111, 0
      %v3165 = vsel %vm445, %v3112, 0
      %v3168 = vsel %vm445, %v3113, 0
      %v3171 = vsel %vm689, %v3115, 0
      %3173 = vmatprep.subr.bf16.mxu0 0
      %3174 = vmatpush1.bf16.msra.mxu0 %v3171
      %3175 = vmatprep.subr.bf16.mxu0 0
      %3176 = vmatpush1.bf16.msra.mxu0 0
      %3177 = vmatprep.subr.bf16.mxu0 0
      %3178 = vmatpush1.bf16.msra.mxu0 0
      %3179 = vmatprep.subr.bf16.mxu0 0
      %3180 = vmatpush1.bf16.msra.mxu0 0
      %3181 = vmatprep.subr.bf16.mxu0 0
      %3182 = vmatpush1.bf16.msra.mxu0 0
      %3183 = vmatprep.subr.bf16.mxu0 0
      %3184 = vmatpush1.bf16.msra.mxu0 0
      %3185 = vmatprep.subr.bf16.mxu0 0
      %3186 = vmatpush1.bf16.msra.mxu0 0
      %3187 = vmatprep.subr.bf16.mxu0 0
      %3188 = vmatpush1.bf16.msra.mxu0 0
      %3189 = vmatprep.subr.bf16.mxu0 0
      %3190 = vmatpush1.bf16.msra.mxu0 0
      %3191 = vmatprep.subr.bf16.mxu0 0
      %3192 = vmatpush1.bf16.msra.mxu0 0
      %3193 = vmatprep.subr.bf16.mxu0 0
      %3194 = vmatpush1.bf16.msra.mxu0 0
      %3195 = vmatprep.subr.bf16.mxu0 0
      %3196 = vmatpush1.bf16.msra.mxu0 0
      %3197 = vmatprep.subr.bf16.mxu0 0
      %3198 = vmatpush1.bf16.msra.mxu0 0
      %3199 = vmatprep.subr.bf16.mxu0 0
      %3200 = vmatpush1.bf16.msra.mxu0 0
      %3201 = vmatprep.subr.bf16.mxu0 0
      %3202 = vmatpush1.bf16.msra.mxu0 0
      %3203 = vmatprep.subr.bf16.mxu0 0
      %3204 = vmatpush1.bf16.msra.mxu0 0
      %3205 = vmatprep.mubr.bf16.mxu0 0
      %3206 = vmatmul.mubr.bf16.gmra.mrb[0].mxu0 %v3117
      %v3207 = vpop.f32.mrb[0].mxu0
      %v3208 = vadd.f32 0.0, %v3207
      %v3209 = vpop.f32.mrb[0].mxu0
      %v3210 = vpop.f32.mrb[0].mxu0
      %v3211 = vadd.f32 0.0, %v3210
      %v3212 = vpop.f32.mrb[0].mxu0
      %3213 = vmatprep.mubr.bf16.mxu0 0
      %3214 = vmatmul.mubr.bf16.gmra.mrb[0].mxu0 %v3120
      %v3215 = vpop.f32.mrb[0].mxu0
      %v3216 = vadd.f32 0.0, %v3215
      %v3217 = vpop.f32.mrb[0].mxu0
      %v3218 = vpop.f32.mrb[0].mxu0
      %v3219 = vadd.f32 0.0, %v3218
      %v3220 = vpop.f32.mrb[0].mxu0
      %3221 = vmatprep.mubr.bf16.mxu0 0
      %3222 = vmatmul.mubr.bf16.gmra.mrb[0].mxu0 %v3123
      %v3223 = vpop.f32.mrb[0].mxu0
      %v3224 = vadd.f32 0.0, %v3223
      %v3225 = vpop.f32.mrb[0].mxu0
      %v3226 = vpop.f32.mrb[0].mxu0
      %v3227 = vadd.f32 0.0, %v3226
      %v3228 = vpop.f32.mrb[0].mxu0
      %3229 = vmatprep.mubr.bf16.mxu0 0
      %3230 = vmatmul.mubr.bf16.gmra.mrb[0].mxu0 %v3126
      %v3231 = vpop.f32.mrb[0].mxu0
      %v3232 = vadd.f32 0.0, %v3231
      %v3233 = vpop.f32.mrb[0].mxu0
      %v3234 = vpop.f32.mrb[0].mxu0
      %v3235 = vadd.f32 0.0, %v3234
      %v3236 = vpop.f32.mrb[0].mxu0
      %3237 = vmatprep.mubr.bf16.mxu0 0
      %3238 = vmatmul.mubr.bf16.gmra.mrb[0].mxu0 %v3129
      %v3239 = vpop.f32.mrb[0].mxu0
      %v3240 = vadd.f32 0.0, %v3239
      %v3241 = vpop.f32.mrb[0].mxu0
      %v3242 = vpop.f32.mrb[0].mxu0
      %v3243 = vadd.f32 0.0, %v3242
      %v3244 = vpop.f32.mrb[0].mxu0
      %3245 = vmatprep.mubr.bf16.mxu0 0
      %3246 = vmatmul.mubr.bf16.gmra.mrb[0].mxu0 %v3132
      %v3247 = vpop.f32.mrb[0].mxu0
      %v3248 = vadd.f32 0.0, %v3247
      %v3249 = vpop.f32.mrb[0].mxu0
      %v3250 = vpop.f32.mrb[0].mxu0
      %v3251 = vadd.f32 0.0, %v3250
      %v3252 = vpop.f32.mrb[0].mxu0
      %3253 = vmatprep.mubr.bf16.mxu0 0
      %3254 = vmatmul.mubr.bf16.gmra.mrb[0].mxu0 %v3135
      %v3255 = vpop.f32.mrb[0].mxu0
      %v3256 = vadd.f32 0.0, %v3255
      %v3257 = vpop.f32.mrb[0].mxu0
      %v3258 = vpop.f32.mrb[0].mxu0
      %v3259 = vadd.f32 0.0, %v3258
      %v3260 = vpop.f32.mrb[0].mxu0
      %3261 = vmatprep.mubr.bf16.mxu0 0
      %3262 = vmatmul.mubr.bf16.gmra.mrb[0].mxu0 %v3138
      %v3263 = vpop.f32.mrb[0].mxu0
      %v3264 = vadd.f32 0.0, %v3263
      %v3265 = vpop.f32.mrb[0].mxu0
      %v3266 = vpop.f32.mrb[0].mxu0
      %v3267 = vadd.f32 0.0, %v3266
      %v3268 = vpop.f32.mrb[0].mxu0
      %3269 = vmatprep.mubr.bf16.mxu0 0
      %3270 = vmatmul.mubr.bf16.gmra.mrb[0].mxu0 %v3141
      %v3271 = vpop.f32.mrb[0].mxu0
      %v3272 = vadd.f32 0.0, %v3271
      %v3273 = vpop.f32.mrb[0].mxu0
      %v3274 = vpop.f32.mrb[0].mxu0
      %v3275 = vadd.f32 0.0, %v3274
      %v3276 = vpop.f32.mrb[0].mxu0
      %3277 = vmatprep.mubr.bf16.mxu0 0
      %3278 = vmatmul.mubr.bf16.gmra.mrb[0].mxu0 %v3144
      %v3279 = vpop.f32.mrb[0].mxu0
      %v3280 = vadd.f32 0.0, %v3279
      %v3281 = vpop.f32.mrb[0].mxu0
      %v3282 = vpop.f32.mrb[0].mxu0
      %v3283 = vadd.f32 0.0, %v3282
      %v3284 = vpop.f32.mrb[0].mxu0
      %3285 = vmatprep.mubr.bf16.mxu0 0
      %3286 = vmatmul.mubr.bf16.gmra.mrb[0].mxu0 %v3147
      %v3287 = vpop.f32.mrb[0].mxu0
      %v3288 = vadd.f32 0.0, %v3287
      %v3289 = vpop.f32.mrb[0].mxu0
      %v3290 = vpop.f32.mrb[0].mxu0
      %v3291 = vadd.f32 0.0, %v3290
      %v3292 = vpop.f32.mrb[0].mxu0
      %3293 = vmatprep.mubr.bf16.mxu0 0
      %3294 = vmatmul.mubr.bf16.gmra.mrb[0].mxu0 %v3150
      %v3295 = vpop.f32.mrb[0].mxu0
      %v3296 = vadd.f32 0.0, %v3295
      %v3297 = vpop.f32.mrb[0].mxu0
      %v3298 = vpop.f32.mrb[0].mxu0
      %v3299 = vadd.f32 0.0, %v3298
      %v3300 = vpop.f32.mrb[0].mxu0
      %3301 = vmatprep.mubr.bf16.mxu0 0
      %3302 = vmatmul.mubr.bf16.gmra.mrb[0].mxu0 %v3153
      %v3303 = vpop.f32.mrb[0].mxu0
      %v3304 = vadd.f32 0.0, %v3303
      %v3305 = vpop.f32.mrb[0].mxu0
      %v3306 = vpop.f32.mrb[0].mxu0
      %v3307 = vadd.f32 0.0, %v3306
      %v3308 = vpop.f32.mrb[0].mxu0
      %3309 = vmatprep.mubr.bf16.mxu0 0
      %3310 = vmatmul.mubr.bf16.gmra.mrb[0].mxu0 %v3156
      %v3311 = vpop.f32.mrb[0].mxu0
      %v3312 = vadd.f32 0.0, %v3311
      %v3313 = vpop.f32.mrb[0].mxu0
      %v3314 = vpop.f32.mrb[0].mxu0
      %v3315 = vadd.f32 0.0, %v3314
      %v3316 = vpop.f32.mrb[0].mxu0
      %3317 = vmatprep.mubr.bf16.mxu0 0
      %3318 = vmatmul.mubr.bf16.gmra.mrb[0].mxu0 %v3159
      %v3319 = vpop.f32.mrb[0].mxu0
      %v3320 = vadd.f32 0.0, %v3319
      %v3321 = vpop.f32.mrb[0].mxu0
      %v3322 = vpop.f32.mrb[0].mxu0
      %v3323 = vadd.f32 0.0, %v3322
      %v3324 = vpop.f32.mrb[0].mxu0
      %3325 = vmatprep.mubr.bf16.mxu0 0
      %3326 = vmatmul.mubr.bf16.gmra.mrb[0].mxu0 %v3162
      %v3327 = vpop.f32.mrb[0].mxu0
      %v3328 = vadd.f32 0.0, %v3327
      %v3329 = vpop.f32.mrb[0].mxu0
      %v3330 = vpop.f32.mrb[0].mxu0
      %v3331 = vadd.f32 0.0, %v3330
      %v3332 = vpop.f32.mrb[0].mxu0
      %3333 = vmatprep.mubr.bf16.mxu0 0
      %3334 = vmatmul.mubr.bf16.gmra.mrb[0].mxu0 %v3165
      %v3335 = vpop.f32.mrb[0].mxu0
      %v3336 = vadd.f32 0.0, %v3335
      %v3337 = vpop.f32.mrb[0].mxu0
      %v3338 = vpop.f32.mrb[0].mxu0
      %v3339 = vadd.f32 0.0, %v3338
      %v3340 = vpop.f32.mrb[0].mxu0
      %3341 = vmatprep.mubr.bf16.mxu0 0
      %3342 = vmatmul.mubr.bf16.gmra.mrb[0].mxu0 %v3168
      %v3343 = vpop.f32.mrb[0].mxu0
      %v3344 = vadd.f32 0.0, %v3343
      %v3345 = vpop.f32.mrb[0].mxu0
      %v3346 = vpop.f32.mrb[0].mxu0
      %v3347 = vadd.f32 0.0, %v3346
      %v3348 = vpop.f32.mrb[0].mxu0
      %3349 = vdwg.mxu0
      %v3350 = vadd.f32 %v3024, %v3208
      %v3351 = vadd.f32 %v3025, %v3211
      %v3352 = vadd.f32 %v3026, %v3216
      %v3353 = vadd.f32 %v3027, %v3219
      %v3354 = vadd.f32 %v3028, %v3224
      %v3355 = vadd.f32 %v3029, %v3227
      %v3356 = vadd.f32 %v3030, %v3232
      %v3357 = vadd.f32 %v3031, %v3235
      %v3358 = vadd.f32 %v3032, %v3240
      %v3359 = vadd.f32 %v3033, %v3243
      %v3360 = vadd.f32 %v3034, %v3248
      %v3361 = vadd.f32 %v3035, %v3251
      %v3362 = vadd.f32 %v3036, %v3256
      %v3363 = vadd.f32 %v3037, %v3259
      %v3364 = vadd.f32 %v3038, %v3264
      %v3365 = vadd.f32 %v3039, %v3267
      %v3366 = vadd.f32 %v3040, %v3272
      %v3367 = vadd.f32 %v3041, %v3275
      %v3368 = vadd.f32 %v3042, %v3280
      %v3369 = vadd.f32 %v3043, %v3283
      %v3370 = vadd.f32 %v3044, %v3288
      %v3371 = vadd.f32 %v3045, %v3291
      %v3372 = vadd.f32 %v3046, %v3296
      %v3373 = vadd.f32 %v3047, %v3299
      %v3374 = vadd.f32 %v3048, %v3304
      %v3375 = vadd.f32 %v3049, %v3307
      %v3376 = vadd.f32 %v3050, %v3312
      %v3377 = vadd.f32 %v3051, %v3315
      %v3378 = vadd.f32 %v3052, %v3320
      %v3379 = vadd.f32 %v3053, %v3323
      %v3380 = vadd.f32 %v3054, %v3328
      %v3381 = vadd.f32 %v3055, %v3331
      %v3382 = vadd.f32 %v3056, %v3336
      %v3383 = vadd.f32 %v3057, %v3339
      %v3384 = vadd.f32 %v3058, %v3344
      %v3385 = vadd.f32 %v3059, %v3347
      %v3386 = vld [vmem:[%s3] sm:$0x1]
      %v3388 = vlaneseq
      %v3389 = vshrl.u32 %v3388, 7
      %v3390 = vsub.s32 0, %v3389
      %v3391 = vrot.slane %v3386, %v3390
      %v3393 = vadd.f32 %v3350, %v3391
      %v3394 = vadd.f32 %v3351, %v3391
      %v3395 = vadd.f32 %v3352, %v3391
      %v3396 = vadd.f32 %v3353, %v3391
      %v3397 = vadd.f32 %v3354, %v3391
      %v3398 = vadd.f32 %v3355, %v3391
      %v3399 = vadd.f32 %v3356, %v3391
      %v3400 = vadd.f32 %v3357, %v3391
      %v3401 = vadd.f32 %v3358, %v3391
      %v3402 = vadd.f32 %v3359, %v3391
      %v3403 = vadd.f32 %v3360, %v3391
      %v3404 = vadd.f32 %v3361, %v3391
      %v3405 = vadd.f32 %v3362, %v3391
      %v3406 = vadd.f32 %v3363, %v3391
      %v3407 = vadd.f32 %v3364, %v3391
      %v3408 = vadd.f32 %v3365, %v3391
      %v3409 = vadd.f32 %v3366, %v3391
      %v3410 = vadd.f32 %v3367, %v3391
      %v3411 = vadd.f32 %v3368, %v3391
      %v3412 = vadd.f32 %v3369, %v3391
      %v3413 = vadd.f32 %v3370, %v3391
      %v3414 = vadd.f32 %v3371, %v3391
      %v3415 = vadd.f32 %v3372, %v3391
      %v3416 = vadd.f32 %v3373, %v3391
      %v3417 = vadd.f32 %v3374, %v3391
      %v3418 = vadd.f32 %v3375, %v3391
      %v3419 = vadd.f32 %v3376, %v3391
      %v3420 = vadd.f32 %v3377, %v3391
      %v3421 = vadd.f32 %v3378, %v3391
      %v3422 = vadd.f32 %v3379, %v3391
      %v3423 = vadd.f32 %v3380, %v3391
      %v3424 = vadd.f32 %v3381, %v3391
      %v3425 = vadd.f32 %v3382, %v3391
      %v3426 = vadd.f32 %v3383, %v3391
      %v3427 = vadd.f32 %v3384, %v3391
      %v3428 = vadd.f32 %v3385, %v3391
      %v3429 = vmax.f32 %v3393, 0.0
      %v3430 = vmax.f32 %v3394, 0.0
      %v3431 = vmax.f32 %v3395, 0.0
      %v3432 = vmax.f32 %v3396, 0.0
      %v3433 = vmax.f32 %v3397, 0.0
      %v3434 = vmax.f32 %v3398, 0.0
      %v3435 = vmax.f32 %v3399, 0.0
      %v3436 = vmax.f32 %v3400, 0.0
      %v3437 = vmax.f32 %v3401, 0.0
      %v3438 = vmax.f32 %v3402, 0.0
      %v3439 = vmax.f32 %v3403, 0.0
      %v3440 = vmax.f32 %v3404, 0.0
      %v3441 = vmax.f32 %v3405, 0.0
      %v3442 = vmax.f32 %v3406, 0.0
      %v3443 = vmax.f32 %v3407, 0.0
      %v3444 = vmax.f32 %v3408, 0.0
      %v3445 = vmax.f32 %v3409, 0.0
      %v3446 = vmax.f32 %v3410, 0.0
      %v3447 = vmax.f32 %v3411, 0.0
      %v3448 = vmax.f32 %v3412, 0.0
      %v3449 = vmax.f32 %v3413, 0.0
      %v3450 = vmax.f32 %v3414, 0.0
      %v3451 = vmax.f32 %v3415, 0.0
      %v3452 = vmax.f32 %v3416, 0.0
      %v3453 = vmax.f32 %v3417, 0.0
      %v3454 = vmax.f32 %v3418, 0.0
      %v3455 = vmax.f32 %v3419, 0.0
      %v3456 = vmax.f32 %v3420, 0.0
      %v3457 = vmax.f32 %v3421, 0.0
      %v3458 = vmax.f32 %v3422, 0.0
      %v3459 = vmax.f32 %v3423, 0.0
      %v3460 = vmax.f32 %v3424, 0.0
      %v3461 = vmax.f32 %v3425, 0.0
      %v3462 = vmax.f32 %v3426, 0.0
      %v3463 = vmax.f32 %v3427, 0.0
      %v3464 = vmax.f32 %v3428, 0.0
      %3466 = vset.pattern.permute.xlu0 0
      %3467 = vperm.xlu0 %3466, %v488
      %v3468 = vpop.permute.xlu0 %3467
      %3471 = vset.pattern.permute.xlu0 0
      %3472 = vperm.xlu0 %3471, %v489
      %v3473 = vpop.permute.xlu0 %3472
      %3476 = vset.pattern.permute.xlu0 0
      %3477 = vperm.xlu0 %3476, %v490
      %v3478 = vpop.permute.xlu0 %3477
      %3481 = vset.pattern.permute.xlu0 0
      %3482 = vperm.xlu0 %3481, %v491
      %v3483 = vpop.permute.xlu0 %3482
      %3486 = vset.pattern.permute.xlu0 0
      %3487 = vperm.xlu0 %3486, %v492
      %v3488 = vpop.permute.xlu0 %3487
      %3491 = vset.pattern.permute.xlu0 0
      %3492 = vperm.xlu0 %3491, %v493
      %v3493 = vpop.permute.xlu0 %3492
      %3496 = vset.pattern.permute.xlu0 0
      %3497 = vperm.xlu0 %3496, %v494
      %v3498 = vpop.permute.xlu0 %3497
      %3501 = vset.pattern.permute.xlu0 0
      %3502 = vperm.xlu0 %3501, %v495
      %v3503 = vpop.permute.xlu0 %3502
      %3506 = vset.pattern.permute.xlu0 0
      %3507 = vperm.xlu0 %3506, %v496
      %v3508 = vpop.permute.xlu0 %3507
      %3511 = vset.pattern.permute.xlu0 0
      %3512 = vperm.xlu0 %3511, %v497
      %v3513 = vpop.permute.xlu0 %3512
      %3516 = vset.pattern.permute.xlu0 0
      %3517 = vperm.xlu0 %3516, %v498
      %v3518 = vpop.permute.xlu0 %3517
      %3521 = vset.pattern.permute.xlu0 0
      %3522 = vperm.xlu0 %3521, %v499
      %v3523 = vpop.permute.xlu0 %3522
      %3526 = vset.pattern.permute.xlu0 0
      %3527 = vperm.xlu0 %3526, %v500
      %v3528 = vpop.permute.xlu0 %3527
      %3531 = vset.pattern.permute.xlu0 0
      %3532 = vperm.xlu0 %3531, %v501
      %v3533 = vpop.permute.xlu0 %3532
      %3536 = vset.pattern.permute.xlu0 0
      %3537 = vperm.xlu0 %3536, %v502
      %v3538 = vpop.permute.xlu0 %3537
      %3541 = vset.pattern.permute.xlu0 0
      %3542 = vperm.xlu0 %3541, %v503
      %v3543 = vpop.permute.xlu0 %3542
      %3546 = vset.pattern.permute.xlu0 0
      %3547 = vperm.xlu0 %3546, %v504
      %v3548 = vpop.permute.xlu0 %3547
      %3551 = vset.pattern.permute.xlu0 0
      %3552 = vperm.xlu0 %3551, %v505
      %v3553 = vpop.permute.xlu0 %3552
      %3556 = vset.pattern.permute.xlu0 0
      %3557 = vperm.xlu0 %3556, %v506
      %v3558 = vpop.permute.xlu0 %3557
      %3561 = vset.pattern.permute.xlu0 0
      %3562 = vperm.xlu0 %3561, %v507
      %v3563 = vpop.permute.xlu0 %3562
      %3566 = vset.pattern.permute.xlu0 0
      %3567 = vperm.xlu0 %3566, %v508
      %v3568 = vpop.permute.xlu0 %3567
      %3571 = vset.pattern.permute.xlu0 0
      %3572 = vperm.xlu0 %3571, %v509
      %v3573 = vpop.permute.xlu0 %3572
      %3576 = vset.pattern.permute.xlu0 0
      %3577 = vperm.xlu0 %3576, %v510
      %v3578 = vpop.permute.xlu0 %3577
      %3581 = vset.pattern.permute.xlu0 0
      %3582 = vperm.xlu0 %3581, %v511
      %v3583 = vpop.permute.xlu0 %3582
      %3586 = vset.pattern.permute.xlu0 0
      %3587 = vperm.xlu0 %3586, %v512
      %v3588 = vpop.permute.xlu0 %3587
      %3591 = vset.pattern.permute.xlu0 0
      %3592 = vperm.xlu0 %3591, %v513
      %v3593 = vpop.permute.xlu0 %3592
      %3596 = vset.pattern.permute.xlu0 0
      %3597 = vperm.xlu0 %3596, %v514
      %v3598 = vpop.permute.xlu0 %3597
      %3601 = vset.pattern.permute.xlu0 0
      %3602 = vperm.xlu0 %3601, %v515
      %v3603 = vpop.permute.xlu0 %3602
      %3606 = vset.pattern.permute.xlu0 0
      %3607 = vperm.xlu0 %3606, %v516
      %v3608 = vpop.permute.xlu0 %3607
      %3611 = vset.pattern.permute.xlu0 0
      %3612 = vperm.xlu0 %3611, %v517
      %v3613 = vpop.permute.xlu0 %3612
      %3616 = vset.pattern.permute.xlu0 0
      %3617 = vperm.xlu0 %3616, %v518
      %v3618 = vpop.permute.xlu0 %3617
      %3621 = vset.pattern.permute.xlu0 0
      %3622 = vperm.xlu0 %3621, %v519
      %v3623 = vpop.permute.xlu0 %3622
      %3626 = vset.pattern.permute.xlu0 0
      %3627 = vperm.xlu0 %3626, %v520
      %v3628 = vpop.permute.xlu0 %3627
      %3631 = vset.pattern.permute.xlu0 0
      %3632 = vperm.xlu0 %3631, %v521
      %v3633 = vpop.permute.xlu0 %3632
      %3636 = vset.pattern.permute.xlu0 0
      %3637 = vperm.xlu0 %3636, %v522
      %v3638 = vpop.permute.xlu0 %3637
      %3641 = vset.pattern.permute.xlu0 0
      %3642 = vperm.xlu0 %3641, %v523
      %v3643 = vpop.permute.xlu0 %3642
      %v3645 = vmul.f32 %v3429, %v3468
      %v3646 = vmul.f32 %v3430, %v3473
      %v3647 = vmul.f32 %v3431, %v3478
      %v3648 = vmul.f32 %v3432, %v3483
      %v3649 = vmul.f32 %v3433, %v3488
      %v3650 = vmul.f32 %v3434, %v3493
      %v3651 = vmul.f32 %v3435, %v3498
      %v3652 = vmul.f32 %v3436, %v3503
      %v3653 = vmul.f32 %v3437, %v3508
      %v3654 = vmul.f32 %v3438, %v3513
      %v3655 = vmul.f32 %v3439, %v3518
      %v3656 = vmul.f32 %v3440, %v3523
      %v3657 = vmul.f32 %v3441, %v3528
      %v3658 = vmul.f32 %v3442, %v3533
      %v3659 = vmul.f32 %v3443, %v3538
      %v3660 = vmul.f32 %v3444, %v3543
      %v3661 = vmul.f32 %v3445, %v3548
      %v3662 = vmul.f32 %v3446, %v3553
      %v3663 = vmul.f32 %v3447, %v3558
      %v3664 = vmul.f32 %v3448, %v3563
      %v3665 = vmul.f32 %v3449, %v3568
      %v3666 = vmul.f32 %v3450, %v3573
      %v3667 = vmul.f32 %v3451, %v3578
      %v3668 = vmul.f32 %v3452, %v3583
      %v3669 = vmul.f32 %v3453, %v3588
      %v3670 = vmul.f32 %v3454, %v3593
      %v3671 = vmul.f32 %v3455, %v3598
      %v3672 = vmul.f32 %v3456, %v3603
      %v3673 = vmul.f32 %v3457, %v3608
      %v3674 = vmul.f32 %v3458, %v3613
      %v3675 = vmul.f32 %v3459, %v3618
      %v3676 = vmul.f32 %v3460, %v3623
      %v3677 = vmul.f32 %v3461, %v3628
      %v3678 = vmul.f32 %v3462, %v3633
      %v3679 = vmul.f32 %v3463, %v3638
      %v3680 = vmul.f32 %v3464, %v3643
      %3717 = vrot.lane.b32.xlu0 %v3645, 4
      %v3718 = vpop.permute.xlu0 %3717
      %3719 = vrot.lane.b32.xlu0 %v3646, 4
      %v3720 = vpop.permute.xlu0 %3719
      %3721 = vrot.lane.b32.xlu0 %v3647, 4
      %v3722 = vpop.permute.xlu0 %3721
      %3723 = vrot.lane.b32.xlu0 %v3648, 4
      %v3724 = vpop.permute.xlu0 %3723
      %3725 = vrot.lane.b32.xlu0 %v3649, 4
      %v3726 = vpop.permute.xlu0 %3725
      %3727 = vrot.lane.b32.xlu0 %v3650, 4
      %v3728 = vpop.permute.xlu0 %3727
      %3729 = vrot.lane.b32.xlu0 %v3651, 4
      %v3730 = vpop.permute.xlu0 %3729
      %3731 = vrot.lane.b32.xlu0 %v3652, 4
      %v3732 = vpop.permute.xlu0 %3731
      %3733 = vrot.lane.b32.xlu0 %v3653, 4
      %v3734 = vpop.permute.xlu0 %3733
      %3735 = vrot.lane.b32.xlu0 %v3654, 4
      %v3736 = vpop.permute.xlu0 %3735
      %3737 = vrot.lane.b32.xlu0 %v3655, 4
      %v3738 = vpop.permute.xlu0 %3737
      %3739 = vrot.lane.b32.xlu0 %v3656, 4
      %v3740 = vpop.permute.xlu0 %3739
      %3741 = vrot.lane.b32.xlu0 %v3657, 4
      %v3742 = vpop.permute.xlu0 %3741
      %3743 = vrot.lane.b32.xlu0 %v3658, 4
      %v3744 = vpop.permute.xlu0 %3743
      %3745 = vrot.lane.b32.xlu0 %v3659, 4
      %v3746 = vpop.permute.xlu0 %3745
      %3747 = vrot.lane.b32.xlu0 %v3660, 4
      %v3748 = vpop.permute.xlu0 %3747
      %3749 = vrot.lane.b32.xlu0 %v3661, 4
      %v3750 = vpop.permute.xlu0 %3749
      %3751 = vrot.lane.b32.xlu0 %v3662, 4
      %v3752 = vpop.permute.xlu0 %3751
      %3753 = vrot.lane.b32.xlu0 %v3663, 4
      %v3754 = vpop.permute.xlu0 %3753
      %3755 = vrot.lane.b32.xlu0 %v3664, 4
      %v3756 = vpop.permute.xlu0 %3755
      %3757 = vrot.lane.b32.xlu0 %v3665, 4
      %v3758 = vpop.permute.xlu0 %3757
      %3759 = vrot.lane.b32.xlu0 %v3666, 4
      %v3760 = vpop.permute.xlu0 %3759
      %3761 = vrot.lane.b32.xlu0 %v3667, 4
      %v3762 = vpop.permute.xlu0 %3761
      %3763 = vrot.lane.b32.xlu0 %v3668, 4
      %v3764 = vpop.permute.xlu0 %3763
      %3765 = vrot.lane.b32.xlu0 %v3669, 4
      %v3766 = vpop.permute.xlu0 %3765
      %3767 = vrot.lane.b32.xlu0 %v3670, 4
      %v3768 = vpop.permute.xlu0 %3767
      %3769 = vrot.lane.b32.xlu0 %v3671, 4
      %v3770 = vpop.permute.xlu0 %3769
      %3771 = vrot.lane.b32.xlu0 %v3672, 4
      %v3772 = vpop.permute.xlu0 %3771
      %3773 = vrot.lane.b32.xlu0 %v3673, 4
      %v3774 = vpop.permute.xlu0 %3773
      %3775 = vrot.lane.b32.xlu0 %v3674, 4
      %v3776 = vpop.permute.xlu0 %3775
      %3777 = vrot.lane.b32.xlu0 %v3675, 4
      %v3778 = vpop.permute.xlu0 %3777
      %3779 = vrot.lane.b32.xlu0 %v3676, 4
      %v3780 = vpop.permute.xlu0 %3779
      %3781 = vrot.lane.b32.xlu0 %v3677, 4
      %v3782 = vpop.permute.xlu0 %3781
      %3783 = vrot.lane.b32.xlu0 %v3678, 4
      %v3784 = vpop.permute.xlu0 %3783
      %3785 = vrot.lane.b32.xlu0 %v3679, 4
      %v3786 = vpop.permute.xlu0 %3785
      %3787 = vrot.lane.b32.xlu0 %v3680, 4
      %v3788 = vpop.permute.xlu0 %3787
      %vm3825 = vcmask 64544
      %3826 = vst.msk [vmem:[#allocation2 + $0x13] sm:$0xff] %vm3825, %v3718
      %3827 = vst.msk [vmem:[#allocation2 + $0x1b] sm:$0xff] %vm3825, %v3720
      %3828 = vst.msk [vmem:[#allocation2 + $0x23] sm:$0xff] %vm3825, %v3722
      %3829 = vst.msk [vmem:[#allocation2 + $0x2b] sm:$0xff] %vm3825, %v3724
      %3830 = vst.msk [vmem:[#allocation2 + $0x33] sm:$0xff] %vm3825, %v3726
      %3831 = vst.msk [vmem:[#allocation2 + $0x3b] sm:$0xff] %vm3825, %v3728
      %3832 = vst.msk [vmem:[#allocation2 + $0x43] sm:$0xff] %vm3825, %v3730
      %3833 = vst.msk [vmem:[#allocation2 + $0x4b] sm:$0xff] %vm3825, %v3732
      %3834 = vst.msk [vmem:[#allocation2 + $0x53] sm:$0xff] %vm3825, %v3734
      %3835 = vst.msk [vmem:[#allocation2 + $0x5b] sm:$0xff] %vm3825, %v3736
      %3836 = vst.msk [vmem:[#allocation2 + $0x63] sm:$0xff] %vm3825, %v3738
      %3837 = vst.msk [vmem:[#allocation2 + $0x6b] sm:$0xff] %vm3825, %v3740
      %3838 = vst.msk [vmem:[#allocation2 + $0x73] sm:$0xff] %vm3825, %v3742
      %3839 = vst.msk [vmem:[#allocation2 + $0x7b] sm:$0xff] %vm3825, %v3744
      %3840 = vst.msk [vmem:[#allocation2 + $0x83] sm:$0xff] %vm3825, %v3746
      %3841 = vst.msk [vmem:[#allocation2 + $0x8b] sm:$0xff] %vm3825, %v3748
      %3842 = vst.msk [vmem:[#allocation2 + $0x93] sm:$0xff] %vm3825, %v3750
      %3843 = vst.msk [vmem:[#allocation2 + $0x9b] sm:$0xff] %vm3825, %v3752
      %3844 = vst.msk [vmem:[#allocation2 + $0xa3] sm:$0xff] %vm3825, %v3754
      %3845 = vst.msk [vmem:[#allocation2 + $0xab] sm:$0xff] %vm3825, %v3756
      %3846 = vst.msk [vmem:[#allocation2 + $0xb3] sm:$0xff] %vm3825, %v3758
      %3847 = vst.msk [vmem:[#allocation2 + $0xbb] sm:$0xff] %vm3825, %v3760
      %3848 = vst.msk [vmem:[#allocation2 + $0xc3] sm:$0xff] %vm3825, %v3762
      %3849 = vst.msk [vmem:[#allocation2 + $0xcb] sm:$0xff] %vm3825, %v3764
      %3850 = vst.msk [vmem:[#allocation2 + $0xd3] sm:$0xff] %vm3825, %v3766
      %3851 = vst.msk [vmem:[#allocation2 + $0xdb] sm:$0xff] %vm3825, %v3768
      %3852 = vst.msk [vmem:[#allocation2 + $0xe3] sm:$0xff] %vm3825, %v3770
      %3853 = vst.msk [vmem:[#allocation2 + $0xeb] sm:$0xff] %vm3825, %v3772
      %3854 = vst.msk [vmem:[#allocation2 + $0xf3] sm:$0xff] %vm3825, %v3774
      %3855 = vst.msk [vmem:[#allocation2 + $0xfb] sm:$0xff] %vm3825, %v3776
      %3856 = vst.msk [vmem:[#allocation2 + $0x103] sm:$0xff] %vm3825, %v3778
      %3857 = vst.msk [vmem:[#allocation2 + $0x10b] sm:$0xff] %vm3825, %v3780
      %3858 = vst.msk [vmem:[#allocation2 + $0x113] sm:$0xff] %vm3825, %v3782
      %3859 = vst.msk [vmem:[#allocation2 + $0x11b] sm:$0xff] %vm3825, %v3784
      %3860 = vst.msk [vmem:[#allocation2 + $0x123] sm:$0xff] %vm3825, %v3786
      %vm3861 = vcmask 62496
      %3862 = vst.msk [vmem:[#allocation2 + $0x12b] sm:$0x3f] %vm3861, %v3788
      %v3863 = vld [vmem:[#allocation2] sm:$0xff]
      %v3864 = vld [vmem:[#allocation2 + $0x8] sm:$0xff]
      %v3865 = vld [vmem:[#allocation2 + $0x10] sm:$0xff]
      %v3866 = vld [vmem:[#allocation2 + $0x18] sm:$0xff]
      %v3867 = vld [vmem:[#allocation2 + $0x20] sm:$0xff]
      %v3868 = vld [vmem:[#allocation2 + $0x28] sm:$0xff]
      %v3869 = vld [vmem:[#allocation2 + $0x30] sm:$0xff]
      %v3870 = vld [vmem:[#allocation2 + $0x38] sm:$0xff]
      %v3871 = vld [vmem:[#allocation2 + $0x40] sm:$0xff]
      %v3872 = vld [vmem:[#allocation2 + $0x48] sm:$0xff]
      %v3873 = vld [vmem:[#allocation2 + $0x50] sm:$0xff]
      %v3874 = vld [vmem:[#allocation2 + $0x58] sm:$0xff]
      %v3875 = vld [vmem:[#allocation2 + $0x60] sm:$0xff]
      %v3876 = vld [vmem:[#allocation2 + $0x68] sm:$0xff]
      %v3877 = vld [vmem:[#allocation2 + $0x70] sm:$0xff]
      %v3878 = vld [vmem:[#allocation2 + $0x78] sm:$0xff]
      %v3879 = vld [vmem:[#allocation2 + $0x80] sm:$0xff]
      %v3880 = vld [vmem:[#allocation2 + $0x88] sm:$0xff]
      %v3881 = vld [vmem:[#allocation2 + $0x90] sm:$0xff]
      %v3882 = vld [vmem:[#allocation2 + $0x98] sm:$0xff]
      %v3883 = vld [vmem:[#allocation2 + $0xa0] sm:$0xff]
      %v3884 = vld [vmem:[#allocation2 + $0xa8] sm:$0xff]
      %v3885 = vld [vmem:[#allocation2 + $0xb0] sm:$0xff]
      %v3886 = vld [vmem:[#allocation2 + $0xb8] sm:$0xff]
      %v3887 = vld [vmem:[#allocation2 + $0xc0] sm:$0xff]
      %v3888 = vld [vmem:[#allocation2 + $0xc8] sm:$0xff]
      %v3889 = vld [vmem:[#allocation2 + $0xd0] sm:$0xff]
      %v3890 = vld [vmem:[#allocation2 + $0xd8] sm:$0xff]
      %v3891 = vld [vmem:[#allocation2 + $0xe0] sm:$0xff]
      %v3892 = vld [vmem:[#allocation2 + $0xe8] sm:$0xff]
      %v3893 = vld [vmem:[#allocation2 + $0xf0] sm:$0xff]
      %v3894 = vld [vmem:[#allocation2 + $0xf8] sm:$0xff]
      %v3895 = vld [vmem:[#allocation2 + $0x100] sm:$0xff]
      %v3896 = vld [vmem:[#allocation2 + $0x108] sm:$0xff]
      %v3897 = vld [vmem:[#allocation2 + $0x110] sm:$0xff]
      %v3898 = vld [vmem:[#allocation2 + $0x118] sm:$0x3f]
      %v3899 = vpack.c.bf16 %v3864, %v3863
      %v3900 = vpack.c.bf16 %v3866, %v3865
      %v3901 = vpack.c.bf16 %v3868, %v3867
      %v3902 = vpack.c.bf16 %v3870, %v3869
      %v3903 = vpack.c.bf16 %v3872, %v3871
      %v3904 = vpack.c.bf16 %v3874, %v3873
      %v3905 = vpack.c.bf16 %v3876, %v3875
      %v3906 = vpack.c.bf16 %v3878, %v3877
      %v3907 = vpack.c.bf16 %v3880, %v3879
      %v3908 = vpack.c.bf16 %v3882, %v3881
      %v3909 = vpack.c.bf16 %v3884, %v3883
      %v3910 = vpack.c.bf16 %v3886, %v3885
      %v3911 = vpack.c.bf16 %v3888, %v3887
      %v3912 = vpack.c.bf16 %v3890, %v3889
      %v3913 = vpack.c.bf16 %v3892, %v3891
      %v3914 = vpack.c.bf16 %v3894, %v3893
      %v3915 = vpack.c.bf16 %v3896, %v3895
      %v3916 = vpack.c.bf16 %v3898, %v3897
      %v3917 = vld [vmem:[%s4] sm:$0xf]
      %v3918 = vld [vmem:[#allocation2 + $0x1] sm:$0xff]
      %v3919 = vld [vmem:[#allocation2 + $0x9] sm:$0xff]
      %v3920 = vld [vmem:[#allocation2 + $0x11] sm:$0xff]
      %v3921 = vld [vmem:[#allocation2 + $0x19] sm:$0xff]
      %v3922 = vld [vmem:[#allocation2 + $0x21] sm:$0xff]
      %v3923 = vld [vmem:[#allocation2 + $0x29] sm:$0xff]
      %v3924 = vld [vmem:[#allocation2 + $0x31] sm:$0xff]
      %v3925 = vld [vmem:[#allocation2 + $0x39] sm:$0xff]
      %v3926 = vld [vmem:[#allocation2 + $0x41] sm:$0xff]
      %v3927 = vld [vmem:[#allocation2 + $0x49] sm:$0xff]
      %v3928 = vld [vmem:[#allocation2 + $0x51] sm:$0xff]
      %v3929 = vld [vmem:[#allocation2 + $0x59] sm:$0xff]
      %v3930 = vld [vmem:[#allocation2 + $0x61] sm:$0xff]
      %v3931 = vld [vmem:[#allocation2 + $0x69] sm:$0xff]
      %v3932 = vld [vmem:[#allocation2 + $0x71] sm:$0xff]
      %v3933 = vld [vmem:[#allocation2 + $0x79] sm:$0xff]
      %v3934 = vld [vmem:[#allocation2 + $0x81] sm:$0xff]
      %v3935 = vld [vmem:[#allocation2 + $0x89] sm:$0xff]
      %v3936 = vld [vmem:[#allocation2 + $0x91] sm:$0xff]
      %v3937 = vld [vmem:[#allocation2 + $0x99] sm:$0xff]
      %v3938 = vld [vmem:[#allocation2 + $0xa1] sm:$0xff]
      %v3939 = vld [vmem:[#allocation2 + $0xa9] sm:$0xff]
      %v3940 = vld [vmem:[#allocation2 + $0xb1] sm:$0xff]
      %v3941 = vld [vmem:[#allocation2 + $0xb9] sm:$0xff]
      %v3942 = vld [vmem:[#allocation2 + $0xc1] sm:$0xff]
      %v3943 = vld [vmem:[#allocation2 + $0xc9] sm:$0xff]
      %v3944 = vld [vmem:[#allocation2 + $0xd1] sm:$0xff]
      %v3945 = vld [vmem:[#allocation2 + $0xd9] sm:$0xff]
      %v3946 = vld [vmem:[#allocation2 + $0xe1] sm:$0xff]
      %v3947 = vld [vmem:[#allocation2 + $0xe9] sm:$0xff]
      %v3948 = vld [vmem:[#allocation2 + $0xf1] sm:$0xff]
      %v3949 = vld [vmem:[#allocation2 + $0xf9] sm:$0xff]
      %v3950 = vld [vmem:[#allocation2 + $0x101] sm:$0xff]
      %v3951 = vld [vmem:[#allocation2 + $0x109] sm:$0xff]
      %v3952 = vld [vmem:[#allocation2 + $0x111] sm:$0xff]
      %v3953 = vld [vmem:[#allocation2 + $0x119] sm:$0x3f]
      %v3954 = vpack.c.bf16 %v3919, %v3918
      %v3955 = vpack.c.bf16 %v3921, %v3920
      %v3956 = vpack.c.bf16 %v3923, %v3922
      %v3957 = vpack.c.bf16 %v3925, %v3924
      %v3958 = vpack.c.bf16 %v3927, %v3926
      %v3959 = vpack.c.bf16 %v3929, %v3928
      %v3960 = vpack.c.bf16 %v3931, %v3930
      %v3961 = vpack.c.bf16 %v3933, %v3932
      %v3962 = vpack.c.bf16 %v3935, %v3934
      %v3963 = vpack.c.bf16 %v3937, %v3936
      %v3964 = vpack.c.bf16 %v3939, %v3938
      %v3965 = vpack.c.bf16 %v3941, %v3940
      %v3966 = vpack.c.bf16 %v3943, %v3942
      %v3967 = vpack.c.bf16 %v3945, %v3944
      %v3968 = vpack.c.bf16 %v3947, %v3946
      %v3969 = vpack.c.bf16 %v3949, %v3948
      %v3970 = vpack.c.bf16 %v3951, %v3950
      %v3971 = vpack.c.bf16 %v3953, %v3952
      %s3972 = scalar_lea.vmem %s4, 4
      %v3973 = vld [vmem:[%s3972] sm:$0xf]
      %vm3974 = vcmask 64512
      %v3976 = vsel %vm3974, %v3954, 0
      %v3979 = vsel %vm3974, %v3955, 0
      %v3982 = vsel %vm3974, %v3956, 0
      %v3985 = vsel %vm3974, %v3957, 0
      %v3988 = vsel %vm3974, %v3958, 0
      %v3991 = vsel %vm3974, %v3959, 0
      %v3994 = vsel %vm3974, %v3960, 0
      %v3997 = vsel %vm3974, %v3961, 0
      %v4000 = vsel %vm3974, %v3962, 0
      %v4003 = vsel %vm3974, %v3963, 0
      %v4006 = vsel %vm3974, %v3964, 0
      %v4009 = vsel %vm3974, %v3965, 0
      %v4012 = vsel %vm3974, %v3966, 0
      %v4015 = vsel %vm3974, %v3967, 0
      %v4018 = vsel %vm3974, %v3968, 0
      %v4021 = vsel %vm3974, %v3969, 0
      %v4024 = vsel %vm3974, %v3970, 0
      %v4027 = vsel %vm3974, %v3971, 0
      %vm4029 = vcmask 1043456
      %v4031 = vsel %vm4029, %v3973, 0
      %4033 = vmatprep.subr.bf16.mxu0 0
      %4034 = vmatpush1.bf16.msra.mxu0 %v4031
      %4035 = vmatprep.subr.bf16.mxu0 0
      %4036 = vmatpush1.bf16.msra.mxu0 0
      %4037 = vmatprep.subr.bf16.mxu0 0
      %4038 = vmatpush1.bf16.msra.mxu0 0
      %4039 = vmatprep.subr.bf16.mxu0 0
      %4040 = vmatpush1.bf16.msra.mxu0 0
      %4041 = vmatprep.subr.bf16.mxu0 0
      %4042 = vmatpush1.bf16.msra.mxu0 0
      %4043 = vmatprep.subr.bf16.mxu0 0
      %4044 = vmatpush1.bf16.msra.mxu0 0
      %4045 = vmatprep.subr.bf16.mxu0 0
      %4046 = vmatpush1.bf16.msra.mxu0 0
      %4047 = vmatprep.subr.bf16.mxu0 0
      %4048 = vmatpush1.bf16.msra.mxu0 0
      %4049 = vmatprep.subr.bf16.mxu0 0
      %4050 = vmatpush1.bf16.msra.mxu0 0
      %4051 = vmatprep.subr.bf16.mxu0 0
      %4052 = vmatpush1.bf16.msra.mxu0 0
      %4053 = vmatprep.subr.bf16.mxu0 0
      %4054 = vmatpush1.bf16.msra.mxu0 0
      %4055 = vmatprep.subr.bf16.mxu0 0
      %4056 = vmatpush1.bf16.msra.mxu0 0
      %4057 = vmatprep.subr.bf16.mxu0 0
      %4058 = vmatpush1.bf16.msra.mxu0 0
      %4059 = vmatprep.subr.bf16.mxu0 0
      %4060 = vmatpush1.bf16.msra.mxu0 0
      %4061 = vmatprep.subr.bf16.mxu0 0
      %4062 = vmatpush1.bf16.msra.mxu0 0
      %4063 = vmatprep.subr.bf16.mxu0 0
      %4064 = vmatpush1.bf16.msra.mxu0 0
      %4065 = vmatprep.mubr.bf16.mxu0 0
      %4066 = vmatmul.mubr.bf16.gmra.mrb[0].mxu0 %v3976
      %v4067 = vpop.f32.mrb[0].mxu0
      %v4068 = vadd.f32 0.0, %v4067
      %v4069 = vpop.f32.mrb[0].mxu0
      %v4070 = vpop.f32.mrb[0].mxu0
      %v4071 = vadd.f32 0.0, %v4070
      %v4072 = vpop.f32.mrb[0].mxu0
      %4073 = vmatprep.mubr.bf16.mxu0 0
      %4074 = vmatmul.mubr.bf16.gmra.mrb[0].mxu0 %v3979
      %v4075 = vpop.f32.mrb[0].mxu0
      %v4076 = vadd.f32 0.0, %v4075
      %v4077 = vpop.f32.mrb[0].mxu0
      %v4078 = vpop.f32.mrb[0].mxu0
      %v4079 = vadd.f32 0.0, %v4078
      %v4080 = vpop.f32.mrb[0].mxu0
      %4081 = vmatprep.mubr.bf16.mxu0 0
      %4082 = vmatmul.mubr.bf16.gmra.mrb[0].mxu0 %v3982
      %v4083 = vpop.f32.mrb[0].mxu0
      %v4084 = vadd.f32 0.0, %v4083
      %v4085 = vpop.f32.mrb[0].mxu0
      %v4086 = vpop.f32.mrb[0].mxu0
      %v4087 = vadd.f32 0.0, %v4086
      %v4088 = vpop.f32.mrb[0].mxu0
      %4089 = vmatprep.mubr.bf16.mxu0 0
      %4090 = vmatmul.mubr.bf16.gmra.mrb[0].mxu0 %v3985
      %v4091 = vpop.f32.mrb[0].mxu0
      %v4092 = vadd.f32 0.0, %v4091
      %v4093 = vpop.f32.mrb[0].mxu0
      %v4094 = vpop.f32.mrb[0].mxu0
      %v4095 = vadd.f32 0.0, %v4094
      %v4096 = vpop.f32.mrb[0].mxu0
      %4097 = vmatprep.mubr.bf16.mxu0 0
      %4098 = vmatmul.mubr.bf16.gmra.mrb[0].mxu0 %v3988
      %v4099 = vpop.f32.mrb[0].mxu0
      %v4100 = vadd.f32 0.0, %v4099
      %v4101 = vpop.f32.mrb[0].mxu0
      %v4102 = vpop.f32.mrb[0].mxu0
      %v4103 = vadd.f32 0.0, %v4102
      %v4104 = vpop.f32.mrb[0].mxu0
      %4105 = vmatprep.mubr.bf16.mxu0 0
      %4106 = vmatmul.mubr.bf16.gmra.mrb[0].mxu0 %v3991
      %v4107 = vpop.f32.mrb[0].mxu0
      %v4108 = vadd.f32 0.0, %v4107
      %v4109 = vpop.f32.mrb[0].mxu0
      %v4110 = vpop.f32.mrb[0].mxu0
      %v4111 = vadd.f32 0.0, %v4110
      %v4112 = vpop.f32.mrb[0].mxu0
      %4113 = vmatprep.mubr.bf16.mxu0 0
      %4114 = vmatmul.mubr.bf16.gmra.mrb[0].mxu0 %v3994
      %v4115 = vpop.f32.mrb[0].mxu0
      %v4116 = vadd.f32 0.0, %v4115
      %v4117 = vpop.f32.mrb[0].mxu0
      %v4118 = vpop.f32.mrb[0].mxu0
      %v4119 = vadd.f32 0.0, %v4118
      %v4120 = vpop.f32.mrb[0].mxu0
      %4121 = vmatprep.mubr.bf16.mxu0 0
      %4122 = vmatmul.mubr.bf16.gmra.mrb[0].mxu0 %v3997
      %v4123 = vpop.f32.mrb[0].mxu0
      %v4124 = vadd.f32 0.0, %v4123
      %v4125 = vpop.f32.mrb[0].mxu0
      %v4126 = vpop.f32.mrb[0].mxu0
      %v4127 = vadd.f32 0.0, %v4126
      %v4128 = vpop.f32.mrb[0].mxu0
      %4129 = vmatprep.mubr.bf16.mxu0 0
      %4130 = vmatmul.mubr.bf16.gmra.mrb[0].mxu0 %v4000
      %v4131 = vpop.f32.mrb[0].mxu0
      %v4132 = vadd.f32 0.0, %v4131
      %v4133 = vpop.f32.mrb[0].mxu0
      %v4134 = vpop.f32.mrb[0].mxu0
      %v4135 = vadd.f32 0.0, %v4134
      %v4136 = vpop.f32.mrb[0].mxu0
      %4137 = vmatprep.mubr.bf16.mxu0 0
      %4138 = vmatmul.mubr.bf16.gmra.mrb[0].mxu0 %v4003
      %v4139 = vpop.f32.mrb[0].mxu0
      %v4140 = vadd.f32 0.0, %v4139
      %v4141 = vpop.f32.mrb[0].mxu0
      %v4142 = vpop.f32.mrb[0].mxu0
      %v4143 = vadd.f32 0.0, %v4142
      %v4144 = vpop.f32.mrb[0].mxu0
      %4145 = vmatprep.mubr.bf16.mxu0 0
      %4146 = vmatmul.mubr.bf16.gmra.mrb[0].mxu0 %v4006
      %v4147 = vpop.f32.mrb[0].mxu0
      %v4148 = vadd.f32 0.0, %v4147
      %v4149 = vpop.f32.mrb[0].mxu0
      %v4150 = vpop.f32.mrb[0].mxu0
      %v4151 = vadd.f32 0.0, %v4150
      %v4152 = vpop.f32.mrb[0].mxu0
      %4153 = vmatprep.mubr.bf16.mxu0 0
      %4154 = vmatmul.mubr.bf16.gmra.mrb[0].mxu0 %v4009
      %v4155 = vpop.f32.mrb[0].mxu0
      %v4156 = vadd.f32 0.0, %v4155
      %v4157 = vpop.f32.mrb[0].mxu0
      %v4158 = vpop.f32.mrb[0].mxu0
      %v4159 = vadd.f32 0.0, %v4158
      %v4160 = vpop.f32.mrb[0].mxu0
      %4161 = vmatprep.mubr.bf16.mxu0 0
      %4162 = vmatmul.mubr.bf16.gmra.mrb[0].mxu0 %v4012
      %v4163 = vpop.f32.mrb[0].mxu0
      %v4164 = vadd.f32 0.0, %v4163
      %v4165 = vpop.f32.mrb[0].mxu0
      %v4166 = vpop.f32.mrb[0].mxu0
      %v4167 = vadd.f32 0.0, %v4166
      %v4168 = vpop.f32.mrb[0].mxu0
      %4169 = vmatprep.mubr.bf16.mxu0 0
      %4170 = vmatmul.mubr.bf16.gmra.mrb[0].mxu0 %v4015
      %v4171 = vpop.f32.mrb[0].mxu0
      %v4172 = vadd.f32 0.0, %v4171
      %v4173 = vpop.f32.mrb[0].mxu0
      %v4174 = vpop.f32.mrb[0].mxu0
      %v4175 = vadd.f32 0.0, %v4174
      %v4176 = vpop.f32.mrb[0].mxu0
      %4177 = vmatprep.mubr.bf16.mxu0 0
      %4178 = vmatmul.mubr.bf16.gmra.mrb[0].mxu0 %v4018
      %v4179 = vpop.f32.mrb[0].mxu0
      %v4180 = vadd.f32 0.0, %v4179
      %v4181 = vpop.f32.mrb[0].mxu0
      %v4182 = vpop.f32.mrb[0].mxu0
      %v4183 = vadd.f32 0.0, %v4182
      %v4184 = vpop.f32.mrb[0].mxu0
      %4185 = vmatprep.mubr.bf16.mxu0 0
      %4186 = vmatmul.mubr.bf16.gmra.mrb[0].mxu0 %v4021
      %v4187 = vpop.f32.mrb[0].mxu0
      %v4188 = vadd.f32 0.0, %v4187
      %v4189 = vpop.f32.mrb[0].mxu0
      %v4190 = vpop.f32.mrb[0].mxu0
      %v4191 = vadd.f32 0.0, %v4190
      %v4192 = vpop.f32.mrb[0].mxu0
      %4193 = vmatprep.mubr.bf16.mxu0 0
      %4194 = vmatmul.mubr.bf16.gmra.mrb[0].mxu0 %v4024
      %v4195 = vpop.f32.mrb[0].mxu0
      %v4196 = vadd.f32 0.0, %v4195
      %v4197 = vpop.f32.mrb[0].mxu0
      %v4198 = vpop.f32.mrb[0].mxu0
      %v4199 = vadd.f32 0.0, %v4198
      %v4200 = vpop.f32.mrb[0].mxu0
      %4201 = vmatprep.mubr.bf16.mxu0 0
      %4202 = vmatmul.mubr.bf16.gmra.mrb[0].mxu0 %v4027
      %v4203 = vpop.f32.mrb[0].mxu0
      %v4204 = vadd.f32 0.0, %v4203
      %v4205 = vpop.f32.mrb[0].mxu0
      %v4206 = vpop.f32.mrb[0].mxu0
      %v4207 = vadd.f32 0.0, %v4206
      %v4208 = vpop.f32.mrb[0].mxu0
      %4209 = vdwg.mxu0
      %v4211 = vsel %vm3974, %v3899, 0
      %v4214 = vsel %vm3974, %v3900, 0
      %v4217 = vsel %vm3974, %v3901, 0
      %v4220 = vsel %vm3974, %v3902, 0
      %v4223 = vsel %vm3974, %v3903, 0
      %v4226 = vsel %vm3974, %v3904, 0
      %v4229 = vsel %vm3974, %v3905, 0
      %v4232 = vsel %vm3974, %v3906, 0
      %v4235 = vsel %vm3974, %v3907, 0
      %v4238 = vsel %vm3974, %v3908, 0
      %v4241 = vsel %vm3974, %v3909, 0
      %v4244 = vsel %vm3974, %v3910, 0
      %v4247 = vsel %vm3974, %v3911, 0
      %v4250 = vsel %vm3974, %v3912, 0
      %v4253 = vsel %vm3974, %v3913, 0
      %v4256 = vsel %vm3974, %v3914, 0
      %v4259 = vsel %vm3974, %v3915, 0
      %v4262 = vsel %vm3974, %v3916, 0
      %v4265 = vsel %vm4029, %v3917, 0
      %4267 = vmatprep.subr.bf16.mxu0 0
      %4268 = vmatpush1.bf16.msra.mxu0 %v4265
      %4269 = vmatprep.subr.bf16.mxu0 0
      %4270 = vmatpush1.bf16.msra.mxu0 0
      %4271 = vmatprep.subr.bf16.mxu0 0
      %4272 = vmatpush1.bf16.msra.mxu0 0
      %4273 = vmatprep.subr.bf16.mxu0 0
      %4274 = vmatpush1.bf16.msra.mxu0 0
      %4275 = vmatprep.subr.bf16.mxu0 0
      %4276 = vmatpush1.bf16.msra.mxu0 0
      %4277 = vmatprep.subr.bf16.mxu0 0
      %4278 = vmatpush1.bf16.msra.mxu0 0
      %4279 = vmatprep.subr.bf16.mxu0 0
      %4280 = vmatpush1.bf16.msra.mxu0 0
      %4281 = vmatprep.subr.bf16.mxu0 0
      %4282 = vmatpush1.bf16.msra.mxu0 0
      %4283 = vmatprep.subr.bf16.mxu0 0
      %4284 = vmatpush1.bf16.msra.mxu0 0
      %4285 = vmatprep.subr.bf16.mxu0 0
      %4286 = vmatpush1.bf16.msra.mxu0 0
      %4287 = vmatprep.subr.bf16.mxu0 0
      %4288 = vmatpush1.bf16.msra.mxu0 0
      %4289 = vmatprep.subr.bf16.mxu0 0
      %4290 = vmatpush1.bf16.msra.mxu0 0
      %4291 = vmatprep.subr.bf16.mxu0 0
      %4292 = vmatpush1.bf16.msra.mxu0 0
      %4293 = vmatprep.subr.bf16.mxu0 0
      %4294 = vmatpush1.bf16.msra.mxu0 0
      %4295 = vmatprep.subr.bf16.mxu0 0
      %4296 = vmatpush1.bf16.msra.mxu0 0
      %4297 = vmatprep.subr.bf16.mxu0 0
      %4298 = vmatpush1.bf16.msra.mxu0 0
      %4299 = vmatprep.mubr.bf16.mxu0 0
      %4300 = vmatmul.mubr.bf16.gmra.mrb[0].mxu0 %v4211
      %v4301 = vpop.f32.mrb[0].mxu0
      %v4302 = vadd.f32 %v4068, %v4301
      %v4303 = vpop.f32.mrb[0].mxu0
      %v4304 = vpop.f32.mrb[0].mxu0
      %v4305 = vadd.f32 %v4071, %v4304
      %v4306 = vpop.f32.mrb[0].mxu0
      %4307 = vmatprep.mubr.bf16.mxu0 0
      %4308 = vmatmul.mubr.bf16.gmra.mrb[0].mxu0 %v4214
      %v4309 = vpop.f32.mrb[0].mxu0
      %v4310 = vadd.f32 %v4076, %v4309
      %v4311 = vpop.f32.mrb[0].mxu0
      %v4312 = vpop.f32.mrb[0].mxu0
      %v4313 = vadd.f32 %v4079, %v4312
      %v4314 = vpop.f32.mrb[0].mxu0
      %4315 = vmatprep.mubr.bf16.mxu0 0
      %4316 = vmatmul.mubr.bf16.gmra.mrb[0].mxu0 %v4217
      %v4317 = vpop.f32.mrb[0].mxu0
      %v4318 = vadd.f32 %v4084, %v4317
      %v4319 = vpop.f32.mrb[0].mxu0
      %v4320 = vpop.f32.mrb[0].mxu0
      %v4321 = vadd.f32 %v4087, %v4320
      %v4322 = vpop.f32.mrb[0].mxu0
      %4323 = vmatprep.mubr.bf16.mxu0 0
      %4324 = vmatmul.mubr.bf16.gmra.mrb[0].mxu0 %v4220
      %v4325 = vpop.f32.mrb[0].mxu0
      %v4326 = vadd.f32 %v4092, %v4325
      %v4327 = vpop.f32.mrb[0].mxu0
      %v4328 = vpop.f32.mrb[0].mxu0
      %v4329 = vadd.f32 %v4095, %v4328
      %v4330 = vpop.f32.mrb[0].mxu0
      %4331 = vmatprep.mubr.bf16.mxu0 0
      %4332 = vmatmul.mubr.bf16.gmra.mrb[0].mxu0 %v4223
      %v4333 = vpop.f32.mrb[0].mxu0
      %v4334 = vadd.f32 %v4100, %v4333
      %v4335 = vpop.f32.mrb[0].mxu0
      %v4336 = vpop.f32.mrb[0].mxu0
      %v4337 = vadd.f32 %v4103, %v4336
      %v4338 = vpop.f32.mrb[0].mxu0
      %4339 = vmatprep.mubr.bf16.mxu0 0
      %4340 = vmatmul.mubr.bf16.gmra.mrb[0].mxu0 %v4226
      %v4341 = vpop.f32.mrb[0].mxu0
      %v4342 = vadd.f32 %v4108, %v4341
      %v4343 = vpop.f32.mrb[0].mxu0
      %v4344 = vpop.f32.mrb[0].mxu0
      %v4345 = vadd.f32 %v4111, %v4344
      %v4346 = vpop.f32.mrb[0].mxu0
      %4347 = vmatprep.mubr.bf16.mxu0 0
      %4348 = vmatmul.mubr.bf16.gmra.mrb[0].mxu0 %v4229
      %v4349 = vpop.f32.mrb[0].mxu0
      %v4350 = vadd.f32 %v4116, %v4349
      %v4351 = vpop.f32.mrb[0].mxu0
      %v4352 = vpop.f32.mrb[0].mxu0
      %v4353 = vadd.f32 %v4119, %v4352
      %v4354 = vpop.f32.mrb[0].mxu0
      %4355 = vmatprep.mubr.bf16.mxu0 0
      %4356 = vmatmul.mubr.bf16.gmra.mrb[0].mxu0 %v4232
      %v4357 = vpop.f32.mrb[0].mxu0
      %v4358 = vadd.f32 %v4124, %v4357
      %v4359 = vpop.f32.mrb[0].mxu0
      %v4360 = vpop.f32.mrb[0].mxu0
      %v4361 = vadd.f32 %v4127, %v4360
      %v4362 = vpop.f32.mrb[0].mxu0
      %4363 = vmatprep.mubr.bf16.mxu0 0
      %4364 = vmatmul.mubr.bf16.gmra.mrb[0].mxu0 %v4235
      %v4365 = vpop.f32.mrb[0].mxu0
      %v4366 = vadd.f32 %v4132, %v4365
      %v4367 = vpop.f32.mrb[0].mxu0
      %v4368 = vpop.f32.mrb[0].mxu0
      %v4369 = vadd.f32 %v4135, %v4368
      %v4370 = vpop.f32.mrb[0].mxu0
      %4371 = vmatprep.mubr.bf16.mxu0 0
      %4372 = vmatmul.mubr.bf16.gmra.mrb[0].mxu0 %v4238
      %v4373 = vpop.f32.mrb[0].mxu0
      %v4374 = vadd.f32 %v4140, %v4373
      %v4375 = vpop.f32.mrb[0].mxu0
      %v4376 = vpop.f32.mrb[0].mxu0
      %v4377 = vadd.f32 %v4143, %v4376
      %v4378 = vpop.f32.mrb[0].mxu0
      %4379 = vmatprep.mubr.bf16.mxu0 0
      %4380 = vmatmul.mubr.bf16.gmra.mrb[0].mxu0 %v4241
      %v4381 = vpop.f32.mrb[0].mxu0
      %v4382 = vadd.f32 %v4148, %v4381
      %v4383 = vpop.f32.mrb[0].mxu0
      %v4384 = vpop.f32.mrb[0].mxu0
      %v4385 = vadd.f32 %v4151, %v4384
      %v4386 = vpop.f32.mrb[0].mxu0
      %4387 = vmatprep.mubr.bf16.mxu0 0
      %4388 = vmatmul.mubr.bf16.gmra.mrb[0].mxu0 %v4244
      %v4389 = vpop.f32.mrb[0].mxu0
      %v4390 = vadd.f32 %v4156, %v4389
      %v4391 = vpop.f32.mrb[0].mxu0
      %v4392 = vpop.f32.mrb[0].mxu0
      %v4393 = vadd.f32 %v4159, %v4392
      %v4394 = vpop.f32.mrb[0].mxu0
      %4395 = vmatprep.mubr.bf16.mxu0 0
      %4396 = vmatmul.mubr.bf16.gmra.mrb[0].mxu0 %v4247
      %v4397 = vpop.f32.mrb[0].mxu0
      %v4398 = vadd.f32 %v4164, %v4397
      %v4399 = vpop.f32.mrb[0].mxu0
      %v4400 = vpop.f32.mrb[0].mxu0
      %v4401 = vadd.f32 %v4167, %v4400
      %v4402 = vpop.f32.mrb[0].mxu0
      %4403 = vmatprep.mubr.bf16.mxu0 0
      %4404 = vmatmul.mubr.bf16.gmra.mrb[0].mxu0 %v4250
      %v4405 = vpop.f32.mrb[0].mxu0
      %v4406 = vadd.f32 %v4172, %v4405
      %v4407 = vpop.f32.mrb[0].mxu0
      %v4408 = vpop.f32.mrb[0].mxu0
      %v4409 = vadd.f32 %v4175, %v4408
      %v4410 = vpop.f32.mrb[0].mxu0
      %4411 = vmatprep.mubr.bf16.mxu0 0
      %4412 = vmatmul.mubr.bf16.gmra.mrb[0].mxu0 %v4253
      %v4413 = vpop.f32.mrb[0].mxu0
      %v4414 = vadd.f32 %v4180, %v4413
      %v4415 = vpop.f32.mrb[0].mxu0
      %v4416 = vpop.f32.mrb[0].mxu0
      %v4417 = vadd.f32 %v4183, %v4416
      %v4418 = vpop.f32.mrb[0].mxu0
      %4419 = vmatprep.mubr.bf16.mxu0 0
      %4420 = vmatmul.mubr.bf16.gmra.mrb[0].mxu0 %v4256
      %v4421 = vpop.f32.mrb[0].mxu0
      %v4422 = vadd.f32 %v4188, %v4421
      %v4423 = vpop.f32.mrb[0].mxu0
      %v4424 = vpop.f32.mrb[0].mxu0
      %v4425 = vadd.f32 %v4191, %v4424
      %v4426 = vpop.f32.mrb[0].mxu0
      %4427 = vmatprep.mubr.bf16.mxu0 0
      %4428 = vmatmul.mubr.bf16.gmra.mrb[0].mxu0 %v4259
      %v4429 = vpop.f32.mrb[0].mxu0
      %v4430 = vadd.f32 %v4196, %v4429
      %v4431 = vpop.f32.mrb[0].mxu0
      %v4432 = vpop.f32.mrb[0].mxu0
      %v4433 = vadd.f32 %v4199, %v4432
      %v4434 = vpop.f32.mrb[0].mxu0
      %4435 = vmatprep.mubr.bf16.mxu0 0
      %4436 = vmatmul.mubr.bf16.gmra.mrb[0].mxu0 %v4262
      %v4437 = vpop.f32.mrb[0].mxu0
      %v4438 = vadd.f32 %v4204, %v4437
      %v4439 = vpop.f32.mrb[0].mxu0
      %v4440 = vpop.f32.mrb[0].mxu0
      %v4441 = vadd.f32 %v4207, %v4440
      %v4442 = vpop.f32.mrb[0].mxu0
      %4443 = vdwg.mxu0
      %v4444 = vld [vmem:[#allocation2 + $0x2] sm:$0xff]
      %v4445 = vld [vmem:[#allocation2 + $0xa] sm:$0xff]
      %v4446 = vld [vmem:[#allocation2 + $0x12] sm:$0xff]
      %v4447 = vld [vmem:[#allocation2 + $0x1a] sm:$0xff]
      %v4448 = vld [vmem:[#allocation2 + $0x22] sm:$0xff]
      %v4449 = vld [vmem:[#allocation2 + $0x2a] sm:$0xff]
      %v4450 = vld [vmem:[#allocation2 + $0x32] sm:$0xff]
      %v4451 = vld [vmem:[#allocation2 + $0x3a] sm:$0xff]
      %v4452 = vld [vmem:[#allocation2 + $0x42] sm:$0xff]
      %v4453 = vld [vmem:[#allocation2 + $0x4a] sm:$0xff]
      %v4454 = vld [vmem:[#allocation2 + $0x52] sm:$0xff]
      %v4455 = vld [vmem:[#allocation2 + $0x5a] sm:$0xff]
      %v4456 = vld [vmem:[#allocation2 + $0x62] sm:$0xff]
      %v4457 = vld [vmem:[#allocation2 + $0x6a] sm:$0xff]
      %v4458 = vld [vmem:[#allocation2 + $0x72] sm:$0xff]
      %v4459 = vld [vmem:[#allocation2 + $0x7a] sm:$0xff]
      %v4460 = vld [vmem:[#allocation2 + $0x82] sm:$0xff]
      %v4461 = vld [vmem:[#allocation2 + $0x8a] sm:$0xff]
      %v4462 = vld [vmem:[#allocation2 + $0x92] sm:$0xff]
      %v4463 = vld [vmem:[#allocation2 + $0x9a] sm:$0xff]
      %v4464 = vld [vmem:[#allocation2 + $0xa2] sm:$0xff]
      %v4465 = vld [vmem:[#allocation2 + $0xaa] sm:$0xff]
      %v4466 = vld [vmem:[#allocation2 + $0xb2] sm:$0xff]
      %v4467 = vld [vmem:[#allocation2 + $0xba] sm:$0xff]
      %v4468 = vld [vmem:[#allocation2 + $0xc2] sm:$0xff]
      %v4469 = vld [vmem:[#allocation2 + $0xca] sm:$0xff]
      %v4470 = vld [vmem:[#allocation2 + $0xd2] sm:$0xff]
      %v4471 = vld [vmem:[#allocation2 + $0xda] sm:$0xff]
      %v4472 = vld [vmem:[#allocation2 + $0xe2] sm:$0xff]
      %v4473 = vld [vmem:[#allocation2 + $0xea] sm:$0xff]
      %v4474 = vld [vmem:[#allocation2 + $0xf2] sm:$0xff]
      %v4475 = vld [vmem:[#allocation2 + $0xfa] sm:$0xff]
      %v4476 = vld [vmem:[#allocation2 + $0x102] sm:$0xff]
      %v4477 = vld [vmem:[#allocation2 + $0x10a] sm:$0xff]
      %v4478 = vld [vmem:[#allocation2 + $0x112] sm:$0xff]
      %v4479 = vld [vmem:[#allocation2 + $0x11a] sm:$0x3f]
      %v4480 = vpack.c.bf16 %v4445, %v4444
      %v4481 = vpack.c.bf16 %v4447, %v4446
      %v4482 = vpack.c.bf16 %v4449, %v4448
      %v4483 = vpack.c.bf16 %v4451, %v4450
      %v4484 = vpack.c.bf16 %v4453, %v4452
      %v4485 = vpack.c.bf16 %v4455, %v4454
      %v4486 = vpack.c.bf16 %v4457, %v4456
      %v4487 = vpack.c.bf16 %v4459, %v4458
      %v4488 = vpack.c.bf16 %v4461, %v4460
      %v4489 = vpack.c.bf16 %v4463, %v4462
      %v4490 = vpack.c.bf16 %v4465, %v4464
      %v4491 = vpack.c.bf16 %v4467, %v4466
      %v4492 = vpack.c.bf16 %v4469, %v4468
      %v4493 = vpack.c.bf16 %v4471, %v4470
      %v4494 = vpack.c.bf16 %v4473, %v4472
      %v4495 = vpack.c.bf16 %v4475, %v4474
      %v4496 = vpack.c.bf16 %v4477, %v4476
      %v4497 = vpack.c.bf16 %v4479, %v4478
      %s4498 = scalar_lea.vmem %s4, 8
      %v4499 = vld [vmem:[%s4498] sm:$0xf]
      %v4501 = vsel %vm3974, %v4480, 0
      %v4504 = vsel %vm3974, %v4481, 0
      %v4507 = vsel %vm3974, %v4482, 0
      %v4510 = vsel %vm3974, %v4483, 0
      %v4513 = vsel %vm3974, %v4484, 0
      %v4516 = vsel %vm3974, %v4485, 0
      %v4519 = vsel %vm3974, %v4486, 0
      %v4522 = vsel %vm3974, %v4487, 0
      %v4525 = vsel %vm3974, %v4488, 0
      %v4528 = vsel %vm3974, %v4489, 0
      %v4531 = vsel %vm3974, %v4490, 0
      %v4534 = vsel %vm3974, %v4491, 0
      %v4537 = vsel %vm3974, %v4492, 0
      %v4540 = vsel %vm3974, %v4493, 0
      %v4543 = vsel %vm3974, %v4494, 0
      %v4546 = vsel %vm3974, %v4495, 0
      %v4549 = vsel %vm3974, %v4496, 0
      %v4552 = vsel %vm3974, %v4497, 0
      %v4555 = vsel %vm4029, %v4499, 0
      %4557 = vmatprep.subr.bf16.mxu0 0
      %4558 = vmatpush1.bf16.msra.mxu0 %v4555
      %4559 = vmatprep.subr.bf16.mxu0 0
      %4560 = vmatpush1.bf16.msra.mxu0 0
      %4561 = vmatprep.subr.bf16.mxu0 0
      %4562 = vmatpush1.bf16.msra.mxu0 0
      %4563 = vmatprep.subr.bf16.mxu0 0
      %4564 = vmatpush1.bf16.msra.mxu0 0
      %4565 = vmatprep.subr.bf16.mxu0 0
      %4566 = vmatpush1.bf16.msra.mxu0 0
      %4567 = vmatprep.subr.bf16.mxu0 0
      %4568 = vmatpush1.bf16.msra.mxu0 0
      %4569 = vmatprep.subr.bf16.mxu0 0
      %4570 = vmatpush1.bf16.msra.mxu0 0
      %4571 = vmatprep.subr.bf16.mxu0 0
      %4572 = vmatpush1.bf16.msra.mxu0 0
      %4573 = vmatprep.subr.bf16.mxu0 0
      %4574 = vmatpush1.bf16.msra.mxu0 0
      %4575 = vmatprep.subr.bf16.mxu0 0
      %4576 = vmatpush1.bf16.msra.mxu0 0
      %4577 = vmatprep.subr.bf16.mxu0 0
      %4578 = vmatpush1.bf16.msra.mxu0 0
      %4579 = vmatprep.subr.bf16.mxu0 0
      %4580 = vmatpush1.bf16.msra.mxu0 0
      %4581 = vmatprep.subr.bf16.mxu0 0
      %4582 = vmatpush1.bf16.msra.mxu0 0
      %4583 = vmatprep.subr.bf16.mxu0 0
      %4584 = vmatpush1.bf16.msra.mxu0 0
      %4585 = vmatprep.subr.bf16.mxu0 0
      %4586 = vmatpush1.bf16.msra.mxu0 0
      %4587 = vmatprep.subr.bf16.mxu0 0
      %4588 = vmatpush1.bf16.msra.mxu0 0
      %4589 = vmatprep.mubr.bf16.mxu0 0
      %4590 = vmatmul.mubr.bf16.gmra.mrb[0].mxu0 %v4501
      %v4591 = vpop.f32.mrb[0].mxu0
      %v4592 = vadd.f32 0.0, %v4591
      %v4593 = vpop.f32.mrb[0].mxu0
      %v4594 = vpop.f32.mrb[0].mxu0
      %v4595 = vadd.f32 0.0, %v4594
      %v4596 = vpop.f32.mrb[0].mxu0
      %4597 = vmatprep.mubr.bf16.mxu0 0
      %4598 = vmatmul.mubr.bf16.gmra.mrb[0].mxu0 %v4504
      %v4599 = vpop.f32.mrb[0].mxu0
      %v4600 = vadd.f32 0.0, %v4599
      %v4601 = vpop.f32.mrb[0].mxu0
      %v4602 = vpop.f32.mrb[0].mxu0
      %v4603 = vadd.f32 0.0, %v4602
      %v4604 = vpop.f32.mrb[0].mxu0
      %4605 = vmatprep.mubr.bf16.mxu0 0
      %4606 = vmatmul.mubr.bf16.gmra.mrb[0].mxu0 %v4507
      %v4607 = vpop.f32.mrb[0].mxu0
      %v4608 = vadd.f32 0.0, %v4607
      %v4609 = vpop.f32.mrb[0].mxu0
      %v4610 = vpop.f32.mrb[0].mxu0
      %v4611 = vadd.f32 0.0, %v4610
      %v4612 = vpop.f32.mrb[0].mxu0
      %4613 = vmatprep.mubr.bf16.mxu0 0
      %4614 = vmatmul.mubr.bf16.gmra.mrb[0].mxu0 %v4510
      %v4615 = vpop.f32.mrb[0].mxu0
      %v4616 = vadd.f32 0.0, %v4615
      %v4617 = vpop.f32.mrb[0].mxu0
      %v4618 = vpop.f32.mrb[0].mxu0
      %v4619 = vadd.f32 0.0, %v4618
      %v4620 = vpop.f32.mrb[0].mxu0
      %4621 = vmatprep.mubr.bf16.mxu0 0
      %4622 = vmatmul.mubr.bf16.gmra.mrb[0].mxu0 %v4513
      %v4623 = vpop.f32.mrb[0].mxu0
      %v4624 = vadd.f32 0.0, %v4623
      %v4625 = vpop.f32.mrb[0].mxu0
      %v4626 = vpop.f32.mrb[0].mxu0
      %v4627 = vadd.f32 0.0, %v4626
      %v4628 = vpop.f32.mrb[0].mxu0
      %4629 = vmatprep.mubr.bf16.mxu0 0
      %4630 = vmatmul.mubr.bf16.gmra.mrb[0].mxu0 %v4516
      %v4631 = vpop.f32.mrb[0].mxu0
      %v4632 = vadd.f32 0.0, %v4631
      %v4633 = vpop.f32.mrb[0].mxu0
      %v4634 = vpop.f32.mrb[0].mxu0
      %v4635 = vadd.f32 0.0, %v4634
      %v4636 = vpop.f32.mrb[0].mxu0
      %4637 = vmatprep.mubr.bf16.mxu0 0
      %4638 = vmatmul.mubr.bf16.gmra.mrb[0].mxu0 %v4519
      %v4639 = vpop.f32.mrb[0].mxu0
      %v4640 = vadd.f32 0.0, %v4639
      %v4641 = vpop.f32.mrb[0].mxu0
      %v4642 = vpop.f32.mrb[0].mxu0
      %v4643 = vadd.f32 0.0, %v4642
      %v4644 = vpop.f32.mrb[0].mxu0
      %4645 = vmatprep.mubr.bf16.mxu0 0
      %4646 = vmatmul.mubr.bf16.gmra.mrb[0].mxu0 %v4522
      %v4647 = vpop.f32.mrb[0].mxu0
      %v4648 = vadd.f32 0.0, %v4647
      %v4649 = vpop.f32.mrb[0].mxu0
      %v4650 = vpop.f32.mrb[0].mxu0
      %v4651 = vadd.f32 0.0, %v4650
      %v4652 = vpop.f32.mrb[0].mxu0
      %4653 = vmatprep.mubr.bf16.mxu0 0
      %4654 = vmatmul.mubr.bf16.gmra.mrb[0].mxu0 %v4525
      %v4655 = vpop.f32.mrb[0].mxu0
      %v4656 = vadd.f32 0.0, %v4655
      %v4657 = vpop.f32.mrb[0].mxu0
      %v4658 = vpop.f32.mrb[0].mxu0
      %v4659 = vadd.f32 0.0, %v4658
      %v4660 = vpop.f32.mrb[0].mxu0
      %4661 = vmatprep.mubr.bf16.mxu0 0
      %4662 = vmatmul.mubr.bf16.gmra.mrb[0].mxu0 %v4528
      %v4663 = vpop.f32.mrb[0].mxu0
      %v4664 = vadd.f32 0.0, %v4663
      %v4665 = vpop.f32.mrb[0].mxu0
      %v4666 = vpop.f32.mrb[0].mxu0
      %v4667 = vadd.f32 0.0, %v4666
      %v4668 = vpop.f32.mrb[0].mxu0
      %4669 = vmatprep.mubr.bf16.mxu0 0
      %4670 = vmatmul.mubr.bf16.gmra.mrb[0].mxu0 %v4531
      %v4671 = vpop.f32.mrb[0].mxu0
      %v4672 = vadd.f32 0.0, %v4671
      %v4673 = vpop.f32.mrb[0].mxu0
      %v4674 = vpop.f32.mrb[0].mxu0
      %v4675 = vadd.f32 0.0, %v4674
      %v4676 = vpop.f32.mrb[0].mxu0
      %4677 = vmatprep.mubr.bf16.mxu0 0
      %4678 = vmatmul.mubr.bf16.gmra.mrb[0].mxu0 %v4534
      %v4679 = vpop.f32.mrb[0].mxu0
      %v4680 = vadd.f32 0.0, %v4679
      %v4681 = vpop.f32.mrb[0].mxu0
      %v4682 = vpop.f32.mrb[0].mxu0
      %v4683 = vadd.f32 0.0, %v4682
      %v4684 = vpop.f32.mrb[0].mxu0
      %4685 = vmatprep.mubr.bf16.mxu0 0
      %4686 = vmatmul.mubr.bf16.gmra.mrb[0].mxu0 %v4537
      %v4687 = vpop.f32.mrb[0].mxu0
      %v4688 = vadd.f32 0.0, %v4687
      %v4689 = vpop.f32.mrb[0].mxu0
      %v4690 = vpop.f32.mrb[0].mxu0
      %v4691 = vadd.f32 0.0, %v4690
      %v4692 = vpop.f32.mrb[0].mxu0
      %4693 = vmatprep.mubr.bf16.mxu0 0
      %4694 = vmatmul.mubr.bf16.gmra.mrb[0].mxu0 %v4540
      %v4695 = vpop.f32.mrb[0].mxu0
      %v4696 = vadd.f32 0.0, %v4695
      %v4697 = vpop.f32.mrb[0].mxu0
      %v4698 = vpop.f32.mrb[0].mxu0
      %v4699 = vadd.f32 0.0, %v4698
      %v4700 = vpop.f32.mrb[0].mxu0
      %4701 = vmatprep.mubr.bf16.mxu0 0
      %4702 = vmatmul.mubr.bf16.gmra.mrb[0].mxu0 %v4543
      %v4703 = vpop.f32.mrb[0].mxu0
      %v4704 = vadd.f32 0.0, %v4703
      %v4705 = vpop.f32.mrb[0].mxu0
      %v4706 = vpop.f32.mrb[0].mxu0
      %v4707 = vadd.f32 0.0, %v4706
      %v4708 = vpop.f32.mrb[0].mxu0
      %4709 = vmatprep.mubr.bf16.mxu0 0
      %4710 = vmatmul.mubr.bf16.gmra.mrb[0].mxu0 %v4546
      %v4711 = vpop.f32.mrb[0].mxu0
      %v4712 = vadd.f32 0.0, %v4711
      %v4713 = vpop.f32.mrb[0].mxu0
      %v4714 = vpop.f32.mrb[0].mxu0
      %v4715 = vadd.f32 0.0, %v4714
      %v4716 = vpop.f32.mrb[0].mxu0
      %4717 = vmatprep.mubr.bf16.mxu0 0
      %4718 = vmatmul.mubr.bf16.gmra.mrb[0].mxu0 %v4549
      %v4719 = vpop.f32.mrb[0].mxu0
      %v4720 = vadd.f32 0.0, %v4719
      %v4721 = vpop.f32.mrb[0].mxu0
      %v4722 = vpop.f32.mrb[0].mxu0
      %v4723 = vadd.f32 0.0, %v4722
      %v4724 = vpop.f32.mrb[0].mxu0
      %4725 = vmatprep.mubr.bf16.mxu0 0
      %4726 = vmatmul.mubr.bf16.gmra.mrb[0].mxu0 %v4552
      %v4727 = vpop.f32.mrb[0].mxu0
      %v4728 = vadd.f32 0.0, %v4727
      %v4729 = vpop.f32.mrb[0].mxu0
      %v4730 = vpop.f32.mrb[0].mxu0
      %v4731 = vadd.f32 0.0, %v4730
      %v4732 = vpop.f32.mrb[0].mxu0
      %4733 = vdwg.mxu0
      %v4734 = vadd.f32 %v4302, %v4592
      %v4735 = vadd.f32 %v4305, %v4595
      %v4736 = vadd.f32 %v4310, %v4600
      %v4737 = vadd.f32 %v4313, %v4603
      %v4738 = vadd.f32 %v4318, %v4608
      %v4739 = vadd.f32 %v4321, %v4611
      %v4740 = vadd.f32 %v4326, %v4616
      %v4741 = vadd.f32 %v4329, %v4619
      %v4742 = vadd.f32 %v4334, %v4624
      %v4743 = vadd.f32 %v4337, %v4627
      %v4744 = vadd.f32 %v4342, %v4632
      %v4745 = vadd.f32 %v4345, %v4635
      %v4746 = vadd.f32 %v4350, %v4640
      %v4747 = vadd.f32 %v4353, %v4643
      %v4748 = vadd.f32 %v4358, %v4648
      %v4749 = vadd.f32 %v4361, %v4651
      %v4750 = vadd.f32 %v4366, %v4656
      %v4751 = vadd.f32 %v4369, %v4659
      %v4752 = vadd.f32 %v4374, %v4664
      %v4753 = vadd.f32 %v4377, %v4667
      %v4754 = vadd.f32 %v4382, %v4672
      %v4755 = vadd.f32 %v4385, %v4675
      %v4756 = vadd.f32 %v4390, %v4680
      %v4757 = vadd.f32 %v4393, %v4683
      %v4758 = vadd.f32 %v4398, %v4688
      %v4759 = vadd.f32 %v4401, %v4691
      %v4760 = vadd.f32 %v4406, %v4696
      %v4761 = vadd.f32 %v4409, %v4699
      %v4762 = vadd.f32 %v4414, %v4704
      %v4763 = vadd.f32 %v4417, %v4707
      %v4764 = vadd.f32 %v4422, %v4712
      %v4765 = vadd.f32 %v4425, %v4715
      %v4766 = vadd.f32 %v4430, %v4720
      %v4767 = vadd.f32 %v4433, %v4723
      %v4768 = vadd.f32 %v4438, %v4728
      %v4769 = vadd.f32 %v4441, %v4731
      %v4770 = vld [vmem:[#allocation2 + $0x12] sm:$0xff]
      %v4771 = vld [vmem:[#allocation2 + $0x1a] sm:$0xff]
      %v4772 = vld [vmem:[#allocation2 + $0x22] sm:$0xff]
      %v4773 = vld [vmem:[#allocation2 + $0x2a] sm:$0xff]
      %v4774 = vld [vmem:[#allocation2 + $0x32] sm:$0xff]
      %v4775 = vld [vmem:[#allocation2 + $0x3a] sm:$0xff]
      %v4776 = vld [vmem:[#allocation2 + $0x42] sm:$0xff]
      %v4777 = vld [vmem:[#allocation2 + $0x4a] sm:$0xff]
      %v4778 = vld [vmem:[#allocation2 + $0x52] sm:$0xff]
      %v4779 = vld [vmem:[#allocation2 + $0x5a] sm:$0xff]
      %v4780 = vld [vmem:[#allocation2 + $0x62] sm:$0xff]
      %v4781 = vld [vmem:[#allocation2 + $0x6a] sm:$0xff]
      %v4782 = vld [vmem:[#allocation2 + $0x72] sm:$0xff]
      %v4783 = vld [vmem:[#allocation2 + $0x7a] sm:$0xff]
      %v4784 = vld [vmem:[#allocation2 + $0x82] sm:$0xff]
      %v4785 = vld [vmem:[#allocation2 + $0x8a] sm:$0xff]
      %v4786 = vld [vmem:[#allocation2 + $0x92] sm:$0xff]
      %v4787 = vld [vmem:[#allocation2 + $0x9a] sm:$0xff]
      %v4788 = vld [vmem:[#allocation2 + $0xa2] sm:$0xff]
      %v4789 = vld [vmem:[#allocation2 + $0xaa] sm:$0xff]
      %v4790 = vld [vmem:[#allocation2 + $0xb2] sm:$0xff]
      %v4791 = vld [vmem:[#allocation2 + $0xba] sm:$0xff]
      %v4792 = vld [vmem:[#allocation2 + $0xc2] sm:$0xff]
      %v4793 = vld [vmem:[#allocation2 + $0xca] sm:$0xff]
      %v4794 = vld [vmem:[#allocation2 + $0xd2] sm:$0xff]
      %v4795 = vld [vmem:[#allocation2 + $0xda] sm:$0xff]
      %v4796 = vld [vmem:[#allocation2 + $0xe2] sm:$0xff]
      %v4797 = vld [vmem:[#allocation2 + $0xea] sm:$0xff]
      %v4798 = vld [vmem:[#allocation2 + $0xf2] sm:$0xff]
      %v4799 = vld [vmem:[#allocation2 + $0xfa] sm:$0xff]
      %v4800 = vld [vmem:[#allocation2 + $0x102] sm:$0xff]
      %v4801 = vld [vmem:[#allocation2 + $0x10a] sm:$0xff]
      %v4802 = vld [vmem:[#allocation2 + $0x112] sm:$0xff]
      %v4803 = vld [vmem:[#allocation2 + $0x11a] sm:$0xff]
      %v4804 = vld [vmem:[#allocation2 + $0x122] sm:$0xff]
      %v4805 = vld [vmem:[#allocation2 + $0x12a] sm:$0x3f]
      %v4806 = vpack.c.bf16 %v4771, %v4770
      %v4807 = vpack.c.bf16 %v4773, %v4772
      %v4808 = vpack.c.bf16 %v4775, %v4774
      %v4809 = vpack.c.bf16 %v4777, %v4776
      %v4810 = vpack.c.bf16 %v4779, %v4778
      %v4811 = vpack.c.bf16 %v4781, %v4780
      %v4812 = vpack.c.bf16 %v4783, %v4782
      %v4813 = vpack.c.bf16 %v4785, %v4784
      %v4814 = vpack.c.bf16 %v4787, %v4786
      %v4815 = vpack.c.bf16 %v4789, %v4788
      %v4816 = vpack.c.bf16 %v4791, %v4790
      %v4817 = vpack.c.bf16 %v4793, %v4792
      %v4818 = vpack.c.bf16 %v4795, %v4794
      %v4819 = vpack.c.bf16 %v4797, %v4796
      %v4820 = vpack.c.bf16 %v4799, %v4798
      %v4821 = vpack.c.bf16 %v4801, %v4800
      %v4822 = vpack.c.bf16 %v4803, %v4802
      %v4823 = vpack.c.bf16 %v4805, %v4804
      %s4824 = scalar_lea.vmem %s4, 12
      %v4825 = vld [vmem:[%s4824] sm:$0xf]
      %v4827 = vsel %vm3974, %v4806, 0
      %v4830 = vsel %vm3974, %v4807, 0
      %v4833 = vsel %vm3974, %v4808, 0
      %v4836 = vsel %vm3974, %v4809, 0
      %v4839 = vsel %vm3974, %v4810, 0
      %v4842 = vsel %vm3974, %v4811, 0
      %v4845 = vsel %vm3974, %v4812, 0
      %v4848 = vsel %vm3974, %v4813, 0
      %v4851 = vsel %vm3974, %v4814, 0
      %v4854 = vsel %vm3974, %v4815, 0
      %v4857 = vsel %vm3974, %v4816, 0
      %v4860 = vsel %vm3974, %v4817, 0
      %v4863 = vsel %vm3974, %v4818, 0
      %v4866 = vsel %vm3974, %v4819, 0
      %v4869 = vsel %vm3974, %v4820, 0
      %v4872 = vsel %vm3974, %v4821, 0
      %v4875 = vsel %vm3974, %v4822, 0
      %v4878 = vsel %vm3974, %v4823, 0
      %v4881 = vsel %vm4029, %v4825, 0
      %4883 = vmatprep.subr.bf16.mxu0 0
      %4884 = vmatpush1.bf16.msra.mxu0 %v4881
      %4885 = vmatprep.subr.bf16.mxu0 0
      %4886 = vmatpush1.bf16.msra.mxu0 0
      %4887 = vmatprep.subr.bf16.mxu0 0
      %4888 = vmatpush1.bf16.msra.mxu0 0
      %4889 = vmatprep.subr.bf16.mxu0 0
      %4890 = vmatpush1.bf16.msra.mxu0 0
      %4891 = vmatprep.subr.bf16.mxu0 0
      %4892 = vmatpush1.bf16.msra.mxu0 0
      %4893 = vmatprep.subr.bf16.mxu0 0
      %4894 = vmatpush1.bf16.msra.mxu0 0
      %4895 = vmatprep.subr.bf16.mxu0 0
      %4896 = vmatpush1.bf16.msra.mxu0 0
      %4897 = vmatprep.subr.bf16.mxu0 0
      %4898 = vmatpush1.bf16.msra.mxu0 0
      %4899 = vmatprep.subr.bf16.mxu0 0
      %4900 = vmatpush1.bf16.msra.mxu0 0
      %4901 = vmatprep.subr.bf16.mxu0 0
      %4902 = vmatpush1.bf16.msra.mxu0 0
      %4903 = vmatprep.subr.bf16.mxu0 0
      %4904 = vmatpush1.bf16.msra.mxu0 0
      %4905 = vmatprep.subr.bf16.mxu0 0
      %4906 = vmatpush1.bf16.msra.mxu0 0
      %4907 = vmatprep.subr.bf16.mxu0 0
      %4908 = vmatpush1.bf16.msra.mxu0 0
      %4909 = vmatprep.subr.bf16.mxu0 0
      %4910 = vmatpush1.bf16.msra.mxu0 0
      %4911 = vmatprep.subr.bf16.mxu0 0
      %4912 = vmatpush1.bf16.msra.mxu0 0
      %4913 = vmatprep.subr.bf16.mxu0 0
      %4914 = vmatpush1.bf16.msra.mxu0 0
      %4915 = vmatprep.mubr.bf16.mxu0 0
      %4916 = vmatmul.mubr.bf16.gmra.mrb[0].mxu0 %v4827
      %v4917 = vpop.f32.mrb[0].mxu0
      %v4918 = vadd.f32 0.0, %v4917
      %v4919 = vpop.f32.mrb[0].mxu0
      %v4920 = vpop.f32.mrb[0].mxu0
      %v4921 = vadd.f32 0.0, %v4920
      %v4922 = vpop.f32.mrb[0].mxu0
      %4923 = vmatprep.mubr.bf16.mxu0 0
      %4924 = vmatmul.mubr.bf16.gmra.mrb[0].mxu0 %v4830
      %v4925 = vpop.f32.mrb[0].mxu0
      %v4926 = vadd.f32 0.0, %v4925
      %v4927 = vpop.f32.mrb[0].mxu0
      %v4928 = vpop.f32.mrb[0].mxu0
      %v4929 = vadd.f32 0.0, %v4928
      %v4930 = vpop.f32.mrb[0].mxu0
      %4931 = vmatprep.mubr.bf16.mxu0 0
      %4932 = vmatmul.mubr.bf16.gmra.mrb[0].mxu0 %v4833
      %v4933 = vpop.f32.mrb[0].mxu0
      %v4934 = vadd.f32 0.0, %v4933
      %v4935 = vpop.f32.mrb[0].mxu0
      %v4936 = vpop.f32.mrb[0].mxu0
      %v4937 = vadd.f32 0.0, %v4936
      %v4938 = vpop.f32.mrb[0].mxu0
      %4939 = vmatprep.mubr.bf16.mxu0 0
      %4940 = vmatmul.mubr.bf16.gmra.mrb[0].mxu0 %v4836
      %v4941 = vpop.f32.mrb[0].mxu0
      %v4942 = vadd.f32 0.0, %v4941
      %v4943 = vpop.f32.mrb[0].mxu0
      %v4944 = vpop.f32.mrb[0].mxu0
      %v4945 = vadd.f32 0.0, %v4944
      %v4946 = vpop.f32.mrb[0].mxu0
      %4947 = vmatprep.mubr.bf16.mxu0 0
      %4948 = vmatmul.mubr.bf16.gmra.mrb[0].mxu0 %v4839
      %v4949 = vpop.f32.mrb[0].mxu0
      %v4950 = vadd.f32 0.0, %v4949
      %v4951 = vpop.f32.mrb[0].mxu0
      %v4952 = vpop.f32.mrb[0].mxu0
      %v4953 = vadd.f32 0.0, %v4952
      %v4954 = vpop.f32.mrb[0].mxu0
      %4955 = vmatprep.mubr.bf16.mxu0 0
      %4956 = vmatmul.mubr.bf16.gmra.mrb[0].mxu0 %v4842
      %v4957 = vpop.f32.mrb[0].mxu0
      %v4958 = vadd.f32 0.0, %v4957
      %v4959 = vpop.f32.mrb[0].mxu0
      %v4960 = vpop.f32.mrb[0].mxu0
      %v4961 = vadd.f32 0.0, %v4960
      %v4962 = vpop.f32.mrb[0].mxu0
      %4963 = vmatprep.mubr.bf16.mxu0 0
      %4964 = vmatmul.mubr.bf16.gmra.mrb[0].mxu0 %v4845
      %v4965 = vpop.f32.mrb[0].mxu0
      %v4966 = vadd.f32 0.0, %v4965
      %v4967 = vpop.f32.mrb[0].mxu0
      %v4968 = vpop.f32.mrb[0].mxu0
      %v4969 = vadd.f32 0.0, %v4968
      %v4970 = vpop.f32.mrb[0].mxu0
      %4971 = vmatprep.mubr.bf16.mxu0 0
      %4972 = vmatmul.mubr.bf16.gmra.mrb[0].mxu0 %v4848
      %v4973 = vpop.f32.mrb[0].mxu0
      %v4974 = vadd.f32 0.0, %v4973
      %v4975 = vpop.f32.mrb[0].mxu0
      %v4976 = vpop.f32.mrb[0].mxu0
      %v4977 = vadd.f32 0.0, %v4976
      %v4978 = vpop.f32.mrb[0].mxu0
      %4979 = vmatprep.mubr.bf16.mxu0 0
      %4980 = vmatmul.mubr.bf16.gmra.mrb[0].mxu0 %v4851
      %v4981 = vpop.f32.mrb[0].mxu0
      %v4982 = vadd.f32 0.0, %v4981
      %v4983 = vpop.f32.mrb[0].mxu0
      %v4984 = vpop.f32.mrb[0].mxu0
      %v4985 = vadd.f32 0.0, %v4984
      %v4986 = vpop.f32.mrb[0].mxu0
      %4987 = vmatprep.mubr.bf16.mxu0 0
      %4988 = vmatmul.mubr.bf16.gmra.mrb[0].mxu0 %v4854
      %v4989 = vpop.f32.mrb[0].mxu0
      %v4990 = vadd.f32 0.0, %v4989
      %v4991 = vpop.f32.mrb[0].mxu0
      %v4992 = vpop.f32.mrb[0].mxu0
      %v4993 = vadd.f32 0.0, %v4992
      %v4994 = vpop.f32.mrb[0].mxu0
      %4995 = vmatprep.mubr.bf16.mxu0 0
      %4996 = vmatmul.mubr.bf16.gmra.mrb[0].mxu0 %v4857
      %v4997 = vpop.f32.mrb[0].mxu0
      %v4998 = vadd.f32 0.0, %v4997
      %v4999 = vpop.f32.mrb[0].mxu0
      %v5000 = vpop.f32.mrb[0].mxu0
      %v5001 = vadd.f32 0.0, %v5000
      %v5002 = vpop.f32.mrb[0].mxu0
      %5003 = vmatprep.mubr.bf16.mxu0 0
      %5004 = vmatmul.mubr.bf16.gmra.mrb[0].mxu0 %v4860
      %v5005 = vpop.f32.mrb[0].mxu0
      %v5006 = vadd.f32 0.0, %v5005
      %v5007 = vpop.f32.mrb[0].mxu0
      %v5008 = vpop.f32.mrb[0].mxu0
      %v5009 = vadd.f32 0.0, %v5008
      %v5010 = vpop.f32.mrb[0].mxu0
      %5011 = vmatprep.mubr.bf16.mxu0 0
      %5012 = vmatmul.mubr.bf16.gmra.mrb[0].mxu0 %v4863
      %v5013 = vpop.f32.mrb[0].mxu0
      %v5014 = vadd.f32 0.0, %v5013
      %v5015 = vpop.f32.mrb[0].mxu0
      %v5016 = vpop.f32.mrb[0].mxu0
      %v5017 = vadd.f32 0.0, %v5016
      %v5018 = vpop.f32.mrb[0].mxu0
      %5019 = vmatprep.mubr.bf16.mxu0 0
      %5020 = vmatmul.mubr.bf16.gmra.mrb[0].mxu0 %v4866
      %v5021 = vpop.f32.mrb[0].mxu0
      %v5022 = vadd.f32 0.0, %v5021
      %v5023 = vpop.f32.mrb[0].mxu0
      %v5024 = vpop.f32.mrb[0].mxu0
      %v5025 = vadd.f32 0.0, %v5024
      %v5026 = vpop.f32.mrb[0].mxu0
      %5027 = vmatprep.mubr.bf16.mxu0 0
      %5028 = vmatmul.mubr.bf16.gmra.mrb[0].mxu0 %v4869
      %v5029 = vpop.f32.mrb[0].mxu0
      %v5030 = vadd.f32 0.0, %v5029
      %v5031 = vpop.f32.mrb[0].mxu0
      %v5032 = vpop.f32.mrb[0].mxu0
      %v5033 = vadd.f32 0.0, %v5032
      %v5034 = vpop.f32.mrb[0].mxu0
      %5035 = vmatprep.mubr.bf16.mxu0 0
      %5036 = vmatmul.mubr.bf16.gmra.mrb[0].mxu0 %v4872
      %v5037 = vpop.f32.mrb[0].mxu0
      %v5038 = vadd.f32 0.0, %v5037
      %v5039 = vpop.f32.mrb[0].mxu0
      %v5040 = vpop.f32.mrb[0].mxu0
      %v5041 = vadd.f32 0.0, %v5040
      %v5042 = vpop.f32.mrb[0].mxu0
      %5043 = vmatprep.mubr.bf16.mxu0 0
      %5044 = vmatmul.mubr.bf16.gmra.mrb[0].mxu0 %v4875
      %v5045 = vpop.f32.mrb[0].mxu0
      %v5046 = vadd.f32 0.0, %v5045
      %v5047 = vpop.f32.mrb[0].mxu0
      %v5048 = vpop.f32.mrb[0].mxu0
      %v5049 = vadd.f32 0.0, %v5048
      %v5050 = vpop.f32.mrb[0].mxu0
      %5051 = vmatprep.mubr.bf16.mxu0 0
      %5052 = vmatmul.mubr.bf16.gmra.mrb[0].mxu0 %v4878
      %v5053 = vpop.f32.mrb[0].mxu0
      %v5054 = vadd.f32 0.0, %v5053
      %v5055 = vpop.f32.mrb[0].mxu0
      %v5056 = vpop.f32.mrb[0].mxu0
      %v5057 = vadd.f32 0.0, %v5056
      %v5058 = vpop.f32.mrb[0].mxu0
      %5059 = vdwg.mxu0
      %v5060 = vadd.f32 %v4734, %v4918
      %v5061 = vadd.f32 %v4735, %v4921
      %v5062 = vadd.f32 %v4736, %v4926
      %v5063 = vadd.f32 %v4737, %v4929
      %v5064 = vadd.f32 %v4738, %v4934
      %v5065 = vadd.f32 %v4739, %v4937
      %v5066 = vadd.f32 %v4740, %v4942
      %v5067 = vadd.f32 %v4741, %v4945
      %v5068 = vadd.f32 %v4742, %v4950
      %v5069 = vadd.f32 %v4743, %v4953
      %v5070 = vadd.f32 %v4744, %v4958
      %v5071 = vadd.f32 %v4745, %v4961
      %v5072 = vadd.f32 %v4746, %v4966
      %v5073 = vadd.f32 %v4747, %v4969
      %v5074 = vadd.f32 %v4748, %v4974
      %v5075 = vadd.f32 %v4749, %v4977
      %v5076 = vadd.f32 %v4750, %v4982
      %v5077 = vadd.f32 %v4751, %v4985
      %v5078 = vadd.f32 %v4752, %v4990
      %v5079 = vadd.f32 %v4753, %v4993
      %v5080 = vadd.f32 %v4754, %v4998
      %v5081 = vadd.f32 %v4755, %v5001
      %v5082 = vadd.f32 %v4756, %v5006
      %v5083 = vadd.f32 %v4757, %v5009
      %v5084 = vadd.f32 %v4758, %v5014
      %v5085 = vadd.f32 %v4759, %v5017
      %v5086 = vadd.f32 %v4760, %v5022
      %v5087 = vadd.f32 %v4761, %v5025
      %v5088 = vadd.f32 %v4762, %v5030
      %v5089 = vadd.f32 %v4763, %v5033
      %v5090 = vadd.f32 %v4764, %v5038
      %v5091 = vadd.f32 %v4765, %v5041
      %v5092 = vadd.f32 %v4766, %v5046
      %v5093 = vadd.f32 %v4767, %v5049
      %v5094 = vadd.f32 %v4768, %v5054
      %v5095 = vadd.f32 %v4769, %v5057
      %v5096 = vld [vmem:[#allocation2 + $0x13] sm:$0xff]
      %v5097 = vld [vmem:[#allocation2 + $0x1b] sm:$0xff]
      %v5098 = vld [vmem:[#allocation2 + $0x23] sm:$0xff]
      %v5099 = vld [vmem:[#allocation2 + $0x2b] sm:$0xff]
      %v5100 = vld [vmem:[#allocation2 + $0x33] sm:$0xff]
      %v5101 = vld [vmem:[#allocation2 + $0x3b] sm:$0xff]
      %v5102 = vld [vmem:[#allocation2 + $0x43] sm:$0xff]
      %v5103 = vld [vmem:[#allocation2 + $0x4b] sm:$0xff]
      %v5104 = vld [vmem:[#allocation2 + $0x53] sm:$0xff]
      %v5105 = vld [vmem:[#allocation2 + $0x5b] sm:$0xff]
      %v5106 = vld [vmem:[#allocation2 + $0x63] sm:$0xff]
      %v5107 = vld [vmem:[#allocation2 + $0x6b] sm:$0xff]
      %v5108 = vld [vmem:[#allocation2 + $0x73] sm:$0xff]
      %v5109 = vld [vmem:[#allocation2 + $0x7b] sm:$0xff]
      %v5110 = vld [vmem:[#allocation2 + $0x83] sm:$0xff]
      %v5111 = vld [vmem:[#allocation2 + $0x8b] sm:$0xff]
      %v5112 = vld [vmem:[#allocation2 + $0x93] sm:$0xff]
      %v5113 = vld [vmem:[#allocation2 + $0x9b] sm:$0xff]
      %v5114 = vld [vmem:[#allocation2 + $0xa3] sm:$0xff]
      %v5115 = vld [vmem:[#allocation2 + $0xab] sm:$0xff]
      %v5116 = vld [vmem:[#allocation2 + $0xb3] sm:$0xff]
      %v5117 = vld [vmem:[#allocation2 + $0xbb] sm:$0xff]
      %v5118 = vld [vmem:[#allocation2 + $0xc3] sm:$0xff]
      %v5119 = vld [vmem:[#allocation2 + $0xcb] sm:$0xff]
      %v5120 = vld [vmem:[#allocation2 + $0xd3] sm:$0xff]
      %v5121 = vld [vmem:[#allocation2 + $0xdb] sm:$0xff]
      %v5122 = vld [vmem:[#allocation2 + $0xe3] sm:$0xff]
      %v5123 = vld [vmem:[#allocation2 + $0xeb] sm:$0xff]
      %v5124 = vld [vmem:[#allocation2 + $0xf3] sm:$0xff]
      %v5125 = vld [vmem:[#allocation2 + $0xfb] sm:$0xff]
      %v5126 = vld [vmem:[#allocation2 + $0x103] sm:$0xff]
      %v5127 = vld [vmem:[#allocation2 + $0x10b] sm:$0xff]
      %v5128 = vld [vmem:[#allocation2 + $0x113] sm:$0xff]
      %v5129 = vld [vmem:[#allocation2 + $0x11b] sm:$0xff]
      %v5130 = vld [vmem:[#allocation2 + $0x123] sm:$0xff]
      %v5131 = vld [vmem:[#allocation2 + $0x12b] sm:$0x3f]
      %v5132 = vpack.c.bf16 %v5097, %v5096
      %v5133 = vpack.c.bf16 %v5099, %v5098
      %v5134 = vpack.c.bf16 %v5101, %v5100
      %v5135 = vpack.c.bf16 %v5103, %v5102
      %v5136 = vpack.c.bf16 %v5105, %v5104
      %v5137 = vpack.c.bf16 %v5107, %v5106
      %v5138 = vpack.c.bf16 %v5109, %v5108
      %v5139 = vpack.c.bf16 %v5111, %v5110
      %v5140 = vpack.c.bf16 %v5113, %v5112
      %v5141 = vpack.c.bf16 %v5115, %v5114
      %v5142 = vpack.c.bf16 %v5117, %v5116
      %v5143 = vpack.c.bf16 %v5119, %v5118
      %v5144 = vpack.c.bf16 %v5121, %v5120
      %v5145 = vpack.c.bf16 %v5123, %v5122
      %v5146 = vpack.c.bf16 %v5125, %v5124
      %v5147 = vpack.c.bf16 %v5127, %v5126
      %v5148 = vpack.c.bf16 %v5129, %v5128
      %v5149 = vpack.c.bf16 %v5131, %v5130
      %s5150 = scalar_lea.vmem %s4, 16
      %v5151 = vld [vmem:[%s5150] sm:$0xf]
      %v5153 = vsel %vm3974, %v5132, 0
      %v5156 = vsel %vm3974, %v5133, 0
      %v5159 = vsel %vm3974, %v5134, 0
      %v5162 = vsel %vm3974, %v5135, 0
      %v5165 = vsel %vm3974, %v5136, 0
      %v5168 = vsel %vm3974, %v5137, 0
      %v5171 = vsel %vm3974, %v5138, 0
      %v5174 = vsel %vm3974, %v5139, 0
      %v5177 = vsel %vm3974, %v5140, 0
      %v5180 = vsel %vm3974, %v5141, 0
      %v5183 = vsel %vm3974, %v5142, 0
      %v5186 = vsel %vm3974, %v5143, 0
      %v5189 = vsel %vm3974, %v5144, 0
      %v5192 = vsel %vm3974, %v5145, 0
      %v5195 = vsel %vm3974, %v5146, 0
      %v5198 = vsel %vm3974, %v5147, 0
      %v5201 = vsel %vm3974, %v5148, 0
      %v5204 = vsel %vm3974, %v5149, 0
      %v5207 = vsel %vm4029, %v5151, 0
      %5209 = vmatprep.subr.bf16.mxu0 0
      %5210 = vmatpush1.bf16.msra.mxu0 %v5207
      %5211 = vmatprep.subr.bf16.mxu0 0
      %5212 = vmatpush1.bf16.msra.mxu0 0
      %5213 = vmatprep.subr.bf16.mxu0 0
      %5214 = vmatpush1.bf16.msra.mxu0 0
      %5215 = vmatprep.subr.bf16.mxu0 0
      %5216 = vmatpush1.bf16.msra.mxu0 0
      %5217 = vmatprep.subr.bf16.mxu0 0
      %5218 = vmatpush1.bf16.msra.mxu0 0
      %5219 = vmatprep.subr.bf16.mxu0 0
      %5220 = vmatpush1.bf16.msra.mxu0 0
      %5221 = vmatprep.subr.bf16.mxu0 0
      %5222 = vmatpush1.bf16.msra.mxu0 0
      %5223 = vmatprep.subr.bf16.mxu0 0
      %5224 = vmatpush1.bf16.msra.mxu0 0
      %5225 = vmatprep.subr.bf16.mxu0 0
      %5226 = vmatpush1.bf16.msra.mxu0 0
      %5227 = vmatprep.subr.bf16.mxu0 0
      %5228 = vmatpush1.bf16.msra.mxu0 0
      %5229 = vmatprep.subr.bf16.mxu0 0
      %5230 = vmatpush1.bf16.msra.mxu0 0
      %5231 = vmatprep.subr.bf16.mxu0 0
      %5232 = vmatpush1.bf16.msra.mxu0 0
      %5233 = vmatprep.subr.bf16.mxu0 0
      %5234 = vmatpush1.bf16.msra.mxu0 0
      %5235 = vmatprep.subr.bf16.mxu0 0
      %5236 = vmatpush1.bf16.msra.mxu0 0
      %5237 = vmatprep.subr.bf16.mxu0 0
      %5238 = vmatpush1.bf16.msra.mxu0 0
      %5239 = vmatprep.subr.bf16.mxu0 0
      %5240 = vmatpush1.bf16.msra.mxu0 0
      %5241 = vmatprep.mubr.bf16.mxu0 0
      %5242 = vmatmul.mubr.bf16.gmra.mrb[0].mxu0 %v5153
      %v5243 = vpop.f32.mrb[0].mxu0
      %v5244 = vadd.f32 0.0, %v5243
      %v5245 = vpop.f32.mrb[0].mxu0
      %v5246 = vpop.f32.mrb[0].mxu0
      %v5247 = vadd.f32 0.0, %v5246
      %v5248 = vpop.f32.mrb[0].mxu0
      %5249 = vmatprep.mubr.bf16.mxu0 0
      %5250 = vmatmul.mubr.bf16.gmra.mrb[0].mxu0 %v5156
      %v5251 = vpop.f32.mrb[0].mxu0
      %v5252 = vadd.f32 0.0, %v5251
      %v5253 = vpop.f32.mrb[0].mxu0
      %v5254 = vpop.f32.mrb[0].mxu0
      %v5255 = vadd.f32 0.0, %v5254
      %v5256 = vpop.f32.mrb[0].mxu0
      %5257 = vmatprep.mubr.bf16.mxu0 0
      %5258 = vmatmul.mubr.bf16.gmra.mrb[0].mxu0 %v5159
      %v5259 = vpop.f32.mrb[0].mxu0
      %v5260 = vadd.f32 0.0, %v5259
      %v5261 = vpop.f32.mrb[0].mxu0
      %v5262 = vpop.f32.mrb[0].mxu0
      %v5263 = vadd.f32 0.0, %v5262
      %v5264 = vpop.f32.mrb[0].mxu0
      %5265 = vmatprep.mubr.bf16.mxu0 0
      %5266 = vmatmul.mubr.bf16.gmra.mrb[0].mxu0 %v5162
      %v5267 = vpop.f32.mrb[0].mxu0
      %v5268 = vadd.f32 0.0, %v5267
      %v5269 = vpop.f32.mrb[0].mxu0
      %v5270 = vpop.f32.mrb[0].mxu0
      %v5271 = vadd.f32 0.0, %v5270
      %v5272 = vpop.f32.mrb[0].mxu0
      %5273 = vmatprep.mubr.bf16.mxu0 0
      %5274 = vmatmul.mubr.bf16.gmra.mrb[0].mxu0 %v5165
      %v5275 = vpop.f32.mrb[0].mxu0
      %v5276 = vadd.f32 0.0, %v5275
      %v5277 = vpop.f32.mrb[0].mxu0
      %v5278 = vpop.f32.mrb[0].mxu0
      %v5279 = vadd.f32 0.0, %v5278
      %v5280 = vpop.f32.mrb[0].mxu0
      %5281 = vmatprep.mubr.bf16.mxu0 0
      %5282 = vmatmul.mubr.bf16.gmra.mrb[0].mxu0 %v5168
      %v5283 = vpop.f32.mrb[0].mxu0
      %v5284 = vadd.f32 0.0, %v5283
      %v5285 = vpop.f32.mrb[0].mxu0
      %v5286 = vpop.f32.mrb[0].mxu0
      %v5287 = vadd.f32 0.0, %v5286
      %v5288 = vpop.f32.mrb[0].mxu0
      %5289 = vmatprep.mubr.bf16.mxu0 0
      %5290 = vmatmul.mubr.bf16.gmra.mrb[0].mxu0 %v5171
      %v5291 = vpop.f32.mrb[0].mxu0
      %v5292 = vadd.f32 0.0, %v5291
      %v5293 = vpop.f32.mrb[0].mxu0
      %v5294 = vpop.f32.mrb[0].mxu0
      %v5295 = vadd.f32 0.0, %v5294
      %v5296 = vpop.f32.mrb[0].mxu0
      %5297 = vmatprep.mubr.bf16.mxu0 0
      %5298 = vmatmul.mubr.bf16.gmra.mrb[0].mxu0 %v5174
      %v5299 = vpop.f32.mrb[0].mxu0
      %v5300 = vadd.f32 0.0, %v5299
      %v5301 = vpop.f32.mrb[0].mxu0
      %v5302 = vpop.f32.mrb[0].mxu0
      %v5303 = vadd.f32 0.0, %v5302
      %v5304 = vpop.f32.mrb[0].mxu0
      %5305 = vmatprep.mubr.bf16.mxu0 0
      %5306 = vmatmul.mubr.bf16.gmra.mrb[0].mxu0 %v5177
      %v5307 = vpop.f32.mrb[0].mxu0
      %v5308 = vadd.f32 0.0, %v5307
      %v5309 = vpop.f32.mrb[0].mxu0
      %v5310 = vpop.f32.mrb[0].mxu0
      %v5311 = vadd.f32 0.0, %v5310
      %v5312 = vpop.f32.mrb[0].mxu0
      %5313 = vmatprep.mubr.bf16.mxu0 0
      %5314 = vmatmul.mubr.bf16.gmra.mrb[0].mxu0 %v5180
      %v5315 = vpop.f32.mrb[0].mxu0
      %v5316 = vadd.f32 0.0, %v5315
      %v5317 = vpop.f32.mrb[0].mxu0
      %v5318 = vpop.f32.mrb[0].mxu0
      %v5319 = vadd.f32 0.0, %v5318
      %v5320 = vpop.f32.mrb[0].mxu0
      %5321 = vmatprep.mubr.bf16.mxu0 0
      %5322 = vmatmul.mubr.bf16.gmra.mrb[0].mxu0 %v5183
      %v5323 = vpop.f32.mrb[0].mxu0
      %v5324 = vadd.f32 0.0, %v5323
      %v5325 = vpop.f32.mrb[0].mxu0
      %v5326 = vpop.f32.mrb[0].mxu0
      %v5327 = vadd.f32 0.0, %v5326
      %v5328 = vpop.f32.mrb[0].mxu0
      %5329 = vmatprep.mubr.bf16.mxu0 0
      %5330 = vmatmul.mubr.bf16.gmra.mrb[0].mxu0 %v5186
      %v5331 = vpop.f32.mrb[0].mxu0
      %v5332 = vadd.f32 0.0, %v5331
      %v5333 = vpop.f32.mrb[0].mxu0
      %v5334 = vpop.f32.mrb[0].mxu0
      %v5335 = vadd.f32 0.0, %v5334
      %v5336 = vpop.f32.mrb[0].mxu0
      %5337 = vmatprep.mubr.bf16.mxu0 0
      %5338 = vmatmul.mubr.bf16.gmra.mrb[0].mxu0 %v5189
      %v5339 = vpop.f32.mrb[0].mxu0
      %v5340 = vadd.f32 0.0, %v5339
      %v5341 = vpop.f32.mrb[0].mxu0
      %v5342 = vpop.f32.mrb[0].mxu0
      %v5343 = vadd.f32 0.0, %v5342
      %v5344 = vpop.f32.mrb[0].mxu0
      %5345 = vmatprep.mubr.bf16.mxu0 0
      %5346 = vmatmul.mubr.bf16.gmra.mrb[0].mxu0 %v5192
      %v5347 = vpop.f32.mrb[0].mxu0
      %v5348 = vadd.f32 0.0, %v5347
      %v5349 = vpop.f32.mrb[0].mxu0
      %v5350 = vpop.f32.mrb[0].mxu0
      %v5351 = vadd.f32 0.0, %v5350
      %v5352 = vpop.f32.mrb[0].mxu0
      %5353 = vmatprep.mubr.bf16.mxu0 0
      %5354 = vmatmul.mubr.bf16.gmra.mrb[0].mxu0 %v5195
      %v5355 = vpop.f32.mrb[0].mxu0
      %v5356 = vadd.f32 0.0, %v5355
      %v5357 = vpop.f32.mrb[0].mxu0
      %v5358 = vpop.f32.mrb[0].mxu0
      %v5359 = vadd.f32 0.0, %v5358
      %v5360 = vpop.f32.mrb[0].mxu0
      %5361 = vmatprep.mubr.bf16.mxu0 0
      %5362 = vmatmul.mubr.bf16.gmra.mrb[0].mxu0 %v5198
      %v5363 = vpop.f32.mrb[0].mxu0
      %v5364 = vadd.f32 0.0, %v5363
      %v5365 = vpop.f32.mrb[0].mxu0
      %v5366 = vpop.f32.mrb[0].mxu0
      %v5367 = vadd.f32 0.0, %v5366
      %v5368 = vpop.f32.mrb[0].mxu0
      %5369 = vmatprep.mubr.bf16.mxu0 0
      %5370 = vmatmul.mubr.bf16.gmra.mrb[0].mxu0 %v5201
      %v5371 = vpop.f32.mrb[0].mxu0
      %v5372 = vadd.f32 0.0, %v5371
      %v5373 = vpop.f32.mrb[0].mxu0
      %v5374 = vpop.f32.mrb[0].mxu0
      %v5375 = vadd.f32 0.0, %v5374
      %v5376 = vpop.f32.mrb[0].mxu0
      %5377 = vmatprep.mubr.bf16.mxu0 0
      %5378 = vmatmul.mubr.bf16.gmra.mrb[0].mxu0 %v5204
      %v5379 = vpop.f32.mrb[0].mxu0
      %v5380 = vadd.f32 0.0, %v5379
      %v5381 = vpop.f32.mrb[0].mxu0
      %v5382 = vpop.f32.mrb[0].mxu0
      %v5383 = vadd.f32 0.0, %v5382
      %v5384 = vpop.f32.mrb[0].mxu0
      %5385 = vdwg.mxu0
      %v5386 = vadd.f32 %v5060, %v5244
      %v5387 = vadd.f32 %v5061, %v5247
      %v5388 = vadd.f32 %v5062, %v5252
      %v5389 = vadd.f32 %v5063, %v5255
      %v5390 = vadd.f32 %v5064, %v5260
      %v5391 = vadd.f32 %v5065, %v5263
      %v5392 = vadd.f32 %v5066, %v5268
      %v5393 = vadd.f32 %v5067, %v5271
      %v5394 = vadd.f32 %v5068, %v5276
      %v5395 = vadd.f32 %v5069, %v5279
      %v5396 = vadd.f32 %v5070, %v5284
      %v5397 = vadd.f32 %v5071, %v5287
      %v5398 = vadd.f32 %v5072, %v5292
      %v5399 = vadd.f32 %v5073, %v5295
      %v5400 = vadd.f32 %v5074, %v5300
      %v5401 = vadd.f32 %v5075, %v5303
      %v5402 = vadd.f32 %v5076, %v5308
      %v5403 = vadd.f32 %v5077, %v5311
      %v5404 = vadd.f32 %v5078, %v5316
      %v5405 = vadd.f32 %v5079, %v5319
      %v5406 = vadd.f32 %v5080, %v5324
      %v5407 = vadd.f32 %v5081, %v5327
      %v5408 = vadd.f32 %v5082, %v5332
      %v5409 = vadd.f32 %v5083, %v5335
      %v5410 = vadd.f32 %v5084, %v5340
      %v5411 = vadd.f32 %v5085, %v5343
      %v5412 = vadd.f32 %v5086, %v5348
      %v5413 = vadd.f32 %v5087, %v5351
      %v5414 = vadd.f32 %v5088, %v5356
      %v5415 = vadd.f32 %v5089, %v5359
      %v5416 = vadd.f32 %v5090, %v5364
      %v5417 = vadd.f32 %v5091, %v5367
      %v5418 = vadd.f32 %v5092, %v5372
      %v5419 = vadd.f32 %v5093, %v5375
      %v5420 = vadd.f32 %v5094, %v5380
      %v5421 = vadd.f32 %v5095, %v5383
      %v5422 = vld [vmem:[#allocation2 + $0x14] sm:$0xff]
      %v5423 = vld [vmem:[#allocation2 + $0x1c] sm:$0xff]
      %v5424 = vld [vmem:[#allocation2 + $0x24] sm:$0xff]
      %v5425 = vld [vmem:[#allocation2 + $0x2c] sm:$0xff]
      %v5426 = vld [vmem:[#allocation2 + $0x34] sm:$0xff]
      %v5427 = vld [vmem:[#allocation2 + $0x3c] sm:$0xff]
      %v5428 = vld [vmem:[#allocation2 + $0x44] sm:$0xff]
      %v5429 = vld [vmem:[#allocation2 + $0x4c] sm:$0xff]
      %v5430 = vld [vmem:[#allocation2 + $0x54] sm:$0xff]
      %v5431 = vld [vmem:[#allocation2 + $0x5c] sm:$0xff]
      %v5432 = vld [vmem:[#allocation2 + $0x64] sm:$0xff]
      %v5433 = vld [vmem:[#allocation2 + $0x6c] sm:$0xff]
      %v5434 = vld [vmem:[#allocation2 + $0x74] sm:$0xff]
      %v5435 = vld [vmem:[#allocation2 + $0x7c] sm:$0xff]
      %v5436 = vld [vmem:[#allocation2 + $0x84] sm:$0xff]
      %v5437 = vld [vmem:[#allocation2 + $0x8c] sm:$0xff]
      %v5438 = vld [vmem:[#allocation2 + $0x94] sm:$0xff]
      %v5439 = vld [vmem:[#allocation2 + $0x9c] sm:$0xff]
      %v5440 = vld [vmem:[#allocation2 + $0xa4] sm:$0xff]
      %v5441 = vld [vmem:[#allocation2 + $0xac] sm:$0xff]
      %v5442 = vld [vmem:[#allocation2 + $0xb4] sm:$0xff]
      %v5443 = vld [vmem:[#allocation2 + $0xbc] sm:$0xff]
      %v5444 = vld [vmem:[#allocation2 + $0xc4] sm:$0xff]
      %v5445 = vld [vmem:[#allocation2 + $0xcc] sm:$0xff]
      %v5446 = vld [vmem:[#allocation2 + $0xd4] sm:$0xff]
      %v5447 = vld [vmem:[#allocation2 + $0xdc] sm:$0xff]
      %v5448 = vld [vmem:[#allocation2 + $0xe4] sm:$0xff]
      %v5449 = vld [vmem:[#allocation2 + $0xec] sm:$0xff]
      %v5450 = vld [vmem:[#allocation2 + $0xf4] sm:$0xff]
      %v5451 = vld [vmem:[#allocation2 + $0xfc] sm:$0xff]
      %v5452 = vld [vmem:[#allocation2 + $0x104] sm:$0xff]
      %v5453 = vld [vmem:[#allocation2 + $0x10c] sm:$0xff]
      %v5454 = vld [vmem:[#allocation2 + $0x114] sm:$0xff]
      %v5455 = vld [vmem:[#allocation2 + $0x11c] sm:$0xff]
      %v5456 = vld [vmem:[#allocation2 + $0x124] sm:$0xff]
      %v5457 = vld [vmem:[#allocation2 + $0x12c] sm:$0x3f]
      %v5458 = vpack.c.bf16 %v5423, %v5422
      %v5459 = vpack.c.bf16 %v5425, %v5424
      %v5460 = vpack.c.bf16 %v5427, %v5426
      %v5461 = vpack.c.bf16 %v5429, %v5428
      %v5462 = vpack.c.bf16 %v5431, %v5430
      %v5463 = vpack.c.bf16 %v5433, %v5432
      %v5464 = vpack.c.bf16 %v5435, %v5434
      %v5465 = vpack.c.bf16 %v5437, %v5436
      %v5466 = vpack.c.bf16 %v5439, %v5438
      %v5467 = vpack.c.bf16 %v5441, %v5440
      %v5468 = vpack.c.bf16 %v5443, %v5442
      %v5469 = vpack.c.bf16 %v5445, %v5444
      %v5470 = vpack.c.bf16 %v5447, %v5446
      %v5471 = vpack.c.bf16 %v5449, %v5448
      %v5472 = vpack.c.bf16 %v5451, %v5450
      %v5473 = vpack.c.bf16 %v5453, %v5452
      %v5474 = vpack.c.bf16 %v5455, %v5454
      %v5475 = vpack.c.bf16 %v5457, %v5456
      %s5476 = scalar_lea.vmem %s4, 20
      %v5477 = vld [vmem:[%s5476] sm:$0xf]
      %v5479 = vsel %vm3974, %v5458, 0
      %v5482 = vsel %vm3974, %v5459, 0
      %v5485 = vsel %vm3974, %v5460, 0
      %v5488 = vsel %vm3974, %v5461, 0
      %v5491 = vsel %vm3974, %v5462, 0
      %v5494 = vsel %vm3974, %v5463, 0
      %v5497 = vsel %vm3974, %v5464, 0
      %v5500 = vsel %vm3974, %v5465, 0
      %v5503 = vsel %vm3974, %v5466, 0
      %v5506 = vsel %vm3974, %v5467, 0
      %v5509 = vsel %vm3974, %v5468, 0
      %v5512 = vsel %vm3974, %v5469, 0
      %v5515 = vsel %vm3974, %v5470, 0
      %v5518 = vsel %vm3974, %v5471, 0
      %v5521 = vsel %vm3974, %v5472, 0
      %v5524 = vsel %vm3974, %v5473, 0
      %v5527 = vsel %vm3974, %v5474, 0
      %v5530 = vsel %vm3974, %v5475, 0
      %v5533 = vsel %vm4029, %v5477, 0
      %5535 = vmatprep.subr.bf16.mxu0 0
      %5536 = vmatpush1.bf16.msra.mxu0 %v5533
      %5537 = vmatprep.subr.bf16.mxu0 0
      %5538 = vmatpush1.bf16.msra.mxu0 0
      %5539 = vmatprep.subr.bf16.mxu0 0
      %5540 = vmatpush1.bf16.msra.mxu0 0
      %5541 = vmatprep.subr.bf16.mxu0 0
      %5542 = vmatpush1.bf16.msra.mxu0 0
      %5543 = vmatprep.subr.bf16.mxu0 0
      %5544 = vmatpush1.bf16.msra.mxu0 0
      %5545 = vmatprep.subr.bf16.mxu0 0
      %5546 = vmatpush1.bf16.msra.mxu0 0
      %5547 = vmatprep.subr.bf16.mxu0 0
      %5548 = vmatpush1.bf16.msra.mxu0 0
      %5549 = vmatprep.subr.bf16.mxu0 0
      %5550 = vmatpush1.bf16.msra.mxu0 0
      %5551 = vmatprep.subr.bf16.mxu0 0
      %5552 = vmatpush1.bf16.msra.mxu0 0
      %5553 = vmatprep.subr.bf16.mxu0 0
      %5554 = vmatpush1.bf16.msra.mxu0 0
      %5555 = vmatprep.subr.bf16.mxu0 0
      %5556 = vmatpush1.bf16.msra.mxu0 0
      %5557 = vmatprep.subr.bf16.mxu0 0
      %5558 = vmatpush1.bf16.msra.mxu0 0
      %5559 = vmatprep.subr.bf16.mxu0 0
      %5560 = vmatpush1.bf16.msra.mxu0 0
      %5561 = vmatprep.subr.bf16.mxu0 0
      %5562 = vmatpush1.bf16.msra.mxu0 0
      %5563 = vmatprep.subr.bf16.mxu0 0
      %5564 = vmatpush1.bf16.msra.mxu0 0
      %5565 = vmatprep.subr.bf16.mxu0 0
      %5566 = vmatpush1.bf16.msra.mxu0 0
      %5567 = vmatprep.mubr.bf16.mxu0 0
      %5568 = vmatmul.mubr.bf16.gmra.mrb[0].mxu0 %v5479
      %v5569 = vpop.f32.mrb[0].mxu0
      %v5570 = vadd.f32 0.0, %v5569
      %v5571 = vpop.f32.mrb[0].mxu0
      %v5572 = vpop.f32.mrb[0].mxu0
      %v5573 = vadd.f32 0.0, %v5572
      %v5574 = vpop.f32.mrb[0].mxu0
      %5575 = vmatprep.mubr.bf16.mxu0 0
      %5576 = vmatmul.mubr.bf16.gmra.mrb[0].mxu0 %v5482
      %v5577 = vpop.f32.mrb[0].mxu0
      %v5578 = vadd.f32 0.0, %v5577
      %v5579 = vpop.f32.mrb[0].mxu0
      %v5580 = vpop.f32.mrb[0].mxu0
      %v5581 = vadd.f32 0.0, %v5580
      %v5582 = vpop.f32.mrb[0].mxu0
      %5583 = vmatprep.mubr.bf16.mxu0 0
      %5584 = vmatmul.mubr.bf16.gmra.mrb[0].mxu0 %v5485
      %v5585 = vpop.f32.mrb[0].mxu0
      %v5586 = vadd.f32 0.0, %v5585
      %v5587 = vpop.f32.mrb[0].mxu0
      %v5588 = vpop.f32.mrb[0].mxu0
      %v5589 = vadd.f32 0.0, %v5588
      %v5590 = vpop.f32.mrb[0].mxu0
      %5591 = vmatprep.mubr.bf16.mxu0 0
      %5592 = vmatmul.mubr.bf16.gmra.mrb[0].mxu0 %v5488
      %v5593 = vpop.f32.mrb[0].mxu0
      %v5594 = vadd.f32 0.0, %v5593
      %v5595 = vpop.f32.mrb[0].mxu0
      %v5596 = vpop.f32.mrb[0].mxu0
      %v5597 = vadd.f32 0.0, %v5596
      %v5598 = vpop.f32.mrb[0].mxu0
      %5599 = vmatprep.mubr.bf16.mxu0 0
      %5600 = vmatmul.mubr.bf16.gmra.mrb[0].mxu0 %v5491
      %v5601 = vpop.f32.mrb[0].mxu0
      %v5602 = vadd.f32 0.0, %v5601
      %v5603 = vpop.f32.mrb[0].mxu0
      %v5604 = vpop.f32.mrb[0].mxu0
      %v5605 = vadd.f32 0.0, %v5604
      %v5606 = vpop.f32.mrb[0].mxu0
      %5607 = vmatprep.mubr.bf16.mxu0 0
      %5608 = vmatmul.mubr.bf16.gmra.mrb[0].mxu0 %v5494
      %v5609 = vpop.f32.mrb[0].mxu0
      %v5610 = vadd.f32 0.0, %v5609
      %v5611 = vpop.f32.mrb[0].mxu0
      %v5612 = vpop.f32.mrb[0].mxu0
      %v5613 = vadd.f32 0.0, %v5612
      %v5614 = vpop.f32.mrb[0].mxu0
      %5615 = vmatprep.mubr.bf16.mxu0 0
      %5616 = vmatmul.mubr.bf16.gmra.mrb[0].mxu0 %v5497
      %v5617 = vpop.f32.mrb[0].mxu0
      %v5618 = vadd.f32 0.0, %v5617
      %v5619 = vpop.f32.mrb[0].mxu0
      %v5620 = vpop.f32.mrb[0].mxu0
      %v5621 = vadd.f32 0.0, %v5620
      %v5622 = vpop.f32.mrb[0].mxu0
      %5623 = vmatprep.mubr.bf16.mxu0 0
      %5624 = vmatmul.mubr.bf16.gmra.mrb[0].mxu0 %v5500
      %v5625 = vpop.f32.mrb[0].mxu0
      %v5626 = vadd.f32 0.0, %v5625
      %v5627 = vpop.f32.mrb[0].mxu0
      %v5628 = vpop.f32.mrb[0].mxu0
      %v5629 = vadd.f32 0.0, %v5628
      %v5630 = vpop.f32.mrb[0].mxu0
      %5631 = vmatprep.mubr.bf16.mxu0 0
      %5632 = vmatmul.mubr.bf16.gmra.mrb[0].mxu0 %v5503
      %v5633 = vpop.f32.mrb[0].mxu0
      %v5634 = vadd.f32 0.0, %v5633
      %v5635 = vpop.f32.mrb[0].mxu0
      %v5636 = vpop.f32.mrb[0].mxu0
      %v5637 = vadd.f32 0.0, %v5636
      %v5638 = vpop.f32.mrb[0].mxu0
      %5639 = vmatprep.mubr.bf16.mxu0 0
      %5640 = vmatmul.mubr.bf16.gmra.mrb[0].mxu0 %v5506
      %v5641 = vpop.f32.mrb[0].mxu0
      %v5642 = vadd.f32 0.0, %v5641
      %v5643 = vpop.f32.mrb[0].mxu0
      %v5644 = vpop.f32.mrb[0].mxu0
      %v5645 = vadd.f32 0.0, %v5644
      %v5646 = vpop.f32.mrb[0].mxu0
      %5647 = vmatprep.mubr.bf16.mxu0 0
      %5648 = vmatmul.mubr.bf16.gmra.mrb[0].mxu0 %v5509
      %v5649 = vpop.f32.mrb[0].mxu0
      %v5650 = vadd.f32 0.0, %v5649
      %v5651 = vpop.f32.mrb[0].mxu0
      %v5652 = vpop.f32.mrb[0].mxu0
      %v5653 = vadd.f32 0.0, %v5652
      %v5654 = vpop.f32.mrb[0].mxu0
      %5655 = vmatprep.mubr.bf16.mxu0 0
      %5656 = vmatmul.mubr.bf16.gmra.mrb[0].mxu0 %v5512
      %v5657 = vpop.f32.mrb[0].mxu0
      %v5658 = vadd.f32 0.0, %v5657
      %v5659 = vpop.f32.mrb[0].mxu0
      %v5660 = vpop.f32.mrb[0].mxu0
      %v5661 = vadd.f32 0.0, %v5660
      %v5662 = vpop.f32.mrb[0].mxu0
      %5663 = vmatprep.mubr.bf16.mxu0 0
      %5664 = vmatmul.mubr.bf16.gmra.mrb[0].mxu0 %v5515
      %v5665 = vpop.f32.mrb[0].mxu0
      %v5666 = vadd.f32 0.0, %v5665
      %v5667 = vpop.f32.mrb[0].mxu0
      %v5668 = vpop.f32.mrb[0].mxu0
      %v5669 = vadd.f32 0.0, %v5668
      %v5670 = vpop.f32.mrb[0].mxu0
      %5671 = vmatprep.mubr.bf16.mxu0 0
      %5672 = vmatmul.mubr.bf16.gmra.mrb[0].mxu0 %v5518
      %v5673 = vpop.f32.mrb[0].mxu0
      %v5674 = vadd.f32 0.0, %v5673
      %v5675 = vpop.f32.mrb[0].mxu0
      %v5676 = vpop.f32.mrb[0].mxu0
      %v5677 = vadd.f32 0.0, %v5676
      %v5678 = vpop.f32.mrb[0].mxu0
      %5679 = vmatprep.mubr.bf16.mxu0 0
      %5680 = vmatmul.mubr.bf16.gmra.mrb[0].mxu0 %v5521
      %v5681 = vpop.f32.mrb[0].mxu0
      %v5682 = vadd.f32 0.0, %v5681
      %v5683 = vpop.f32.mrb[0].mxu0
      %v5684 = vpop.f32.mrb[0].mxu0
      %v5685 = vadd.f32 0.0, %v5684
      %v5686 = vpop.f32.mrb[0].mxu0
      %5687 = vmatprep.mubr.bf16.mxu0 0
      %5688 = vmatmul.mubr.bf16.gmra.mrb[0].mxu0 %v5524
      %v5689 = vpop.f32.mrb[0].mxu0
      %v5690 = vadd.f32 0.0, %v5689
      %v5691 = vpop.f32.mrb[0].mxu0
      %v5692 = vpop.f32.mrb[0].mxu0
      %v5693 = vadd.f32 0.0, %v5692
      %v5694 = vpop.f32.mrb[0].mxu0
      %5695 = vmatprep.mubr.bf16.mxu0 0
      %5696 = vmatmul.mubr.bf16.gmra.mrb[0].mxu0 %v5527
      %v5697 = vpop.f32.mrb[0].mxu0
      %v5698 = vadd.f32 0.0, %v5697
      %v5699 = vpop.f32.mrb[0].mxu0
      %v5700 = vpop.f32.mrb[0].mxu0
      %v5701 = vadd.f32 0.0, %v5700
      %v5702 = vpop.f32.mrb[0].mxu0
      %5703 = vmatprep.mubr.bf16.mxu0 0
      %5704 = vmatmul.mubr.bf16.gmra.mrb[0].mxu0 %v5530
      %v5705 = vpop.f32.mrb[0].mxu0
      %v5706 = vadd.f32 0.0, %v5705
      %v5707 = vpop.f32.mrb[0].mxu0
      %v5708 = vpop.f32.mrb[0].mxu0
      %v5709 = vadd.f32 0.0, %v5708
      %v5710 = vpop.f32.mrb[0].mxu0
      %5711 = vdwg.mxu0
      %v5712 = vadd.f32 %v5386, %v5570
      %v5713 = vadd.f32 %v5387, %v5573
      %v5714 = vadd.f32 %v5388, %v5578
      %v5715 = vadd.f32 %v5389, %v5581
      %v5716 = vadd.f32 %v5390, %v5586
      %v5717 = vadd.f32 %v5391, %v5589
      %v5718 = vadd.f32 %v5392, %v5594
      %v5719 = vadd.f32 %v5393, %v5597
      %v5720 = vadd.f32 %v5394, %v5602
      %v5721 = vadd.f32 %v5395, %v5605
      %v5722 = vadd.f32 %v5396, %v5610
      %v5723 = vadd.f32 %v5397, %v5613
      %v5724 = vadd.f32 %v5398, %v5618
      %v5725 = vadd.f32 %v5399, %v5621
      %v5726 = vadd.f32 %v5400, %v5626
      %v5727 = vadd.f32 %v5401, %v5629
      %v5728 = vadd.f32 %v5402, %v5634
      %v5729 = vadd.f32 %v5403, %v5637
      %v5730 = vadd.f32 %v5404, %v5642
      %v5731 = vadd.f32 %v5405, %v5645
      %v5732 = vadd.f32 %v5406, %v5650
      %v5733 = vadd.f32 %v5407, %v5653
      %v5734 = vadd.f32 %v5408, %v5658
      %v5735 = vadd.f32 %v5409, %v5661
      %v5736 = vadd.f32 %v5410, %v5666
      %v5737 = vadd.f32 %v5411, %v5669
      %v5738 = vadd.f32 %v5412, %v5674
      %v5739 = vadd.f32 %v5413, %v5677
      %v5740 = vadd.f32 %v5414, %v5682
      %v5741 = vadd.f32 %v5415, %v5685
      %v5742 = vadd.f32 %v5416, %v5690
      %v5743 = vadd.f32 %v5417, %v5693
      %v5744 = vadd.f32 %v5418, %v5698
      %v5745 = vadd.f32 %v5419, %v5701
      %v5746 = vadd.f32 %v5420, %v5706
      %v5747 = vadd.f32 %v5421, %v5709
      %v5748 = vld [vmem:[#allocation2 + $0x24] sm:$0xff]
      %v5749 = vld [vmem:[#allocation2 + $0x2c] sm:$0xff]
      %v5750 = vld [vmem:[#allocation2 + $0x34] sm:$0xff]
      %v5751 = vld [vmem:[#allocation2 + $0x3c] sm:$0xff]
      %v5752 = vld [vmem:[#allocation2 + $0x44] sm:$0xff]
      %v5753 = vld [vmem:[#allocation2 + $0x4c] sm:$0xff]
      %v5754 = vld [vmem:[#allocation2 + $0x54] sm:$0xff]
      %v5755 = vld [vmem:[#allocation2 + $0x5c] sm:$0xff]
      %v5756 = vld [vmem:[#allocation2 + $0x64] sm:$0xff]
      %v5757 = vld [vmem:[#allocation2 + $0x6c] sm:$0xff]
      %v5758 = vld [vmem:[#allocation2 + $0x74] sm:$0xff]
      %v5759 = vld [vmem:[#allocation2 + $0x7c] sm:$0xff]
      %v5760 = vld [vmem:[#allocation2 + $0x84] sm:$0xff]
      %v5761 = vld [vmem:[#allocation2 + $0x8c] sm:$0xff]
      %v5762 = vld [vmem:[#allocation2 + $0x94] sm:$0xff]
      %v5763 = vld [vmem:[#allocation2 + $0x9c] sm:$0xff]
      %v5764 = vld [vmem:[#allocation2 + $0xa4] sm:$0xff]
      %v5765 = vld [vmem:[#allocation2 + $0xac] sm:$0xff]
      %v5766 = vld [vmem:[#allocation2 + $0xb4] sm:$0xff]
      %v5767 = vld [vmem:[#allocation2 + $0xbc] sm:$0xff]
      %v5768 = vld [vmem:[#allocation2 + $0xc4] sm:$0xff]
      %v5769 = vld [vmem:[#allocation2 + $0xcc] sm:$0xff]
      %v5770 = vld [vmem:[#allocation2 + $0xd4] sm:$0xff]
      %v5771 = vld [vmem:[#allocation2 + $0xdc] sm:$0xff]
      %v5772 = vld [vmem:[#allocation2 + $0xe4] sm:$0xff]
      %v5773 = vld [vmem:[#allocation2 + $0xec] sm:$0xff]
      %v5774 = vld [vmem:[#allocation2 + $0xf4] sm:$0xff]
      %v5775 = vld [vmem:[#allocation2 + $0xfc] sm:$0xff]
      %v5776 = vld [vmem:[#allocation2 + $0x104] sm:$0xff]
      %v5777 = vld [vmem:[#allocation2 + $0x10c] sm:$0xff]
      %v5778 = vld [vmem:[#allocation2 + $0x114] sm:$0xff]
      %v5779 = vld [vmem:[#allocation2 + $0x11c] sm:$0xff]
      %v5780 = vld [vmem:[#allocation2 + $0x124] sm:$0xff]
      %v5781 = vld [vmem:[#allocation2 + $0x12c] sm:$0xff]
      %v5782 = vld [vmem:[#allocation2 + $0x134] sm:$0xff]
      %v5783 = vld [vmem:[#allocation2 + $0x13c] sm:$0x3f]
      %v5784 = vpack.c.bf16 %v5749, %v5748
      %v5785 = vpack.c.bf16 %v5751, %v5750
      %v5786 = vpack.c.bf16 %v5753, %v5752
      %v5787 = vpack.c.bf16 %v5755, %v5754
      %v5788 = vpack.c.bf16 %v5757, %v5756
      %v5789 = vpack.c.bf16 %v5759, %v5758
      %v5790 = vpack.c.bf16 %v5761, %v5760
      %v5791 = vpack.c.bf16 %v5763, %v5762
      %v5792 = vpack.c.bf16 %v5765, %v5764
      %v5793 = vpack.c.bf16 %v5767, %v5766
      %v5794 = vpack.c.bf16 %v5769, %v5768
      %v5795 = vpack.c.bf16 %v5771, %v5770
      %v5796 = vpack.c.bf16 %v5773, %v5772
      %v5797 = vpack.c.bf16 %v5775, %v5774
      %v5798 = vpack.c.bf16 %v5777, %v5776
      %v5799 = vpack.c.bf16 %v5779, %v5778
      %v5800 = vpack.c.bf16 %v5781, %v5780
      %v5801 = vpack.c.bf16 %v5783, %v5782
      %s5802 = scalar_lea.vmem %s4, 24
      %v5803 = vld [vmem:[%s5802] sm:$0xf]
      %v5805 = vsel %vm3974, %v5784, 0
      %v5808 = vsel %vm3974, %v5785, 0
      %v5811 = vsel %vm3974, %v5786, 0
      %v5814 = vsel %vm3974, %v5787, 0
      %v5817 = vsel %vm3974, %v5788, 0
      %v5820 = vsel %vm3974, %v5789, 0
      %v5823 = vsel %vm3974, %v5790, 0
      %v5826 = vsel %vm3974, %v5791, 0
      %v5829 = vsel %vm3974, %v5792, 0
      %v5832 = vsel %vm3974, %v5793, 0
      %v5835 = vsel %vm3974, %v5794, 0
      %v5838 = vsel %vm3974, %v5795, 0
      %v5841 = vsel %vm3974, %v5796, 0
      %v5844 = vsel %vm3974, %v5797, 0
      %v5847 = vsel %vm3974, %v5798, 0
      %v5850 = vsel %vm3974, %v5799, 0
      %v5853 = vsel %vm3974, %v5800, 0
      %v5856 = vsel %vm3974, %v5801, 0
      %v5859 = vsel %vm4029, %v5803, 0
      %5861 = vmatprep.subr.bf16.mxu0 0
      %5862 = vmatpush1.bf16.msra.mxu0 %v5859
      %5863 = vmatprep.subr.bf16.mxu0 0
      %5864 = vmatpush1.bf16.msra.mxu0 0
      %5865 = vmatprep.subr.bf16.mxu0 0
      %5866 = vmatpush1.bf16.msra.mxu0 0
      %5867 = vmatprep.subr.bf16.mxu0 0
      %5868 = vmatpush1.bf16.msra.mxu0 0
      %5869 = vmatprep.subr.bf16.mxu0 0
      %5870 = vmatpush1.bf16.msra.mxu0 0
      %5871 = vmatprep.subr.bf16.mxu0 0
      %5872 = vmatpush1.bf16.msra.mxu0 0
      %5873 = vmatprep.subr.bf16.mxu0 0
      %5874 = vmatpush1.bf16.msra.mxu0 0
      %5875 = vmatprep.subr.bf16.mxu0 0
      %5876 = vmatpush1.bf16.msra.mxu0 0
      %5877 = vmatprep.subr.bf16.mxu0 0
      %5878 = vmatpush1.bf16.msra.mxu0 0
      %5879 = vmatprep.subr.bf16.mxu0 0
      %5880 = vmatpush1.bf16.msra.mxu0 0
      %5881 = vmatprep.subr.bf16.mxu0 0
      %5882 = vmatpush1.bf16.msra.mxu0 0
      %5883 = vmatprep.subr.bf16.mxu0 0
      %5884 = vmatpush1.bf16.msra.mxu0 0
      %5885 = vmatprep.subr.bf16.mxu0 0
      %5886 = vmatpush1.bf16.msra.mxu0 0
      %5887 = vmatprep.subr.bf16.mxu0 0
      %5888 = vmatpush1.bf16.msra.mxu0 0
      %5889 = vmatprep.subr.bf16.mxu0 0
      %5890 = vmatpush1.bf16.msra.mxu0 0
      %5891 = vmatprep.subr.bf16.mxu0 0
      %5892 = vmatpush1.bf16.msra.mxu0 0
      %5893 = vmatprep.mubr.bf16.mxu0 0
      %5894 = vmatmul.mubr.bf16.gmra.mrb[0].mxu0 %v5805
      %v5895 = vpop.f32.mrb[0].mxu0
      %v5896 = vadd.f32 0.0, %v5895
      %v5897 = vpop.f32.mrb[0].mxu0
      %v5898 = vpop.f32.mrb[0].mxu0
      %v5899 = vadd.f32 0.0, %v5898
      %v5900 = vpop.f32.mrb[0].mxu0
      %5901 = vmatprep.mubr.bf16.mxu0 0
      %5902 = vmatmul.mubr.bf16.gmra.mrb[0].mxu0 %v5808
      %v5903 = vpop.f32.mrb[0].mxu0
      %v5904 = vadd.f32 0.0, %v5903
      %v5905 = vpop.f32.mrb[0].mxu0
      %v5906 = vpop.f32.mrb[0].mxu0
      %v5907 = vadd.f32 0.0, %v5906
      %v5908 = vpop.f32.mrb[0].mxu0
      %5909 = vmatprep.mubr.bf16.mxu0 0
      %5910 = vmatmul.mubr.bf16.gmra.mrb[0].mxu0 %v5811
      %v5911 = vpop.f32.mrb[0].mxu0
      %v5912 = vadd.f32 0.0, %v5911
      %v5913 = vpop.f32.mrb[0].mxu0
      %v5914 = vpop.f32.mrb[0].mxu0
      %v5915 = vadd.f32 0.0, %v5914
      %v5916 = vpop.f32.mrb[0].mxu0
      %5917 = vmatprep.mubr.bf16.mxu0 0
      %5918 = vmatmul.mubr.bf16.gmra.mrb[0].mxu0 %v5814
      %v5919 = vpop.f32.mrb[0].mxu0
      %v5920 = vadd.f32 0.0, %v5919
      %v5921 = vpop.f32.mrb[0].mxu0
      %v5922 = vpop.f32.mrb[0].mxu0
      %v5923 = vadd.f32 0.0, %v5922
      %v5924 = vpop.f32.mrb[0].mxu0
      %5925 = vmatprep.mubr.bf16.mxu0 0
      %5926 = vmatmul.mubr.bf16.gmra.mrb[0].mxu0 %v5817
      %v5927 = vpop.f32.mrb[0].mxu0
      %v5928 = vadd.f32 0.0, %v5927
      %v5929 = vpop.f32.mrb[0].mxu0
      %v5930 = vpop.f32.mrb[0].mxu0
      %v5931 = vadd.f32 0.0, %v5930
      %v5932 = vpop.f32.mrb[0].mxu0
      %5933 = vmatprep.mubr.bf16.mxu0 0
      %5934 = vmatmul.mubr.bf16.gmra.mrb[0].mxu0 %v5820
      %v5935 = vpop.f32.mrb[0].mxu0
      %v5936 = vadd.f32 0.0, %v5935
      %v5937 = vpop.f32.mrb[0].mxu0
      %v5938 = vpop.f32.mrb[0].mxu0
      %v5939 = vadd.f32 0.0, %v5938
      %v5940 = vpop.f32.mrb[0].mxu0
      %5941 = vmatprep.mubr.bf16.mxu0 0
      %5942 = vmatmul.mubr.bf16.gmra.mrb[0].mxu0 %v5823
      %v5943 = vpop.f32.mrb[0].mxu0
      %v5944 = vadd.f32 0.0, %v5943
      %v5945 = vpop.f32.mrb[0].mxu0
      %v5946 = vpop.f32.mrb[0].mxu0
      %v5947 = vadd.f32 0.0, %v5946
      %v5948 = vpop.f32.mrb[0].mxu0
      %5949 = vmatprep.mubr.bf16.mxu0 0
      %5950 = vmatmul.mubr.bf16.gmra.mrb[0].mxu0 %v5826
      %v5951 = vpop.f32.mrb[0].mxu0
      %v5952 = vadd.f32 0.0, %v5951
      %v5953 = vpop.f32.mrb[0].mxu0
      %v5954 = vpop.f32.mrb[0].mxu0
      %v5955 = vadd.f32 0.0, %v5954
      %v5956 = vpop.f32.mrb[0].mxu0
      %5957 = vmatprep.mubr.bf16.mxu0 0
      %5958 = vmatmul.mubr.bf16.gmra.mrb[0].mxu0 %v5829
      %v5959 = vpop.f32.mrb[0].mxu0
      %v5960 = vadd.f32 0.0, %v5959
      %v5961 = vpop.f32.mrb[0].mxu0
      %v5962 = vpop.f32.mrb[0].mxu0
      %v5963 = vadd.f32 0.0, %v5962
      %v5964 = vpop.f32.mrb[0].mxu0
      %5965 = vmatprep.mubr.bf16.mxu0 0
      %5966 = vmatmul.mubr.bf16.gmra.mrb[0].mxu0 %v5832
      %v5967 = vpop.f32.mrb[0].mxu0
      %v5968 = vadd.f32 0.0, %v5967
      %v5969 = vpop.f32.mrb[0].mxu0
      %v5970 = vpop.f32.mrb[0].mxu0
      %v5971 = vadd.f32 0.0, %v5970
      %v5972 = vpop.f32.mrb[0].mxu0
      %5973 = vmatprep.mubr.bf16.mxu0 0
      %5974 = vmatmul.mubr.bf16.gmra.mrb[0].mxu0 %v5835
      %v5975 = vpop.f32.mrb[0].mxu0
      %v5976 = vadd.f32 0.0, %v5975
      %v5977 = vpop.f32.mrb[0].mxu0
      %v5978 = vpop.f32.mrb[0].mxu0
      %v5979 = vadd.f32 0.0, %v5978
      %v5980 = vpop.f32.mrb[0].mxu0
      %5981 = vmatprep.mubr.bf16.mxu0 0
      %5982 = vmatmul.mubr.bf16.gmra.mrb[0].mxu0 %v5838
      %v5983 = vpop.f32.mrb[0].mxu0
      %v5984 = vadd.f32 0.0, %v5983
      %v5985 = vpop.f32.mrb[0].mxu0
      %v5986 = vpop.f32.mrb[0].mxu0
      %v5987 = vadd.f32 0.0, %v5986
      %v5988 = vpop.f32.mrb[0].mxu0
      %5989 = vmatprep.mubr.bf16.mxu0 0
      %5990 = vmatmul.mubr.bf16.gmra.mrb[0].mxu0 %v5841
      %v5991 = vpop.f32.mrb[0].mxu0
      %v5992 = vadd.f32 0.0, %v5991
      %v5993 = vpop.f32.mrb[0].mxu0
      %v5994 = vpop.f32.mrb[0].mxu0
      %v5995 = vadd.f32 0.0, %v5994
      %v5996 = vpop.f32.mrb[0].mxu0
      %5997 = vmatprep.mubr.bf16.mxu0 0
      %5998 = vmatmul.mubr.bf16.gmra.mrb[0].mxu0 %v5844
      %v5999 = vpop.f32.mrb[0].mxu0
      %v6000 = vadd.f32 0.0, %v5999
      %v6001 = vpop.f32.mrb[0].mxu0
      %v6002 = vpop.f32.mrb[0].mxu0
      %v6003 = vadd.f32 0.0, %v6002
      %v6004 = vpop.f32.mrb[0].mxu0
      %6005 = vmatprep.mubr.bf16.mxu0 0
      %6006 = vmatmul.mubr.bf16.gmra.mrb[0].mxu0 %v5847
      %v6007 = vpop.f32.mrb[0].mxu0
      %v6008 = vadd.f32 0.0, %v6007
      %v6009 = vpop.f32.mrb[0].mxu0
      %v6010 = vpop.f32.mrb[0].mxu0
      %v6011 = vadd.f32 0.0, %v6010
      %v6012 = vpop.f32.mrb[0].mxu0
      %6013 = vmatprep.mubr.bf16.mxu0 0
      %6014 = vmatmul.mubr.bf16.gmra.mrb[0].mxu0 %v5850
      %v6015 = vpop.f32.mrb[0].mxu0
      %v6016 = vadd.f32 0.0, %v6015
      %v6017 = vpop.f32.mrb[0].mxu0
      %v6018 = vpop.f32.mrb[0].mxu0
      %v6019 = vadd.f32 0.0, %v6018
      %v6020 = vpop.f32.mrb[0].mxu0
      %6021 = vmatprep.mubr.bf16.mxu0 0
      %6022 = vmatmul.mubr.bf16.gmra.mrb[0].mxu0 %v5853
      %v6023 = vpop.f32.mrb[0].mxu0
      %v6024 = vadd.f32 0.0, %v6023
      %v6025 = vpop.f32.mrb[0].mxu0
      %v6026 = vpop.f32.mrb[0].mxu0
      %v6027 = vadd.f32 0.0, %v6026
      %v6028 = vpop.f32.mrb[0].mxu0
      %6029 = vmatprep.mubr.bf16.mxu0 0
      %6030 = vmatmul.mubr.bf16.gmra.mrb[0].mxu0 %v5856
      %v6031 = vpop.f32.mrb[0].mxu0
      %v6032 = vadd.f32 0.0, %v6031
      %v6033 = vpop.f32.mrb[0].mxu0
      %v6034 = vpop.f32.mrb[0].mxu0
      %v6035 = vadd.f32 0.0, %v6034
      %v6036 = vpop.f32.mrb[0].mxu0
      %6037 = vdwg.mxu0
      %v6038 = vadd.f32 %v5712, %v5896
      %v6039 = vadd.f32 %v5713, %v5899
      %v6040 = vadd.f32 %v5714, %v5904
      %v6041 = vadd.f32 %v5715, %v5907
      %v6042 = vadd.f32 %v5716, %v5912
      %v6043 = vadd.f32 %v5717, %v5915
      %v6044 = vadd.f32 %v5718, %v5920
      %v6045 = vadd.f32 %v5719, %v5923
      %v6046 = vadd.f32 %v5720, %v5928
      %v6047 = vadd.f32 %v5721, %v5931
      %v6048 = vadd.f32 %v5722, %v5936
      %v6049 = vadd.f32 %v5723, %v5939
      %v6050 = vadd.f32 %v5724, %v5944
      %v6051 = vadd.f32 %v5725, %v5947
      %v6052 = vadd.f32 %v5726, %v5952
      %v6053 = vadd.f32 %v5727, %v5955
      %v6054 = vadd.f32 %v5728, %v5960
      %v6055 = vadd.f32 %v5729, %v5963
      %v6056 = vadd.f32 %v5730, %v5968
      %v6057 = vadd.f32 %v5731, %v5971
      %v6058 = vadd.f32 %v5732, %v5976
      %v6059 = vadd.f32 %v5733, %v5979
      %v6060 = vadd.f32 %v5734, %v5984
      %v6061 = vadd.f32 %v5735, %v5987
      %v6062 = vadd.f32 %v5736, %v5992
      %v6063 = vadd.f32 %v5737, %v5995
      %v6064 = vadd.f32 %v5738, %v6000
      %v6065 = vadd.f32 %v5739, %v6003
      %v6066 = vadd.f32 %v5740, %v6008
      %v6067 = vadd.f32 %v5741, %v6011
      %v6068 = vadd.f32 %v5742, %v6016
      %v6069 = vadd.f32 %v5743, %v6019
      %v6070 = vadd.f32 %v5744, %v6024
      %v6071 = vadd.f32 %v5745, %v6027
      %v6072 = vadd.f32 %v5746, %v6032
      %v6073 = vadd.f32 %v5747, %v6035
      %v6074 = vld [vmem:[#allocation2 + $0x25] sm:$0xff]
      %v6075 = vld [vmem:[#allocation2 + $0x2d] sm:$0xff]
      %v6076 = vld [vmem:[#allocation2 + $0x35] sm:$0xff]
      %v6077 = vld [vmem:[#allocation2 + $0x3d] sm:$0xff]
      %v6078 = vld [vmem:[#allocation2 + $0x45] sm:$0xff]
      %v6079 = vld [vmem:[#allocation2 + $0x4d] sm:$0xff]
      %v6080 = vld [vmem:[#allocation2 + $0x55] sm:$0xff]
      %v6081 = vld [vmem:[#allocation2 + $0x5d] sm:$0xff]
      %v6082 = vld [vmem:[#allocation2 + $0x65] sm:$0xff]
      %v6083 = vld [vmem:[#allocation2 + $0x6d] sm:$0xff]
      %v6084 = vld [vmem:[#allocation2 + $0x75] sm:$0xff]
      %v6085 = vld [vmem:[#allocation2 + $0x7d] sm:$0xff]
      %v6086 = vld [vmem:[#allocation2 + $0x85] sm:$0xff]
      %v6087 = vld [vmem:[#allocation2 + $0x8d] sm:$0xff]
      %v6088 = vld [vmem:[#allocation2 + $0x95] sm:$0xff]
      %v6089 = vld [vmem:[#allocation2 + $0x9d] sm:$0xff]
      %v6090 = vld [vmem:[#allocation2 + $0xa5] sm:$0xff]
      %v6091 = vld [vmem:[#allocation2 + $0xad] sm:$0xff]
      %v6092 = vld [vmem:[#allocation2 + $0xb5] sm:$0xff]
      %v6093 = vld [vmem:[#allocation2 + $0xbd] sm:$0xff]
      %v6094 = vld [vmem:[#allocation2 + $0xc5] sm:$0xff]
      %v6095 = vld [vmem:[#allocation2 + $0xcd] sm:$0xff]
      %v6096 = vld [vmem:[#allocation2 + $0xd5] sm:$0xff]
      %v6097 = vld [vmem:[#allocation2 + $0xdd] sm:$0xff]
      %v6098 = vld [vmem:[#allocation2 + $0xe5] sm:$0xff]
      %v6099 = vld [vmem:[#allocation2 + $0xed] sm:$0xff]
      %v6100 = vld [vmem:[#allocation2 + $0xf5] sm:$0xff]
      %v6101 = vld [vmem:[#allocation2 + $0xfd] sm:$0xff]
      %v6102 = vld [vmem:[#allocation2 + $0x105] sm:$0xff]
      %v6103 = vld [vmem:[#allocation2 + $0x10d] sm:$0xff]
      %v6104 = vld [vmem:[#allocation2 + $0x115] sm:$0xff]
      %v6105 = vld [vmem:[#allocation2 + $0x11d] sm:$0xff]
      %v6106 = vld [vmem:[#allocation2 + $0x125] sm:$0xff]
      %v6107 = vld [vmem:[#allocation2 + $0x12d] sm:$0xff]
      %v6108 = vld [vmem:[#allocation2 + $0x135] sm:$0xff]
      %v6109 = vld [vmem:[#allocation2 + $0x13d] sm:$0x3f]
      %v6110 = vpack.c.bf16 %v6075, %v6074
      %v6111 = vpack.c.bf16 %v6077, %v6076
      %v6112 = vpack.c.bf16 %v6079, %v6078
      %v6113 = vpack.c.bf16 %v6081, %v6080
      %v6114 = vpack.c.bf16 %v6083, %v6082
      %v6115 = vpack.c.bf16 %v6085, %v6084
      %v6116 = vpack.c.bf16 %v6087, %v6086
      %v6117 = vpack.c.bf16 %v6089, %v6088
      %v6118 = vpack.c.bf16 %v6091, %v6090
      %v6119 = vpack.c.bf16 %v6093, %v6092
      %v6120 = vpack.c.bf16 %v6095, %v6094
      %v6121 = vpack.c.bf16 %v6097, %v6096
      %v6122 = vpack.c.bf16 %v6099, %v6098
      %v6123 = vpack.c.bf16 %v6101, %v6100
      %v6124 = vpack.c.bf16 %v6103, %v6102
      %v6125 = vpack.c.bf16 %v6105, %v6104
      %v6126 = vpack.c.bf16 %v6107, %v6106
      %v6127 = vpack.c.bf16 %v6109, %v6108
      %s6128 = scalar_lea.vmem %s4, 28
      %v6129 = vld [vmem:[%s6128] sm:$0xf]
      %v6131 = vsel %vm3974, %v6110, 0
      %v6134 = vsel %vm3974, %v6111, 0
      %v6137 = vsel %vm3974, %v6112, 0
      %v6140 = vsel %vm3974, %v6113, 0
      %v6143 = vsel %vm3974, %v6114, 0
      %v6146 = vsel %vm3974, %v6115, 0
      %v6149 = vsel %vm3974, %v6116, 0
      %v6152 = vsel %vm3974, %v6117, 0
      %v6155 = vsel %vm3974, %v6118, 0
      %v6158 = vsel %vm3974, %v6119, 0
      %v6161 = vsel %vm3974, %v6120, 0
      %v6164 = vsel %vm3974, %v6121, 0
      %v6167 = vsel %vm3974, %v6122, 0
      %v6170 = vsel %vm3974, %v6123, 0
      %v6173 = vsel %vm3974, %v6124, 0
      %v6176 = vsel %vm3974, %v6125, 0
      %v6179 = vsel %vm3974, %v6126, 0
      %v6182 = vsel %vm3974, %v6127, 0
      %v6185 = vsel %vm4029, %v6129, 0
      %6187 = vmatprep.subr.bf16.mxu0 0
      %6188 = vmatpush1.bf16.msra.mxu0 %v6185
      %6189 = vmatprep.subr.bf16.mxu0 0
      %6190 = vmatpush1.bf16.msra.mxu0 0
      %6191 = vmatprep.subr.bf16.mxu0 0
      %6192 = vmatpush1.bf16.msra.mxu0 0
      %6193 = vmatprep.subr.bf16.mxu0 0
      %6194 = vmatpush1.bf16.msra.mxu0 0
      %6195 = vmatprep.subr.bf16.mxu0 0
      %6196 = vmatpush1.bf16.msra.mxu0 0
      %6197 = vmatprep.subr.bf16.mxu0 0
      %6198 = vmatpush1.bf16.msra.mxu0 0
      %6199 = vmatprep.subr.bf16.mxu0 0
      %6200 = vmatpush1.bf16.msra.mxu0 0
      %6201 = vmatprep.subr.bf16.mxu0 0
      %6202 = vmatpush1.bf16.msra.mxu0 0
      %6203 = vmatprep.subr.bf16.mxu0 0
      %6204 = vmatpush1.bf16.msra.mxu0 0
      %6205 = vmatprep.subr.bf16.mxu0 0
      %6206 = vmatpush1.bf16.msra.mxu0 0
      %6207 = vmatprep.subr.bf16.mxu0 0
      %6208 = vmatpush1.bf16.msra.mxu0 0
      %6209 = vmatprep.subr.bf16.mxu0 0
      %6210 = vmatpush1.bf16.msra.mxu0 0
      %6211 = vmatprep.subr.bf16.mxu0 0
      %6212 = vmatpush1.bf16.msra.mxu0 0
      %6213 = vmatprep.subr.bf16.mxu0 0
      %6214 = vmatpush1.bf16.msra.mxu0 0
      %6215 = vmatprep.subr.bf16.mxu0 0
      %6216 = vmatpush1.bf16.msra.mxu0 0
      %6217 = vmatprep.subr.bf16.mxu0 0
      %6218 = vmatpush1.bf16.msra.mxu0 0
      %6219 = vmatprep.mubr.bf16.mxu0 0
      %6220 = vmatmul.mubr.bf16.gmra.mrb[0].mxu0 %v6131
      %v6221 = vpop.f32.mrb[0].mxu0
      %v6222 = vadd.f32 0.0, %v6221
      %v6223 = vpop.f32.mrb[0].mxu0
      %v6224 = vpop.f32.mrb[0].mxu0
      %v6225 = vadd.f32 0.0, %v6224
      %v6226 = vpop.f32.mrb[0].mxu0
      %6227 = vmatprep.mubr.bf16.mxu0 0
      %6228 = vmatmul.mubr.bf16.gmra.mrb[0].mxu0 %v6134
      %v6229 = vpop.f32.mrb[0].mxu0
      %v6230 = vadd.f32 0.0, %v6229
      %v6231 = vpop.f32.mrb[0].mxu0
      %v6232 = vpop.f32.mrb[0].mxu0
      %v6233 = vadd.f32 0.0, %v6232
      %v6234 = vpop.f32.mrb[0].mxu0
      %6235 = vmatprep.mubr.bf16.mxu0 0
      %6236 = vmatmul.mubr.bf16.gmra.mrb[0].mxu0 %v6137
      %v6237 = vpop.f32.mrb[0].mxu0
      %v6238 = vadd.f32 0.0, %v6237
      %v6239 = vpop.f32.mrb[0].mxu0
      %v6240 = vpop.f32.mrb[0].mxu0
      %v6241 = vadd.f32 0.0, %v6240
      %v6242 = vpop.f32.mrb[0].mxu0
      %6243 = vmatprep.mubr.bf16.mxu0 0
      %6244 = vmatmul.mubr.bf16.gmra.mrb[0].mxu0 %v6140
      %v6245 = vpop.f32.mrb[0].mxu0
      %v6246 = vadd.f32 0.0, %v6245
      %v6247 = vpop.f32.mrb[0].mxu0
      %v6248 = vpop.f32.mrb[0].mxu0
      %v6249 = vadd.f32 0.0, %v6248
      %v6250 = vpop.f32.mrb[0].mxu0
      %6251 = vmatprep.mubr.bf16.mxu0 0
      %6252 = vmatmul.mubr.bf16.gmra.mrb[0].mxu0 %v6143
      %v6253 = vpop.f32.mrb[0].mxu0
      %v6254 = vadd.f32 0.0, %v6253
      %v6255 = vpop.f32.mrb[0].mxu0
      %v6256 = vpop.f32.mrb[0].mxu0
      %v6257 = vadd.f32 0.0, %v6256
      %v6258 = vpop.f32.mrb[0].mxu0
      %6259 = vmatprep.mubr.bf16.mxu0 0
      %6260 = vmatmul.mubr.bf16.gmra.mrb[0].mxu0 %v6146
      %v6261 = vpop.f32.mrb[0].mxu0
      %v6262 = vadd.f32 0.0, %v6261
      %v6263 = vpop.f32.mrb[0].mxu0
      %v6264 = vpop.f32.mrb[0].mxu0
      %v6265 = vadd.f32 0.0, %v6264
      %v6266 = vpop.f32.mrb[0].mxu0
      %6267 = vmatprep.mubr.bf16.mxu0 0
      %6268 = vmatmul.mubr.bf16.gmra.mrb[0].mxu0 %v6149
      %v6269 = vpop.f32.mrb[0].mxu0
      %v6270 = vadd.f32 0.0, %v6269
      %v6271 = vpop.f32.mrb[0].mxu0
      %v6272 = vpop.f32.mrb[0].mxu0
      %v6273 = vadd.f32 0.0, %v6272
      %v6274 = vpop.f32.mrb[0].mxu0
      %6275 = vmatprep.mubr.bf16.mxu0 0
      %6276 = vmatmul.mubr.bf16.gmra.mrb[0].mxu0 %v6152
      %v6277 = vpop.f32.mrb[0].mxu0
      %v6278 = vadd.f32 0.0, %v6277
      %v6279 = vpop.f32.mrb[0].mxu0
      %v6280 = vpop.f32.mrb[0].mxu0
      %v6281 = vadd.f32 0.0, %v6280
      %v6282 = vpop.f32.mrb[0].mxu0
      %6283 = vmatprep.mubr.bf16.mxu0 0
      %6284 = vmatmul.mubr.bf16.gmra.mrb[0].mxu0 %v6155
      %v6285 = vpop.f32.mrb[0].mxu0
      %v6286 = vadd.f32 0.0, %v6285
      %v6287 = vpop.f32.mrb[0].mxu0
      %v6288 = vpop.f32.mrb[0].mxu0
      %v6289 = vadd.f32 0.0, %v6288
      %v6290 = vpop.f32.mrb[0].mxu0
      %6291 = vmatprep.mubr.bf16.mxu0 0
      %6292 = vmatmul.mubr.bf16.gmra.mrb[0].mxu0 %v6158
      %v6293 = vpop.f32.mrb[0].mxu0
      %v6294 = vadd.f32 0.0, %v6293
      %v6295 = vpop.f32.mrb[0].mxu0
      %v6296 = vpop.f32.mrb[0].mxu0
      %v6297 = vadd.f32 0.0, %v6296
      %v6298 = vpop.f32.mrb[0].mxu0
      %6299 = vmatprep.mubr.bf16.mxu0 0
      %6300 = vmatmul.mubr.bf16.gmra.mrb[0].mxu0 %v6161
      %v6301 = vpop.f32.mrb[0].mxu0
      %v6302 = vadd.f32 0.0, %v6301
      %v6303 = vpop.f32.mrb[0].mxu0
      %v6304 = vpop.f32.mrb[0].mxu0
      %v6305 = vadd.f32 0.0, %v6304
      %v6306 = vpop.f32.mrb[0].mxu0
      %6307 = vmatprep.mubr.bf16.mxu0 0
      %6308 = vmatmul.mubr.bf16.gmra.mrb[0].mxu0 %v6164
      %v6309 = vpop.f32.mrb[0].mxu0
      %v6310 = vadd.f32 0.0, %v6309
      %v6311 = vpop.f32.mrb[0].mxu0
      %v6312 = vpop.f32.mrb[0].mxu0
      %v6313 = vadd.f32 0.0, %v6312
      %v6314 = vpop.f32.mrb[0].mxu0
      %6315 = vmatprep.mubr.bf16.mxu0 0
      %6316 = vmatmul.mubr.bf16.gmra.mrb[0].mxu0 %v6167
      %v6317 = vpop.f32.mrb[0].mxu0
      %v6318 = vadd.f32 0.0, %v6317
      %v6319 = vpop.f32.mrb[0].mxu0
      %v6320 = vpop.f32.mrb[0].mxu0
      %v6321 = vadd.f32 0.0, %v6320
      %v6322 = vpop.f32.mrb[0].mxu0
      %6323 = vmatprep.mubr.bf16.mxu0 0
      %6324 = vmatmul.mubr.bf16.gmra.mrb[0].mxu0 %v6170
      %v6325 = vpop.f32.mrb[0].mxu0
      %v6326 = vadd.f32 0.0, %v6325
      %v6327 = vpop.f32.mrb[0].mxu0
      %v6328 = vpop.f32.mrb[0].mxu0
      %v6329 = vadd.f32 0.0, %v6328
      %v6330 = vpop.f32.mrb[0].mxu0
      %6331 = vmatprep.mubr.bf16.mxu0 0
      %6332 = vmatmul.mubr.bf16.gmra.mrb[0].mxu0 %v6173
      %v6333 = vpop.f32.mrb[0].mxu0
      %v6334 = vadd.f32 0.0, %v6333
      %v6335 = vpop.f32.mrb[0].mxu0
      %v6336 = vpop.f32.mrb[0].mxu0
      %v6337 = vadd.f32 0.0, %v6336
      %v6338 = vpop.f32.mrb[0].mxu0
      %6339 = vmatprep.mubr.bf16.mxu0 0
      %6340 = vmatmul.mubr.bf16.gmra.mrb[0].mxu0 %v6176
      %v6341 = vpop.f32.mrb[0].mxu0
      %v6342 = vadd.f32 0.0, %v6341
      %v6343 = vpop.f32.mrb[0].mxu0
      %v6344 = vpop.f32.mrb[0].mxu0
      %v6345 = vadd.f32 0.0, %v6344
      %v6346 = vpop.f32.mrb[0].mxu0
      %6347 = vmatprep.mubr.bf16.mxu0 0
      %6348 = vmatmul.mubr.bf16.gmra.mrb[0].mxu0 %v6179
      %v6349 = vpop.f32.mrb[0].mxu0
      %v6350 = vadd.f32 0.0, %v6349
      %v6351 = vpop.f32.mrb[0].mxu0
      %v6352 = vpop.f32.mrb[0].mxu0
      %v6353 = vadd.f32 0.0, %v6352
      %v6354 = vpop.f32.mrb[0].mxu0
      %6355 = vmatprep.mubr.bf16.mxu0 0
      %6356 = vmatmul.mubr.bf16.gmra.mrb[0].mxu0 %v6182
      %v6357 = vpop.f32.mrb[0].mxu0
      %v6358 = vadd.f32 0.0, %v6357
      %v6359 = vpop.f32.mrb[0].mxu0
      %v6360 = vpop.f32.mrb[0].mxu0
      %v6361 = vadd.f32 0.0, %v6360
      %v6362 = vpop.f32.mrb[0].mxu0
      %6363 = vdwg.mxu0
      %v6364 = vadd.f32 %v6038, %v6222
      %v6365 = vadd.f32 %v6039, %v6225
      %v6366 = vadd.f32 %v6040, %v6230
      %v6367 = vadd.f32 %v6041, %v6233
      %v6368 = vadd.f32 %v6042, %v6238
      %v6369 = vadd.f32 %v6043, %v6241
      %v6370 = vadd.f32 %v6044, %v6246
      %v6371 = vadd.f32 %v6045, %v6249
      %v6372 = vadd.f32 %v6046, %v6254
      %v6373 = vadd.f32 %v6047, %v6257
      %v6374 = vadd.f32 %v6048, %v6262
      %v6375 = vadd.f32 %v6049, %v6265
      %v6376 = vadd.f32 %v6050, %v6270
      %v6377 = vadd.f32 %v6051, %v6273
      %v6378 = vadd.f32 %v6052, %v6278
      %v6379 = vadd.f32 %v6053, %v6281
      %v6380 = vadd.f32 %v6054, %v6286
      %v6381 = vadd.f32 %v6055, %v6289
      %v6382 = vadd.f32 %v6056, %v6294
      %v6383 = vadd.f32 %v6057, %v6297
      %v6384 = vadd.f32 %v6058, %v6302
      %v6385 = vadd.f32 %v6059, %v6305
      %v6386 = vadd.f32 %v6060, %v6310
      %v6387 = vadd.f32 %v6061, %v6313
      %v6388 = vadd.f32 %v6062, %v6318
      %v6389 = vadd.f32 %v6063, %v6321
      %v6390 = vadd.f32 %v6064, %v6326
      %v6391 = vadd.f32 %v6065, %v6329
      %v6392 = vadd.f32 %v6066, %v6334
      %v6393 = vadd.f32 %v6067, %v6337
      %v6394 = vadd.f32 %v6068, %v6342
      %v6395 = vadd.f32 %v6069, %v6345
      %v6396 = vadd.f32 %v6070, %v6350
      %v6397 = vadd.f32 %v6071, %v6353
      %v6398 = vadd.f32 %v6072, %v6358
      %v6399 = vadd.f32 %v6073, %v6361
      %v6400 = vld [vmem:[#allocation2 + $0x26] sm:$0xff]
      %v6401 = vld [vmem:[#allocation2 + $0x2e] sm:$0xff]
      %v6402 = vld [vmem:[#allocation2 + $0x36] sm:$0xff]
      %v6403 = vld [vmem:[#allocation2 + $0x3e] sm:$0xff]
      %v6404 = vld [vmem:[#allocation2 + $0x46] sm:$0xff]
      %v6405 = vld [vmem:[#allocation2 + $0x4e] sm:$0xff]
      %v6406 = vld [vmem:[#allocation2 + $0x56] sm:$0xff]
      %v6407 = vld [vmem:[#allocation2 + $0x5e] sm:$0xff]
      %v6408 = vld [vmem:[#allocation2 + $0x66] sm:$0xff]
      %v6409 = vld [vmem:[#allocation2 + $0x6e] sm:$0xff]
      %v6410 = vld [vmem:[#allocation2 + $0x76] sm:$0xff]
      %v6411 = vld [vmem:[#allocation2 + $0x7e] sm:$0xff]
      %v6412 = vld [vmem:[#allocation2 + $0x86] sm:$0xff]
      %v6413 = vld [vmem:[#allocation2 + $0x8e] sm:$0xff]
      %v6414 = vld [vmem:[#allocation2 + $0x96] sm:$0xff]
      %v6415 = vld [vmem:[#allocation2 + $0x9e] sm:$0xff]
      %v6416 = vld [vmem:[#allocation2 + $0xa6] sm:$0xff]
      %v6417 = vld [vmem:[#allocation2 + $0xae] sm:$0xff]
      %v6418 = vld [vmem:[#allocation2 + $0xb6] sm:$0xff]
      %v6419 = vld [vmem:[#allocation2 + $0xbe] sm:$0xff]
      %v6420 = vld [vmem:[#allocation2 + $0xc6] sm:$0xff]
      %v6421 = vld [vmem:[#allocation2 + $0xce] sm:$0xff]
      %v6422 = vld [vmem:[#allocation2 + $0xd6] sm:$0xff]
      %v6423 = vld [vmem:[#allocation2 + $0xde] sm:$0xff]
      %v6424 = vld [vmem:[#allocation2 + $0xe6] sm:$0xff]
      %v6425 = vld [vmem:[#allocation2 + $0xee] sm:$0xff]
      %v6426 = vld [vmem:[#allocation2 + $0xf6] sm:$0xff]
      %v6427 = vld [vmem:[#allocation2 + $0xfe] sm:$0xff]
      %v6428 = vld [vmem:[#allocation2 + $0x106] sm:$0xff]
      %v6429 = vld [vmem:[#allocation2 + $0x10e] sm:$0xff]
      %v6430 = vld [vmem:[#allocation2 + $0x116] sm:$0xff]
      %v6431 = vld [vmem:[#allocation2 + $0x11e] sm:$0xff]
      %v6432 = vld [vmem:[#allocation2 + $0x126] sm:$0xff]
      %v6433 = vld [vmem:[#allocation2 + $0x12e] sm:$0xff]
      %v6434 = vld [vmem:[#allocation2 + $0x136] sm:$0xff]
      %v6435 = vld [vmem:[#allocation2 + $0x13e] sm:$0x3f]
      %v6436 = vpack.c.bf16 %v6401, %v6400
      %v6437 = vpack.c.bf16 %v6403, %v6402
      %v6438 = vpack.c.bf16 %v6405, %v6404
      %v6439 = vpack.c.bf16 %v6407, %v6406
      %v6440 = vpack.c.bf16 %v6409, %v6408
      %v6441 = vpack.c.bf16 %v6411, %v6410
      %v6442 = vpack.c.bf16 %v6413, %v6412
      %v6443 = vpack.c.bf16 %v6415, %v6414
      %v6444 = vpack.c.bf16 %v6417, %v6416
      %v6445 = vpack.c.bf16 %v6419, %v6418
      %v6446 = vpack.c.bf16 %v6421, %v6420
      %v6447 = vpack.c.bf16 %v6423, %v6422
      %v6448 = vpack.c.bf16 %v6425, %v6424
      %v6449 = vpack.c.bf16 %v6427, %v6426
      %v6450 = vpack.c.bf16 %v6429, %v6428
      %v6451 = vpack.c.bf16 %v6431, %v6430
      %v6452 = vpack.c.bf16 %v6433, %v6432
      %v6453 = vpack.c.bf16 %v6435, %v6434
      %s6454 = scalar_lea.vmem %s4, 32
      %v6455 = vld [vmem:[%s6454] sm:$0xf]
      %v6457 = vsel %vm3974, %v6436, 0
      %v6460 = vsel %vm3974, %v6437, 0
      %v6463 = vsel %vm3974, %v6438, 0
      %v6466 = vsel %vm3974, %v6439, 0
      %v6469 = vsel %vm3974, %v6440, 0
      %v6472 = vsel %vm3974, %v6441, 0
      %v6475 = vsel %vm3974, %v6442, 0
      %v6478 = vsel %vm3974, %v6443, 0
      %v6481 = vsel %vm3974, %v6444, 0
      %v6484 = vsel %vm3974, %v6445, 0
      %v6487 = vsel %vm3974, %v6446, 0
      %v6490 = vsel %vm3974, %v6447, 0
      %v6493 = vsel %vm3974, %v6448, 0
      %v6496 = vsel %vm3974, %v6449, 0
      %v6499 = vsel %vm3974, %v6450, 0
      %v6502 = vsel %vm3974, %v6451, 0
      %v6505 = vsel %vm3974, %v6452, 0
      %v6508 = vsel %vm3974, %v6453, 0
      %v6511 = vsel %vm4029, %v6455, 0
      %6513 = vmatprep.subr.bf16.mxu0 0
      %6514 = vmatpush1.bf16.msra.mxu0 %v6511
      %6515 = vmatprep.subr.bf16.mxu0 0
      %6516 = vmatpush1.bf16.msra.mxu0 0
      %6517 = vmatprep.subr.bf16.mxu0 0
      %6518 = vmatpush1.bf16.msra.mxu0 0
      %6519 = vmatprep.subr.bf16.mxu0 0
      %6520 = vmatpush1.bf16.msra.mxu0 0
      %6521 = vmatprep.subr.bf16.mxu0 0
      %6522 = vmatpush1.bf16.msra.mxu0 0
      %6523 = vmatprep.subr.bf16.mxu0 0
      %6524 = vmatpush1.bf16.msra.mxu0 0
      %6525 = vmatprep.subr.bf16.mxu0 0
      %6526 = vmatpush1.bf16.msra.mxu0 0
      %6527 = vmatprep.subr.bf16.mxu0 0
      %6528 = vmatpush1.bf16.msra.mxu0 0
      %6529 = vmatprep.subr.bf16.mxu0 0
      %6530 = vmatpush1.bf16.msra.mxu0 0
      %6531 = vmatprep.subr.bf16.mxu0 0
      %6532 = vmatpush1.bf16.msra.mxu0 0
      %6533 = vmatprep.subr.bf16.mxu0 0
      %6534 = vmatpush1.bf16.msra.mxu0 0
      %6535 = vmatprep.subr.bf16.mxu0 0
      %6536 = vmatpush1.bf16.msra.mxu0 0
      %6537 = vmatprep.subr.bf16.mxu0 0
      %6538 = vmatpush1.bf16.msra.mxu0 0
      %6539 = vmatprep.subr.bf16.mxu0 0
      %6540 = vmatpush1.bf16.msra.mxu0 0
      %6541 = vmatprep.subr.bf16.mxu0 0
      %6542 = vmatpush1.bf16.msra.mxu0 0
      %6543 = vmatprep.subr.bf16.mxu0 0
      %6544 = vmatpush1.bf16.msra.mxu0 0
      %6545 = vmatprep.mubr.bf16.mxu0 0
      %6546 = vmatmul.mubr.bf16.gmra.mrb[0].mxu0 %v6457
      %v6547 = vpop.f32.mrb[0].mxu0
      %v6548 = vadd.f32 0.0, %v6547
      %v6549 = vpop.f32.mrb[0].mxu0
      %v6550 = vpop.f32.mrb[0].mxu0
      %v6551 = vadd.f32 0.0, %v6550
      %v6552 = vpop.f32.mrb[0].mxu0
      %6553 = vmatprep.mubr.bf16.mxu0 0
      %6554 = vmatmul.mubr.bf16.gmra.mrb[0].mxu0 %v6460
      %v6555 = vpop.f32.mrb[0].mxu0
      %v6556 = vadd.f32 0.0, %v6555
      %v6557 = vpop.f32.mrb[0].mxu0
      %v6558 = vpop.f32.mrb[0].mxu0
      %v6559 = vadd.f32 0.0, %v6558
      %v6560 = vpop.f32.mrb[0].mxu0
      %6561 = vmatprep.mubr.bf16.mxu0 0
      %6562 = vmatmul.mubr.bf16.gmra.mrb[0].mxu0 %v6463
      %v6563 = vpop.f32.mrb[0].mxu0
      %v6564 = vadd.f32 0.0, %v6563
      %v6565 = vpop.f32.mrb[0].mxu0
      %v6566 = vpop.f32.mrb[0].mxu0
      %v6567 = vadd.f32 0.0, %v6566
      %v6568 = vpop.f32.mrb[0].mxu0
      %6569 = vmatprep.mubr.bf16.mxu0 0
      %6570 = vmatmul.mubr.bf16.gmra.mrb[0].mxu0 %v6466
      %v6571 = vpop.f32.mrb[0].mxu0
      %v6572 = vadd.f32 0.0, %v6571
      %v6573 = vpop.f32.mrb[0].mxu0
      %v6574 = vpop.f32.mrb[0].mxu0
      %v6575 = vadd.f32 0.0, %v6574
      %v6576 = vpop.f32.mrb[0].mxu0
      %6577 = vmatprep.mubr.bf16.mxu0 0
      %6578 = vmatmul.mubr.bf16.gmra.mrb[0].mxu0 %v6469
      %v6579 = vpop.f32.mrb[0].mxu0
      %v6580 = vadd.f32 0.0, %v6579
      %v6581 = vpop.f32.mrb[0].mxu0
      %v6582 = vpop.f32.mrb[0].mxu0
      %v6583 = vadd.f32 0.0, %v6582
      %v6584 = vpop.f32.mrb[0].mxu0
      %6585 = vmatprep.mubr.bf16.mxu0 0
      %6586 = vmatmul.mubr.bf16.gmra.mrb[0].mxu0 %v6472
      %v6587 = vpop.f32.mrb[0].mxu0
      %v6588 = vadd.f32 0.0, %v6587
      %v6589 = vpop.f32.mrb[0].mxu0
      %v6590 = vpop.f32.mrb[0].mxu0
      %v6591 = vadd.f32 0.0, %v6590
      %v6592 = vpop.f32.mrb[0].mxu0
      %6593 = vmatprep.mubr.bf16.mxu0 0
      %6594 = vmatmul.mubr.bf16.gmra.mrb[0].mxu0 %v6475
      %v6595 = vpop.f32.mrb[0].mxu0
      %v6596 = vadd.f32 0.0, %v6595
      %v6597 = vpop.f32.mrb[0].mxu0
      %v6598 = vpop.f32.mrb[0].mxu0
      %v6599 = vadd.f32 0.0, %v6598
      %v6600 = vpop.f32.mrb[0].mxu0
      %6601 = vmatprep.mubr.bf16.mxu0 0
      %6602 = vmatmul.mubr.bf16.gmra.mrb[0].mxu0 %v6478
      %v6603 = vpop.f32.mrb[0].mxu0
      %v6604 = vadd.f32 0.0, %v6603
      %v6605 = vpop.f32.mrb[0].mxu0
      %v6606 = vpop.f32.mrb[0].mxu0
      %v6607 = vadd.f32 0.0, %v6606
      %v6608 = vpop.f32.mrb[0].mxu0
      %6609 = vmatprep.mubr.bf16.mxu0 0
      %6610 = vmatmul.mubr.bf16.gmra.mrb[0].mxu0 %v6481
      %v6611 = vpop.f32.mrb[0].mxu0
      %v6612 = vadd.f32 0.0, %v6611
      %v6613 = vpop.f32.mrb[0].mxu0
      %v6614 = vpop.f32.mrb[0].mxu0
      %v6615 = vadd.f32 0.0, %v6614
      %v6616 = vpop.f32.mrb[0].mxu0
      %6617 = vmatprep.mubr.bf16.mxu0 0
      %6618 = vmatmul.mubr.bf16.gmra.mrb[0].mxu0 %v6484
      %v6619 = vpop.f32.mrb[0].mxu0
      %v6620 = vadd.f32 0.0, %v6619
      %v6621 = vpop.f32.mrb[0].mxu0
      %v6622 = vpop.f32.mrb[0].mxu0
      %v6623 = vadd.f32 0.0, %v6622
      %v6624 = vpop.f32.mrb[0].mxu0
      %6625 = vmatprep.mubr.bf16.mxu0 0
      %6626 = vmatmul.mubr.bf16.gmra.mrb[0].mxu0 %v6487
      %v6627 = vpop.f32.mrb[0].mxu0
      %v6628 = vadd.f32 0.0, %v6627
      %v6629 = vpop.f32.mrb[0].mxu0
      %v6630 = vpop.f32.mrb[0].mxu0
      %v6631 = vadd.f32 0.0, %v6630
      %v6632 = vpop.f32.mrb[0].mxu0
      %6633 = vmatprep.mubr.bf16.mxu0 0
      %6634 = vmatmul.mubr.bf16.gmra.mrb[0].mxu0 %v6490
      %v6635 = vpop.f32.mrb[0].mxu0
      %v6636 = vadd.f32 0.0, %v6635
      %v6637 = vpop.f32.mrb[0].mxu0
      %v6638 = vpop.f32.mrb[0].mxu0
      %v6639 = vadd.f32 0.0, %v6638
      %v6640 = vpop.f32.mrb[0].mxu0
      %6641 = vmatprep.mubr.bf16.mxu0 0
      %6642 = vmatmul.mubr.bf16.gmra.mrb[0].mxu0 %v6493
      %v6643 = vpop.f32.mrb[0].mxu0
      %v6644 = vadd.f32 0.0, %v6643
      %v6645 = vpop.f32.mrb[0].mxu0
      %v6646 = vpop.f32.mrb[0].mxu0
      %v6647 = vadd.f32 0.0, %v6646
      %v6648 = vpop.f32.mrb[0].mxu0
      %6649 = vmatprep.mubr.bf16.mxu0 0
      %6650 = vmatmul.mubr.bf16.gmra.mrb[0].mxu0 %v6496
      %v6651 = vpop.f32.mrb[0].mxu0
      %v6652 = vadd.f32 0.0, %v6651
      %v6653 = vpop.f32.mrb[0].mxu0
      %v6654 = vpop.f32.mrb[0].mxu0
      %v6655 = vadd.f32 0.0, %v6654
      %v6656 = vpop.f32.mrb[0].mxu0
      %6657 = vmatprep.mubr.bf16.mxu0 0
      %6658 = vmatmul.mubr.bf16.gmra.mrb[0].mxu0 %v6499
      %v6659 = vpop.f32.mrb[0].mxu0
      %v6660 = vadd.f32 0.0, %v6659
      %v6661 = vpop.f32.mrb[0].mxu0
      %v6662 = vpop.f32.mrb[0].mxu0
      %v6663 = vadd.f32 0.0, %v6662
      %v6664 = vpop.f32.mrb[0].mxu0
      %6665 = vmatprep.mubr.bf16.mxu0 0
      %6666 = vmatmul.mubr.bf16.gmra.mrb[0].mxu0 %v6502
      %v6667 = vpop.f32.mrb[0].mxu0
      %v6668 = vadd.f32 0.0, %v6667
      %v6669 = vpop.f32.mrb[0].mxu0
      %v6670 = vpop.f32.mrb[0].mxu0
      %v6671 = vadd.f32 0.0, %v6670
      %v6672 = vpop.f32.mrb[0].mxu0
      %6673 = vmatprep.mubr.bf16.mxu0 0
      %6674 = vmatmul.mubr.bf16.gmra.mrb[0].mxu0 %v6505
      %v6675 = vpop.f32.mrb[0].mxu0
      %v6676 = vadd.f32 0.0, %v6675
      %v6677 = vpop.f32.mrb[0].mxu0
      %v6678 = vpop.f32.mrb[0].mxu0
      %v6679 = vadd.f32 0.0, %v6678
      %v6680 = vpop.f32.mrb[0].mxu0
      %6681 = vmatprep.mubr.bf16.mxu0 0
      %6682 = vmatmul.mubr.bf16.gmra.mrb[0].mxu0 %v6508
      %v6683 = vpop.f32.mrb[0].mxu0
      %v6684 = vadd.f32 0.0, %v6683
      %v6685 = vpop.f32.mrb[0].mxu0
      %v6686 = vpop.f32.mrb[0].mxu0
      %v6687 = vadd.f32 0.0, %v6686
      %v6688 = vpop.f32.mrb[0].mxu0
      %6689 = vdwg.mxu0
      %v6690 = vadd.f32 %v6364, %v6548
      %v6691 = vadd.f32 %v6365, %v6551
      %v6692 = vadd.f32 %v6366, %v6556
      %v6693 = vadd.f32 %v6367, %v6559
      %v6694 = vadd.f32 %v6368, %v6564
      %v6695 = vadd.f32 %v6369, %v6567
      %v6696 = vadd.f32 %v6370, %v6572
      %v6697 = vadd.f32 %v6371, %v6575
      %v6698 = vadd.f32 %v6372, %v6580
      %v6699 = vadd.f32 %v6373, %v6583
      %v6700 = vadd.f32 %v6374, %v6588
      %v6701 = vadd.f32 %v6375, %v6591
      %v6702 = vadd.f32 %v6376, %v6596
      %v6703 = vadd.f32 %v6377, %v6599
      %v6704 = vadd.f32 %v6378, %v6604
      %v6705 = vadd.f32 %v6379, %v6607
      %v6706 = vadd.f32 %v6380, %v6612
      %v6707 = vadd.f32 %v6381, %v6615
      %v6708 = vadd.f32 %v6382, %v6620
      %v6709 = vadd.f32 %v6383, %v6623
      %v6710 = vadd.f32 %v6384, %v6628
      %v6711 = vadd.f32 %v6385, %v6631
      %v6712 = vadd.f32 %v6386, %v6636
      %v6713 = vadd.f32 %v6387, %v6639
      %v6714 = vadd.f32 %v6388, %v6644
      %v6715 = vadd.f32 %v6389, %v6647
      %v6716 = vadd.f32 %v6390, %v6652
      %v6717 = vadd.f32 %v6391, %v6655
      %v6718 = vadd.f32 %v6392, %v6660
      %v6719 = vadd.f32 %v6393, %v6663
      %v6720 = vadd.f32 %v6394, %v6668
      %v6721 = vadd.f32 %v6395, %v6671
      %v6722 = vadd.f32 %v6396, %v6676
      %v6723 = vadd.f32 %v6397, %v6679
      %v6724 = vadd.f32 %v6398, %v6684
      %v6725 = vadd.f32 %v6399, %v6687
      %v6726 = vld [vmem:[%s5] sm:$0x1]
      %v6728 = vlaneseq
      %v6729 = vshrl.u32 %v6728, 7
      %v6730 = vsub.s32 0, %v6729
      %v6731 = vrot.slane %v6726, %v6730
      %v6733 = vadd.f32 %v6690, %v6731
      %v6734 = vadd.f32 %v6691, %v6731
      %v6735 = vadd.f32 %v6692, %v6731
      %v6736 = vadd.f32 %v6693, %v6731
      %v6737 = vadd.f32 %v6694, %v6731
      %v6738 = vadd.f32 %v6695, %v6731
      %v6739 = vadd.f32 %v6696, %v6731
      %v6740 = vadd.f32 %v6697, %v6731
      %v6741 = vadd.f32 %v6698, %v6731
      %v6742 = vadd.f32 %v6699, %v6731
      %v6743 = vadd.f32 %v6700, %v6731
      %v6744 = vadd.f32 %v6701, %v6731
      %v6745 = vadd.f32 %v6702, %v6731
      %v6746 = vadd.f32 %v6703, %v6731
      %v6747 = vadd.f32 %v6704, %v6731
      %v6748 = vadd.f32 %v6705, %v6731
      %v6749 = vadd.f32 %v6706, %v6731
      %v6750 = vadd.f32 %v6707, %v6731
      %v6751 = vadd.f32 %v6708, %v6731
      %v6752 = vadd.f32 %v6709, %v6731
      %v6753 = vadd.f32 %v6710, %v6731
      %v6754 = vadd.f32 %v6711, %v6731
      %v6755 = vadd.f32 %v6712, %v6731
      %v6756 = vadd.f32 %v6713, %v6731
      %v6757 = vadd.f32 %v6714, %v6731
      %v6758 = vadd.f32 %v6715, %v6731
      %v6759 = vadd.f32 %v6716, %v6731
      %v6760 = vadd.f32 %v6717, %v6731
      %v6761 = vadd.f32 %v6718, %v6731
      %v6762 = vadd.f32 %v6719, %v6731
      %v6763 = vadd.f32 %v6720, %v6731
      %v6764 = vadd.f32 %v6721, %v6731
      %v6765 = vadd.f32 %v6722, %v6731
      %v6766 = vadd.f32 %v6723, %v6731
      %v6767 = vadd.f32 %v6724, %v6731
      %v6768 = vadd.f32 %v6725, %v6731
      %v6769 = vmax.f32 %v6733, 0.0
      %v6770 = vmax.f32 %v6734, 0.0
      %v6771 = vmax.f32 %v6735, 0.0
      %v6772 = vmax.f32 %v6736, 0.0
      %v6773 = vmax.f32 %v6737, 0.0
      %v6774 = vmax.f32 %v6738, 0.0
      %v6775 = vmax.f32 %v6739, 0.0
      %v6776 = vmax.f32 %v6740, 0.0
      %v6777 = vmax.f32 %v6741, 0.0
      %v6778 = vmax.f32 %v6742, 0.0
      %v6779 = vmax.f32 %v6743, 0.0
      %v6780 = vmax.f32 %v6744, 0.0
      %v6781 = vmax.f32 %v6745, 0.0
      %v6782 = vmax.f32 %v6746, 0.0
      %v6783 = vmax.f32 %v6747, 0.0
      %v6784 = vmax.f32 %v6748, 0.0
      %v6785 = vmax.f32 %v6749, 0.0
      %v6786 = vmax.f32 %v6750, 0.0
      %v6787 = vmax.f32 %v6751, 0.0
      %v6788 = vmax.f32 %v6752, 0.0
      %v6789 = vmax.f32 %v6753, 0.0
      %v6790 = vmax.f32 %v6754, 0.0
      %v6791 = vmax.f32 %v6755, 0.0
      %v6792 = vmax.f32 %v6756, 0.0
      %v6793 = vmax.f32 %v6757, 0.0
      %v6794 = vmax.f32 %v6758, 0.0
      %v6795 = vmax.f32 %v6759, 0.0
      %v6796 = vmax.f32 %v6760, 0.0
      %v6797 = vmax.f32 %v6761, 0.0
      %v6798 = vmax.f32 %v6762, 0.0
      %v6799 = vmax.f32 %v6763, 0.0
      %v6800 = vmax.f32 %v6764, 0.0
      %v6801 = vmax.f32 %v6765, 0.0
      %v6802 = vmax.f32 %v6766, 0.0
      %v6803 = vmax.f32 %v6767, 0.0
      %v6804 = vmax.f32 %v6768, 0.0
      %v6805 = vmul.f32 %v6769, %v3468
      %v6806 = vmul.f32 %v6770, %v3473
      %v6807 = vmul.f32 %v6771, %v3478
      %v6808 = vmul.f32 %v6772, %v3483
      %v6809 = vmul.f32 %v6773, %v3488
      %v6810 = vmul.f32 %v6774, %v3493
      %v6811 = vmul.f32 %v6775, %v3498
      %v6812 = vmul.f32 %v6776, %v3503
      %v6813 = vmul.f32 %v6777, %v3508
      %v6814 = vmul.f32 %v6778, %v3513
      %v6815 = vmul.f32 %v6779, %v3518
      %v6816 = vmul.f32 %v6780, %v3523
      %v6817 = vmul.f32 %v6781, %v3528
      %v6818 = vmul.f32 %v6782, %v3533
      %v6819 = vmul.f32 %v6783, %v3538
      %v6820 = vmul.f32 %v6784, %v3543
      %v6821 = vmul.f32 %v6785, %v3548
      %v6822 = vmul.f32 %v6786, %v3553
      %v6823 = vmul.f32 %v6787, %v3558
      %v6824 = vmul.f32 %v6788, %v3563
      %v6825 = vmul.f32 %v6789, %v3568
      %v6826 = vmul.f32 %v6790, %v3573
      %v6827 = vmul.f32 %v6791, %v3578
      %v6828 = vmul.f32 %v6792, %v3583
      %v6829 = vmul.f32 %v6793, %v3588
      %v6830 = vmul.f32 %v6794, %v3593
      %v6831 = vmul.f32 %v6795, %v3598
      %v6832 = vmul.f32 %v6796, %v3603
      %v6833 = vmul.f32 %v6797, %v3608
      %v6834 = vmul.f32 %v6798, %v3613
      %v6835 = vmul.f32 %v6799, %v3618
      %v6836 = vmul.f32 %v6800, %v3623
      %v6837 = vmul.f32 %v6801, %v3628
      %v6838 = vmul.f32 %v6802, %v3633
      %v6839 = vmul.f32 %v6803, %v3638
      %v6840 = vmul.f32 %v6804, %v3643
      %6877 = vrot.lane.b32.xlu0 %v6805, 8
      %v6878 = vpop.permute.xlu0 %6877
      %6879 = vrot.lane.b32.xlu0 %v6806, 8
      %v6880 = vpop.permute.xlu0 %6879
      %6881 = vrot.lane.b32.xlu0 %v6807, 8
      %v6882 = vpop.permute.xlu0 %6881
      %6883 = vrot.lane.b32.xlu0 %v6808, 8
      %v6884 = vpop.permute.xlu0 %6883
      %6885 = vrot.lane.b32.xlu0 %v6809, 8
      %v6886 = vpop.permute.xlu0 %6885
      %6887 = vrot.lane.b32.xlu0 %v6810, 8
      %v6888 = vpop.permute.xlu0 %6887
      %6889 = vrot.lane.b32.xlu0 %v6811, 8
      %v6890 = vpop.permute.xlu0 %6889
      %6891 = vrot.lane.b32.xlu0 %v6812, 8
      %v6892 = vpop.permute.xlu0 %6891
      %6893 = vrot.lane.b32.xlu0 %v6813, 8
      %v6894 = vpop.permute.xlu0 %6893
      %6895 = vrot.lane.b32.xlu0 %v6814, 8
      %v6896 = vpop.permute.xlu0 %6895
      %6897 = vrot.lane.b32.xlu0 %v6815, 8
      %v6898 = vpop.permute.xlu0 %6897
      %6899 = vrot.lane.b32.xlu0 %v6816, 8
      %v6900 = vpop.permute.xlu0 %6899
      %6901 = vrot.lane.b32.xlu0 %v6817, 8
      %v6902 = vpop.permute.xlu0 %6901
      %6903 = vrot.lane.b32.xlu0 %v6818, 8
      %v6904 = vpop.permute.xlu0 %6903
      %6905 = vrot.lane.b32.xlu0 %v6819, 8
      %v6906 = vpop.permute.xlu0 %6905
      %6907 = vrot.lane.b32.xlu0 %v6820, 8
      %v6908 = vpop.permute.xlu0 %6907
      %6909 = vrot.lane.b32.xlu0 %v6821, 8
      %v6910 = vpop.permute.xlu0 %6909
      %6911 = vrot.lane.b32.xlu0 %v6822, 8
      %v6912 = vpop.permute.xlu0 %6911
      %6913 = vrot.lane.b32.xlu0 %v6823, 8
      %v6914 = vpop.permute.xlu0 %6913
      %6915 = vrot.lane.b32.xlu0 %v6824, 8
      %v6916 = vpop.permute.xlu0 %6915
      %6917 = vrot.lane.b32.xlu0 %v6825, 8
      %v6918 = vpop.permute.xlu0 %6917
      %6919 = vrot.lane.b32.xlu0 %v6826, 8
      %v6920 = vpop.permute.xlu0 %6919
      %6921 = vrot.lane.b32.xlu0 %v6827, 8
      %v6922 = vpop.permute.xlu0 %6921
      %6923 = vrot.lane.b32.xlu0 %v6828, 8
      %v6924 = vpop.permute.xlu0 %6923
      %6925 = vrot.lane.b32.xlu0 %v6829, 8
      %v6926 = vpop.permute.xlu0 %6925
      %6927 = vrot.lane.b32.xlu0 %v6830, 8
      %v6928 = vpop.permute.xlu0 %6927
      %6929 = vrot.lane.b32.xlu0 %v6831, 8
      %v6930 = vpop.permute.xlu0 %6929
      %6931 = vrot.lane.b32.xlu0 %v6832, 8
      %v6932 = vpop.permute.xlu0 %6931
      %6933 = vrot.lane.b32.xlu0 %v6833, 8
      %v6934 = vpop.permute.xlu0 %6933
      %6935 = vrot.lane.b32.xlu0 %v6834, 8
      %v6936 = vpop.permute.xlu0 %6935
      %6937 = vrot.lane.b32.xlu0 %v6835, 8
      %v6938 = vpop.permute.xlu0 %6937
      %6939 = vrot.lane.b32.xlu0 %v6836, 8
      %v6940 = vpop.permute.xlu0 %6939
      %6941 = vrot.lane.b32.xlu0 %v6837, 8
      %v6942 = vpop.permute.xlu0 %6941
      %6943 = vrot.lane.b32.xlu0 %v6838, 8
      %v6944 = vpop.permute.xlu0 %6943
      %6945 = vrot.lane.b32.xlu0 %v6839, 8
      %v6946 = vpop.permute.xlu0 %6945
      %6947 = vrot.lane.b32.xlu0 %v6840, 8
      %v6948 = vpop.permute.xlu0 %6947
      %vm6985 = vcmask 97344
      %6986 = vst.msk [vmem:[#allocation2 + $0x13] sm:$0xff] %vm6985, %v6878
      %6987 = vst.msk [vmem:[#allocation2 + $0x1b] sm:$0xff] %vm6985, %v6880
      %6988 = vst.msk [vmem:[#allocation2 + $0x23] sm:$0xff] %vm6985, %v6882
      %6989 = vst.msk [vmem:[#allocation2 + $0x2b] sm:$0xff] %vm6985, %v6884
      %6990 = vst.msk [vmem:[#allocation2 + $0x33] sm:$0xff] %vm6985, %v6886
      %6991 = vst.msk [vmem:[#allocation2 + $0x3b] sm:$0xff] %vm6985, %v6888
      %6992 = vst.msk [vmem:[#allocation2 + $0x43] sm:$0xff] %vm6985, %v6890
      %6993 = vst.msk [vmem:[#allocation2 + $0x4b] sm:$0xff] %vm6985, %v6892
      %6994 = vst.msk [vmem:[#allocation2 + $0x53] sm:$0xff] %vm6985, %v6894
      %6995 = vst.msk [vmem:[#allocation2 + $0x5b] sm:$0xff] %vm6985, %v6896
      %6996 = vst.msk [vmem:[#allocation2 + $0x63] sm:$0xff] %vm6985, %v6898
      %6997 = vst.msk [vmem:[#allocation2 + $0x6b] sm:$0xff] %vm6985, %v6900
      %6998 = vst.msk [vmem:[#allocation2 + $0x73] sm:$0xff] %vm6985, %v6902
      %6999 = vst.msk [vmem:[#allocation2 + $0x7b] sm:$0xff] %vm6985, %v6904
      %7000 = vst.msk [vmem:[#allocation2 + $0x83] sm:$0xff] %vm6985, %v6906
      %7001 = vst.msk [vmem:[#allocation2 + $0x8b] sm:$0xff] %vm6985, %v6908
      %7002 = vst.msk [vmem:[#allocation2 + $0x93] sm:$0xff] %vm6985, %v6910
      %7003 = vst.msk [vmem:[#allocation2 + $0x9b] sm:$0xff] %vm6985, %v6912
      %7004 = vst.msk [vmem:[#allocation2 + $0xa3] sm:$0xff] %vm6985, %v6914
      %7005 = vst.msk [vmem:[#allocation2 + $0xab] sm:$0xff] %vm6985, %v6916
      %7006 = vst.msk [vmem:[#allocation2 + $0xb3] sm:$0xff] %vm6985, %v6918
      %7007 = vst.msk [vmem:[#allocation2 + $0xbb] sm:$0xff] %vm6985, %v6920
      %7008 = vst.msk [vmem:[#allocation2 + $0xc3] sm:$0xff] %vm6985, %v6922
      %7009 = vst.msk [vmem:[#allocation2 + $0xcb] sm:$0xff] %vm6985, %v6924
      %7010 = vst.msk [vmem:[#allocation2 + $0xd3] sm:$0xff] %vm6985, %v6926
      %7011 = vst.msk [vmem:[#allocation2 + $0xdb] sm:$0xff] %vm6985, %v6928
      %7012 = vst.msk [vmem:[#allocation2 + $0xe3] sm:$0xff] %vm6985, %v6930
      %7013 = vst.msk [vmem:[#allocation2 + $0xeb] sm:$0xff] %vm6985, %v6932
      %7014 = vst.msk [vmem:[#allocation2 + $0xf3] sm:$0xff] %vm6985, %v6934
      %7015 = vst.msk [vmem:[#allocation2 + $0xfb] sm:$0xff] %vm6985, %v6936
      %7016 = vst.msk [vmem:[#allocation2 + $0x103] sm:$0xff] %vm6985, %v6938
      %7017 = vst.msk [vmem:[#allocation2 + $0x10b] sm:$0xff] %vm6985, %v6940
      %7018 = vst.msk [vmem:[#allocation2 + $0x113] sm:$0xff] %vm6985, %v6942
      %7019 = vst.msk [vmem:[#allocation2 + $0x11b] sm:$0xff] %vm6985, %v6944
      %7020 = vst.msk [vmem:[#allocation2 + $0x123] sm:$0xff] %vm6985, %v6946
      %vm7021 = vcmask 95296
      %7022 = vst.msk [vmem:[#allocation2 + $0x12b] sm:$0x3f] %vm7021, %v6948
      %v7023 = vld [vmem:[#allocation2] sm:$0xff]
      %v7024 = vld [vmem:[#allocation2 + $0x8] sm:$0xff]
      %v7025 = vld [vmem:[#allocation2 + $0x10] sm:$0xff]
      %v7026 = vld [vmem:[#allocation2 + $0x18] sm:$0xff]
      %v7027 = vld [vmem:[#allocation2 + $0x20] sm:$0xff]
      %v7028 = vld [vmem:[#allocation2 + $0x28] sm:$0xff]
      %v7029 = vld [vmem:[#allocation2 + $0x30] sm:$0xff]
      %v7030 = vld [vmem:[#allocation2 + $0x38] sm:$0xff]
      %v7031 = vld [vmem:[#allocation2 + $0x40] sm:$0xff]
      %v7032 = vld [vmem:[#allocation2 + $0x48] sm:$0xff]
      %v7033 = vld [vmem:[#allocation2 + $0x50] sm:$0xff]
      %v7034 = vld [vmem:[#allocation2 + $0x58] sm:$0xff]
      %v7035 = vld [vmem:[#allocation2 + $0x60] sm:$0xff]
      %v7036 = vld [vmem:[#allocation2 + $0x68] sm:$0xff]
      %v7037 = vld [vmem:[#allocation2 + $0x70] sm:$0xff]
      %v7038 = vld [vmem:[#allocation2 + $0x78] sm:$0xff]
      %v7039 = vld [vmem:[#allocation2 + $0x80] sm:$0xff]
      %v7040 = vld [vmem:[#allocation2 + $0x88] sm:$0xff]
      %v7041 = vld [vmem:[#allocation2 + $0x90] sm:$0xff]
      %v7042 = vld [vmem:[#allocation2 + $0x98] sm:$0xff]
      %v7043 = vld [vmem:[#allocation2 + $0xa0] sm:$0xff]
      %v7044 = vld [vmem:[#allocation2 + $0xa8] sm:$0xff]
      %v7045 = vld [vmem:[#allocation2 + $0xb0] sm:$0xff]
      %v7046 = vld [vmem:[#allocation2 + $0xb8] sm:$0xff]
      %v7047 = vld [vmem:[#allocation2 + $0xc0] sm:$0xff]
      %v7048 = vld [vmem:[#allocation2 + $0xc8] sm:$0xff]
      %v7049 = vld [vmem:[#allocation2 + $0xd0] sm:$0xff]
      %v7050 = vld [vmem:[#allocation2 + $0xd8] sm:$0xff]
      %v7051 = vld [vmem:[#allocation2 + $0xe0] sm:$0xff]
      %v7052 = vld [vmem:[#allocation2 + $0xe8] sm:$0xff]
      %v7053 = vld [vmem:[#allocation2 + $0xf0] sm:$0xff]
      %v7054 = vld [vmem:[#allocation2 + $0xf8] sm:$0xff]
      %v7055 = vld [vmem:[#allocation2 + $0x100] sm:$0xff]
      %v7056 = vld [vmem:[#allocation2 + $0x108] sm:$0xff]
      %v7057 = vld [vmem:[#allocation2 + $0x110] sm:$0xff]
      %v7058 = vld [vmem:[#allocation2 + $0x118] sm:$0x3f]
      %v7059 = vpack.c.bf16 %v7024, %v7023
      %v7060 = vpack.c.bf16 %v7026, %v7025
      %v7061 = vpack.c.bf16 %v7028, %v7027
      %v7062 = vpack.c.bf16 %v7030, %v7029
      %v7063 = vpack.c.bf16 %v7032, %v7031
      %v7064 = vpack.c.bf16 %v7034, %v7033
      %v7065 = vpack.c.bf16 %v7036, %v7035
      %v7066 = vpack.c.bf16 %v7038, %v7037
      %v7067 = vpack.c.bf16 %v7040, %v7039
      %v7068 = vpack.c.bf16 %v7042, %v7041
      %v7069 = vpack.c.bf16 %v7044, %v7043
      %v7070 = vpack.c.bf16 %v7046, %v7045
      %v7071 = vpack.c.bf16 %v7048, %v7047
      %v7072 = vpack.c.bf16 %v7050, %v7049
      %v7073 = vpack.c.bf16 %v7052, %v7051
      %v7074 = vpack.c.bf16 %v7054, %v7053
      %v7075 = vpack.c.bf16 %v7056, %v7055
      %v7076 = vpack.c.bf16 %v7058, %v7057
      %v7077 = vld [vmem:[%s6] sm:$0xf]
      %v7078 = vld [vmem:[%s6 + $0x4] sm:$0x3]
      %v7079 = vld [vmem:[#allocation2 + $0x1] sm:$0xff]
      %v7080 = vld [vmem:[#allocation2 + $0x9] sm:$0xff]
      %v7081 = vld [vmem:[#allocation2 + $0x11] sm:$0xff]
      %v7082 = vld [vmem:[#allocation2 + $0x19] sm:$0xff]
      %v7083 = vld [vmem:[#allocation2 + $0x21] sm:$0xff]
      %v7084 = vld [vmem:[#allocation2 + $0x29] sm:$0xff]
      %v7085 = vld [vmem:[#allocation2 + $0x31] sm:$0xff]
      %v7086 = vld [vmem:[#allocation2 + $0x39] sm:$0xff]
      %v7087 = vld [vmem:[#allocation2 + $0x41] sm:$0xff]
      %v7088 = vld [vmem:[#allocation2 + $0x49] sm:$0xff]
      %v7089 = vld [vmem:[#allocation2 + $0x51] sm:$0xff]
      %v7090 = vld [vmem:[#allocation2 + $0x59] sm:$0xff]
      %v7091 = vld [vmem:[#allocation2 + $0x61] sm:$0xff]
      %v7092 = vld [vmem:[#allocation2 + $0x69] sm:$0xff]
      %v7093 = vld [vmem:[#allocation2 + $0x71] sm:$0xff]
      %v7094 = vld [vmem:[#allocation2 + $0x79] sm:$0xff]
      %v7095 = vld [vmem:[#allocation2 + $0x81] sm:$0xff]
      %v7096 = vld [vmem:[#allocation2 + $0x89] sm:$0xff]
      %v7097 = vld [vmem:[#allocation2 + $0x91] sm:$0xff]
      %v7098 = vld [vmem:[#allocation2 + $0x99] sm:$0xff]
      %v7099 = vld [vmem:[#allocation2 + $0xa1] sm:$0xff]
      %v7100 = vld [vmem:[#allocation2 + $0xa9] sm:$0xff]
      %v7101 = vld [vmem:[#allocation2 + $0xb1] sm:$0xff]
      %v7102 = vld [vmem:[#allocation2 + $0xb9] sm:$0xff]
      %v7103 = vld [vmem:[#allocation2 + $0xc1] sm:$0xff]
      %v7104 = vld [vmem:[#allocation2 + $0xc9] sm:$0xff]
      %v7105 = vld [vmem:[#allocation2 + $0xd1] sm:$0xff]
      %v7106 = vld [vmem:[#allocation2 + $0xd9] sm:$0xff]
      %v7107 = vld [vmem:[#allocation2 + $0xe1] sm:$0xff]
      %v7108 = vld [vmem:[#allocation2 + $0xe9] sm:$0xff]
      %v7109 = vld [vmem:[#allocation2 + $0xf1] sm:$0xff]
      %v7110 = vld [vmem:[#allocation2 + $0xf9] sm:$0xff]
      %v7111 = vld [vmem:[#allocation2 + $0x101] sm:$0xff]
      %v7112 = vld [vmem:[#allocation2 + $0x109] sm:$0xff]
      %v7113 = vld [vmem:[#allocation2 + $0x111] sm:$0xff]
      %v7114 = vld [vmem:[#allocation2 + $0x119] sm:$0x3f]
      %v7115 = vpack.c.bf16 %v7080, %v7079
      %v7116 = vpack.c.bf16 %v7082, %v7081
      %v7117 = vpack.c.bf16 %v7084, %v7083
      %v7118 = vpack.c.bf16 %v7086, %v7085
      %v7119 = vpack.c.bf16 %v7088, %v7087
      %v7120 = vpack.c.bf16 %v7090, %v7089
      %v7121 = vpack.c.bf16 %v7092, %v7091
      %v7122 = vpack.c.bf16 %v7094, %v7093
      %v7123 = vpack.c.bf16 %v7096, %v7095
      %v7124 = vpack.c.bf16 %v7098, %v7097
      %v7125 = vpack.c.bf16 %v7100, %v7099
      %v7126 = vpack.c.bf16 %v7102, %v7101
      %v7127 = vpack.c.bf16 %v7104, %v7103
      %v7128 = vpack.c.bf16 %v7106, %v7105
      %v7129 = vpack.c.bf16 %v7108, %v7107
      %v7130 = vpack.c.bf16 %v7110, %v7109
      %v7131 = vpack.c.bf16 %v7112, %v7111
      %v7132 = vpack.c.bf16 %v7114, %v7113
      %s7133 = scalar_lea.vmem %s6, 8
      %v7134 = vld [vmem:[%s7133] sm:$0xf]
      %v7135 = vld [vmem:[%s7133 + $0x4] sm:$0x3]
      %v7138 = vunpack.c.l.b16 %v7134
      %v7139 = vunpack.c.l.b16 %v7135
      %v7140 = vpack.c.b16 %v7139, %v7138
      %vm7141 = vcmask 97280
      %v7143 = vsel %vm7141, %v7115, 0
      %v7146 = vsel %vm7141, %v7116, 0
      %v7149 = vsel %vm7141, %v7117, 0
      %v7152 = vsel %vm7141, %v7118, 0
      %v7155 = vsel %vm7141, %v7119, 0
      %v7158 = vsel %vm7141, %v7120, 0
      %v7161 = vsel %vm7141, %v7121, 0
      %v7164 = vsel %vm7141, %v7122, 0
      %v7167 = vsel %vm7141, %v7123, 0
      %v7170 = vsel %vm7141, %v7124, 0
      %v7173 = vsel %vm7141, %v7125, 0
      %v7176 = vsel %vm7141, %v7126, 0
      %v7179 = vsel %vm7141, %v7127, 0
      %v7182 = vsel %vm7141, %v7128, 0
      %v7185 = vsel %vm7141, %v7129, 0
      %v7188 = vsel %vm7141, %v7130, 0
      %v7191 = vsel %vm7141, %v7131, 0
      %v7194 = vsel %vm7141, %v7132, 0
      %vm7196 = vcmask 1045504
      %v7198 = vsel %vm7196, %v7140, 0
      %7200 = vmatprep.subr.bf16.mxu0 0
      %7201 = vmatpush1.bf16.msra.mxu0 %v7198
      %7202 = vmatprep.subr.bf16.mxu0 0
      %7203 = vmatpush1.bf16.msra.mxu0 0
      %7204 = vmatprep.subr.bf16.mxu0 0
      %7205 = vmatpush1.bf16.msra.mxu0 0
      %7206 = vmatprep.subr.bf16.mxu0 0
      %7207 = vmatpush1.bf16.msra.mxu0 0
      %7208 = vmatprep.subr.bf16.mxu0 0
      %7209 = vmatpush1.bf16.msra.mxu0 0
      %7210 = vmatprep.subr.bf16.mxu0 0
      %7211 = vmatpush1.bf16.msra.mxu0 0
      %7212 = vmatprep.subr.bf16.mxu0 0
      %7213 = vmatpush1.bf16.msra.mxu0 0
      %7214 = vmatprep.subr.bf16.mxu0 0
      %7215 = vmatpush1.bf16.msra.mxu0 0
      %7216 = vmatprep.subr.bf16.mxu0 0
      %7217 = vmatpush1.bf16.msra.mxu0 0
      %7218 = vmatprep.subr.bf16.mxu0 0
      %7219 = vmatpush1.bf16.msra.mxu0 0
      %7220 = vmatprep.subr.bf16.mxu0 0
      %7221 = vmatpush1.bf16.msra.mxu0 0
      %7222 = vmatprep.subr.bf16.mxu0 0
      %7223 = vmatpush1.bf16.msra.mxu0 0
      %7224 = vmatprep.subr.bf16.mxu0 0
      %7225 = vmatpush1.bf16.msra.mxu0 0
      %7226 = vmatprep.subr.bf16.mxu0 0
      %7227 = vmatpush1.bf16.msra.mxu0 0
      %7228 = vmatprep.subr.bf16.mxu0 0
      %7229 = vmatpush1.bf16.msra.mxu0 0
      %7230 = vmatprep.subr.bf16.mxu0 0
      %7231 = vmatpush1.bf16.msra.mxu0 0
      %7232 = vmatprep.mubr.bf16.mxu0 0
      %7233 = vmatmul.mubr.bf16.gmra.mrb[0].mxu0 %v7143
      %v7234 = vpop.f32.mrb[0].mxu0
      %v7235 = vadd.f32 0.0, %v7234
      %v7236 = vpop.f32.mrb[0].mxu0
      %v7237 = vpop.f32.mrb[0].mxu0
      %v7238 = vadd.f32 0.0, %v7237
      %v7239 = vpop.f32.mrb[0].mxu0
      %7240 = vmatprep.mubr.bf16.mxu0 0
      %7241 = vmatmul.mubr.bf16.gmra.mrb[0].mxu0 %v7146
      %v7242 = vpop.f32.mrb[0].mxu0
      %v7243 = vadd.f32 0.0, %v7242
      %v7244 = vpop.f32.mrb[0].mxu0
      %v7245 = vpop.f32.mrb[0].mxu0
      %v7246 = vadd.f32 0.0, %v7245
      %v7247 = vpop.f32.mrb[0].mxu0
      %7248 = vmatprep.mubr.bf16.mxu0 0
      %7249 = vmatmul.mubr.bf16.gmra.mrb[0].mxu0 %v7149
      %v7250 = vpop.f32.mrb[0].mxu0
      %v7251 = vadd.f32 0.0, %v7250
      %v7252 = vpop.f32.mrb[0].mxu0
      %v7253 = vpop.f32.mrb[0].mxu0
      %v7254 = vadd.f32 0.0, %v7253
      %v7255 = vpop.f32.mrb[0].mxu0
      %7256 = vmatprep.mubr.bf16.mxu0 0
      %7257 = vmatmul.mubr.bf16.gmra.mrb[0].mxu0 %v7152
      %v7258 = vpop.f32.mrb[0].mxu0
      %v7259 = vadd.f32 0.0, %v7258
      %v7260 = vpop.f32.mrb[0].mxu0
      %v7261 = vpop.f32.mrb[0].mxu0
      %v7262 = vadd.f32 0.0, %v7261
      %v7263 = vpop.f32.mrb[0].mxu0
      %7264 = vmatprep.mubr.bf16.mxu0 0
      %7265 = vmatmul.mubr.bf16.gmra.mrb[0].mxu0 %v7155
      %v7266 = vpop.f32.mrb[0].mxu0
      %v7267 = vadd.f32 0.0, %v7266
      %v7268 = vpop.f32.mrb[0].mxu0
      %v7269 = vpop.f32.mrb[0].mxu0
      %v7270 = vadd.f32 0.0, %v7269
      %v7271 = vpop.f32.mrb[0].mxu0
      %7272 = vmatprep.mubr.bf16.mxu0 0
      %7273 = vmatmul.mubr.bf16.gmra.mrb[0].mxu0 %v7158
      %v7274 = vpop.f32.mrb[0].mxu0
      %v7275 = vadd.f32 0.0, %v7274
      %v7276 = vpop.f32.mrb[0].mxu0
      %v7277 = vpop.f32.mrb[0].mxu0
      %v7278 = vadd.f32 0.0, %v7277
      %v7279 = vpop.f32.mrb[0].mxu0
      %7280 = vmatprep.mubr.bf16.mxu0 0
      %7281 = vmatmul.mubr.bf16.gmra.mrb[0].mxu0 %v7161
      %v7282 = vpop.f32.mrb[0].mxu0
      %v7283 = vadd.f32 0.0, %v7282
      %v7284 = vpop.f32.mrb[0].mxu0
      %v7285 = vpop.f32.mrb[0].mxu0
      %v7286 = vadd.f32 0.0, %v7285
      %v7287 = vpop.f32.mrb[0].mxu0
      %7288 = vmatprep.mubr.bf16.mxu0 0
      %7289 = vmatmul.mubr.bf16.gmra.mrb[0].mxu0 %v7164
      %v7290 = vpop.f32.mrb[0].mxu0
      %v7291 = vadd.f32 0.0, %v7290
      %v7292 = vpop.f32.mrb[0].mxu0
      %v7293 = vpop.f32.mrb[0].mxu0
      %v7294 = vadd.f32 0.0, %v7293
      %v7295 = vpop.f32.mrb[0].mxu0
      %7296 = vmatprep.mubr.bf16.mxu0 0
      %7297 = vmatmul.mubr.bf16.gmra.mrb[0].mxu0 %v7167
      %v7298 = vpop.f32.mrb[0].mxu0
      %v7299 = vadd.f32 0.0, %v7298
      %v7300 = vpop.f32.mrb[0].mxu0
      %v7301 = vpop.f32.mrb[0].mxu0
      %v7302 = vadd.f32 0.0, %v7301
      %v7303 = vpop.f32.mrb[0].mxu0
      %7304 = vmatprep.mubr.bf16.mxu0 0
      %7305 = vmatmul.mubr.bf16.gmra.mrb[0].mxu0 %v7170
      %v7306 = vpop.f32.mrb[0].mxu0
      %v7307 = vadd.f32 0.0, %v7306
      %v7308 = vpop.f32.mrb[0].mxu0
      %v7309 = vpop.f32.mrb[0].mxu0
      %v7310 = vadd.f32 0.0, %v7309
      %v7311 = vpop.f32.mrb[0].mxu0
      %7312 = vmatprep.mubr.bf16.mxu0 0
      %7313 = vmatmul.mubr.bf16.gmra.mrb[0].mxu0 %v7173
      %v7314 = vpop.f32.mrb[0].mxu0
      %v7315 = vadd.f32 0.0, %v7314
      %v7316 = vpop.f32.mrb[0].mxu0
      %v7317 = vpop.f32.mrb[0].mxu0
      %v7318 = vadd.f32 0.0, %v7317
      %v7319 = vpop.f32.mrb[0].mxu0
      %7320 = vmatprep.mubr.bf16.mxu0 0
      %7321 = vmatmul.mubr.bf16.gmra.mrb[0].mxu0 %v7176
      %v7322 = vpop.f32.mrb[0].mxu0
      %v7323 = vadd.f32 0.0, %v7322
      %v7324 = vpop.f32.mrb[0].mxu0
      %v7325 = vpop.f32.mrb[0].mxu0
      %v7326 = vadd.f32 0.0, %v7325
      %v7327 = vpop.f32.mrb[0].mxu0
      %7328 = vmatprep.mubr.bf16.mxu0 0
      %7329 = vmatmul.mubr.bf16.gmra.mrb[0].mxu0 %v7179
      %v7330 = vpop.f32.mrb[0].mxu0
      %v7331 = vadd.f32 0.0, %v7330
      %v7332 = vpop.f32.mrb[0].mxu0
      %v7333 = vpop.f32.mrb[0].mxu0
      %v7334 = vadd.f32 0.0, %v7333
      %v7335 = vpop.f32.mrb[0].mxu0
      %7336 = vmatprep.mubr.bf16.mxu0 0
      %7337 = vmatmul.mubr.bf16.gmra.mrb[0].mxu0 %v7182
      %v7338 = vpop.f32.mrb[0].mxu0
      %v7339 = vadd.f32 0.0, %v7338
      %v7340 = vpop.f32.mrb[0].mxu0
      %v7341 = vpop.f32.mrb[0].mxu0
      %v7342 = vadd.f32 0.0, %v7341
      %v7343 = vpop.f32.mrb[0].mxu0
      %7344 = vmatprep.mubr.bf16.mxu0 0
      %7345 = vmatmul.mubr.bf16.gmra.mrb[0].mxu0 %v7185
      %v7346 = vpop.f32.mrb[0].mxu0
      %v7347 = vadd.f32 0.0, %v7346
      %v7348 = vpop.f32.mrb[0].mxu0
      %v7349 = vpop.f32.mrb[0].mxu0
      %v7350 = vadd.f32 0.0, %v7349
      %v7351 = vpop.f32.mrb[0].mxu0
      %7352 = vmatprep.mubr.bf16.mxu0 0
      %7353 = vmatmul.mubr.bf16.gmra.mrb[0].mxu0 %v7188
      %v7354 = vpop.f32.mrb[0].mxu0
      %v7355 = vadd.f32 0.0, %v7354
      %v7356 = vpop.f32.mrb[0].mxu0
      %v7357 = vpop.f32.mrb[0].mxu0
      %v7358 = vadd.f32 0.0, %v7357
      %v7359 = vpop.f32.mrb[0].mxu0
      %7360 = vmatprep.mubr.bf16.mxu0 0
      %7361 = vmatmul.mubr.bf16.gmra.mrb[0].mxu0 %v7191
      %v7362 = vpop.f32.mrb[0].mxu0
      %v7363 = vadd.f32 0.0, %v7362
      %v7364 = vpop.f32.mrb[0].mxu0
      %v7365 = vpop.f32.mrb[0].mxu0
      %v7366 = vadd.f32 0.0, %v7365
      %v7367 = vpop.f32.mrb[0].mxu0
      %7368 = vmatprep.mubr.bf16.mxu0 0
      %7369 = vmatmul.mubr.bf16.gmra.mrb[0].mxu0 %v7194
      %v7370 = vpop.f32.mrb[0].mxu0
      %v7371 = vadd.f32 0.0, %v7370
      %v7372 = vpop.f32.mrb[0].mxu0
      %v7373 = vpop.f32.mrb[0].mxu0
      %v7374 = vadd.f32 0.0, %v7373
      %v7375 = vpop.f32.mrb[0].mxu0
      %7376 = vdwg.mxu0
      %v7379 = vunpack.c.l.b16 %v7077
      %v7380 = vunpack.c.l.b16 %v7078
      %v7381 = vpack.c.b16 %v7380, %v7379
      %v7383 = vsel %vm7141, %v7059, 0
      %v7386 = vsel %vm7141, %v7060, 0
      %v7389 = vsel %vm7141, %v7061, 0
      %v7392 = vsel %vm7141, %v7062, 0
      %v7395 = vsel %vm7141, %v7063, 0
      %v7398 = vsel %vm7141, %v7064, 0
      %v7401 = vsel %vm7141, %v7065, 0
      %v7404 = vsel %vm7141, %v7066, 0
      %v7407 = vsel %vm7141, %v7067, 0
      %v7410 = vsel %vm7141, %v7068, 0
      %v7413 = vsel %vm7141, %v7069, 0
      %v7416 = vsel %vm7141, %v7070, 0
      %v7419 = vsel %vm7141, %v7071, 0
      %v7422 = vsel %vm7141, %v7072, 0
      %v7425 = vsel %vm7141, %v7073, 0
      %v7428 = vsel %vm7141, %v7074, 0
      %v7431 = vsel %vm7141, %v7075, 0
      %v7434 = vsel %vm7141, %v7076, 0
      %v7437 = vsel %vm7196, %v7381, 0
      %7439 = vmatprep.subr.bf16.mxu0 0
      %7440 = vmatpush1.bf16.msra.mxu0 %v7437
      %7441 = vmatprep.subr.bf16.mxu0 0
      %7442 = vmatpush1.bf16.msra.mxu0 0
      %7443 = vmatprep.subr.bf16.mxu0 0
      %7444 = vmatpush1.bf16.msra.mxu0 0
      %7445 = vmatprep.subr.bf16.mxu0 0
      %7446 = vmatpush1.bf16.msra.mxu0 0
      %7447 = vmatprep.subr.bf16.mxu0 0
      %7448 = vmatpush1.bf16.msra.mxu0 0
      %7449 = vmatprep.subr.bf16.mxu0 0
      %7450 = vmatpush1.bf16.msra.mxu0 0
      %7451 = vmatprep.subr.bf16.mxu0 0
      %7452 = vmatpush1.bf16.msra.mxu0 0
      %7453 = vmatprep.subr.bf16.mxu0 0
      %7454 = vmatpush1.bf16.msra.mxu0 0
      %7455 = vmatprep.subr.bf16.mxu0 0
      %7456 = vmatpush1.bf16.msra.mxu0 0
      %7457 = vmatprep.subr.bf16.mxu0 0
      %7458 = vmatpush1.bf16.msra.mxu0 0
      %7459 = vmatprep.subr.bf16.mxu0 0
      %7460 = vmatpush1.bf16.msra.mxu0 0
      %7461 = vmatprep.subr.bf16.mxu0 0
      %7462 = vmatpush1.bf16.msra.mxu0 0
      %7463 = vmatprep.subr.bf16.mxu0 0
      %7464 = vmatpush1.bf16.msra.mxu0 0
      %7465 = vmatprep.subr.bf16.mxu0 0
      %7466 = vmatpush1.bf16.msra.mxu0 0
      %7467 = vmatprep.subr.bf16.mxu0 0
      %7468 = vmatpush1.bf16.msra.mxu0 0
      %7469 = vmatprep.subr.bf16.mxu0 0
      %7470 = vmatpush1.bf16.msra.mxu0 0
      %7471 = vmatprep.mubr.bf16.mxu0 0
      %7472 = vmatmul.mubr.bf16.gmra.mrb[0].mxu0 %v7383
      %v7473 = vpop.f32.mrb[0].mxu0
      %v7474 = vadd.f32 %v7235, %v7473
      %v7475 = vpop.f32.mrb[0].mxu0
      %v7476 = vpop.f32.mrb[0].mxu0
      %v7477 = vadd.f32 %v7238, %v7476
      %v7478 = vpop.f32.mrb[0].mxu0
      %7479 = vmatprep.mubr.bf16.mxu0 0
      %7480 = vmatmul.mubr.bf16.gmra.mrb[0].mxu0 %v7386
      %v7481 = vpop.f32.mrb[0].mxu0
      %v7482 = vadd.f32 %v7243, %v7481
      %v7483 = vpop.f32.mrb[0].mxu0
      %v7484 = vpop.f32.mrb[0].mxu0
      %v7485 = vadd.f32 %v7246, %v7484
      %v7486 = vpop.f32.mrb[0].mxu0
      %7487 = vmatprep.mubr.bf16.mxu0 0
      %7488 = vmatmul.mubr.bf16.gmra.mrb[0].mxu0 %v7389
      %v7489 = vpop.f32.mrb[0].mxu0
      %v7490 = vadd.f32 %v7251, %v7489
      %v7491 = vpop.f32.mrb[0].mxu0
      %v7492 = vpop.f32.mrb[0].mxu0
      %v7493 = vadd.f32 %v7254, %v7492
      %v7494 = vpop.f32.mrb[0].mxu0
      %7495 = vmatprep.mubr.bf16.mxu0 0
      %7496 = vmatmul.mubr.bf16.gmra.mrb[0].mxu0 %v7392
      %v7497 = vpop.f32.mrb[0].mxu0
      %v7498 = vadd.f32 %v7259, %v7497
      %v7499 = vpop.f32.mrb[0].mxu0
      %v7500 = vpop.f32.mrb[0].mxu0
      %v7501 = vadd.f32 %v7262, %v7500
      %v7502 = vpop.f32.mrb[0].mxu0
      %7503 = vmatprep.mubr.bf16.mxu0 0
      %7504 = vmatmul.mubr.bf16.gmra.mrb[0].mxu0 %v7395
      %v7505 = vpop.f32.mrb[0].mxu0
      %v7506 = vadd.f32 %v7267, %v7505
      %v7507 = vpop.f32.mrb[0].mxu0
      %v7508 = vpop.f32.mrb[0].mxu0
      %v7509 = vadd.f32 %v7270, %v7508
      %v7510 = vpop.f32.mrb[0].mxu0
      %7511 = vmatprep.mubr.bf16.mxu0 0
      %7512 = vmatmul.mubr.bf16.gmra.mrb[0].mxu0 %v7398
      %v7513 = vpop.f32.mrb[0].mxu0
      %v7514 = vadd.f32 %v7275, %v7513
      %v7515 = vpop.f32.mrb[0].mxu0
      %v7516 = vpop.f32.mrb[0].mxu0
      %v7517 = vadd.f32 %v7278, %v7516
      %v7518 = vpop.f32.mrb[0].mxu0
      %7519 = vmatprep.mubr.bf16.mxu0 0
      %7520 = vmatmul.mubr.bf16.gmra.mrb[0].mxu0 %v7401
      %v7521 = vpop.f32.mrb[0].mxu0
      %v7522 = vadd.f32 %v7283, %v7521
      %v7523 = vpop.f32.mrb[0].mxu0
      %v7524 = vpop.f32.mrb[0].mxu0
      %v7525 = vadd.f32 %v7286, %v7524
      %v7526 = vpop.f32.mrb[0].mxu0
      %7527 = vmatprep.mubr.bf16.mxu0 0
      %7528 = vmatmul.mubr.bf16.gmra.mrb[0].mxu0 %v7404
      %v7529 = vpop.f32.mrb[0].mxu0
      %v7530 = vadd.f32 %v7291, %v7529
      %v7531 = vpop.f32.mrb[0].mxu0
      %v7532 = vpop.f32.mrb[0].mxu0
      %v7533 = vadd.f32 %v7294, %v7532
      %v7534 = vpop.f32.mrb[0].mxu0
      %7535 = vmatprep.mubr.bf16.mxu0 0
      %7536 = vmatmul.mubr.bf16.gmra.mrb[0].mxu0 %v7407
      %v7537 = vpop.f32.mrb[0].mxu0
      %v7538 = vadd.f32 %v7299, %v7537
      %v7539 = vpop.f32.mrb[0].mxu0
      %v7540 = vpop.f32.mrb[0].mxu0
      %v7541 = vadd.f32 %v7302, %v7540
      %v7542 = vpop.f32.mrb[0].mxu0
      %7543 = vmatprep.mubr.bf16.mxu0 0
      %7544 = vmatmul.mubr.bf16.gmra.mrb[0].mxu0 %v7410
      %v7545 = vpop.f32.mrb[0].mxu0
      %v7546 = vadd.f32 %v7307, %v7545
      %v7547 = vpop.f32.mrb[0].mxu0
      %v7548 = vpop.f32.mrb[0].mxu0
      %v7549 = vadd.f32 %v7310, %v7548
      %v7550 = vpop.f32.mrb[0].mxu0
      %7551 = vmatprep.mubr.bf16.mxu0 0
      %7552 = vmatmul.mubr.bf16.gmra.mrb[0].mxu0 %v7413
      %v7553 = vpop.f32.mrb[0].mxu0
      %v7554 = vadd.f32 %v7315, %v7553
      %v7555 = vpop.f32.mrb[0].mxu0
      %v7556 = vpop.f32.mrb[0].mxu0
      %v7557 = vadd.f32 %v7318, %v7556
      %v7558 = vpop.f32.mrb[0].mxu0
      %7559 = vmatprep.mubr.bf16.mxu0 0
      %7560 = vmatmul.mubr.bf16.gmra.mrb[0].mxu0 %v7416
      %v7561 = vpop.f32.mrb[0].mxu0
      %v7562 = vadd.f32 %v7323, %v7561
      %v7563 = vpop.f32.mrb[0].mxu0
      %v7564 = vpop.f32.mrb[0].mxu0
      %v7565 = vadd.f32 %v7326, %v7564
      %v7566 = vpop.f32.mrb[0].mxu0
      %7567 = vmatprep.mubr.bf16.mxu0 0
      %7568 = vmatmul.mubr.bf16.gmra.mrb[0].mxu0 %v7419
      %v7569 = vpop.f32.mrb[0].mxu0
      %v7570 = vadd.f32 %v7331, %v7569
      %v7571 = vpop.f32.mrb[0].mxu0
      %v7572 = vpop.f32.mrb[0].mxu0
      %v7573 = vadd.f32 %v7334, %v7572
      %v7574 = vpop.f32.mrb[0].mxu0
      %7575 = vmatprep.mubr.bf16.mxu0 0
      %7576 = vmatmul.mubr.bf16.gmra.mrb[0].mxu0 %v7422
      %v7577 = vpop.f32.mrb[0].mxu0
      %v7578 = vadd.f32 %v7339, %v7577
      %v7579 = vpop.f32.mrb[0].mxu0
      %v7580 = vpop.f32.mrb[0].mxu0
      %v7581 = vadd.f32 %v7342, %v7580
      %v7582 = vpop.f32.mrb[0].mxu0
      %7583 = vmatprep.mubr.bf16.mxu0 0
      %7584 = vmatmul.mubr.bf16.gmra.mrb[0].mxu0 %v7425
      %v7585 = vpop.f32.mrb[0].mxu0
      %v7586 = vadd.f32 %v7347, %v7585
      %v7587 = vpop.f32.mrb[0].mxu0
      %v7588 = vpop.f32.mrb[0].mxu0
      %v7589 = vadd.f32 %v7350, %v7588
      %v7590 = vpop.f32.mrb[0].mxu0
      %7591 = vmatprep.mubr.bf16.mxu0 0
      %7592 = vmatmul.mubr.bf16.gmra.mrb[0].mxu0 %v7428
      %v7593 = vpop.f32.mrb[0].mxu0
      %v7594 = vadd.f32 %v7355, %v7593
      %v7595 = vpop.f32.mrb[0].mxu0
      %v7596 = vpop.f32.mrb[0].mxu0
      %v7597 = vadd.f32 %v7358, %v7596
      %v7598 = vpop.f32.mrb[0].mxu0
      %7599 = vmatprep.mubr.bf16.mxu0 0
      %7600 = vmatmul.mubr.bf16.gmra.mrb[0].mxu0 %v7431
      %v7601 = vpop.f32.mrb[0].mxu0
      %v7602 = vadd.f32 %v7363, %v7601
      %v7603 = vpop.f32.mrb[0].mxu0
      %v7604 = vpop.f32.mrb[0].mxu0
      %v7605 = vadd.f32 %v7366, %v7604
      %v7606 = vpop.f32.mrb[0].mxu0
      %7607 = vmatprep.mubr.bf16.mxu0 0
      %7608 = vmatmul.mubr.bf16.gmra.mrb[0].mxu0 %v7434
      %v7609 = vpop.f32.mrb[0].mxu0
      %v7610 = vadd.f32 %v7371, %v7609
      %v7611 = vpop.f32.mrb[0].mxu0
      %v7612 = vpop.f32.mrb[0].mxu0
      %v7613 = vadd.f32 %v7374, %v7612
      %v7614 = vpop.f32.mrb[0].mxu0
      %7615 = vdwg.mxu0
      %v7616 = vld [vmem:[#allocation2 + $0x2] sm:$0xff]
      %v7617 = vld [vmem:[#allocation2 + $0xa] sm:$0xff]
      %v7618 = vld [vmem:[#allocation2 + $0x12] sm:$0xff]
      %v7619 = vld [vmem:[#allocation2 + $0x1a] sm:$0xff]
      %v7620 = vld [vmem:[#allocation2 + $0x22] sm:$0xff]
      %v7621 = vld [vmem:[#allocation2 + $0x2a] sm:$0xff]
      %v7622 = vld [vmem:[#allocation2 + $0x32] sm:$0xff]
      %v7623 = vld [vmem:[#allocation2 + $0x3a] sm:$0xff]
      %v7624 = vld [vmem:[#allocation2 + $0x42] sm:$0xff]
      %v7625 = vld [vmem:[#allocation2 + $0x4a] sm:$0xff]
      %v7626 = vld [vmem:[#allocation2 + $0x52] sm:$0xff]
      %v7627 = vld [vmem:[#allocation2 + $0x5a] sm:$0xff]
      %v7628 = vld [vmem:[#allocation2 + $0x62] sm:$0xff]
      %v7629 = vld [vmem:[#allocation2 + $0x6a] sm:$0xff]
      %v7630 = vld [vmem:[#allocation2 + $0x72] sm:$0xff]
      %v7631 = vld [vmem:[#allocation2 + $0x7a] sm:$0xff]
      %v7632 = vld [vmem:[#allocation2 + $0x82] sm:$0xff]
      %v7633 = vld [vmem:[#allocation2 + $0x8a] sm:$0xff]
      %v7634 = vld [vmem:[#allocation2 + $0x92] sm:$0xff]
      %v7635 = vld [vmem:[#allocation2 + $0x9a] sm:$0xff]
      %v7636 = vld [vmem:[#allocation2 + $0xa2] sm:$0xff]
      %v7637 = vld [vmem:[#allocation2 + $0xaa] sm:$0xff]
      %v7638 = vld [vmem:[#allocation2 + $0xb2] sm:$0xff]
      %v7639 = vld [vmem:[#allocation2 + $0xba] sm:$0xff]
      %v7640 = vld [vmem:[#allocation2 + $0xc2] sm:$0xff]
      %v7641 = vld [vmem:[#allocation2 + $0xca] sm:$0xff]
      %v7642 = vld [vmem:[#allocation2 + $0xd2] sm:$0xff]
      %v7643 = vld [vmem:[#allocation2 + $0xda] sm:$0xff]
      %v7644 = vld [vmem:[#allocation2 + $0xe2] sm:$0xff]
      %v7645 = vld [vmem:[#allocation2 + $0xea] sm:$0xff]
      %v7646 = vld [vmem:[#allocation2 + $0xf2] sm:$0xff]
      %v7647 = vld [vmem:[#allocation2 + $0xfa] sm:$0xff]
      %v7648 = vld [vmem:[#allocation2 + $0x102] sm:$0xff]
      %v7649 = vld [vmem:[#allocation2 + $0x10a] sm:$0xff]
      %v7650 = vld [vmem:[#allocation2 + $0x112] sm:$0xff]
      %v7651 = vld [vmem:[#allocation2 + $0x11a] sm:$0x3f]
      %v7652 = vpack.c.bf16 %v7617, %v7616
      %v7653 = vpack.c.bf16 %v7619, %v7618
      %v7654 = vpack.c.bf16 %v7621, %v7620
      %v7655 = vpack.c.bf16 %v7623, %v7622
      %v7656 = vpack.c.bf16 %v7625, %v7624
      %v7657 = vpack.c.bf16 %v7627, %v7626
      %v7658 = vpack.c.bf16 %v7629, %v7628
      %v7659 = vpack.c.bf16 %v7631, %v7630
      %v7660 = vpack.c.bf16 %v7633, %v7632
      %v7661 = vpack.c.bf16 %v7635, %v7634
      %v7662 = vpack.c.bf16 %v7637, %v7636
      %v7663 = vpack.c.bf16 %v7639, %v7638
      %v7664 = vpack.c.bf16 %v7641, %v7640
      %v7665 = vpack.c.bf16 %v7643, %v7642
      %v7666 = vpack.c.bf16 %v7645, %v7644
      %v7667 = vpack.c.bf16 %v7647, %v7646
      %v7668 = vpack.c.bf16 %v7649, %v7648
      %v7669 = vpack.c.bf16 %v7651, %v7650
      %s7670 = scalar_lea.vmem %s6, 16
      %v7671 = vld [vmem:[%s7670] sm:$0xf]
      %v7672 = vld [vmem:[%s7670 + $0x4] sm:$0x3]
      %v7675 = vunpack.c.l.b16 %v7671
      %v7676 = vunpack.c.l.b16 %v7672
      %v7677 = vpack.c.b16 %v7676, %v7675
      %v7679 = vsel %vm7141, %v7652, 0
      %v7682 = vsel %vm7141, %v7653, 0
      %v7685 = vsel %vm7141, %v7654, 0
      %v7688 = vsel %vm7141, %v7655, 0
      %v7691 = vsel %vm7141, %v7656, 0
      %v7694 = vsel %vm7141, %v7657, 0
      %v7697 = vsel %vm7141, %v7658, 0
      %v7700 = vsel %vm7141, %v7659, 0
      %v7703 = vsel %vm7141, %v7660, 0
      %v7706 = vsel %vm7141, %v7661, 0
      %v7709 = vsel %vm7141, %v7662, 0
      %v7712 = vsel %vm7141, %v7663, 0
      %v7715 = vsel %vm7141, %v7664, 0
      %v7718 = vsel %vm7141, %v7665, 0
      %v7721 = vsel %vm7141, %v7666, 0
      %v7724 = vsel %vm7141, %v7667, 0
      %v7727 = vsel %vm7141, %v7668, 0
      %v7730 = vsel %vm7141, %v7669, 0
      %v7733 = vsel %vm7196, %v7677, 0
      %7735 = vmatprep.subr.bf16.mxu0 0
      %7736 = vmatpush1.bf16.msra.mxu0 %v7733
      %7737 = vmatprep.subr.bf16.mxu0 0
      %7738 = vmatpush1.bf16.msra.mxu0 0
      %7739 = vmatprep.subr.bf16.mxu0 0
      %7740 = vmatpush1.bf16.msra.mxu0 0
      %7741 = vmatprep.subr.bf16.mxu0 0
      %7742 = vmatpush1.bf16.msra.mxu0 0
      %7743 = vmatprep.subr.bf16.mxu0 0
      %7744 = vmatpush1.bf16.msra.mxu0 0
      %7745 = vmatprep.subr.bf16.mxu0 0
      %7746 = vmatpush1.bf16.msra.mxu0 0
      %7747 = vmatprep.subr.bf16.mxu0 0
      %7748 = vmatpush1.bf16.msra.mxu0 0
      %7749 = vmatprep.subr.bf16.mxu0 0
      %7750 = vmatpush1.bf16.msra.mxu0 0
      %7751 = vmatprep.subr.bf16.mxu0 0
      %7752 = vmatpush1.bf16.msra.mxu0 0
      %7753 = vmatprep.subr.bf16.mxu0 0
      %7754 = vmatpush1.bf16.msra.mxu0 0
      %7755 = vmatprep.subr.bf16.mxu0 0
      %7756 = vmatpush1.bf16.msra.mxu0 0
      %7757 = vmatprep.subr.bf16.mxu0 0
      %7758 = vmatpush1.bf16.msra.mxu0 0
      %7759 = vmatprep.subr.bf16.mxu0 0
      %7760 = vmatpush1.bf16.msra.mxu0 0
      %7761 = vmatprep.subr.bf16.mxu0 0
      %7762 = vmatpush1.bf16.msra.mxu0 0
      %7763 = vmatprep.subr.bf16.mxu0 0
      %7764 = vmatpush1.bf16.msra.mxu0 0
      %7765 = vmatprep.subr.bf16.mxu0 0
      %7766 = vmatpush1.bf16.msra.mxu0 0
      %7767 = vmatprep.mubr.bf16.mxu0 0
      %7768 = vmatmul.mubr.bf16.gmra.mrb[0].mxu0 %v7679
      %v7769 = vpop.f32.mrb[0].mxu0
      %v7770 = vadd.f32 0.0, %v7769
      %v7771 = vpop.f32.mrb[0].mxu0
      %v7772 = vpop.f32.mrb[0].mxu0
      %v7773 = vadd.f32 0.0, %v7772
      %v7774 = vpop.f32.mrb[0].mxu0
      %7775 = vmatprep.mubr.bf16.mxu0 0
      %7776 = vmatmul.mubr.bf16.gmra.mrb[0].mxu0 %v7682
      %v7777 = vpop.f32.mrb[0].mxu0
      %v7778 = vadd.f32 0.0, %v7777
      %v7779 = vpop.f32.mrb[0].mxu0
      %v7780 = vpop.f32.mrb[0].mxu0
      %v7781 = vadd.f32 0.0, %v7780
      %v7782 = vpop.f32.mrb[0].mxu0
      %7783 = vmatprep.mubr.bf16.mxu0 0
      %7784 = vmatmul.mubr.bf16.gmra.mrb[0].mxu0 %v7685
      %v7785 = vpop.f32.mrb[0].mxu0
      %v7786 = vadd.f32 0.0, %v7785
      %v7787 = vpop.f32.mrb[0].mxu0
      %v7788 = vpop.f32.mrb[0].mxu0
      %v7789 = vadd.f32 0.0, %v7788
      %v7790 = vpop.f32.mrb[0].mxu0
      %7791 = vmatprep.mubr.bf16.mxu0 0
      %7792 = vmatmul.mubr.bf16.gmra.mrb[0].mxu0 %v7688
      %v7793 = vpop.f32.mrb[0].mxu0
      %v7794 = vadd.f32 0.0, %v7793
      %v7795 = vpop.f32.mrb[0].mxu0
      %v7796 = vpop.f32.mrb[0].mxu0
      %v7797 = vadd.f32 0.0, %v7796
      %v7798 = vpop.f32.mrb[0].mxu0
      %7799 = vmatprep.mubr.bf16.mxu0 0
      %7800 = vmatmul.mubr.bf16.gmra.mrb[0].mxu0 %v7691
      %v7801 = vpop.f32.mrb[0].mxu0
      %v7802 = vadd.f32 0.0, %v7801
      %v7803 = vpop.f32.mrb[0].mxu0
      %v7804 = vpop.f32.mrb[0].mxu0
      %v7805 = vadd.f32 0.0, %v7804
      %v7806 = vpop.f32.mrb[0].mxu0
      %7807 = vmatprep.mubr.bf16.mxu0 0
      %7808 = vmatmul.mubr.bf16.gmra.mrb[0].mxu0 %v7694
      %v7809 = vpop.f32.mrb[0].mxu0
      %v7810 = vadd.f32 0.0, %v7809
      %v7811 = vpop.f32.mrb[0].mxu0
      %v7812 = vpop.f32.mrb[0].mxu0
      %v7813 = vadd.f32 0.0, %v7812
      %v7814 = vpop.f32.mrb[0].mxu0
      %7815 = vmatprep.mubr.bf16.mxu0 0
      %7816 = vmatmul.mubr.bf16.gmra.mrb[0].mxu0 %v7697
      %v7817 = vpop.f32.mrb[0].mxu0
      %v7818 = vadd.f32 0.0, %v7817
      %v7819 = vpop.f32.mrb[0].mxu0
      %v7820 = vpop.f32.mrb[0].mxu0
      %v7821 = vadd.f32 0.0, %v7820
      %v7822 = vpop.f32.mrb[0].mxu0
      %7823 = vmatprep.mubr.bf16.mxu0 0
      %7824 = vmatmul.mubr.bf16.gmra.mrb[0].mxu0 %v7700
      %v7825 = vpop.f32.mrb[0].mxu0
      %v7826 = vadd.f32 0.0, %v7825
      %v7827 = vpop.f32.mrb[0].mxu0
      %v7828 = vpop.f32.mrb[0].mxu0
      %v7829 = vadd.f32 0.0, %v7828
      %v7830 = vpop.f32.mrb[0].mxu0
      %7831 = vmatprep.mubr.bf16.mxu0 0
      %7832 = vmatmul.mubr.bf16.gmra.mrb[0].mxu0 %v7703
      %v7833 = vpop.f32.mrb[0].mxu0
      %v7834 = vadd.f32 0.0, %v7833
      %v7835 = vpop.f32.mrb[0].mxu0
      %v7836 = vpop.f32.mrb[0].mxu0
      %v7837 = vadd.f32 0.0, %v7836
      %v7838 = vpop.f32.mrb[0].mxu0
      %7839 = vmatprep.mubr.bf16.mxu0 0
      %7840 = vmatmul.mubr.bf16.gmra.mrb[0].mxu0 %v7706
      %v7841 = vpop.f32.mrb[0].mxu0
      %v7842 = vadd.f32 0.0, %v7841
      %v7843 = vpop.f32.mrb[0].mxu0
      %v7844 = vpop.f32.mrb[0].mxu0
      %v7845 = vadd.f32 0.0, %v7844
      %v7846 = vpop.f32.mrb[0].mxu0
      %7847 = vmatprep.mubr.bf16.mxu0 0
      %7848 = vmatmul.mubr.bf16.gmra.mrb[0].mxu0 %v7709
      %v7849 = vpop.f32.mrb[0].mxu0
      %v7850 = vadd.f32 0.0, %v7849
      %v7851 = vpop.f32.mrb[0].mxu0
      %v7852 = vpop.f32.mrb[0].mxu0
      %v7853 = vadd.f32 0.0, %v7852
      %v7854 = vpop.f32.mrb[0].mxu0
      %7855 = vmatprep.mubr.bf16.mxu0 0
      %7856 = vmatmul.mubr.bf16.gmra.mrb[0].mxu0 %v7712
      %v7857 = vpop.f32.mrb[0].mxu0
      %v7858 = vadd.f32 0.0, %v7857
      %v7859 = vpop.f32.mrb[0].mxu0
      %v7860 = vpop.f32.mrb[0].mxu0
      %v7861 = vadd.f32 0.0, %v7860
      %v7862 = vpop.f32.mrb[0].mxu0
      %7863 = vmatprep.mubr.bf16.mxu0 0
      %7864 = vmatmul.mubr.bf16.gmra.mrb[0].mxu0 %v7715
      %v7865 = vpop.f32.mrb[0].mxu0
      %v7866 = vadd.f32 0.0, %v7865
      %v7867 = vpop.f32.mrb[0].mxu0
      %v7868 = vpop.f32.mrb[0].mxu0
      %v7869 = vadd.f32 0.0, %v7868
      %v7870 = vpop.f32.mrb[0].mxu0
      %7871 = vmatprep.mubr.bf16.mxu0 0
      %7872 = vmatmul.mubr.bf16.gmra.mrb[0].mxu0 %v7718
      %v7873 = vpop.f32.mrb[0].mxu0
      %v7874 = vadd.f32 0.0, %v7873
      %v7875 = vpop.f32.mrb[0].mxu0
      %v7876 = vpop.f32.mrb[0].mxu0
      %v7877 = vadd.f32 0.0, %v7876
      %v7878 = vpop.f32.mrb[0].mxu0
      %7879 = vmatprep.mubr.bf16.mxu0 0
      %7880 = vmatmul.mubr.bf16.gmra.mrb[0].mxu0 %v7721
      %v7881 = vpop.f32.mrb[0].mxu0
      %v7882 = vadd.f32 0.0, %v7881
      %v7883 = vpop.f32.mrb[0].mxu0
      %v7884 = vpop.f32.mrb[0].mxu0
      %v7885 = vadd.f32 0.0, %v7884
      %v7886 = vpop.f32.mrb[0].mxu0
      %7887 = vmatprep.mubr.bf16.mxu0 0
      %7888 = vmatmul.mubr.bf16.gmra.mrb[0].mxu0 %v7724
      %v7889 = vpop.f32.mrb[0].mxu0
      %v7890 = vadd.f32 0.0, %v7889
      %v7891 = vpop.f32.mrb[0].mxu0
      %v7892 = vpop.f32.mrb[0].mxu0
      %v7893 = vadd.f32 0.0, %v7892
      %v7894 = vpop.f32.mrb[0].mxu0
      %7895 = vmatprep.mubr.bf16.mxu0 0
      %7896 = vmatmul.mubr.bf16.gmra.mrb[0].mxu0 %v7727
      %v7897 = vpop.f32.mrb[0].mxu0
      %v7898 = vadd.f32 0.0, %v7897
      %v7899 = vpop.f32.mrb[0].mxu0
      %v7900 = vpop.f32.mrb[0].mxu0
      %v7901 = vadd.f32 0.0, %v7900
      %v7902 = vpop.f32.mrb[0].mxu0
      %7903 = vmatprep.mubr.bf16.mxu0 0
      %7904 = vmatmul.mubr.bf16.gmra.mrb[0].mxu0 %v7730
      %v7905 = vpop.f32.mrb[0].mxu0
      %v7906 = vadd.f32 0.0, %v7905
      %v7907 = vpop.f32.mrb[0].mxu0
      %v7908 = vpop.f32.mrb[0].mxu0
      %v7909 = vadd.f32 0.0, %v7908
      %v7910 = vpop.f32.mrb[0].mxu0
      %7911 = vdwg.mxu0
      %v7912 = vadd.f32 %v7474, %v7770
      %v7913 = vadd.f32 %v7477, %v7773
      %v7914 = vadd.f32 %v7482, %v7778
      %v7915 = vadd.f32 %v7485, %v7781
      %v7916 = vadd.f32 %v7490, %v7786
      %v7917 = vadd.f32 %v7493, %v7789
      %v7918 = vadd.f32 %v7498, %v7794
      %v7919 = vadd.f32 %v7501, %v7797
      %v7920 = vadd.f32 %v7506, %v7802
      %v7921 = vadd.f32 %v7509, %v7805
      %v7922 = vadd.f32 %v7514, %v7810
      %v7923 = vadd.f32 %v7517, %v7813
      %v7924 = vadd.f32 %v7522, %v7818
      %v7925 = vadd.f32 %v7525, %v7821
      %v7926 = vadd.f32 %v7530, %v7826
      %v7927 = vadd.f32 %v7533, %v7829
      %v7928 = vadd.f32 %v7538, %v7834
      %v7929 = vadd.f32 %v7541, %v7837
      %v7930 = vadd.f32 %v7546, %v7842
      %v7931 = vadd.f32 %v7549, %v7845
      %v7932 = vadd.f32 %v7554, %v7850
      %v7933 = vadd.f32 %v7557, %v7853
      %v7934 = vadd.f32 %v7562, %v7858
      %v7935 = vadd.f32 %v7565, %v7861
      %v7936 = vadd.f32 %v7570, %v7866
      %v7937 = vadd.f32 %v7573, %v7869
      %v7938 = vadd.f32 %v7578, %v7874
      %v7939 = vadd.f32 %v7581, %v7877
      %v7940 = vadd.f32 %v7586, %v7882
      %v7941 = vadd.f32 %v7589, %v7885
      %v7942 = vadd.f32 %v7594, %v7890
      %v7943 = vadd.f32 %v7597, %v7893
      %v7944 = vadd.f32 %v7602, %v7898
      %v7945 = vadd.f32 %v7605, %v7901
      %v7946 = vadd.f32 %v7610, %v7906
      %v7947 = vadd.f32 %v7613, %v7909
      %v7948 = vld [vmem:[#allocation2 + $0x12] sm:$0xff]
      %v7949 = vld [vmem:[#allocation2 + $0x1a] sm:$0xff]
      %v7950 = vld [vmem:[#allocation2 + $0x22] sm:$0xff]
      %v7951 = vld [vmem:[#allocation2 + $0x2a] sm:$0xff]
      %v7952 = vld [vmem:[#allocation2 + $0x32] sm:$0xff]
      %v7953 = vld [vmem:[#allocation2 + $0x3a] sm:$0xff]
      %v7954 = vld [vmem:[#allocation2 + $0x42] sm:$0xff]
      %v7955 = vld [vmem:[#allocation2 + $0x4a] sm:$0xff]
      %v7956 = vld [vmem:[#allocation2 + $0x52] sm:$0xff]
      %v7957 = vld [vmem:[#allocation2 + $0x5a] sm:$0xff]
      %v7958 = vld [vmem:[#allocation2 + $0x62] sm:$0xff]
      %v7959 = vld [vmem:[#allocation2 + $0x6a] sm:$0xff]
      %v7960 = vld [vmem:[#allocation2 + $0x72] sm:$0xff]
      %v7961 = vld [vmem:[#allocation2 + $0x7a] sm:$0xff]
      %v7962 = vld [vmem:[#allocation2 + $0x82] sm:$0xff]
      %v7963 = vld [vmem:[#allocation2 + $0x8a] sm:$0xff]
      %v7964 = vld [vmem:[#allocation2 + $0x92] sm:$0xff]
      %v7965 = vld [vmem:[#allocation2 + $0x9a] sm:$0xff]
      %v7966 = vld [vmem:[#allocation2 + $0xa2] sm:$0xff]
      %v7967 = vld [vmem:[#allocation2 + $0xaa] sm:$0xff]
      %v7968 = vld [vmem:[#allocation2 + $0xb2] sm:$0xff]
      %v7969 = vld [vmem:[#allocation2 + $0xba] sm:$0xff]
      %v7970 = vld [vmem:[#allocation2 + $0xc2] sm:$0xff]
      %v7971 = vld [vmem:[#allocation2 + $0xca] sm:$0xff]
      %v7972 = vld [vmem:[#allocation2 + $0xd2] sm:$0xff]
      %v7973 = vld [vmem:[#allocation2 + $0xda] sm:$0xff]
      %v7974 = vld [vmem:[#allocation2 + $0xe2] sm:$0xff]
      %v7975 = vld [vmem:[#allocation2 + $0xea] sm:$0xff]
      %v7976 = vld [vmem:[#allocation2 + $0xf2] sm:$0xff]
      %v7977 = vld [vmem:[#allocation2 + $0xfa] sm:$0xff]
      %v7978 = vld [vmem:[#allocation2 + $0x102] sm:$0xff]
      %v7979 = vld [vmem:[#allocation2 + $0x10a] sm:$0xff]
      %v7980 = vld [vmem:[#allocation2 + $0x112] sm:$0xff]
      %v7981 = vld [vmem:[#allocation2 + $0x11a] sm:$0xff]
      %v7982 = vld [vmem:[#allocation2 + $0x122] sm:$0xff]
      %v7983 = vld [vmem:[#allocation2 + $0x12a] sm:$0x3f]
      %v7984 = vpack.c.bf16 %v7949, %v7948
      %v7985 = vpack.c.bf16 %v7951, %v7950
      %v7986 = vpack.c.bf16 %v7953, %v7952
      %v7987 = vpack.c.bf16 %v7955, %v7954
      %v7988 = vpack.c.bf16 %v7957, %v7956
      %v7989 = vpack.c.bf16 %v7959, %v7958
      %v7990 = vpack.c.bf16 %v7961, %v7960
      %v7991 = vpack.c.bf16 %v7963, %v7962
      %v7992 = vpack.c.bf16 %v7965, %v7964
      %v7993 = vpack.c.bf16 %v7967, %v7966
      %v7994 = vpack.c.bf16 %v7969, %v7968
      %v7995 = vpack.c.bf16 %v7971, %v7970
      %v7996 = vpack.c.bf16 %v7973, %v7972
      %v7997 = vpack.c.bf16 %v7975, %v7974
      %v7998 = vpack.c.bf16 %v7977, %v7976
      %v7999 = vpack.c.bf16 %v7979, %v7978
      %v8000 = vpack.c.bf16 %v7981, %v7980
      %v8001 = vpack.c.bf16 %v7983, %v7982
      %s8002 = scalar_lea.vmem %s6, 24
      %v8003 = vld [vmem:[%s8002] sm:$0xf]
      %v8004 = vld [vmem:[%s8002 + $0x4] sm:$0x3]
      %v8007 = vunpack.c.l.b16 %v8003
      %v8008 = vunpack.c.l.b16 %v8004
      %v8009 = vpack.c.b16 %v8008, %v8007
      %v8011 = vsel %vm7141, %v7984, 0
      %v8014 = vsel %vm7141, %v7985, 0
      %v8017 = vsel %vm7141, %v7986, 0
      %v8020 = vsel %vm7141, %v7987, 0
      %v8023 = vsel %vm7141, %v7988, 0
      %v8026 = vsel %vm7141, %v7989, 0
      %v8029 = vsel %vm7141, %v7990, 0
      %v8032 = vsel %vm7141, %v7991, 0
      %v8035 = vsel %vm7141, %v7992, 0
      %v8038 = vsel %vm7141, %v7993, 0
      %v8041 = vsel %vm7141, %v7994, 0
      %v8044 = vsel %vm7141, %v7995, 0
      %v8047 = vsel %vm7141, %v7996, 0
      %v8050 = vsel %vm7141, %v7997, 0
      %v8053 = vsel %vm7141, %v7998, 0
      %v8056 = vsel %vm7141, %v7999, 0
      %v8059 = vsel %vm7141, %v8000, 0
      %v8062 = vsel %vm7141, %v8001, 0
      %v8065 = vsel %vm7196, %v8009, 0
      %8067 = vmatprep.subr.bf16.mxu0 0
      %8068 = vmatpush1.bf16.msra.mxu0 %v8065
      %8069 = vmatprep.subr.bf16.mxu0 0
      %8070 = vmatpush1.bf16.msra.mxu0 0
      %8071 = vmatprep.subr.bf16.mxu0 0
      %8072 = vmatpush1.bf16.msra.mxu0 0
      %8073 = vmatprep.subr.bf16.mxu0 0
      %8074 = vmatpush1.bf16.msra.mxu0 0
      %8075 = vmatprep.subr.bf16.mxu0 0
      %8076 = vmatpush1.bf16.msra.mxu0 0
      %8077 = vmatprep.subr.bf16.mxu0 0
      %8078 = vmatpush1.bf16.msra.mxu0 0
      %8079 = vmatprep.subr.bf16.mxu0 0
      %8080 = vmatpush1.bf16.msra.mxu0 0
      %8081 = vmatprep.subr.bf16.mxu0 0
      %8082 = vmatpush1.bf16.msra.mxu0 0
      %8083 = vmatprep.subr.bf16.mxu0 0
      %8084 = vmatpush1.bf16.msra.mxu0 0
      %8085 = vmatprep.subr.bf16.mxu0 0
      %8086 = vmatpush1.bf16.msra.mxu0 0
      %8087 = vmatprep.subr.bf16.mxu0 0
      %8088 = vmatpush1.bf16.msra.mxu0 0
      %8089 = vmatprep.subr.bf16.mxu0 0
      %8090 = vmatpush1.bf16.msra.mxu0 0
      %8091 = vmatprep.subr.bf16.mxu0 0
      %8092 = vmatpush1.bf16.msra.mxu0 0
      %8093 = vmatprep.subr.bf16.mxu0 0
      %8094 = vmatpush1.bf16.msra.mxu0 0
      %8095 = vmatprep.subr.bf16.mxu0 0
      %8096 = vmatpush1.bf16.msra.mxu0 0
      %8097 = vmatprep.subr.bf16.mxu0 0
      %8098 = vmatpush1.bf16.msra.mxu0 0
      %8099 = vmatprep.mubr.bf16.mxu0 0
      %8100 = vmatmul.mubr.bf16.gmra.mrb[0].mxu0 %v8011
      %v8101 = vpop.f32.mrb[0].mxu0
      %v8102 = vadd.f32 0.0, %v8101
      %v8103 = vpop.f32.mrb[0].mxu0
      %v8104 = vpop.f32.mrb[0].mxu0
      %v8105 = vadd.f32 0.0, %v8104
      %v8106 = vpop.f32.mrb[0].mxu0
      %8107 = vmatprep.mubr.bf16.mxu0 0
      %8108 = vmatmul.mubr.bf16.gmra.mrb[0].mxu0 %v8014
      %v8109 = vpop.f32.mrb[0].mxu0
      %v8110 = vadd.f32 0.0, %v8109
      %v8111 = vpop.f32.mrb[0].mxu0
      %v8112 = vpop.f32.mrb[0].mxu0
      %v8113 = vadd.f32 0.0, %v8112
      %v8114 = vpop.f32.mrb[0].mxu0
      %8115 = vmatprep.mubr.bf16.mxu0 0
      %8116 = vmatmul.mubr.bf16.gmra.mrb[0].mxu0 %v8017
      %v8117 = vpop.f32.mrb[0].mxu0
      %v8118 = vadd.f32 0.0, %v8117
      %v8119 = vpop.f32.mrb[0].mxu0
      %v8120 = vpop.f32.mrb[0].mxu0
      %v8121 = vadd.f32 0.0, %v8120
      %v8122 = vpop.f32.mrb[0].mxu0
      %8123 = vmatprep.mubr.bf16.mxu0 0
      %8124 = vmatmul.mubr.bf16.gmra.mrb[0].mxu0 %v8020
      %v8125 = vpop.f32.mrb[0].mxu0
      %v8126 = vadd.f32 0.0, %v8125
      %v8127 = vpop.f32.mrb[0].mxu0
      %v8128 = vpop.f32.mrb[0].mxu0
      %v8129 = vadd.f32 0.0, %v8128
      %v8130 = vpop.f32.mrb[0].mxu0
      %8131 = vmatprep.mubr.bf16.mxu0 0
      %8132 = vmatmul.mubr.bf16.gmra.mrb[0].mxu0 %v8023
      %v8133 = vpop.f32.mrb[0].mxu0
      %v8134 = vadd.f32 0.0, %v8133
      %v8135 = vpop.f32.mrb[0].mxu0
      %v8136 = vpop.f32.mrb[0].mxu0
      %v8137 = vadd.f32 0.0, %v8136
      %v8138 = vpop.f32.mrb[0].mxu0
      %8139 = vmatprep.mubr.bf16.mxu0 0
      %8140 = vmatmul.mubr.bf16.gmra.mrb[0].mxu0 %v8026
      %v8141 = vpop.f32.mrb[0].mxu0
      %v8142 = vadd.f32 0.0, %v8141
      %v8143 = vpop.f32.mrb[0].mxu0
      %v8144 = vpop.f32.mrb[0].mxu0
      %v8145 = vadd.f32 0.0, %v8144
      %v8146 = vpop.f32.mrb[0].mxu0
      %8147 = vmatprep.mubr.bf16.mxu0 0
      %8148 = vmatmul.mubr.bf16.gmra.mrb[0].mxu0 %v8029
      %v8149 = vpop.f32.mrb[0].mxu0
      %v8150 = vadd.f32 0.0, %v8149
      %v8151 = vpop.f32.mrb[0].mxu0
      %v8152 = vpop.f32.mrb[0].mxu0
      %v8153 = vadd.f32 0.0, %v8152
      %v8154 = vpop.f32.mrb[0].mxu0
      %8155 = vmatprep.mubr.bf16.mxu0 0
      %8156 = vmatmul.mubr.bf16.gmra.mrb[0].mxu0 %v8032
      %v8157 = vpop.f32.mrb[0].mxu0
      %v8158 = vadd.f32 0.0, %v8157
      %v8159 = vpop.f32.mrb[0].mxu0
      %v8160 = vpop.f32.mrb[0].mxu0
      %v8161 = vadd.f32 0.0, %v8160
      %v8162 = vpop.f32.mrb[0].mxu0
      %8163 = vmatprep.mubr.bf16.mxu0 0
      %8164 = vmatmul.mubr.bf16.gmra.mrb[0].mxu0 %v8035
      %v8165 = vpop.f32.mrb[0].mxu0
      %v8166 = vadd.f32 0.0, %v8165
      %v8167 = vpop.f32.mrb[0].mxu0
      %v8168 = vpop.f32.mrb[0].mxu0
      %v8169 = vadd.f32 0.0, %v8168
      %v8170 = vpop.f32.mrb[0].mxu0
      %8171 = vmatprep.mubr.bf16.mxu0 0
      %8172 = vmatmul.mubr.bf16.gmra.mrb[0].mxu0 %v8038
      %v8173 = vpop.f32.mrb[0].mxu0
      %v8174 = vadd.f32 0.0, %v8173
      %v8175 = vpop.f32.mrb[0].mxu0
      %v8176 = vpop.f32.mrb[0].mxu0
      %v8177 = vadd.f32 0.0, %v8176
      %v8178 = vpop.f32.mrb[0].mxu0
      %8179 = vmatprep.mubr.bf16.mxu0 0
      %8180 = vmatmul.mubr.bf16.gmra.mrb[0].mxu0 %v8041
      %v8181 = vpop.f32.mrb[0].mxu0
      %v8182 = vadd.f32 0.0, %v8181
      %v8183 = vpop.f32.mrb[0].mxu0
      %v8184 = vpop.f32.mrb[0].mxu0
      %v8185 = vadd.f32 0.0, %v8184
      %v8186 = vpop.f32.mrb[0].mxu0
      %8187 = vmatprep.mubr.bf16.mxu0 0
      %8188 = vmatmul.mubr.bf16.gmra.mrb[0].mxu0 %v8044
      %v8189 = vpop.f32.mrb[0].mxu0
      %v8190 = vadd.f32 0.0, %v8189
      %v8191 = vpop.f32.mrb[0].mxu0
      %v8192 = vpop.f32.mrb[0].mxu0
      %v8193 = vadd.f32 0.0, %v8192
      %v8194 = vpop.f32.mrb[0].mxu0
      %8195 = vmatprep.mubr.bf16.mxu0 0
      %8196 = vmatmul.mubr.bf16.gmra.mrb[0].mxu0 %v8047
      %v8197 = vpop.f32.mrb[0].mxu0
      %v8198 = vadd.f32 0.0, %v8197
      %v8199 = vpop.f32.mrb[0].mxu0
      %v8200 = vpop.f32.mrb[0].mxu0
      %v8201 = vadd.f32 0.0, %v8200
      %v8202 = vpop.f32.mrb[0].mxu0
      %8203 = vmatprep.mubr.bf16.mxu0 0
      %8204 = vmatmul.mubr.bf16.gmra.mrb[0].mxu0 %v8050
      %v8205 = vpop.f32.mrb[0].mxu0
      %v8206 = vadd.f32 0.0, %v8205
      %v8207 = vpop.f32.mrb[0].mxu0
      %v8208 = vpop.f32.mrb[0].mxu0
      %v8209 = vadd.f32 0.0, %v8208
      %v8210 = vpop.f32.mrb[0].mxu0
      %8211 = vmatprep.mubr.bf16.mxu0 0
      %8212 = vmatmul.mubr.bf16.gmra.mrb[0].mxu0 %v8053
      %v8213 = vpop.f32.mrb[0].mxu0
      %v8214 = vadd.f32 0.0, %v8213
      %v8215 = vpop.f32.mrb[0].mxu0
      %v8216 = vpop.f32.mrb[0].mxu0
      %v8217 = vadd.f32 0.0, %v8216
      %v8218 = vpop.f32.mrb[0].mxu0
      %8219 = vmatprep.mubr.bf16.mxu0 0
      %8220 = vmatmul.mubr.bf16.gmra.mrb[0].mxu0 %v8056
      %v8221 = vpop.f32.mrb[0].mxu0
      %v8222 = vadd.f32 0.0, %v8221
      %v8223 = vpop.f32.mrb[0].mxu0
      %v8224 = vpop.f32.mrb[0].mxu0
      %v8225 = vadd.f32 0.0, %v8224
      %v8226 = vpop.f32.mrb[0].mxu0
      %8227 = vmatprep.mubr.bf16.mxu0 0
      %8228 = vmatmul.mubr.bf16.gmra.mrb[0].mxu0 %v8059
      %v8229 = vpop.f32.mrb[0].mxu0
      %v8230 = vadd.f32 0.0, %v8229
      %v8231 = vpop.f32.mrb[0].mxu0
      %v8232 = vpop.f32.mrb[0].mxu0
      %v8233 = vadd.f32 0.0, %v8232
      %v8234 = vpop.f32.mrb[0].mxu0
      %8235 = vmatprep.mubr.bf16.mxu0 0
      %8236 = vmatmul.mubr.bf16.gmra.mrb[0].mxu0 %v8062
      %v8237 = vpop.f32.mrb[0].mxu0
      %v8238 = vadd.f32 0.0, %v8237
      %v8239 = vpop.f32.mrb[0].mxu0
      %v8240 = vpop.f32.mrb[0].mxu0
      %v8241 = vadd.f32 0.0, %v8240
      %v8242 = vpop.f32.mrb[0].mxu0
      %8243 = vdwg.mxu0
      %v8244 = vadd.f32 %v7912, %v8102
      %v8245 = vadd.f32 %v7913, %v8105
      %v8246 = vadd.f32 %v7914, %v8110
      %v8247 = vadd.f32 %v7915, %v8113
      %v8248 = vadd.f32 %v7916, %v8118
      %v8249 = vadd.f32 %v7917, %v8121
      %v8250 = vadd.f32 %v7918, %v8126
      %v8251 = vadd.f32 %v7919, %v8129
      %v8252 = vadd.f32 %v7920, %v8134
      %v8253 = vadd.f32 %v7921, %v8137
      %v8254 = vadd.f32 %v7922, %v8142
      %v8255 = vadd.f32 %v7923, %v8145
      %v8256 = vadd.f32 %v7924, %v8150
      %v8257 = vadd.f32 %v7925, %v8153
      %v8258 = vadd.f32 %v7926, %v8158
      %v8259 = vadd.f32 %v7927, %v8161
      %v8260 = vadd.f32 %v7928, %v8166
      %v8261 = vadd.f32 %v7929, %v8169
      %v8262 = vadd.f32 %v7930, %v8174
      %v8263 = vadd.f32 %v7931, %v8177
      %v8264 = vadd.f32 %v7932, %v8182
      %v8265 = vadd.f32 %v7933, %v8185
      %v8266 = vadd.f32 %v7934, %v8190
      %v8267 = vadd.f32 %v7935, %v8193
      %v8268 = vadd.f32 %v7936, %v8198
      %v8269 = vadd.f32 %v7937, %v8201
      %v8270 = vadd.f32 %v7938, %v8206
      %v8271 = vadd.f32 %v7939, %v8209
      %v8272 = vadd.f32 %v7940, %v8214
      %v8273 = vadd.f32 %v7941, %v8217
      %v8274 = vadd.f32 %v7942, %v8222
      %v8275 = vadd.f32 %v7943, %v8225
      %v8276 = vadd.f32 %v7944, %v8230
      %v8277 = vadd.f32 %v7945, %v8233
      %v8278 = vadd.f32 %v7946, %v8238
      %v8279 = vadd.f32 %v7947, %v8241
      %v8280 = vld [vmem:[#allocation2 + $0x13] sm:$0xff]
      %v8281 = vld [vmem:[#allocation2 + $0x1b] sm:$0xff]
      %v8282 = vld [vmem:[#allocation2 + $0x23] sm:$0xff]
      %v8283 = vld [vmem:[#allocation2 + $0x2b] sm:$0xff]
      %v8284 = vld [vmem:[#allocation2 + $0x33] sm:$0xff]
      %v8285 = vld [vmem:[#allocation2 + $0x3b] sm:$0xff]
      %v8286 = vld [vmem:[#allocation2 + $0x43] sm:$0xff]
      %v8287 = vld [vmem:[#allocation2 + $0x4b] sm:$0xff]
      %v8288 = vld [vmem:[#allocation2 + $0x53] sm:$0xff]
      %v8289 = vld [vmem:[#allocation2 + $0x5b] sm:$0xff]
      %v8290 = vld [vmem:[#allocation2 + $0x63] sm:$0xff]
      %v8291 = vld [vmem:[#allocation2 + $0x6b] sm:$0xff]
      %v8292 = vld [vmem:[#allocation2 + $0x73] sm:$0xff]
      %v8293 = vld [vmem:[#allocation2 + $0x7b] sm:$0xff]
      %v8294 = vld [vmem:[#allocation2 + $0x83] sm:$0xff]
      %v8295 = vld [vmem:[#allocation2 + $0x8b] sm:$0xff]
      %v8296 = vld [vmem:[#allocation2 + $0x93] sm:$0xff]
      %v8297 = vld [vmem:[#allocation2 + $0x9b] sm:$0xff]
      %v8298 = vld [vmem:[#allocation2 + $0xa3] sm:$0xff]
      %v8299 = vld [vmem:[#allocation2 + $0xab] sm:$0xff]
      %v8300 = vld [vmem:[#allocation2 + $0xb3] sm:$0xff]
      %v8301 = vld [vmem:[#allocation2 + $0xbb] sm:$0xff]
      %v8302 = vld [vmem:[#allocation2 + $0xc3] sm:$0xff]
      %v8303 = vld [vmem:[#allocation2 + $0xcb] sm:$0xff]
      %v8304 = vld [vmem:[#allocation2 + $0xd3] sm:$0xff]
      %v8305 = vld [vmem:[#allocation2 + $0xdb] sm:$0xff]
      %v8306 = vld [vmem:[#allocation2 + $0xe3] sm:$0xff]
      %v8307 = vld [vmem:[#allocation2 + $0xeb] sm:$0xff]
      %v8308 = vld [vmem:[#allocation2 + $0xf3] sm:$0xff]
      %v8309 = vld [vmem:[#allocation2 + $0xfb] sm:$0xff]
      %v8310 = vld [vmem:[#allocation2 + $0x103] sm:$0xff]
      %v8311 = vld [vmem:[#allocation2 + $0x10b] sm:$0xff]
      %v8312 = vld [vmem:[#allocation2 + $0x113] sm:$0xff]
      %v8313 = vld [vmem:[#allocation2 + $0x11b] sm:$0xff]
      %v8314 = vld [vmem:[#allocation2 + $0x123] sm:$0xff]
      %v8315 = vld [vmem:[#allocation2 + $0x12b] sm:$0x3f]
      %v8316 = vpack.c.bf16 %v8281, %v8280
      %v8317 = vpack.c.bf16 %v8283, %v8282
      %v8318 = vpack.c.bf16 %v8285, %v8284
      %v8319 = vpack.c.bf16 %v8287, %v8286
      %v8320 = vpack.c.bf16 %v8289, %v8288
      %v8321 = vpack.c.bf16 %v8291, %v8290
      %v8322 = vpack.c.bf16 %v8293, %v8292
      %v8323 = vpack.c.bf16 %v8295, %v8294
      %v8324 = vpack.c.bf16 %v8297, %v8296
      %v8325 = vpack.c.bf16 %v8299, %v8298
      %v8326 = vpack.c.bf16 %v8301, %v8300
      %v8327 = vpack.c.bf16 %v8303, %v8302
      %v8328 = vpack.c.bf16 %v8305, %v8304
      %v8329 = vpack.c.bf16 %v8307, %v8306
      %v8330 = vpack.c.bf16 %v8309, %v8308
      %v8331 = vpack.c.bf16 %v8311, %v8310
      %v8332 = vpack.c.bf16 %v8313, %v8312
      %v8333 = vpack.c.bf16 %v8315, %v8314
      %s8334 = scalar_lea.vmem %s6, 32
      %v8335 = vld [vmem:[%s8334] sm:$0xf]
      %v8336 = vld [vmem:[%s8334 + $0x4] sm:$0x3]
      %v8339 = vunpack.c.l.b16 %v8335
      %v8340 = vunpack.c.l.b16 %v8336
      %v8341 = vpack.c.b16 %v8340, %v8339
      %v8343 = vsel %vm7141, %v8316, 0
      %v8346 = vsel %vm7141, %v8317, 0
      %v8349 = vsel %vm7141, %v8318, 0
      %v8352 = vsel %vm7141, %v8319, 0
      %v8355 = vsel %vm7141, %v8320, 0
      %v8358 = vsel %vm7141, %v8321, 0
      %v8361 = vsel %vm7141, %v8322, 0
      %v8364 = vsel %vm7141, %v8323, 0
      %v8367 = vsel %vm7141, %v8324, 0
      %v8370 = vsel %vm7141, %v8325, 0
      %v8373 = vsel %vm7141, %v8326, 0
      %v8376 = vsel %vm7141, %v8327, 0
      %v8379 = vsel %vm7141, %v8328, 0
      %v8382 = vsel %vm7141, %v8329, 0
      %v8385 = vsel %vm7141, %v8330, 0
      %v8388 = vsel %vm7141, %v8331, 0
      %v8391 = vsel %vm7141, %v8332, 0
      %v8394 = vsel %vm7141, %v8333, 0
      %v8397 = vsel %vm7196, %v8341, 0
      %8399 = vmatprep.subr.bf16.mxu0 0
      %8400 = vmatpush1.bf16.msra.mxu0 %v8397
      %8401 = vmatprep.subr.bf16.mxu0 0
      %8402 = vmatpush1.bf16.msra.mxu0 0
      %8403 = vmatprep.subr.bf16.mxu0 0
      %8404 = vmatpush1.bf16.msra.mxu0 0
      %8405 = vmatprep.subr.bf16.mxu0 0
      %8406 = vmatpush1.bf16.msra.mxu0 0
      %8407 = vmatprep.subr.bf16.mxu0 0
      %8408 = vmatpush1.bf16.msra.mxu0 0
      %8409 = vmatprep.subr.bf16.mxu0 0
      %8410 = vmatpush1.bf16.msra.mxu0 0
      %8411 = vmatprep.subr.bf16.mxu0 0
      %8412 = vmatpush1.bf16.msra.mxu0 0
      %8413 = vmatprep.subr.bf16.mxu0 0
      %8414 = vmatpush1.bf16.msra.mxu0 0
      %8415 = vmatprep.subr.bf16.mxu0 0
      %8416 = vmatpush1.bf16.msra.mxu0 0
      %8417 = vmatprep.subr.bf16.mxu0 0
      %8418 = vmatpush1.bf16.msra.mxu0 0
      %8419 = vmatprep.subr.bf16.mxu0 0
      %8420 = vmatpush1.bf16.msra.mxu0 0
      %8421 = vmatprep.subr.bf16.mxu0 0
      %8422 = vmatpush1.bf16.msra.mxu0 0
      %8423 = vmatprep.subr.bf16.mxu0 0
      %8424 = vmatpush1.bf16.msra.mxu0 0
      %8425 = vmatprep.subr.bf16.mxu0 0
      %8426 = vmatpush1.bf16.msra.mxu0 0
      %8427 = vmatprep.subr.bf16.mxu0 0
      %8428 = vmatpush1.bf16.msra.mxu0 0
      %8429 = vmatprep.subr.bf16.mxu0 0
      %8430 = vmatpush1.bf16.msra.mxu0 0
      %8431 = vmatprep.mubr.bf16.mxu0 0
      %8432 = vmatmul.mubr.bf16.gmra.mrb[0].mxu0 %v8343
      %v8433 = vpop.f32.mrb[0].mxu0
      %v8434 = vadd.f32 0.0, %v8433
      %v8435 = vpop.f32.mrb[0].mxu0
      %v8436 = vpop.f32.mrb[0].mxu0
      %v8437 = vadd.f32 0.0, %v8436
      %v8438 = vpop.f32.mrb[0].mxu0
      %8439 = vmatprep.mubr.bf16.mxu0 0
      %8440 = vmatmul.mubr.bf16.gmra.mrb[0].mxu0 %v8346
      %v8441 = vpop.f32.mrb[0].mxu0
      %v8442 = vadd.f32 0.0, %v8441
      %v8443 = vpop.f32.mrb[0].mxu0
      %v8444 = vpop.f32.mrb[0].mxu0
      %v8445 = vadd.f32 0.0, %v8444
      %v8446 = vpop.f32.mrb[0].mxu0
      %8447 = vmatprep.mubr.bf16.mxu0 0
      %8448 = vmatmul.mubr.bf16.gmra.mrb[0].mxu0 %v8349
      %v8449 = vpop.f32.mrb[0].mxu0
      %v8450 = vadd.f32 0.0, %v8449
      %v8451 = vpop.f32.mrb[0].mxu0
      %v8452 = vpop.f32.mrb[0].mxu0
      %v8453 = vadd.f32 0.0, %v8452
      %v8454 = vpop.f32.mrb[0].mxu0
      %8455 = vmatprep.mubr.bf16.mxu0 0
      %8456 = vmatmul.mubr.bf16.gmra.mrb[0].mxu0 %v8352
      %v8457 = vpop.f32.mrb[0].mxu0
      %v8458 = vadd.f32 0.0, %v8457
      %v8459 = vpop.f32.mrb[0].mxu0
      %v8460 = vpop.f32.mrb[0].mxu0
      %v8461 = vadd.f32 0.0, %v8460
      %v8462 = vpop.f32.mrb[0].mxu0
      %8463 = vmatprep.mubr.bf16.mxu0 0
      %8464 = vmatmul.mubr.bf16.gmra.mrb[0].mxu0 %v8355
      %v8465 = vpop.f32.mrb[0].mxu0
      %v8466 = vadd.f32 0.0, %v8465
      %v8467 = vpop.f32.mrb[0].mxu0
      %v8468 = vpop.f32.mrb[0].mxu0
      %v8469 = vadd.f32 0.0, %v8468
      %v8470 = vpop.f32.mrb[0].mxu0
      %8471 = vmatprep.mubr.bf16.mxu0 0
      %8472 = vmatmul.mubr.bf16.gmra.mrb[0].mxu0 %v8358
      %v8473 = vpop.f32.mrb[0].mxu0
      %v8474 = vadd.f32 0.0, %v8473
      %v8475 = vpop.f32.mrb[0].mxu0
      %v8476 = vpop.f32.mrb[0].mxu0
      %v8477 = vadd.f32 0.0, %v8476
      %v8478 = vpop.f32.mrb[0].mxu0
      %8479 = vmatprep.mubr.bf16.mxu0 0
      %8480 = vmatmul.mubr.bf16.gmra.mrb[0].mxu0 %v8361
      %v8481 = vpop.f32.mrb[0].mxu0
      %v8482 = vadd.f32 0.0, %v8481
      %v8483 = vpop.f32.mrb[0].mxu0
      %v8484 = vpop.f32.mrb[0].mxu0
      %v8485 = vadd.f32 0.0, %v8484
      %v8486 = vpop.f32.mrb[0].mxu0
      %8487 = vmatprep.mubr.bf16.mxu0 0
      %8488 = vmatmul.mubr.bf16.gmra.mrb[0].mxu0 %v8364
      %v8489 = vpop.f32.mrb[0].mxu0
      %v8490 = vadd.f32 0.0, %v8489
      %v8491 = vpop.f32.mrb[0].mxu0
      %v8492 = vpop.f32.mrb[0].mxu0
      %v8493 = vadd.f32 0.0, %v8492
      %v8494 = vpop.f32.mrb[0].mxu0
      %8495 = vmatprep.mubr.bf16.mxu0 0
      %8496 = vmatmul.mubr.bf16.gmra.mrb[0].mxu0 %v8367
      %v8497 = vpop.f32.mrb[0].mxu0
      %v8498 = vadd.f32 0.0, %v8497
      %v8499 = vpop.f32.mrb[0].mxu0
      %v8500 = vpop.f32.mrb[0].mxu0
      %v8501 = vadd.f32 0.0, %v8500
      %v8502 = vpop.f32.mrb[0].mxu0
      %8503 = vmatprep.mubr.bf16.mxu0 0
      %8504 = vmatmul.mubr.bf16.gmra.mrb[0].mxu0 %v8370
      %v8505 = vpop.f32.mrb[0].mxu0
      %v8506 = vadd.f32 0.0, %v8505
      %v8507 = vpop.f32.mrb[0].mxu0
      %v8508 = vpop.f32.mrb[0].mxu0
      %v8509 = vadd.f32 0.0, %v8508
      %v8510 = vpop.f32.mrb[0].mxu0
      %8511 = vmatprep.mubr.bf16.mxu0 0
      %8512 = vmatmul.mubr.bf16.gmra.mrb[0].mxu0 %v8373
      %v8513 = vpop.f32.mrb[0].mxu0
      %v8514 = vadd.f32 0.0, %v8513
      %v8515 = vpop.f32.mrb[0].mxu0
      %v8516 = vpop.f32.mrb[0].mxu0
      %v8517 = vadd.f32 0.0, %v8516
      %v8518 = vpop.f32.mrb[0].mxu0
      %8519 = vmatprep.mubr.bf16.mxu0 0
      %8520 = vmatmul.mubr.bf16.gmra.mrb[0].mxu0 %v8376
      %v8521 = vpop.f32.mrb[0].mxu0
      %v8522 = vadd.f32 0.0, %v8521
      %v8523 = vpop.f32.mrb[0].mxu0
      %v8524 = vpop.f32.mrb[0].mxu0
      %v8525 = vadd.f32 0.0, %v8524
      %v8526 = vpop.f32.mrb[0].mxu0
      %8527 = vmatprep.mubr.bf16.mxu0 0
      %8528 = vmatmul.mubr.bf16.gmra.mrb[0].mxu0 %v8379
      %v8529 = vpop.f32.mrb[0].mxu0
      %v8530 = vadd.f32 0.0, %v8529
      %v8531 = vpop.f32.mrb[0].mxu0
      %v8532 = vpop.f32.mrb[0].mxu0
      %v8533 = vadd.f32 0.0, %v8532
      %v8534 = vpop.f32.mrb[0].mxu0
      %8535 = vmatprep.mubr.bf16.mxu0 0
      %8536 = vmatmul.mubr.bf16.gmra.mrb[0].mxu0 %v8382
      %v8537 = vpop.f32.mrb[0].mxu0
      %v8538 = vadd.f32 0.0, %v8537
      %v8539 = vpop.f32.mrb[0].mxu0
      %v8540 = vpop.f32.mrb[0].mxu0
      %v8541 = vadd.f32 0.0, %v8540
      %v8542 = vpop.f32.mrb[0].mxu0
      %8543 = vmatprep.mubr.bf16.mxu0 0
      %8544 = vmatmul.mubr.bf16.gmra.mrb[0].mxu0 %v8385
      %v8545 = vpop.f32.mrb[0].mxu0
      %v8546 = vadd.f32 0.0, %v8545
      %v8547 = vpop.f32.mrb[0].mxu0
      %v8548 = vpop.f32.mrb[0].mxu0
      %v8549 = vadd.f32 0.0, %v8548
      %v8550 = vpop.f32.mrb[0].mxu0
      %8551 = vmatprep.mubr.bf16.mxu0 0
      %8552 = vmatmul.mubr.bf16.gmra.mrb[0].mxu0 %v8388
      %v8553 = vpop.f32.mrb[0].mxu0
      %v8554 = vadd.f32 0.0, %v8553
      %v8555 = vpop.f32.mrb[0].mxu0
      %v8556 = vpop.f32.mrb[0].mxu0
      %v8557 = vadd.f32 0.0, %v8556
      %v8558 = vpop.f32.mrb[0].mxu0
      %8559 = vmatprep.mubr.bf16.mxu0 0
      %8560 = vmatmul.mubr.bf16.gmra.mrb[0].mxu0 %v8391
      %v8561 = vpop.f32.mrb[0].mxu0
      %v8562 = vadd.f32 0.0, %v8561
      %v8563 = vpop.f32.mrb[0].mxu0
      %v8564 = vpop.f32.mrb[0].mxu0
      %v8565 = vadd.f32 0.0, %v8564
      %v8566 = vpop.f32.mrb[0].mxu0
      %8567 = vmatprep.mubr.bf16.mxu0 0
      %8568 = vmatmul.mubr.bf16.gmra.mrb[0].mxu0 %v8394
      %v8569 = vpop.f32.mrb[0].mxu0
      %v8570 = vadd.f32 0.0, %v8569
      %v8571 = vpop.f32.mrb[0].mxu0
      %v8572 = vpop.f32.mrb[0].mxu0
      %v8573 = vadd.f32 0.0, %v8572
      %v8574 = vpop.f32.mrb[0].mxu0
      %8575 = vdwg.mxu0
      %v8576 = vadd.f32 %v8244, %v8434
      %v8577 = vadd.f32 %v8245, %v8437
      %v8578 = vadd.f32 %v8246, %v8442
      %v8579 = vadd.f32 %v8247, %v8445
      %v8580 = vadd.f32 %v8248, %v8450
      %v8581 = vadd.f32 %v8249, %v8453
      %v8582 = vadd.f32 %v8250, %v8458
      %v8583 = vadd.f32 %v8251, %v8461
      %v8584 = vadd.f32 %v8252, %v8466
      %v8585 = vadd.f32 %v8253, %v8469
      %v8586 = vadd.f32 %v8254, %v8474
      %v8587 = vadd.f32 %v8255, %v8477
      %v8588 = vadd.f32 %v8256, %v8482
      %v8589 = vadd.f32 %v8257, %v8485
      %v8590 = vadd.f32 %v8258, %v8490
      %v8591 = vadd.f32 %v8259, %v8493
      %v8592 = vadd.f32 %v8260, %v8498
      %v8593 = vadd.f32 %v8261, %v8501
      %v8594 = vadd.f32 %v8262, %v8506
      %v8595 = vadd.f32 %v8263, %v8509
      %v8596 = vadd.f32 %v8264, %v8514
      %v8597 = vadd.f32 %v8265, %v8517
      %v8598 = vadd.f32 %v8266, %v8522
      %v8599 = vadd.f32 %v8267, %v8525
      %v8600 = vadd.f32 %v8268, %v8530
      %v8601 = vadd.f32 %v8269, %v8533
      %v8602 = vadd.f32 %v8270, %v8538
      %v8603 = vadd.f32 %v8271, %v8541
      %v8604 = vadd.f32 %v8272, %v8546
      %v8605 = vadd.f32 %v8273, %v8549
      %v8606 = vadd.f32 %v8274, %v8554
      %v8607 = vadd.f32 %v8275, %v8557
      %v8608 = vadd.f32 %v8276, %v8562
      %v8609 = vadd.f32 %v8277, %v8565
      %v8610 = vadd.f32 %v8278, %v8570
      %v8611 = vadd.f32 %v8279, %v8573
      %v8612 = vld [vmem:[#allocation2 + $0x14] sm:$0xff]
      %v8613 = vld [vmem:[#allocation2 + $0x1c] sm:$0xff]
      %v8614 = vld [vmem:[#allocation2 + $0x24] sm:$0xff]
      %v8615 = vld [vmem:[#allocation2 + $0x2c] sm:$0xff]
      %v8616 = vld [vmem:[#allocation2 + $0x34] sm:$0xff]
      %v8617 = vld [vmem:[#allocation2 + $0x3c] sm:$0xff]
      %v8618 = vld [vmem:[#allocation2 + $0x44] sm:$0xff]
      %v8619 = vld [vmem:[#allocation2 + $0x4c] sm:$0xff]
      %v8620 = vld [vmem:[#allocation2 + $0x54] sm:$0xff]
      %v8621 = vld [vmem:[#allocation2 + $0x5c] sm:$0xff]
      %v8622 = vld [vmem:[#allocation2 + $0x64] sm:$0xff]
      %v8623 = vld [vmem:[#allocation2 + $0x6c] sm:$0xff]
      %v8624 = vld [vmem:[#allocation2 + $0x74] sm:$0xff]
      %v8625 = vld [vmem:[#allocation2 + $0x7c] sm:$0xff]
      %v8626 = vld [vmem:[#allocation2 + $0x84] sm:$0xff]
      %v8627 = vld [vmem:[#allocation2 + $0x8c] sm:$0xff]
      %v8628 = vld [vmem:[#allocation2 + $0x94] sm:$0xff]
      %v8629 = vld [vmem:[#allocation2 + $0x9c] sm:$0xff]
      %v8630 = vld [vmem:[#allocation2 + $0xa4] sm:$0xff]
      %v8631 = vld [vmem:[#allocation2 + $0xac] sm:$0xff]
      %v8632 = vld [vmem:[#allocation2 + $0xb4] sm:$0xff]
      %v8633 = vld [vmem:[#allocation2 + $0xbc] sm:$0xff]
      %v8634 = vld [vmem:[#allocation2 + $0xc4] sm:$0xff]
      %v8635 = vld [vmem:[#allocation2 + $0xcc] sm:$0xff]
      %v8636 = vld [vmem:[#allocation2 + $0xd4] sm:$0xff]
      %v8637 = vld [vmem:[#allocation2 + $0xdc] sm:$0xff]
      %v8638 = vld [vmem:[#allocation2 + $0xe4] sm:$0xff]
      %v8639 = vld [vmem:[#allocation2 + $0xec] sm:$0xff]
      %v8640 = vld [vmem:[#allocation2 + $0xf4] sm:$0xff]
      %v8641 = vld [vmem:[#allocation2 + $0xfc] sm:$0xff]
      %v8642 = vld [vmem:[#allocation2 + $0x104] sm:$0xff]
      %v8643 = vld [vmem:[#allocation2 + $0x10c] sm:$0xff]
      %v8644 = vld [vmem:[#allocation2 + $0x114] sm:$0xff]
      %v8645 = vld [vmem:[#allocation2 + $0x11c] sm:$0xff]
      %v8646 = vld [vmem:[#allocation2 + $0x124] sm:$0xff]
      %v8647 = vld [vmem:[#allocation2 + $0x12c] sm:$0x3f]
      %v8648 = vpack.c.bf16 %v8613, %v8612
      %v8649 = vpack.c.bf16 %v8615, %v8614
      %v8650 = vpack.c.bf16 %v8617, %v8616
      %v8651 = vpack.c.bf16 %v8619, %v8618
      %v8652 = vpack.c.bf16 %v8621, %v8620
      %v8653 = vpack.c.bf16 %v8623, %v8622
      %v8654 = vpack.c.bf16 %v8625, %v8624
      %v8655 = vpack.c.bf16 %v8627, %v8626
      %v8656 = vpack.c.bf16 %v8629, %v8628
      %v8657 = vpack.c.bf16 %v8631, %v8630
      %v8658 = vpack.c.bf16 %v8633, %v8632
      %v8659 = vpack.c.bf16 %v8635, %v8634
      %v8660 = vpack.c.bf16 %v8637, %v8636
      %v8661 = vpack.c.bf16 %v8639, %v8638
      %v8662 = vpack.c.bf16 %v8641, %v8640
      %v8663 = vpack.c.bf16 %v8643, %v8642
      %v8664 = vpack.c.bf16 %v8645, %v8644
      %v8665 = vpack.c.bf16 %v8647, %v8646
      %s8666 = scalar_lea.vmem %s6, 40
      %v8667 = vld [vmem:[%s8666] sm:$0xf]
      %v8668 = vld [vmem:[%s8666 + $0x4] sm:$0x3]
      %v8671 = vunpack.c.l.b16 %v8667
      %v8672 = vunpack.c.l.b16 %v8668
      %v8673 = vpack.c.b16 %v8672, %v8671
      %v8675 = vsel %vm7141, %v8648, 0
      %v8678 = vsel %vm7141, %v8649, 0
      %v8681 = vsel %vm7141, %v8650, 0
      %v8684 = vsel %vm7141, %v8651, 0
      %v8687 = vsel %vm7141, %v8652, 0
      %v8690 = vsel %vm7141, %v8653, 0
      %v8693 = vsel %vm7141, %v8654, 0
      %v8696 = vsel %vm7141, %v8655, 0
      %v8699 = vsel %vm7141, %v8656, 0
      %v8702 = vsel %vm7141, %v8657, 0
      %v8705 = vsel %vm7141, %v8658, 0
      %v8708 = vsel %vm7141, %v8659, 0
      %v8711 = vsel %vm7141, %v8660, 0
      %v8714 = vsel %vm7141, %v8661, 0
      %v8717 = vsel %vm7141, %v8662, 0
      %v8720 = vsel %vm7141, %v8663, 0
      %v8723 = vsel %vm7141, %v8664, 0
      %v8726 = vsel %vm7141, %v8665, 0
      %v8729 = vsel %vm7196, %v8673, 0
      %8731 = vmatprep.subr.bf16.mxu0 0
      %8732 = vmatpush1.bf16.msra.mxu0 %v8729
      %8733 = vmatprep.subr.bf16.mxu0 0
      %8734 = vmatpush1.bf16.msra.mxu0 0
      %8735 = vmatprep.subr.bf16.mxu0 0
      %8736 = vmatpush1.bf16.msra.mxu0 0
      %8737 = vmatprep.subr.bf16.mxu0 0
      %8738 = vmatpush1.bf16.msra.mxu0 0
      %8739 = vmatprep.subr.bf16.mxu0 0
      %8740 = vmatpush1.bf16.msra.mxu0 0
      %8741 = vmatprep.subr.bf16.mxu0 0
      %8742 = vmatpush1.bf16.msra.mxu0 0
      %8743 = vmatprep.subr.bf16.mxu0 0
      %8744 = vmatpush1.bf16.msra.mxu0 0
      %8745 = vmatprep.subr.bf16.mxu0 0
      %8746 = vmatpush1.bf16.msra.mxu0 0
      %8747 = vmatprep.subr.bf16.mxu0 0
      %8748 = vmatpush1.bf16.msra.mxu0 0
      %8749 = vmatprep.subr.bf16.mxu0 0
      %8750 = vmatpush1.bf16.msra.mxu0 0
      %8751 = vmatprep.subr.bf16.mxu0 0
      %8752 = vmatpush1.bf16.msra.mxu0 0
      %8753 = vmatprep.subr.bf16.mxu0 0
      %8754 = vmatpush1.bf16.msra.mxu0 0
      %8755 = vmatprep.subr.bf16.mxu0 0
      %8756 = vmatpush1.bf16.msra.mxu0 0
      %8757 = vmatprep.subr.bf16.mxu0 0
      %8758 = vmatpush1.bf16.msra.mxu0 0
      %8759 = vmatprep.subr.bf16.mxu0 0
      %8760 = vmatpush1.bf16.msra.mxu0 0
      %8761 = vmatprep.subr.bf16.mxu0 0
      %8762 = vmatpush1.bf16.msra.mxu0 0
      %8763 = vmatprep.mubr.bf16.mxu0 0
      %8764 = vmatmul.mubr.bf16.gmra.mrb[0].mxu0 %v8675
      %v8765 = vpop.f32.mrb[0].mxu0
      %v8766 = vadd.f32 0.0, %v8765
      %v8767 = vpop.f32.mrb[0].mxu0
      %v8768 = vpop.f32.mrb[0].mxu0
      %v8769 = vadd.f32 0.0, %v8768
      %v8770 = vpop.f32.mrb[0].mxu0
      %8771 = vmatprep.mubr.bf16.mxu0 0
      %8772 = vmatmul.mubr.bf16.gmra.mrb[0].mxu0 %v8678
      %v8773 = vpop.f32.mrb[0].mxu0
      %v8774 = vadd.f32 0.0, %v8773
      %v8775 = vpop.f32.mrb[0].mxu0
      %v8776 = vpop.f32.mrb[0].mxu0
      %v8777 = vadd.f32 0.0, %v8776
      %v8778 = vpop.f32.mrb[0].mxu0
      %8779 = vmatprep.mubr.bf16.mxu0 0
      %8780 = vmatmul.mubr.bf16.gmra.mrb[0].mxu0 %v8681
      %v8781 = vpop.f32.mrb[0].mxu0
      %v8782 = vadd.f32 0.0, %v8781
      %v8783 = vpop.f32.mrb[0].mxu0
      %v8784 = vpop.f32.mrb[0].mxu0
      %v8785 = vadd.f32 0.0, %v8784
      %v8786 = vpop.f32.mrb[0].mxu0
      %8787 = vmatprep.mubr.bf16.mxu0 0
      %8788 = vmatmul.mubr.bf16.gmra.mrb[0].mxu0 %v8684
      %v8789 = vpop.f32.mrb[0].mxu0
      %v8790 = vadd.f32 0.0, %v8789
      %v8791 = vpop.f32.mrb[0].mxu0
      %v8792 = vpop.f32.mrb[0].mxu0
      %v8793 = vadd.f32 0.0, %v8792
      %v8794 = vpop.f32.mrb[0].mxu0
      %8795 = vmatprep.mubr.bf16.mxu0 0
      %8796 = vmatmul.mubr.bf16.gmra.mrb[0].mxu0 %v8687
      %v8797 = vpop.f32.mrb[0].mxu0
      %v8798 = vadd.f32 0.0, %v8797
      %v8799 = vpop.f32.mrb[0].mxu0
      %v8800 = vpop.f32.mrb[0].mxu0
      %v8801 = vadd.f32 0.0, %v8800
      %v8802 = vpop.f32.mrb[0].mxu0
      %8803 = vmatprep.mubr.bf16.mxu0 0
      %8804 = vmatmul.mubr.bf16.gmra.mrb[0].mxu0 %v8690
      %v8805 = vpop.f32.mrb[0].mxu0
      %v8806 = vadd.f32 0.0, %v8805
      %v8807 = vpop.f32.mrb[0].mxu0
      %v8808 = vpop.f32.mrb[0].mxu0
      %v8809 = vadd.f32 0.0, %v8808
      %v8810 = vpop.f32.mrb[0].mxu0
      %8811 = vmatprep.mubr.bf16.mxu0 0
      %8812 = vmatmul.mubr.bf16.gmra.mrb[0].mxu0 %v8693
      %v8813 = vpop.f32.mrb[0].mxu0
      %v8814 = vadd.f32 0.0, %v8813
      %v8815 = vpop.f32.mrb[0].mxu0
      %v8816 = vpop.f32.mrb[0].mxu0
      %v8817 = vadd.f32 0.0, %v8816
      %v8818 = vpop.f32.mrb[0].mxu0
      %8819 = vmatprep.mubr.bf16.mxu0 0
      %8820 = vmatmul.mubr.bf16.gmra.mrb[0].mxu0 %v8696
      %v8821 = vpop.f32.mrb[0].mxu0
      %v8822 = vadd.f32 0.0, %v8821
      %v8823 = vpop.f32.mrb[0].mxu0
      %v8824 = vpop.f32.mrb[0].mxu0
      %v8825 = vadd.f32 0.0, %v8824
      %v8826 = vpop.f32.mrb[0].mxu0
      %8827 = vmatprep.mubr.bf16.mxu0 0
      %8828 = vmatmul.mubr.bf16.gmra.mrb[0].mxu0 %v8699
      %v8829 = vpop.f32.mrb[0].mxu0
      %v8830 = vadd.f32 0.0, %v8829
      %v8831 = vpop.f32.mrb[0].mxu0
      %v8832 = vpop.f32.mrb[0].mxu0
      %v8833 = vadd.f32 0.0, %v8832
      %v8834 = vpop.f32.mrb[0].mxu0
      %8835 = vmatprep.mubr.bf16.mxu0 0
      %8836 = vmatmul.mubr.bf16.gmra.mrb[0].mxu0 %v8702
      %v8837 = vpop.f32.mrb[0].mxu0
      %v8838 = vadd.f32 0.0, %v8837
      %v8839 = vpop.f32.mrb[0].mxu0
      %v8840 = vpop.f32.mrb[0].mxu0
      %v8841 = vadd.f32 0.0, %v8840
      %v8842 = vpop.f32.mrb[0].mxu0
      %8843 = vmatprep.mubr.bf16.mxu0 0
      %8844 = vmatmul.mubr.bf16.gmra.mrb[0].mxu0 %v8705
      %v8845 = vpop.f32.mrb[0].mxu0
      %v8846 = vadd.f32 0.0, %v8845
      %v8847 = vpop.f32.mrb[0].mxu0
      %v8848 = vpop.f32.mrb[0].mxu0
      %v8849 = vadd.f32 0.0, %v8848
      %v8850 = vpop.f32.mrb[0].mxu0
      %8851 = vmatprep.mubr.bf16.mxu0 0
      %8852 = vmatmul.mubr.bf16.gmra.mrb[0].mxu0 %v8708
      %v8853 = vpop.f32.mrb[0].mxu0
      %v8854 = vadd.f32 0.0, %v8853
      %v8855 = vpop.f32.mrb[0].mxu0
      %v8856 = vpop.f32.mrb[0].mxu0
      %v8857 = vadd.f32 0.0, %v8856
      %v8858 = vpop.f32.mrb[0].mxu0
      %8859 = vmatprep.mubr.bf16.mxu0 0
      %8860 = vmatmul.mubr.bf16.gmra.mrb[0].mxu0 %v8711
      %v8861 = vpop.f32.mrb[0].mxu0
      %v8862 = vadd.f32 0.0, %v8861
      %v8863 = vpop.f32.mrb[0].mxu0
      %v8864 = vpop.f32.mrb[0].mxu0
      %v8865 = vadd.f32 0.0, %v8864
      %v8866 = vpop.f32.mrb[0].mxu0
      %8867 = vmatprep.mubr.bf16.mxu0 0
      %8868 = vmatmul.mubr.bf16.gmra.mrb[0].mxu0 %v8714
      %v8869 = vpop.f32.mrb[0].mxu0
      %v8870 = vadd.f32 0.0, %v8869
      %v8871 = vpop.f32.mrb[0].mxu0
      %v8872 = vpop.f32.mrb[0].mxu0
      %v8873 = vadd.f32 0.0, %v8872
      %v8874 = vpop.f32.mrb[0].mxu0
      %8875 = vmatprep.mubr.bf16.mxu0 0
      %8876 = vmatmul.mubr.bf16.gmra.mrb[0].mxu0 %v8717
      %v8877 = vpop.f32.mrb[0].mxu0
      %v8878 = vadd.f32 0.0, %v8877
      %v8879 = vpop.f32.mrb[0].mxu0
      %v8880 = vpop.f32.mrb[0].mxu0
      %v8881 = vadd.f32 0.0, %v8880
      %v8882 = vpop.f32.mrb[0].mxu0
      %8883 = vmatprep.mubr.bf16.mxu0 0
      %8884 = vmatmul.mubr.bf16.gmra.mrb[0].mxu0 %v8720
      %v8885 = vpop.f32.mrb[0].mxu0
      %v8886 = vadd.f32 0.0, %v8885
      %v8887 = vpop.f32.mrb[0].mxu0
      %v8888 = vpop.f32.mrb[0].mxu0
      %v8889 = vadd.f32 0.0, %v8888
      %v8890 = vpop.f32.mrb[0].mxu0
      %8891 = vmatprep.mubr.bf16.mxu0 0
      %8892 = vmatmul.mubr.bf16.gmra.mrb[0].mxu0 %v8723
      %v8893 = vpop.f32.mrb[0].mxu0
      %v8894 = vadd.f32 0.0, %v8893
      %v8895 = vpop.f32.mrb[0].mxu0
      %v8896 = vpop.f32.mrb[0].mxu0
      %v8897 = vadd.f32 0.0, %v8896
      %v8898 = vpop.f32.mrb[0].mxu0
      %8899 = vmatprep.mubr.bf16.mxu0 0
      %8900 = vmatmul.mubr.bf16.gmra.mrb[0].mxu0 %v8726
      %v8901 = vpop.f32.mrb[0].mxu0
      %v8902 = vadd.f32 0.0, %v8901
      %v8903 = vpop.f32.mrb[0].mxu0
      %v8904 = vpop.f32.mrb[0].mxu0
      %v8905 = vadd.f32 0.0, %v8904
      %v8906 = vpop.f32.mrb[0].mxu0
      %8907 = vdwg.mxu0
      %v8908 = vadd.f32 %v8576, %v8766
      %v8909 = vadd.f32 %v8577, %v8769
      %v8910 = vadd.f32 %v8578, %v8774
      %v8911 = vadd.f32 %v8579, %v8777
      %v8912 = vadd.f32 %v8580, %v8782
      %v8913 = vadd.f32 %v8581, %v8785
      %v8914 = vadd.f32 %v8582, %v8790
      %v8915 = vadd.f32 %v8583, %v8793
      %v8916 = vadd.f32 %v8584, %v8798
      %v8917 = vadd.f32 %v8585, %v8801
      %v8918 = vadd.f32 %v8586, %v8806
      %v8919 = vadd.f32 %v8587, %v8809
      %v8920 = vadd.f32 %v8588, %v8814
      %v8921 = vadd.f32 %v8589, %v8817
      %v8922 = vadd.f32 %v8590, %v8822
      %v8923 = vadd.f32 %v8591, %v8825
      %v8924 = vadd.f32 %v8592, %v8830
      %v8925 = vadd.f32 %v8593, %v8833
      %v8926 = vadd.f32 %v8594, %v8838
      %v8927 = vadd.f32 %v8595, %v8841
      %v8928 = vadd.f32 %v8596, %v8846
      %v8929 = vadd.f32 %v8597, %v8849
      %v8930 = vadd.f32 %v8598, %v8854
      %v8931 = vadd.f32 %v8599, %v8857
      %v8932 = vadd.f32 %v8600, %v8862
      %v8933 = vadd.f32 %v8601, %v8865
      %v8934 = vadd.f32 %v8602, %v8870
      %v8935 = vadd.f32 %v8603, %v8873
      %v8936 = vadd.f32 %v8604, %v8878
      %v8937 = vadd.f32 %v8605, %v8881
      %v8938 = vadd.f32 %v8606, %v8886
      %v8939 = vadd.f32 %v8607, %v8889
      %v8940 = vadd.f32 %v8608, %v8894
      %v8941 = vadd.f32 %v8609, %v8897
      %v8942 = vadd.f32 %v8610, %v8902
      %v8943 = vadd.f32 %v8611, %v8905
      %v8944 = vld [vmem:[#allocation2 + $0x24] sm:$0xff]
      %v8945 = vld [vmem:[#allocation2 + $0x2c] sm:$0xff]
      %v8946 = vld [vmem:[#allocation2 + $0x34] sm:$0xff]
      %v8947 = vld [vmem:[#allocation2 + $0x3c] sm:$0xff]
      %v8948 = vld [vmem:[#allocation2 + $0x44] sm:$0xff]
      %v8949 = vld [vmem:[#allocation2 + $0x4c] sm:$0xff]
      %v8950 = vld [vmem:[#allocation2 + $0x54] sm:$0xff]
      %v8951 = vld [vmem:[#allocation2 + $0x5c] sm:$0xff]
      %v8952 = vld [vmem:[#allocation2 + $0x64] sm:$0xff]
      %v8953 = vld [vmem:[#allocation2 + $0x6c] sm:$0xff]
      %v8954 = vld [vmem:[#allocation2 + $0x74] sm:$0xff]
      %v8955 = vld [vmem:[#allocation2 + $0x7c] sm:$0xff]
      %v8956 = vld [vmem:[#allocation2 + $0x84] sm:$0xff]
      %v8957 = vld [vmem:[#allocation2 + $0x8c] sm:$0xff]
      %v8958 = vld [vmem:[#allocation2 + $0x94] sm:$0xff]
      %v8959 = vld [vmem:[#allocation2 + $0x9c] sm:$0xff]
      %v8960 = vld [vmem:[#allocation2 + $0xa4] sm:$0xff]
      %v8961 = vld [vmem:[#allocation2 + $0xac] sm:$0xff]
      %v8962 = vld [vmem:[#allocation2 + $0xb4] sm:$0xff]
      %v8963 = vld [vmem:[#allocation2 + $0xbc] sm:$0xff]
      %v8964 = vld [vmem:[#allocation2 + $0xc4] sm:$0xff]
      %v8965 = vld [vmem:[#allocation2 + $0xcc] sm:$0xff]
      %v8966 = vld [vmem:[#allocation2 + $0xd4] sm:$0xff]
      %v8967 = vld [vmem:[#allocation2 + $0xdc] sm:$0xff]
      %v8968 = vld [vmem:[#allocation2 + $0xe4] sm:$0xff]
      %v8969 = vld [vmem:[#allocation2 + $0xec] sm:$0xff]
      %v8970 = vld [vmem:[#allocation2 + $0xf4] sm:$0xff]
      %v8971 = vld [vmem:[#allocation2 + $0xfc] sm:$0xff]
      %v8972 = vld [vmem:[#allocation2 + $0x104] sm:$0xff]
      %v8973 = vld [vmem:[#allocation2 + $0x10c] sm:$0xff]
      %v8974 = vld [vmem:[#allocation2 + $0x114] sm:$0xff]
      %v8975 = vld [vmem:[#allocation2 + $0x11c] sm:$0xff]
      %v8976 = vld [vmem:[#allocation2 + $0x124] sm:$0xff]
      %v8977 = vld [vmem:[#allocation2 + $0x12c] sm:$0xff]
      %v8978 = vld [vmem:[#allocation2 + $0x134] sm:$0xff]
      %v8979 = vld [vmem:[#allocation2 + $0x13c] sm:$0x3f]
      %v8980 = vpack.c.bf16 %v8945, %v8944
      %v8981 = vpack.c.bf16 %v8947, %v8946
      %v8982 = vpack.c.bf16 %v8949, %v8948
      %v8983 = vpack.c.bf16 %v8951, %v8950
      %v8984 = vpack.c.bf16 %v8953, %v8952
      %v8985 = vpack.c.bf16 %v8955, %v8954
      %v8986 = vpack.c.bf16 %v8957, %v8956
      %v8987 = vpack.c.bf16 %v8959, %v8958
      %v8988 = vpack.c.bf16 %v8961, %v8960
      %v8989 = vpack.c.bf16 %v8963, %v8962
      %v8990 = vpack.c.bf16 %v8965, %v8964
      %v8991 = vpack.c.bf16 %v8967, %v8966
      %v8992 = vpack.c.bf16 %v8969, %v8968
      %v8993 = vpack.c.bf16 %v8971, %v8970
      %v8994 = vpack.c.bf16 %v8973, %v8972
      %v8995 = vpack.c.bf16 %v8975, %v8974
      %v8996 = vpack.c.bf16 %v8977, %v8976
      %v8997 = vpack.c.bf16 %v8979, %v8978
      %s8998 = scalar_lea.vmem %s6, 48
      %v8999 = vld [vmem:[%s8998] sm:$0xf]
      %v9000 = vld [vmem:[%s8998 + $0x4] sm:$0x3]
      %v9003 = vunpack.c.l.b16 %v8999
      %v9004 = vunpack.c.l.b16 %v9000
      %v9005 = vpack.c.b16 %v9004, %v9003
      %v9007 = vsel %vm7141, %v8980, 0
      %v9010 = vsel %vm7141, %v8981, 0
      %v9013 = vsel %vm7141, %v8982, 0
      %v9016 = vsel %vm7141, %v8983, 0
      %v9019 = vsel %vm7141, %v8984, 0
      %v9022 = vsel %vm7141, %v8985, 0
      %v9025 = vsel %vm7141, %v8986, 0
      %v9028 = vsel %vm7141, %v8987, 0
      %v9031 = vsel %vm7141, %v8988, 0
      %v9034 = vsel %vm7141, %v8989, 0
      %v9037 = vsel %vm7141, %v8990, 0
      %v9040 = vsel %vm7141, %v8991, 0
      %v9043 = vsel %vm7141, %v8992, 0
      %v9046 = vsel %vm7141, %v8993, 0
      %v9049 = vsel %vm7141, %v8994, 0
      %v9052 = vsel %vm7141, %v8995, 0
      %v9055 = vsel %vm7141, %v8996, 0
      %v9058 = vsel %vm7141, %v8997, 0
      %v9061 = vsel %vm7196, %v9005, 0
      %9063 = vmatprep.subr.bf16.mxu0 0
      %9064 = vmatpush1.bf16.msra.mxu0 %v9061
      %9065 = vmatprep.subr.bf16.mxu0 0
      %9066 = vmatpush1.bf16.msra.mxu0 0
      %9067 = vmatprep.subr.bf16.mxu0 0
      %9068 = vmatpush1.bf16.msra.mxu0 0
      %9069 = vmatprep.subr.bf16.mxu0 0
      %9070 = vmatpush1.bf16.msra.mxu0 0
      %9071 = vmatprep.subr.bf16.mxu0 0
      %9072 = vmatpush1.bf16.msra.mxu0 0
      %9073 = vmatprep.subr.bf16.mxu0 0
      %9074 = vmatpush1.bf16.msra.mxu0 0
      %9075 = vmatprep.subr.bf16.mxu0 0
      %9076 = vmatpush1.bf16.msra.mxu0 0
      %9077 = vmatprep.subr.bf16.mxu0 0
      %9078 = vmatpush1.bf16.msra.mxu0 0
      %9079 = vmatprep.subr.bf16.mxu0 0
      %9080 = vmatpush1.bf16.msra.mxu0 0
      %9081 = vmatprep.subr.bf16.mxu0 0
      %9082 = vmatpush1.bf16.msra.mxu0 0
      %9083 = vmatprep.subr.bf16.mxu0 0
      %9084 = vmatpush1.bf16.msra.mxu0 0
      %9085 = vmatprep.subr.bf16.mxu0 0
      %9086 = vmatpush1.bf16.msra.mxu0 0
      %9087 = vmatprep.subr.bf16.mxu0 0
      %9088 = vmatpush1.bf16.msra.mxu0 0
      %9089 = vmatprep.subr.bf16.mxu0 0
      %9090 = vmatpush1.bf16.msra.mxu0 0
      %9091 = vmatprep.subr.bf16.mxu0 0
      %9092 = vmatpush1.bf16.msra.mxu0 0
      %9093 = vmatprep.subr.bf16.mxu0 0
      %9094 = vmatpush1.bf16.msra.mxu0 0
      %9095 = vmatprep.mubr.bf16.mxu0 0
      %9096 = vmatmul.mubr.bf16.gmra.mrb[0].mxu0 %v9007
      %v9097 = vpop.f32.mrb[0].mxu0
      %v9098 = vadd.f32 0.0, %v9097
      %v9099 = vpop.f32.mrb[0].mxu0
      %v9100 = vpop.f32.mrb[0].mxu0
      %v9101 = vadd.f32 0.0, %v9100
      %v9102 = vpop.f32.mrb[0].mxu0
      %9103 = vmatprep.mubr.bf16.mxu0 0
      %9104 = vmatmul.mubr.bf16.gmra.mrb[0].mxu0 %v9010
      %v9105 = vpop.f32.mrb[0].mxu0
      %v9106 = vadd.f32 0.0, %v9105
      %v9107 = vpop.f32.mrb[0].mxu0
      %v9108 = vpop.f32.mrb[0].mxu0
      %v9109 = vadd.f32 0.0, %v9108
      %v9110 = vpop.f32.mrb[0].mxu0
      %9111 = vmatprep.mubr.bf16.mxu0 0
      %9112 = vmatmul.mubr.bf16.gmra.mrb[0].mxu0 %v9013
      %v9113 = vpop.f32.mrb[0].mxu0
      %v9114 = vadd.f32 0.0, %v9113
      %v9115 = vpop.f32.mrb[0].mxu0
      %v9116 = vpop.f32.mrb[0].mxu0
      %v9117 = vadd.f32 0.0, %v9116
      %v9118 = vpop.f32.mrb[0].mxu0
      %9119 = vmatprep.mubr.bf16.mxu0 0
      %9120 = vmatmul.mubr.bf16.gmra.mrb[0].mxu0 %v9016
      %v9121 = vpop.f32.mrb[0].mxu0
      %v9122 = vadd.f32 0.0, %v9121
      %v9123 = vpop.f32.mrb[0].mxu0
      %v9124 = vpop.f32.mrb[0].mxu0
      %v9125 = vadd.f32 0.0, %v9124
      %v9126 = vpop.f32.mrb[0].mxu0
      %9127 = vmatprep.mubr.bf16.mxu0 0
      %9128 = vmatmul.mubr.bf16.gmra.mrb[0].mxu0 %v9019
      %v9129 = vpop.f32.mrb[0].mxu0
      %v9130 = vadd.f32 0.0, %v9129
      %v9131 = vpop.f32.mrb[0].mxu0
      %v9132 = vpop.f32.mrb[0].mxu0
      %v9133 = vadd.f32 0.0, %v9132
      %v9134 = vpop.f32.mrb[0].mxu0
      %9135 = vmatprep.mubr.bf16.mxu0 0
      %9136 = vmatmul.mubr.bf16.gmra.mrb[0].mxu0 %v9022
      %v9137 = vpop.f32.mrb[0].mxu0
      %v9138 = vadd.f32 0.0, %v9137
      %v9139 = vpop.f32.mrb[0].mxu0
      %v9140 = vpop.f32.mrb[0].mxu0
      %v9141 = vadd.f32 0.0, %v9140
      %v9142 = vpop.f32.mrb[0].mxu0
      %9143 = vmatprep.mubr.bf16.mxu0 0
      %9144 = vmatmul.mubr.bf16.gmra.mrb[0].mxu0 %v9025
      %v9145 = vpop.f32.mrb[0].mxu0
      %v9146 = vadd.f32 0.0, %v9145
      %v9147 = vpop.f32.mrb[0].mxu0
      %v9148 = vpop.f32.mrb[0].mxu0
      %v9149 = vadd.f32 0.0, %v9148
      %v9150 = vpop.f32.mrb[0].mxu0
      %9151 = vmatprep.mubr.bf16.mxu0 0
      %9152 = vmatmul.mubr.bf16.gmra.mrb[0].mxu0 %v9028
      %v9153 = vpop.f32.mrb[0].mxu0
      %v9154 = vadd.f32 0.0, %v9153
      %v9155 = vpop.f32.mrb[0].mxu0
      %v9156 = vpop.f32.mrb[0].mxu0
      %v9157 = vadd.f32 0.0, %v9156
      %v9158 = vpop.f32.mrb[0].mxu0
      %9159 = vmatprep.mubr.bf16.mxu0 0
      %9160 = vmatmul.mubr.bf16.gmra.mrb[0].mxu0 %v9031
      %v9161 = vpop.f32.mrb[0].mxu0
      %v9162 = vadd.f32 0.0, %v9161
      %v9163 = vpop.f32.mrb[0].mxu0
      %v9164 = vpop.f32.mrb[0].mxu0
      %v9165 = vadd.f32 0.0, %v9164
      %v9166 = vpop.f32.mrb[0].mxu0
      %9167 = vmatprep.mubr.bf16.mxu0 0
      %9168 = vmatmul.mubr.bf16.gmra.mrb[0].mxu0 %v9034
      %v9169 = vpop.f32.mrb[0].mxu0
      %v9170 = vadd.f32 0.0, %v9169
      %v9171 = vpop.f32.mrb[0].mxu0
      %v9172 = vpop.f32.mrb[0].mxu0
      %v9173 = vadd.f32 0.0, %v9172
      %v9174 = vpop.f32.mrb[0].mxu0
      %9175 = vmatprep.mubr.bf16.mxu0 0
      %9176 = vmatmul.mubr.bf16.gmra.mrb[0].mxu0 %v9037
      %v9177 = vpop.f32.mrb[0].mxu0
      %v9178 = vadd.f32 0.0, %v9177
      %v9179 = vpop.f32.mrb[0].mxu0
      %v9180 = vpop.f32.mrb[0].mxu0
      %v9181 = vadd.f32 0.0, %v9180
      %v9182 = vpop.f32.mrb[0].mxu0
      %9183 = vmatprep.mubr.bf16.mxu0 0
      %9184 = vmatmul.mubr.bf16.gmra.mrb[0].mxu0 %v9040
      %v9185 = vpop.f32.mrb[0].mxu0
      %v9186 = vadd.f32 0.0, %v9185
      %v9187 = vpop.f32.mrb[0].mxu0
      %v9188 = vpop.f32.mrb[0].mxu0
      %v9189 = vadd.f32 0.0, %v9188
      %v9190 = vpop.f32.mrb[0].mxu0
      %9191 = vmatprep.mubr.bf16.mxu0 0
      %9192 = vmatmul.mubr.bf16.gmra.mrb[0].mxu0 %v9043
      %v9193 = vpop.f32.mrb[0].mxu0
      %v9194 = vadd.f32 0.0, %v9193
      %v9195 = vpop.f32.mrb[0].mxu0
      %v9196 = vpop.f32.mrb[0].mxu0
      %v9197 = vadd.f32 0.0, %v9196
      %v9198 = vpop.f32.mrb[0].mxu0
      %9199 = vmatprep.mubr.bf16.mxu0 0
      %9200 = vmatmul.mubr.bf16.gmra.mrb[0].mxu0 %v9046
      %v9201 = vpop.f32.mrb[0].mxu0
      %v9202 = vadd.f32 0.0, %v9201
      %v9203 = vpop.f32.mrb[0].mxu0
      %v9204 = vpop.f32.mrb[0].mxu0
      %v9205 = vadd.f32 0.0, %v9204
      %v9206 = vpop.f32.mrb[0].mxu0
      %9207 = vmatprep.mubr.bf16.mxu0 0
      %9208 = vmatmul.mubr.bf16.gmra.mrb[0].mxu0 %v9049
      %v9209 = vpop.f32.mrb[0].mxu0
      %v9210 = vadd.f32 0.0, %v9209
      %v9211 = vpop.f32.mrb[0].mxu0
      %v9212 = vpop.f32.mrb[0].mxu0
      %v9213 = vadd.f32 0.0, %v9212
      %v9214 = vpop.f32.mrb[0].mxu0
      %9215 = vmatprep.mubr.bf16.mxu0 0
      %9216 = vmatmul.mubr.bf16.gmra.mrb[0].mxu0 %v9052
      %v9217 = vpop.f32.mrb[0].mxu0
      %v9218 = vadd.f32 0.0, %v9217
      %v9219 = vpop.f32.mrb[0].mxu0
      %v9220 = vpop.f32.mrb[0].mxu0
      %v9221 = vadd.f32 0.0, %v9220
      %v9222 = vpop.f32.mrb[0].mxu0
      %9223 = vmatprep.mubr.bf16.mxu0 0
      %9224 = vmatmul.mubr.bf16.gmra.mrb[0].mxu0 %v9055
      %v9225 = vpop.f32.mrb[0].mxu0
      %v9226 = vadd.f32 0.0, %v9225
      %v9227 = vpop.f32.mrb[0].mxu0
      %v9228 = vpop.f32.mrb[0].mxu0
      %v9229 = vadd.f32 0.0, %v9228
      %v9230 = vpop.f32.mrb[0].mxu0
      %9231 = vmatprep.mubr.bf16.mxu0 0
      %9232 = vmatmul.mubr.bf16.gmra.mrb[0].mxu0 %v9058
      %v9233 = vpop.f32.mrb[0].mxu0
      %v9234 = vadd.f32 0.0, %v9233
      %v9235 = vpop.f32.mrb[0].mxu0
      %v9236 = vpop.f32.mrb[0].mxu0
      %v9237 = vadd.f32 0.0, %v9236
      %v9238 = vpop.f32.mrb[0].mxu0
      %9239 = vdwg.mxu0
      %v9240 = vadd.f32 %v8908, %v9098
      %v9241 = vadd.f32 %v8909, %v9101
      %v9242 = vadd.f32 %v8910, %v9106
      %v9243 = vadd.f32 %v8911, %v9109
      %v9244 = vadd.f32 %v8912, %v9114
      %v9245 = vadd.f32 %v8913, %v9117
      %v9246 = vadd.f32 %v8914, %v9122
      %v9247 = vadd.f32 %v8915, %v9125
      %v9248 = vadd.f32 %v8916, %v9130
      %v9249 = vadd.f32 %v8917, %v9133
      %v9250 = vadd.f32 %v8918, %v9138
      %v9251 = vadd.f32 %v8919, %v9141
      %v9252 = vadd.f32 %v8920, %v9146
      %v9253 = vadd.f32 %v8921, %v9149
      %v9254 = vadd.f32 %v8922, %v9154
      %v9255 = vadd.f32 %v8923, %v9157
      %v9256 = vadd.f32 %v8924, %v9162
      %v9257 = vadd.f32 %v8925, %v9165
      %v9258 = vadd.f32 %v8926, %v9170
      %v9259 = vadd.f32 %v8927, %v9173
      %v9260 = vadd.f32 %v8928, %v9178
      %v9261 = vadd.f32 %v8929, %v9181
      %v9262 = vadd.f32 %v8930, %v9186
      %v9263 = vadd.f32 %v8931, %v9189
      %v9264 = vadd.f32 %v8932, %v9194
      %v9265 = vadd.f32 %v8933, %v9197
      %v9266 = vadd.f32 %v8934, %v9202
      %v9267 = vadd.f32 %v8935, %v9205
      %v9268 = vadd.f32 %v8936, %v9210
      %v9269 = vadd.f32 %v8937, %v9213
      %v9270 = vadd.f32 %v8938, %v9218
      %v9271 = vadd.f32 %v8939, %v9221
      %v9272 = vadd.f32 %v8940, %v9226
      %v9273 = vadd.f32 %v8941, %v9229
      %v9274 = vadd.f32 %v8942, %v9234
      %v9275 = vadd.f32 %v8943, %v9237
      %v9276 = vld [vmem:[#allocation2 + $0x25] sm:$0xff]
      %v9277 = vld [vmem:[#allocation2 + $0x2d] sm:$0xff]
      %v9278 = vld [vmem:[#allocation2 + $0x35] sm:$0xff]
      %v9279 = vld [vmem:[#allocation2 + $0x3d] sm:$0xff]
      %v9280 = vld [vmem:[#allocation2 + $0x45] sm:$0xff]
      %v9281 = vld [vmem:[#allocation2 + $0x4d] sm:$0xff]
      %v9282 = vld [vmem:[#allocation2 + $0x55] sm:$0xff]
      %v9283 = vld [vmem:[#allocation2 + $0x5d] sm:$0xff]
      %v9284 = vld [vmem:[#allocation2 + $0x65] sm:$0xff]
      %v9285 = vld [vmem:[#allocation2 + $0x6d] sm:$0xff]
      %v9286 = vld [vmem:[#allocation2 + $0x75] sm:$0xff]
      %v9287 = vld [vmem:[#allocation2 + $0x7d] sm:$0xff]
      %v9288 = vld [vmem:[#allocation2 + $0x85] sm:$0xff]
      %v9289 = vld [vmem:[#allocation2 + $0x8d] sm:$0xff]
      %v9290 = vld [vmem:[#allocation2 + $0x95] sm:$0xff]
      %v9291 = vld [vmem:[#allocation2 + $0x9d] sm:$0xff]
      %v9292 = vld [vmem:[#allocation2 + $0xa5] sm:$0xff]
      %v9293 = vld [vmem:[#allocation2 + $0xad] sm:$0xff]
      %v9294 = vld [vmem:[#allocation2 + $0xb5] sm:$0xff]
      %v9295 = vld [vmem:[#allocation2 + $0xbd] sm:$0xff]
      %v9296 = vld [vmem:[#allocation2 + $0xc5] sm:$0xff]
      %v9297 = vld [vmem:[#allocation2 + $0xcd] sm:$0xff]
      %v9298 = vld [vmem:[#allocation2 + $0xd5] sm:$0xff]
      %v9299 = vld [vmem:[#allocation2 + $0xdd] sm:$0xff]
      %v9300 = vld [vmem:[#allocation2 + $0xe5] sm:$0xff]
      %v9301 = vld [vmem:[#allocation2 + $0xed] sm:$0xff]
      %v9302 = vld [vmem:[#allocation2 + $0xf5] sm:$0xff]
      %v9303 = vld [vmem:[#allocation2 + $0xfd] sm:$0xff]
      %v9304 = vld [vmem:[#allocation2 + $0x105] sm:$0xff]
      %v9305 = vld [vmem:[#allocation2 + $0x10d] sm:$0xff]
      %v9306 = vld [vmem:[#allocation2 + $0x115] sm:$0xff]
      %v9307 = vld [vmem:[#allocation2 + $0x11d] sm:$0xff]
      %v9308 = vld [vmem:[#allocation2 + $0x125] sm:$0xff]
      %v9309 = vld [vmem:[#allocation2 + $0x12d] sm:$0xff]
      %v9310 = vld [vmem:[#allocation2 + $0x135] sm:$0xff]
      %v9311 = vld [vmem:[#allocation2 + $0x13d] sm:$0x3f]
      %v9312 = vpack.c.bf16 %v9277, %v9276
      %v9313 = vpack.c.bf16 %v9279, %v9278
      %v9314 = vpack.c.bf16 %v9281, %v9280
      %v9315 = vpack.c.bf16 %v9283, %v9282
      %v9316 = vpack.c.bf16 %v9285, %v9284
      %v9317 = vpack.c.bf16 %v9287, %v9286
      %v9318 = vpack.c.bf16 %v9289, %v9288
      %v9319 = vpack.c.bf16 %v9291, %v9290
      %v9320 = vpack.c.bf16 %v9293, %v9292
      %v9321 = vpack.c.bf16 %v9295, %v9294
      %v9322 = vpack.c.bf16 %v9297, %v9296
      %v9323 = vpack.c.bf16 %v9299, %v9298
      %v9324 = vpack.c.bf16 %v9301, %v9300
      %v9325 = vpack.c.bf16 %v9303, %v9302
      %v9326 = vpack.c.bf16 %v9305, %v9304
      %v9327 = vpack.c.bf16 %v9307, %v9306
      %v9328 = vpack.c.bf16 %v9309, %v9308
      %v9329 = vpack.c.bf16 %v9311, %v9310
      %s9330 = scalar_lea.vmem %s6, 56
      %v9331 = vld [vmem:[%s9330] sm:$0xf]
      %v9332 = vld [vmem:[%s9330 + $0x4] sm:$0x3]
      %v9335 = vunpack.c.l.b16 %v9331
      %v9336 = vunpack.c.l.b16 %v9332
      %v9337 = vpack.c.b16 %v9336, %v9335
      %v9339 = vsel %vm7141, %v9312, 0
      %v9342 = vsel %vm7141, %v9313, 0
      %v9345 = vsel %vm7141, %v9314, 0
      %v9348 = vsel %vm7141, %v9315, 0
      %v9351 = vsel %vm7141, %v9316, 0
      %v9354 = vsel %vm7141, %v9317, 0
      %v9357 = vsel %vm7141, %v9318, 0
      %v9360 = vsel %vm7141, %v9319, 0
      %v9363 = vsel %vm7141, %v9320, 0
      %v9366 = vsel %vm7141, %v9321, 0
      %v9369 = vsel %vm7141, %v9322, 0
      %v9372 = vsel %vm7141, %v9323, 0
      %v9375 = vsel %vm7141, %v9324, 0
      %v9378 = vsel %vm7141, %v9325, 0
      %v9381 = vsel %vm7141, %v9326, 0
      %v9384 = vsel %vm7141, %v9327, 0
      %v9387 = vsel %vm7141, %v9328, 0
      %v9390 = vsel %vm7141, %v9329, 0
      %v9393 = vsel %vm7196, %v9337, 0
      %9395 = vmatprep.subr.bf16.mxu0 0
      %9396 = vmatpush1.bf16.msra.mxu0 %v9393
      %9397 = vmatprep.subr.bf16.mxu0 0
      %9398 = vmatpush1.bf16.msra.mxu0 0
      %9399 = vmatprep.subr.bf16.mxu0 0
      %9400 = vmatpush1.bf16.msra.mxu0 0
      %9401 = vmatprep.subr.bf16.mxu0 0
      %9402 = vmatpush1.bf16.msra.mxu0 0
      %9403 = vmatprep.subr.bf16.mxu0 0
      %9404 = vmatpush1.bf16.msra.mxu0 0
      %9405 = vmatprep.subr.bf16.mxu0 0
      %9406 = vmatpush1.bf16.msra.mxu0 0
      %9407 = vmatprep.subr.bf16.mxu0 0
      %9408 = vmatpush1.bf16.msra.mxu0 0
      %9409 = vmatprep.subr.bf16.mxu0 0
      %9410 = vmatpush1.bf16.msra.mxu0 0
      %9411 = vmatprep.subr.bf16.mxu0 0
      %9412 = vmatpush1.bf16.msra.mxu0 0
      %9413 = vmatprep.subr.bf16.mxu0 0
      %9414 = vmatpush1.bf16.msra.mxu0 0
      %9415 = vmatprep.subr.bf16.mxu0 0
      %9416 = vmatpush1.bf16.msra.mxu0 0
      %9417 = vmatprep.subr.bf16.mxu0 0
      %9418 = vmatpush1.bf16.msra.mxu0 0
      %9419 = vmatprep.subr.bf16.mxu0 0
      %9420 = vmatpush1.bf16.msra.mxu0 0
      %9421 = vmatprep.subr.bf16.mxu0 0
      %9422 = vmatpush1.bf16.msra.mxu0 0
      %9423 = vmatprep.subr.bf16.mxu0 0
      %9424 = vmatpush1.bf16.msra.mxu0 0
      %9425 = vmatprep.subr.bf16.mxu0 0
      %9426 = vmatpush1.bf16.msra.mxu0 0
      %9427 = vmatprep.mubr.bf16.mxu0 0
      %9428 = vmatmul.mubr.bf16.gmra.mrb[0].mxu0 %v9339
      %v9429 = vpop.f32.mrb[0].mxu0
      %v9430 = vadd.f32 0.0, %v9429
      %v9431 = vpop.f32.mrb[0].mxu0
      %v9432 = vpop.f32.mrb[0].mxu0
      %v9433 = vadd.f32 0.0, %v9432
      %v9434 = vpop.f32.mrb[0].mxu0
      %9435 = vmatprep.mubr.bf16.mxu0 0
      %9436 = vmatmul.mubr.bf16.gmra.mrb[0].mxu0 %v9342
      %v9437 = vpop.f32.mrb[0].mxu0
      %v9438 = vadd.f32 0.0, %v9437
      %v9439 = vpop.f32.mrb[0].mxu0
      %v9440 = vpop.f32.mrb[0].mxu0
      %v9441 = vadd.f32 0.0, %v9440
      %v9442 = vpop.f32.mrb[0].mxu0
      %9443 = vmatprep.mubr.bf16.mxu0 0
      %9444 = vmatmul.mubr.bf16.gmra.mrb[0].mxu0 %v9345
      %v9445 = vpop.f32.mrb[0].mxu0
      %v9446 = vadd.f32 0.0, %v9445
      %v9447 = vpop.f32.mrb[0].mxu0
      %v9448 = vpop.f32.mrb[0].mxu0
      %v9449 = vadd.f32 0.0, %v9448
      %v9450 = vpop.f32.mrb[0].mxu0
      %9451 = vmatprep.mubr.bf16.mxu0 0
      %9452 = vmatmul.mubr.bf16.gmra.mrb[0].mxu0 %v9348
      %v9453 = vpop.f32.mrb[0].mxu0
      %v9454 = vadd.f32 0.0, %v9453
      %v9455 = vpop.f32.mrb[0].mxu0
      %v9456 = vpop.f32.mrb[0].mxu0
      %v9457 = vadd.f32 0.0, %v9456
      %v9458 = vpop.f32.mrb[0].mxu0
      %9459 = vmatprep.mubr.bf16.mxu0 0
      %9460 = vmatmul.mubr.bf16.gmra.mrb[0].mxu0 %v9351
      %v9461 = vpop.f32.mrb[0].mxu0
      %v9462 = vadd.f32 0.0, %v9461
      %v9463 = vpop.f32.mrb[0].mxu0
      %v9464 = vpop.f32.mrb[0].mxu0
      %v9465 = vadd.f32 0.0, %v9464
      %v9466 = vpop.f32.mrb[0].mxu0
      %9467 = vmatprep.mubr.bf16.mxu0 0
      %9468 = vmatmul.mubr.bf16.gmra.mrb[0].mxu0 %v9354
      %v9469 = vpop.f32.mrb[0].mxu0
      %v9470 = vadd.f32 0.0, %v9469
      %v9471 = vpop.f32.mrb[0].mxu0
      %v9472 = vpop.f32.mrb[0].mxu0
      %v9473 = vadd.f32 0.0, %v9472
      %v9474 = vpop.f32.mrb[0].mxu0
      %9475 = vmatprep.mubr.bf16.mxu0 0
      %9476 = vmatmul.mubr.bf16.gmra.mrb[0].mxu0 %v9357
      %v9477 = vpop.f32.mrb[0].mxu0
      %v9478 = vadd.f32 0.0, %v9477
      %v9479 = vpop.f32.mrb[0].mxu0
      %v9480 = vpop.f32.mrb[0].mxu0
      %v9481 = vadd.f32 0.0, %v9480
      %v9482 = vpop.f32.mrb[0].mxu0
      %9483 = vmatprep.mubr.bf16.mxu0 0
      %9484 = vmatmul.mubr.bf16.gmra.mrb[0].mxu0 %v9360
      %v9485 = vpop.f32.mrb[0].mxu0
      %v9486 = vadd.f32 0.0, %v9485
      %v9487 = vpop.f32.mrb[0].mxu0
      %v9488 = vpop.f32.mrb[0].mxu0
      %v9489 = vadd.f32 0.0, %v9488
      %v9490 = vpop.f32.mrb[0].mxu0
      %9491 = vmatprep.mubr.bf16.mxu0 0
      %9492 = vmatmul.mubr.bf16.gmra.mrb[0].mxu0 %v9363
      %v9493 = vpop.f32.mrb[0].mxu0
      %v9494 = vadd.f32 0.0, %v9493
      %v9495 = vpop.f32.mrb[0].mxu0
      %v9496 = vpop.f32.mrb[0].mxu0
      %v9497 = vadd.f32 0.0, %v9496
      %v9498 = vpop.f32.mrb[0].mxu0
      %9499 = vmatprep.mubr.bf16.mxu0 0
      %9500 = vmatmul.mubr.bf16.gmra.mrb[0].mxu0 %v9366
      %v9501 = vpop.f32.mrb[0].mxu0
      %v9502 = vadd.f32 0.0, %v9501
      %v9503 = vpop.f32.mrb[0].mxu0
      %v9504 = vpop.f32.mrb[0].mxu0
      %v9505 = vadd.f32 0.0, %v9504
      %v9506 = vpop.f32.mrb[0].mxu0
      %9507 = vmatprep.mubr.bf16.mxu0 0
      %9508 = vmatmul.mubr.bf16.gmra.mrb[0].mxu0 %v9369
      %v9509 = vpop.f32.mrb[0].mxu0
      %v9510 = vadd.f32 0.0, %v9509
      %v9511 = vpop.f32.mrb[0].mxu0
      %v9512 = vpop.f32.mrb[0].mxu0
      %v9513 = vadd.f32 0.0, %v9512
      %v9514 = vpop.f32.mrb[0].mxu0
      %9515 = vmatprep.mubr.bf16.mxu0 0
      %9516 = vmatmul.mubr.bf16.gmra.mrb[0].mxu0 %v9372
      %v9517 = vpop.f32.mrb[0].mxu0
      %v9518 = vadd.f32 0.0, %v9517
      %v9519 = vpop.f32.mrb[0].mxu0
      %v9520 = vpop.f32.mrb[0].mxu0
      %v9521 = vadd.f32 0.0, %v9520
      %v9522 = vpop.f32.mrb[0].mxu0
      %9523 = vmatprep.mubr.bf16.mxu0 0
      %9524 = vmatmul.mubr.bf16.gmra.mrb[0].mxu0 %v9375
      %v9525 = vpop.f32.mrb[0].mxu0
      %v9526 = vadd.f32 0.0, %v9525
      %v9527 = vpop.f32.mrb[0].mxu0
      %v9528 = vpop.f32.mrb[0].mxu0
      %v9529 = vadd.f32 0.0, %v9528
      %v9530 = vpop.f32.mrb[0].mxu0
      %9531 = vmatprep.mubr.bf16.mxu0 0
      %9532 = vmatmul.mubr.bf16.gmra.mrb[0].mxu0 %v9378
      %v9533 = vpop.f32.mrb[0].mxu0
      %v9534 = vadd.f32 0.0, %v9533
      %v9535 = vpop.f32.mrb[0].mxu0
      %v9536 = vpop.f32.mrb[0].mxu0
      %v9537 = vadd.f32 0.0, %v9536
      %v9538 = vpop.f32.mrb[0].mxu0
      %9539 = vmatprep.mubr.bf16.mxu0 0
      %9540 = vmatmul.mubr.bf16.gmra.mrb[0].mxu0 %v9381
      %v9541 = vpop.f32.mrb[0].mxu0
      %v9542 = vadd.f32 0.0, %v9541
      %v9543 = vpop.f32.mrb[0].mxu0
      %v9544 = vpop.f32.mrb[0].mxu0
      %v9545 = vadd.f32 0.0, %v9544
      %v9546 = vpop.f32.mrb[0].mxu0
      %9547 = vmatprep.mubr.bf16.mxu0 0
      %9548 = vmatmul.mubr.bf16.gmra.mrb[0].mxu0 %v9384
      %v9549 = vpop.f32.mrb[0].mxu0
      %v9550 = vadd.f32 0.0, %v9549
      %v9551 = vpop.f32.mrb[0].mxu0
      %v9552 = vpop.f32.mrb[0].mxu0
      %v9553 = vadd.f32 0.0, %v9552
      %v9554 = vpop.f32.mrb[0].mxu0
      %9555 = vmatprep.mubr.bf16.mxu0 0
      %9556 = vmatmul.mubr.bf16.gmra.mrb[0].mxu0 %v9387
      %v9557 = vpop.f32.mrb[0].mxu0
      %v9558 = vadd.f32 0.0, %v9557
      %v9559 = vpop.f32.mrb[0].mxu0
      %v9560 = vpop.f32.mrb[0].mxu0
      %v9561 = vadd.f32 0.0, %v9560
      %v9562 = vpop.f32.mrb[0].mxu0
      %9563 = vmatprep.mubr.bf16.mxu0 0
      %9564 = vmatmul.mubr.bf16.gmra.mrb[0].mxu0 %v9390
      %v9565 = vpop.f32.mrb[0].mxu0
      %v9566 = vadd.f32 0.0, %v9565
      %v9567 = vpop.f32.mrb[0].mxu0
      %v9568 = vpop.f32.mrb[0].mxu0
      %v9569 = vadd.f32 0.0, %v9568
      %v9570 = vpop.f32.mrb[0].mxu0
      %9571 = vdwg.mxu0
      %v9572 = vadd.f32 %v9240, %v9430
      %v9573 = vadd.f32 %v9241, %v9433
      %v9574 = vadd.f32 %v9242, %v9438
      %v9575 = vadd.f32 %v9243, %v9441
      %v9576 = vadd.f32 %v9244, %v9446
      %v9577 = vadd.f32 %v9245, %v9449
      %v9578 = vadd.f32 %v9246, %v9454
      %v9579 = vadd.f32 %v9247, %v9457
      %v9580 = vadd.f32 %v9248, %v9462
      %v9581 = vadd.f32 %v9249, %v9465
      %v9582 = vadd.f32 %v9250, %v9470
      %v9583 = vadd.f32 %v9251, %v9473
      %v9584 = vadd.f32 %v9252, %v9478
      %v9585 = vadd.f32 %v9253, %v9481
      %v9586 = vadd.f32 %v9254, %v9486
      %v9587 = vadd.f32 %v9255, %v9489
      %v9588 = vadd.f32 %v9256, %v9494
      %v9589 = vadd.f32 %v9257, %v9497
      %v9590 = vadd.f32 %v9258, %v9502
      %v9591 = vadd.f32 %v9259, %v9505
      %v9592 = vadd.f32 %v9260, %v9510
      %v9593 = vadd.f32 %v9261, %v9513
      %v9594 = vadd.f32 %v9262, %v9518
      %v9595 = vadd.f32 %v9263, %v9521
      %v9596 = vadd.f32 %v9264, %v9526
      %v9597 = vadd.f32 %v9265, %v9529
      %v9598 = vadd.f32 %v9266, %v9534
      %v9599 = vadd.f32 %v9267, %v9537
      %v9600 = vadd.f32 %v9268, %v9542
      %v9601 = vadd.f32 %v9269, %v9545
      %v9602 = vadd.f32 %v9270, %v9550
      %v9603 = vadd.f32 %v9271, %v9553
      %v9604 = vadd.f32 %v9272, %v9558
      %v9605 = vadd.f32 %v9273, %v9561
      %v9606 = vadd.f32 %v9274, %v9566
      %v9607 = vadd.f32 %v9275, %v9569
      %v9608 = vld [vmem:[#allocation2 + $0x26] sm:$0xff]
      %v9609 = vld [vmem:[#allocation2 + $0x2e] sm:$0xff]
      %v9610 = vld [vmem:[#allocation2 + $0x36] sm:$0xff]
      %v9611 = vld [vmem:[#allocation2 + $0x3e] sm:$0xff]
      %v9612 = vld [vmem:[#allocation2 + $0x46] sm:$0xff]
      %v9613 = vld [vmem:[#allocation2 + $0x4e] sm:$0xff]
      %v9614 = vld [vmem:[#allocation2 + $0x56] sm:$0xff]
      %v9615 = vld [vmem:[#allocation2 + $0x5e] sm:$0xff]
      %v9616 = vld [vmem:[#allocation2 + $0x66] sm:$0xff]
      %v9617 = vld [vmem:[#allocation2 + $0x6e] sm:$0xff]
      %v9618 = vld [vmem:[#allocation2 + $0x76] sm:$0xff]
      %v9619 = vld [vmem:[#allocation2 + $0x7e] sm:$0xff]
      %v9620 = vld [vmem:[#allocation2 + $0x86] sm:$0xff]
      %v9621 = vld [vmem:[#allocation2 + $0x8e] sm:$0xff]
      %v9622 = vld [vmem:[#allocation2 + $0x96] sm:$0xff]
      %v9623 = vld [vmem:[#allocation2 + $0x9e] sm:$0xff]
      %v9624 = vld [vmem:[#allocation2 + $0xa6] sm:$0xff]
      %v9625 = vld [vmem:[#allocation2 + $0xae] sm:$0xff]
      %v9626 = vld [vmem:[#allocation2 + $0xb6] sm:$0xff]
      %v9627 = vld [vmem:[#allocation2 + $0xbe] sm:$0xff]
      %v9628 = vld [vmem:[#allocation2 + $0xc6] sm:$0xff]
      %v9629 = vld [vmem:[#allocation2 + $0xce] sm:$0xff]
      %v9630 = vld [vmem:[#allocation2 + $0xd6] sm:$0xff]
      %v9631 = vld [vmem:[#allocation2 + $0xde] sm:$0xff]
      %v9632 = vld [vmem:[#allocation2 + $0xe6] sm:$0xff]
      %v9633 = vld [vmem:[#allocation2 + $0xee] sm:$0xff]
      %v9634 = vld [vmem:[#allocation2 + $0xf6] sm:$0xff]
      %v9635 = vld [vmem:[#allocation2 + $0xfe] sm:$0xff]
      %v9636 = vld [vmem:[#allocation2 + $0x106] sm:$0xff]
      %v9637 = vld [vmem:[#allocation2 + $0x10e] sm:$0xff]
      %v9638 = vld [vmem:[#allocation2 + $0x116] sm:$0xff]
      %v9639 = vld [vmem:[#allocation2 + $0x11e] sm:$0xff]
      %v9640 = vld [vmem:[#allocation2 + $0x126] sm:$0xff]
      %v9641 = vld [vmem:[#allocation2 + $0x12e] sm:$0xff]
      %v9642 = vld [vmem:[#allocation2 + $0x136] sm:$0xff]
      %v9643 = vld [vmem:[#allocation2 + $0x13e] sm:$0x3f]
      %v9644 = vpack.c.bf16 %v9609, %v9608
      %v9645 = vpack.c.bf16 %v9611, %v9610
      %v9646 = vpack.c.bf16 %v9613, %v9612
      %v9647 = vpack.c.bf16 %v9615, %v9614
      %v9648 = vpack.c.bf16 %v9617, %v9616
      %v9649 = vpack.c.bf16 %v9619, %v9618
      %v9650 = vpack.c.bf16 %v9621, %v9620
      %v9651 = vpack.c.bf16 %v9623, %v9622
      %v9652 = vpack.c.bf16 %v9625, %v9624
      %v9653 = vpack.c.bf16 %v9627, %v9626
      %v9654 = vpack.c.bf16 %v9629, %v9628
      %v9655 = vpack.c.bf16 %v9631, %v9630
      %v9656 = vpack.c.bf16 %v9633, %v9632
      %v9657 = vpack.c.bf16 %v9635, %v9634
      %v9658 = vpack.c.bf16 %v9637, %v9636
      %v9659 = vpack.c.bf16 %v9639, %v9638
      %v9660 = vpack.c.bf16 %v9641, %v9640
      %v9661 = vpack.c.bf16 %v9643, %v9642
      %s9662 = scalar_lea.vmem %s6, 64
      %v9663 = vld [vmem:[%s9662] sm:$0xf]
      %v9664 = vld [vmem:[%s9662 + $0x4] sm:$0x3]
      %v9667 = vunpack.c.l.b16 %v9663
      %v9668 = vunpack.c.l.b16 %v9664
      %v9669 = vpack.c.b16 %v9668, %v9667
      %v9671 = vsel %vm7141, %v9644, 0
      %v9674 = vsel %vm7141, %v9645, 0
      %v9677 = vsel %vm7141, %v9646, 0
      %v9680 = vsel %vm7141, %v9647, 0
      %v9683 = vsel %vm7141, %v9648, 0
      %v9686 = vsel %vm7141, %v9649, 0
      %v9689 = vsel %vm7141, %v9650, 0
      %v9692 = vsel %vm7141, %v9651, 0
      %v9695 = vsel %vm7141, %v9652, 0
      %v9698 = vsel %vm7141, %v9653, 0
      %v9701 = vsel %vm7141, %v9654, 0
      %v9704 = vsel %vm7141, %v9655, 0
      %v9707 = vsel %vm7141, %v9656, 0
      %v9710 = vsel %vm7141, %v9657, 0
      %v9713 = vsel %vm7141, %v9658, 0
      %v9716 = vsel %vm7141, %v9659, 0
      %v9719 = vsel %vm7141, %v9660, 0
      %v9722 = vsel %vm7141, %v9661, 0
      %v9725 = vsel %vm7196, %v9669, 0
      %9727 = vmatprep.subr.bf16.mxu0 0
      %9728 = vmatpush1.bf16.msra.mxu0 %v9725
      %9729 = vmatprep.subr.bf16.mxu0 0
      %9730 = vmatpush1.bf16.msra.mxu0 0
      %9731 = vmatprep.subr.bf16.mxu0 0
      %9732 = vmatpush1.bf16.msra.mxu0 0
      %9733 = vmatprep.subr.bf16.mxu0 0
      %9734 = vmatpush1.bf16.msra.mxu0 0
      %9735 = vmatprep.subr.bf16.mxu0 0
      %9736 = vmatpush1.bf16.msra.mxu0 0
      %9737 = vmatprep.subr.bf16.mxu0 0
      %9738 = vmatpush1.bf16.msra.mxu0 0
      %9739 = vmatprep.subr.bf16.mxu0 0
      %9740 = vmatpush1.bf16.msra.mxu0 0
      %9741 = vmatprep.subr.bf16.mxu0 0
      %9742 = vmatpush1.bf16.msra.mxu0 0
      %9743 = vmatprep.subr.bf16.mxu0 0
      %9744 = vmatpush1.bf16.msra.mxu0 0
      %9745 = vmatprep.subr.bf16.mxu0 0
      %9746 = vmatpush1.bf16.msra.mxu0 0
      %9747 = vmatprep.subr.bf16.mxu0 0
      %9748 = vmatpush1.bf16.msra.mxu0 0
      %9749 = vmatprep.subr.bf16.mxu0 0
      %9750 = vmatpush1.bf16.msra.mxu0 0
      %9751 = vmatprep.subr.bf16.mxu0 0
      %9752 = vmatpush1.bf16.msra.mxu0 0
      %9753 = vmatprep.subr.bf16.mxu0 0
      %9754 = vmatpush1.bf16.msra.mxu0 0
      %9755 = vmatprep.subr.bf16.mxu0 0
      %9756 = vmatpush1.bf16.msra.mxu0 0
      %9757 = vmatprep.subr.bf16.mxu0 0
      %9758 = vmatpush1.bf16.msra.mxu0 0
      %9759 = vmatprep.mubr.bf16.mxu0 0
      %9760 = vmatmul.mubr.bf16.gmra.mrb[0].mxu0 %v9671
      %v9761 = vpop.f32.mrb[0].mxu0
      %v9762 = vadd.f32 0.0, %v9761
      %v9763 = vpop.f32.mrb[0].mxu0
      %v9764 = vpop.f32.mrb[0].mxu0
      %v9765 = vadd.f32 0.0, %v9764
      %v9766 = vpop.f32.mrb[0].mxu0
      %9767 = vmatprep.mubr.bf16.mxu0 0
      %9768 = vmatmul.mubr.bf16.gmra.mrb[0].mxu0 %v9674
      %v9769 = vpop.f32.mrb[0].mxu0
      %v9770 = vadd.f32 0.0, %v9769
      %v9771 = vpop.f32.mrb[0].mxu0
      %v9772 = vpop.f32.mrb[0].mxu0
      %v9773 = vadd.f32 0.0, %v9772
      %v9774 = vpop.f32.mrb[0].mxu0
      %9775 = vmatprep.mubr.bf16.mxu0 0
      %9776 = vmatmul.mubr.bf16.gmra.mrb[0].mxu0 %v9677
      %v9777 = vpop.f32.mrb[0].mxu0
      %v9778 = vadd.f32 0.0, %v9777
      %v9779 = vpop.f32.mrb[0].mxu0
      %v9780 = vpop.f32.mrb[0].mxu0
      %v9781 = vadd.f32 0.0, %v9780
      %v9782 = vpop.f32.mrb[0].mxu0
      %9783 = vmatprep.mubr.bf16.mxu0 0
      %9784 = vmatmul.mubr.bf16.gmra.mrb[0].mxu0 %v9680
      %v9785 = vpop.f32.mrb[0].mxu0
      %v9786 = vadd.f32 0.0, %v9785
      %v9787 = vpop.f32.mrb[0].mxu0
      %v9788 = vpop.f32.mrb[0].mxu0
      %v9789 = vadd.f32 0.0, %v9788
      %v9790 = vpop.f32.mrb[0].mxu0
      %9791 = vmatprep.mubr.bf16.mxu0 0
      %9792 = vmatmul.mubr.bf16.gmra.mrb[0].mxu0 %v9683
      %v9793 = vpop.f32.mrb[0].mxu0
      %v9794 = vadd.f32 0.0, %v9793
      %v9795 = vpop.f32.mrb[0].mxu0
      %v9796 = vpop.f32.mrb[0].mxu0
      %v9797 = vadd.f32 0.0, %v9796
      %v9798 = vpop.f32.mrb[0].mxu0
      %9799 = vmatprep.mubr.bf16.mxu0 0
      %9800 = vmatmul.mubr.bf16.gmra.mrb[0].mxu0 %v9686
      %v9801 = vpop.f32.mrb[0].mxu0
      %v9802 = vadd.f32 0.0, %v9801
      %v9803 = vpop.f32.mrb[0].mxu0
      %v9804 = vpop.f32.mrb[0].mxu0
      %v9805 = vadd.f32 0.0, %v9804
      %v9806 = vpop.f32.mrb[0].mxu0
      %9807 = vmatprep.mubr.bf16.mxu0 0
      %9808 = vmatmul.mubr.bf16.gmra.mrb[0].mxu0 %v9689
      %v9809 = vpop.f32.mrb[0].mxu0
      %v9810 = vadd.f32 0.0, %v9809
      %v9811 = vpop.f32.mrb[0].mxu0
      %v9812 = vpop.f32.mrb[0].mxu0
      %v9813 = vadd.f32 0.0, %v9812
      %v9814 = vpop.f32.mrb[0].mxu0
      %9815 = vmatprep.mubr.bf16.mxu0 0
      %9816 = vmatmul.mubr.bf16.gmra.mrb[0].mxu0 %v9692
      %v9817 = vpop.f32.mrb[0].mxu0
      %v9818 = vadd.f32 0.0, %v9817
      %v9819 = vpop.f32.mrb[0].mxu0
      %v9820 = vpop.f32.mrb[0].mxu0
      %v9821 = vadd.f32 0.0, %v9820
      %v9822 = vpop.f32.mrb[0].mxu0
      %9823 = vmatprep.mubr.bf16.mxu0 0
      %9824 = vmatmul.mubr.bf16.gmra.mrb[0].mxu0 %v9695
      %v9825 = vpop.f32.mrb[0].mxu0
      %v9826 = vadd.f32 0.0, %v9825
      %v9827 = vpop.f32.mrb[0].mxu0
      %v9828 = vpop.f32.mrb[0].mxu0
      %v9829 = vadd.f32 0.0, %v9828
      %v9830 = vpop.f32.mrb[0].mxu0
      %9831 = vmatprep.mubr.bf16.mxu0 0
      %9832 = vmatmul.mubr.bf16.gmra.mrb[0].mxu0 %v9698
      %v9833 = vpop.f32.mrb[0].mxu0
      %v9834 = vadd.f32 0.0, %v9833
      %v9835 = vpop.f32.mrb[0].mxu0
      %v9836 = vpop.f32.mrb[0].mxu0
      %v9837 = vadd.f32 0.0, %v9836
      %v9838 = vpop.f32.mrb[0].mxu0
      %9839 = vmatprep.mubr.bf16.mxu0 0
      %9840 = vmatmul.mubr.bf16.gmra.mrb[0].mxu0 %v9701
      %v9841 = vpop.f32.mrb[0].mxu0
      %v9842 = vadd.f32 0.0, %v9841
      %v9843 = vpop.f32.mrb[0].mxu0
      %v9844 = vpop.f32.mrb[0].mxu0
      %v9845 = vadd.f32 0.0, %v9844
      %v9846 = vpop.f32.mrb[0].mxu0
      %9847 = vmatprep.mubr.bf16.mxu0 0
      %9848 = vmatmul.mubr.bf16.gmra.mrb[0].mxu0 %v9704
      %v9849 = vpop.f32.mrb[0].mxu0
      %v9850 = vadd.f32 0.0, %v9849
      %v9851 = vpop.f32.mrb[0].mxu0
      %v9852 = vpop.f32.mrb[0].mxu0
      %v9853 = vadd.f32 0.0, %v9852
      %v9854 = vpop.f32.mrb[0].mxu0
      %9855 = vmatprep.mubr.bf16.mxu0 0
      %9856 = vmatmul.mubr.bf16.gmra.mrb[0].mxu0 %v9707
      %v9857 = vpop.f32.mrb[0].mxu0
      %v9858 = vadd.f32 0.0, %v9857
      %v9859 = vpop.f32.mrb[0].mxu0
      %v9860 = vpop.f32.mrb[0].mxu0
      %v9861 = vadd.f32 0.0, %v9860
      %v9862 = vpop.f32.mrb[0].mxu0
      %9863 = vmatprep.mubr.bf16.mxu0 0
      %9864 = vmatmul.mubr.bf16.gmra.mrb[0].mxu0 %v9710
      %v9865 = vpop.f32.mrb[0].mxu0
      %v9866 = vadd.f32 0.0, %v9865
      %v9867 = vpop.f32.mrb[0].mxu0
      %v9868 = vpop.f32.mrb[0].mxu0
      %v9869 = vadd.f32 0.0, %v9868
      %v9870 = vpop.f32.mrb[0].mxu0
      %9871 = vmatprep.mubr.bf16.mxu0 0
      %9872 = vmatmul.mubr.bf16.gmra.mrb[0].mxu0 %v9713
      %v9873 = vpop.f32.mrb[0].mxu0
      %v9874 = vadd.f32 0.0, %v9873
      %v9875 = vpop.f32.mrb[0].mxu0
      %v9876 = vpop.f32.mrb[0].mxu0
      %v9877 = vadd.f32 0.0, %v9876
      %v9878 = vpop.f32.mrb[0].mxu0
      %9879 = vmatprep.mubr.bf16.mxu0 0
      %9880 = vmatmul.mubr.bf16.gmra.mrb[0].mxu0 %v9716
      %v9881 = vpop.f32.mrb[0].mxu0
      %v9882 = vadd.f32 0.0, %v9881
      %v9883 = vpop.f32.mrb[0].mxu0
      %v9884 = vpop.f32.mrb[0].mxu0
      %v9885 = vadd.f32 0.0, %v9884
      %v9886 = vpop.f32.mrb[0].mxu0
      %9887 = vmatprep.mubr.bf16.mxu0 0
      %9888 = vmatmul.mubr.bf16.gmra.mrb[0].mxu0 %v9719
      %v9889 = vpop.f32.mrb[0].mxu0
      %v9890 = vadd.f32 0.0, %v9889
      %v9891 = vpop.f32.mrb[0].mxu0
      %v9892 = vpop.f32.mrb[0].mxu0
      %v9893 = vadd.f32 0.0, %v9892
      %v9894 = vpop.f32.mrb[0].mxu0
      %9895 = vmatprep.mubr.bf16.mxu0 0
      %9896 = vmatmul.mubr.bf16.gmra.mrb[0].mxu0 %v9722
      %v9897 = vpop.f32.mrb[0].mxu0
      %v9898 = vadd.f32 0.0, %v9897
      %v9899 = vpop.f32.mrb[0].mxu0
      %v9900 = vpop.f32.mrb[0].mxu0
      %v9901 = vadd.f32 0.0, %v9900
      %v9902 = vpop.f32.mrb[0].mxu0
      %9903 = vdwg.mxu0
      %v9904 = vadd.f32 %v9572, %v9762
      %v9905 = vadd.f32 %v9573, %v9765
      %v9906 = vadd.f32 %v9574, %v9770
      %v9907 = vadd.f32 %v9575, %v9773
      %v9908 = vadd.f32 %v9576, %v9778
      %v9909 = vadd.f32 %v9577, %v9781
      %v9910 = vadd.f32 %v9578, %v9786
      %v9911 = vadd.f32 %v9579, %v9789
      %v9912 = vadd.f32 %v9580, %v9794
      %v9913 = vadd.f32 %v9581, %v9797
      %v9914 = vadd.f32 %v9582, %v9802
      %v9915 = vadd.f32 %v9583, %v9805
      %v9916 = vadd.f32 %v9584, %v9810
      %v9917 = vadd.f32 %v9585, %v9813
      %v9918 = vadd.f32 %v9586, %v9818
      %v9919 = vadd.f32 %v9587, %v9821
      %v9920 = vadd.f32 %v9588, %v9826
      %v9921 = vadd.f32 %v9589, %v9829
      %v9922 = vadd.f32 %v9590, %v9834
      %v9923 = vadd.f32 %v9591, %v9837
      %v9924 = vadd.f32 %v9592, %v9842
      %v9925 = vadd.f32 %v9593, %v9845
      %v9926 = vadd.f32 %v9594, %v9850
      %v9927 = vadd.f32 %v9595, %v9853
      %v9928 = vadd.f32 %v9596, %v9858
      %v9929 = vadd.f32 %v9597, %v9861
      %v9930 = vadd.f32 %v9598, %v9866
      %v9931 = vadd.f32 %v9599, %v9869
      %v9932 = vadd.f32 %v9600, %v9874
      %v9933 = vadd.f32 %v9601, %v9877
      %v9934 = vadd.f32 %v9602, %v9882
      %v9935 = vadd.f32 %v9603, %v9885
      %v9936 = vadd.f32 %v9604, %v9890
      %v9937 = vadd.f32 %v9605, %v9893
      %v9938 = vadd.f32 %v9606, %v9898
      %v9939 = vadd.f32 %v9607, %v9901
      %v9940 = vld [vmem:[%s7] sm:$0x1]
      %v9942 = vlaneseq
      %v9943 = vshrl.u32 %v9942, 7
      %v9944 = vsub.s32 0, %v9943
      %v9945 = vrot.slane %v9940, %v9944
      %v9947 = vadd.f32 %v9904, %v9945
      %v9948 = vadd.f32 %v9905, %v9945
      %v9949 = vadd.f32 %v9906, %v9945
      %v9950 = vadd.f32 %v9907, %v9945
      %v9951 = vadd.f32 %v9908, %v9945
      %v9952 = vadd.f32 %v9909, %v9945
      %v9953 = vadd.f32 %v9910, %v9945
      %v9954 = vadd.f32 %v9911, %v9945
      %v9955 = vadd.f32 %v9912, %v9945
      %v9956 = vadd.f32 %v9913, %v9945
      %v9957 = vadd.f32 %v9914, %v9945
      %v9958 = vadd.f32 %v9915, %v9945
      %v9959 = vadd.f32 %v9916, %v9945
      %v9960 = vadd.f32 %v9917, %v9945
      %v9961 = vadd.f32 %v9918, %v9945
      %v9962 = vadd.f32 %v9919, %v9945
      %v9963 = vadd.f32 %v9920, %v9945
      %v9964 = vadd.f32 %v9921, %v9945
      %v9965 = vadd.f32 %v9922, %v9945
      %v9966 = vadd.f32 %v9923, %v9945
      %v9967 = vadd.f32 %v9924, %v9945
      %v9968 = vadd.f32 %v9925, %v9945
      %v9969 = vadd.f32 %v9926, %v9945
      %v9970 = vadd.f32 %v9927, %v9945
      %v9971 = vadd.f32 %v9928, %v9945
      %v9972 = vadd.f32 %v9929, %v9945
      %v9973 = vadd.f32 %v9930, %v9945
      %v9974 = vadd.f32 %v9931, %v9945
      %v9975 = vadd.f32 %v9932, %v9945
      %v9976 = vadd.f32 %v9933, %v9945
      %v9977 = vadd.f32 %v9934, %v9945
      %v9978 = vadd.f32 %v9935, %v9945
      %v9979 = vadd.f32 %v9936, %v9945
      %v9980 = vadd.f32 %v9937, %v9945
      %v9981 = vadd.f32 %v9938, %v9945
      %v9982 = vadd.f32 %v9939, %v9945
      %v9983 = vmax.f32 %v9947, 0.0
      %v9984 = vmax.f32 %v9948, 0.0
      %v9985 = vmax.f32 %v9949, 0.0
      %v9986 = vmax.f32 %v9950, 0.0
      %v9987 = vmax.f32 %v9951, 0.0
      %v9988 = vmax.f32 %v9952, 0.0
      %v9989 = vmax.f32 %v9953, 0.0
      %v9990 = vmax.f32 %v9954, 0.0
      %v9991 = vmax.f32 %v9955, 0.0
      %v9992 = vmax.f32 %v9956, 0.0
      %v9993 = vmax.f32 %v9957, 0.0
      %v9994 = vmax.f32 %v9958, 0.0
      %v9995 = vmax.f32 %v9959, 0.0
      %v9996 = vmax.f32 %v9960, 0.0
      %v9997 = vmax.f32 %v9961, 0.0
      %v9998 = vmax.f32 %v9962, 0.0
      %v9999 = vmax.f32 %v9963, 0.0
      %v10000 = vmax.f32 %v9964, 0.0
      %v10001 = vmax.f32 %v9965, 0.0
      %v10002 = vmax.f32 %v9966, 0.0
      %v10003 = vmax.f32 %v9967, 0.0
      %v10004 = vmax.f32 %v9968, 0.0
      %v10005 = vmax.f32 %v9969, 0.0
      %v10006 = vmax.f32 %v9970, 0.0
      %v10007 = vmax.f32 %v9971, 0.0
      %v10008 = vmax.f32 %v9972, 0.0
      %v10009 = vmax.f32 %v9973, 0.0
      %v10010 = vmax.f32 %v9974, 0.0
      %v10011 = vmax.f32 %v9975, 0.0
      %v10012 = vmax.f32 %v9976, 0.0
      %v10013 = vmax.f32 %v9977, 0.0
      %v10014 = vmax.f32 %v9978, 0.0
      %v10015 = vmax.f32 %v9979, 0.0
      %v10016 = vmax.f32 %v9980, 0.0
      %v10017 = vmax.f32 %v9981, 0.0
      %v10018 = vmax.f32 %v9982, 0.0
      %v10019 = vmul.f32 %v9983, %v3468
      %v10020 = vmul.f32 %v9984, %v3473
      %v10021 = vmul.f32 %v9985, %v3478
      %v10022 = vmul.f32 %v9986, %v3483
      %v10023 = vmul.f32 %v9987, %v3488
      %v10024 = vmul.f32 %v9988, %v3493
      %v10025 = vmul.f32 %v9989, %v3498
      %v10026 = vmul.f32 %v9990, %v3503
      %v10027 = vmul.f32 %v9991, %v3508
      %v10028 = vmul.f32 %v9992, %v3513
      %v10029 = vmul.f32 %v9993, %v3518
      %v10030 = vmul.f32 %v9994, %v3523
      %v10031 = vmul.f32 %v9995, %v3528
      %v10032 = vmul.f32 %v9996, %v3533
      %v10033 = vmul.f32 %v9997, %v3538
      %v10034 = vmul.f32 %v9998, %v3543
      %v10035 = vmul.f32 %v9999, %v3548
      %v10036 = vmul.f32 %v10000, %v3553
      %v10037 = vmul.f32 %v10001, %v3558
      %v10038 = vmul.f32 %v10002, %v3563
      %v10039 = vmul.f32 %v10003, %v3568
      %v10040 = vmul.f32 %v10004, %v3573
      %v10041 = vmul.f32 %v10005, %v3578
      %v10042 = vmul.f32 %v10006, %v3583
      %v10043 = vmul.f32 %v10007, %v3588
      %v10044 = vmul.f32 %v10008, %v3593
      %v10045 = vmul.f32 %v10009, %v3598
      %v10046 = vmul.f32 %v10010, %v3603
      %v10047 = vmul.f32 %v10011, %v3608
      %v10048 = vmul.f32 %v10012, %v3613
      %v10049 = vmul.f32 %v10013, %v3618
      %v10050 = vmul.f32 %v10014, %v3623
      %v10051 = vmul.f32 %v10015, %v3628
      %v10052 = vmul.f32 %v10016, %v3633
      %v10053 = vmul.f32 %v10017, %v3638
      %v10054 = vmul.f32 %v10018, %v3643
      %10091 = vrot.lane.b32.xlu0 %v10019, 12
      %v10092 = vpop.permute.xlu0 %10091
      %10093 = vrot.lane.b32.xlu0 %v10020, 12
      %v10094 = vpop.permute.xlu0 %10093
      %10095 = vrot.lane.b32.xlu0 %v10021, 12
      %v10096 = vpop.permute.xlu0 %10095
      %10097 = vrot.lane.b32.xlu0 %v10022, 12
      %v10098 = vpop.permute.xlu0 %10097
      %10099 = vrot.lane.b32.xlu0 %v10023, 12
      %v10100 = vpop.permute.xlu0 %10099
      %10101 = vrot.lane.b32.xlu0 %v10024, 12
      %v10102 = vpop.permute.xlu0 %10101
      %10103 = vrot.lane.b32.xlu0 %v10025, 12
      %v10104 = vpop.permute.xlu0 %10103
      %10105 = vrot.lane.b32.xlu0 %v10026, 12
      %v10106 = vpop.permute.xlu0 %10105
      %10107 = vrot.lane.b32.xlu0 %v10027, 12
      %v10108 = vpop.permute.xlu0 %10107
      %10109 = vrot.lane.b32.xlu0 %v10028, 12
      %v10110 = vpop.permute.xlu0 %10109
      %10111 = vrot.lane.b32.xlu0 %v10029, 12
      %v10112 = vpop.permute.xlu0 %10111
      %10113 = vrot.lane.b32.xlu0 %v10030, 12
      %v10114 = vpop.permute.xlu0 %10113
      %10115 = vrot.lane.b32.xlu0 %v10031, 12
      %v10116 = vpop.permute.xlu0 %10115
      %10117 = vrot.lane.b32.xlu0 %v10032, 12
      %v10118 = vpop.permute.xlu0 %10117
      %10119 = vrot.lane.b32.xlu0 %v10033, 12
      %v10120 = vpop.permute.xlu0 %10119
      %10121 = vrot.lane.b32.xlu0 %v10034, 12
      %v10122 = vpop.permute.xlu0 %10121
      %10123 = vrot.lane.b32.xlu0 %v10035, 12
      %v10124 = vpop.permute.xlu0 %10123
      %10125 = vrot.lane.b32.xlu0 %v10036, 12
      %v10126 = vpop.permute.xlu0 %10125
      %10127 = vrot.lane.b32.xlu0 %v10037, 12
      %v10128 = vpop.permute.xlu0 %10127
      %10129 = vrot.lane.b32.xlu0 %v10038, 12
      %v10130 = vpop.permute.xlu0 %10129
      %10131 = vrot.lane.b32.xlu0 %v10039, 12
      %v10132 = vpop.permute.xlu0 %10131
      %10133 = vrot.lane.b32.xlu0 %v10040, 12
      %v10134 = vpop.permute.xlu0 %10133
      %10135 = vrot.lane.b32.xlu0 %v10041, 12
      %v10136 = vpop.permute.xlu0 %10135
      %10137 = vrot.lane.b32.xlu0 %v10042, 12
      %v10138 = vpop.permute.xlu0 %10137
      %10139 = vrot.lane.b32.xlu0 %v10043, 12
      %v10140 = vpop.permute.xlu0 %10139
      %10141 = vrot.lane.b32.xlu0 %v10044, 12
      %v10142 = vpop.permute.xlu0 %10141
      %10143 = vrot.lane.b32.xlu0 %v10045, 12
      %v10144 = vpop.permute.xlu0 %10143
      %10145 = vrot.lane.b32.xlu0 %v10046, 12
      %v10146 = vpop.permute.xlu0 %10145
      %10147 = vrot.lane.b32.xlu0 %v10047, 12
      %v10148 = vpop.permute.xlu0 %10147
      %10149 = vrot.lane.b32.xlu0 %v10048, 12
      %v10150 = vpop.permute.xlu0 %10149
      %10151 = vrot.lane.b32.xlu0 %v10049, 12
      %v10152 = vpop.permute.xlu0 %10151
      %10153 = vrot.lane.b32.xlu0 %v10050, 12
      %v10154 = vpop.permute.xlu0 %10153
      %10155 = vrot.lane.b32.xlu0 %v10051, 12
      %v10156 = vpop.permute.xlu0 %10155
      %10157 = vrot.lane.b32.xlu0 %v10052, 12
      %v10158 = vpop.permute.xlu0 %10157
      %10159 = vrot.lane.b32.xlu0 %v10053, 12
      %v10160 = vpop.permute.xlu0 %10159
      %10161 = vrot.lane.b32.xlu0 %v10054, 12
      %v10162 = vpop.permute.xlu0 %10161
      %vm10199 = vcmask 130144
      %10200 = vst.msk [vmem:[#allocation2 + $0x13] sm:$0xff] %vm10199, %v10092
      %10201 = vst.msk [vmem:[#allocation2 + $0x1b] sm:$0xff] %vm10199, %v10094
      %10202 = vst.msk [vmem:[#allocation2 + $0x23] sm:$0xff] %vm10199, %v10096
      %10203 = vst.msk [vmem:[#allocation2 + $0x2b] sm:$0xff] %vm10199, %v10098
      %10204 = vst.msk [vmem:[#allocation2 + $0x33] sm:$0xff] %vm10199, %v10100
      %10205 = vst.msk [vmem:[#allocation2 + $0x3b] sm:$0xff] %vm10199, %v10102
      %10206 = vst.msk [vmem:[#allocation2 + $0x43] sm:$0xff] %vm10199, %v10104
      %10207 = vst.msk [vmem:[#allocation2 + $0x4b] sm:$0xff] %vm10199, %v10106
      %10208 = vst.msk [vmem:[#allocation2 + $0x53] sm:$0xff] %vm10199, %v10108
      %10209 = vst.msk [vmem:[#allocation2 + $0x5b] sm:$0xff] %vm10199, %v10110
      %10210 = vst.msk [vmem:[#allocation2 + $0x63] sm:$0xff] %vm10199, %v10112
      %10211 = vst.msk [vmem:[#allocation2 + $0x6b] sm:$0xff] %vm10199, %v10114
      %10212 = vst.msk [vmem:[#allocation2 + $0x73] sm:$0xff] %vm10199, %v10116
      %10213 = vst.msk [vmem:[#allocation2 + $0x7b] sm:$0xff] %vm10199, %v10118
      %10214 = vst.msk [vmem:[#allocation2 + $0x83] sm:$0xff] %vm10199, %v10120
      %10215 = vst.msk [vmem:[#allocation2 + $0x8b] sm:$0xff] %vm10199, %v10122
      %10216 = vst.msk [vmem:[#allocation2 + $0x93] sm:$0xff] %vm10199, %v10124
      %10217 = vst.msk [vmem:[#allocation2 + $0x9b] sm:$0xff] %vm10199, %v10126
      %10218 = vst.msk [vmem:[#allocation2 + $0xa3] sm:$0xff] %vm10199, %v10128
      %10219 = vst.msk [vmem:[#allocation2 + $0xab] sm:$0xff] %vm10199, %v10130
      %10220 = vst.msk [vmem:[#allocation2 + $0xb3] sm:$0xff] %vm10199, %v10132
      %10221 = vst.msk [vmem:[#allocation2 + $0xbb] sm:$0xff] %vm10199, %v10134
      %10222 = vst.msk [vmem:[#allocation2 + $0xc3] sm:$0xff] %vm10199, %v10136
      %10223 = vst.msk [vmem:[#allocation2 + $0xcb] sm:$0xff] %vm10199, %v10138
      %10224 = vst.msk [vmem:[#allocation2 + $0xd3] sm:$0xff] %vm10199, %v10140
      %10225 = vst.msk [vmem:[#allocation2 + $0xdb] sm:$0xff] %vm10199, %v10142
      %10226 = vst.msk [vmem:[#allocation2 + $0xe3] sm:$0xff] %vm10199, %v10144
      %10227 = vst.msk [vmem:[#allocation2 + $0xeb] sm:$0xff] %vm10199, %v10146
      %10228 = vst.msk [vmem:[#allocation2 + $0xf3] sm:$0xff] %vm10199, %v10148
      %10229 = vst.msk [vmem:[#allocation2 + $0xfb] sm:$0xff] %vm10199, %v10150
      %10230 = vst.msk [vmem:[#allocation2 + $0x103] sm:$0xff] %vm10199, %v10152
      %10231 = vst.msk [vmem:[#allocation2 + $0x10b] sm:$0xff] %vm10199, %v10154
      %10232 = vst.msk [vmem:[#allocation2 + $0x113] sm:$0xff] %vm10199, %v10156
      %10233 = vst.msk [vmem:[#allocation2 + $0x11b] sm:$0xff] %vm10199, %v10158
      %10234 = vst.msk [vmem:[#allocation2 + $0x123] sm:$0xff] %vm10199, %v10160
      %vm10235 = vcmask 128096
      %10236 = vst.msk [vmem:[#allocation2 + $0x12b] sm:$0x3f] %vm10235, %v10162
      %v10237 = vld [vmem:[#allocation2] sm:$0xff]
      %v10238 = vld [vmem:[#allocation2 + $0x8] sm:$0xff]
      %v10239 = vld [vmem:[#allocation2 + $0x10] sm:$0xff]
      %v10240 = vld [vmem:[#allocation2 + $0x18] sm:$0xff]
      %v10241 = vld [vmem:[#allocation2 + $0x20] sm:$0xff]
      %v10242 = vld [vmem:[#allocation2 + $0x28] sm:$0xff]
      %v10243 = vld [vmem:[#allocation2 + $0x30] sm:$0xff]
      %v10244 = vld [vmem:[#allocation2 + $0x38] sm:$0xff]
      %v10245 = vld [vmem:[#allocation2 + $0x40] sm:$0xff]
      %v10246 = vld [vmem:[#allocation2 + $0x48] sm:$0xff]
      %v10247 = vld [vmem:[#allocation2 + $0x50] sm:$0xff]
      %v10248 = vld [vmem:[#allocation2 + $0x58] sm:$0xff]
      %v10249 = vld [vmem:[#allocation2 + $0x60] sm:$0xff]
      %v10250 = vld [vmem:[#allocation2 + $0x68] sm:$0xff]
      %v10251 = vld [vmem:[#allocation2 + $0x70] sm:$0xff]
      %v10252 = vld [vmem:[#allocation2 + $0x78] sm:$0xff]
      %v10253 = vld [vmem:[#allocation2 + $0x80] sm:$0xff]
      %v10254 = vld [vmem:[#allocation2 + $0x88] sm:$0xff]
      %v10255 = vld [vmem:[#allocation2 + $0x90] sm:$0xff]
      %v10256 = vld [vmem:[#allocation2 + $0x98] sm:$0xff]
      %v10257 = vld [vmem:[#allocation2 + $0xa0] sm:$0xff]
      %v10258 = vld [vmem:[#allocation2 + $0xa8] sm:$0xff]
      %v10259 = vld [vmem:[#allocation2 + $0xb0] sm:$0xff]
      %v10260 = vld [vmem:[#allocation2 + $0xb8] sm:$0xff]
      %v10261 = vld [vmem:[#allocation2 + $0xc0] sm:$0xff]
      %v10262 = vld [vmem:[#allocation2 + $0xc8] sm:$0xff]
      %v10263 = vld [vmem:[#allocation2 + $0xd0] sm:$0xff]
      %v10264 = vld [vmem:[#allocation2 + $0xd8] sm:$0xff]
      %v10265 = vld [vmem:[#allocation2 + $0xe0] sm:$0xff]
      %v10266 = vld [vmem:[#allocation2 + $0xe8] sm:$0xff]
      %v10267 = vld [vmem:[#allocation2 + $0xf0] sm:$0xff]
      %v10268 = vld [vmem:[#allocation2 + $0xf8] sm:$0xff]
      %v10269 = vld [vmem:[#allocation2 + $0x100] sm:$0xff]
      %v10270 = vld [vmem:[#allocation2 + $0x108] sm:$0xff]
      %v10271 = vld [vmem:[#allocation2 + $0x110] sm:$0xff]
      %v10272 = vld [vmem:[#allocation2 + $0x118] sm:$0xff]
      %v10273 = vld [vmem:[#allocation2 + $0x120] sm:$0xff]
      %v10274 = vld [vmem:[#allocation2 + $0x128] sm:$0xff]
      %v10275 = vld [vmem:[#allocation2 + $0x130] sm:$0xff]
      %v10276 = vld [vmem:[#allocation2 + $0x138] sm:$0xff]
      %v10277 = vld [vmem:[#allocation2 + $0x140] sm:$0xf]
      %v10278 = vpack.c.bf16 %v10238, %v10237
      %v10279 = vpack.c.bf16 %v10240, %v10239
      %v10280 = vpack.c.bf16 %v10242, %v10241
      %v10281 = vpack.c.bf16 %v10244, %v10243
      %v10282 = vpack.c.bf16 %v10246, %v10245
      %v10283 = vpack.c.bf16 %v10248, %v10247
      %v10284 = vpack.c.bf16 %v10250, %v10249
      %v10285 = vpack.c.bf16 %v10252, %v10251
      %v10286 = vpack.c.bf16 %v10254, %v10253
      %v10287 = vpack.c.bf16 %v10256, %v10255
      %v10288 = vpack.c.bf16 %v10258, %v10257
      %v10289 = vpack.c.bf16 %v10260, %v10259
      %v10290 = vpack.c.bf16 %v10262, %v10261
      %v10291 = vpack.c.bf16 %v10264, %v10263
      %v10292 = vpack.c.bf16 %v10266, %v10265
      %v10293 = vpack.c.bf16 %v10268, %v10267
      %v10294 = vpack.c.bf16 %v10270, %v10269
      %v10295 = vpack.c.bf16 %v10272, %v10271
      %v10296 = vpack.c.bf16 %v10274, %v10273
      %v10297 = vpack.c.bf16 %v10276, %v10275
      %v10298 = vpack.c.bf16 %v10277, %v10277
      %v10299 = vld [vmem:[%s8] sm:$0xf]
      %v10300 = vld [vmem:[%s8 + $0x4] sm:$0xf]
      %v10301 = vld [vmem:[%s9] sm:$0x1]
      %v10303 = vlaneseq
      %v10304 = vshrl.u32 %v10303, 7
      %v10305 = vsub.s32 0, %v10304
      %v10306 = vrot.slane %v10301, %v10305
      %v10310 = vunpack.c.l.b16 %v10299
      %v10311 = vunpack.c.l.b16 %v10300
      %v10312 = vpack.c.b16 %v10311, %v10310
      %v10315 = vsel %vm361, %v10278, 0
      %v10318 = vsel %vm361, %v10279, 0
      %v10321 = vsel %vm361, %v10280, 0
      %v10324 = vsel %vm361, %v10281, 0
      %v10327 = vsel %vm361, %v10282, 0
      %v10330 = vsel %vm361, %v10283, 0
      %v10333 = vsel %vm361, %v10284, 0
      %v10336 = vsel %vm361, %v10285, 0
      %v10339 = vsel %vm361, %v10286, 0
      %v10342 = vsel %vm361, %v10287, 0
      %v10345 = vsel %vm361, %v10288, 0
      %v10348 = vsel %vm361, %v10289, 0
      %v10351 = vsel %vm361, %v10290, 0
      %v10354 = vsel %vm361, %v10291, 0
      %v10357 = vsel %vm361, %v10292, 0
      %v10360 = vsel %vm361, %v10293, 0
      %v10363 = vsel %vm361, %v10294, 0
      %v10366 = vsel %vm361, %v10295, 0
      %v10369 = vsel %vm361, %v10296, 0
      %v10372 = vsel %vm361, %v10297, 0
      %v10375 = vsel %vm361, %v10298, 0
      %10377 = vmatprep.subr.bf16.mxu0 0
      %10378 = vmatpush1.bf16.msra.mxu0 %v10312
      %10379 = vmatprep.subr.bf16.mxu0 0
      %10380 = vmatpush1.bf16.msra.mxu0 0
      %10381 = vmatprep.subr.bf16.mxu0 0
      %10382 = vmatpush1.bf16.msra.mxu0 0
      %10383 = vmatprep.subr.bf16.mxu0 0
      %10384 = vmatpush1.bf16.msra.mxu0 0
      %10385 = vmatprep.subr.bf16.mxu0 0
      %10386 = vmatpush1.bf16.msra.mxu0 0
      %10387 = vmatprep.subr.bf16.mxu0 0
      %10388 = vmatpush1.bf16.msra.mxu0 0
      %10389 = vmatprep.subr.bf16.mxu0 0
      %10390 = vmatpush1.bf16.msra.mxu0 0
      %10391 = vmatprep.subr.bf16.mxu0 0
      %10392 = vmatpush1.bf16.msra.mxu0 0
      %10393 = vmatprep.subr.bf16.mxu0 0
      %10394 = vmatpush1.bf16.msra.mxu0 0
      %10395 = vmatprep.subr.bf16.mxu0 0
      %10396 = vmatpush1.bf16.msra.mxu0 0
      %10397 = vmatprep.subr.bf16.mxu0 0
      %10398 = vmatpush1.bf16.msra.mxu0 0
      %10399 = vmatprep.subr.bf16.mxu0 0
      %10400 = vmatpush1.bf16.msra.mxu0 0
      %10401 = vmatprep.subr.bf16.mxu0 0
      %10402 = vmatpush1.bf16.msra.mxu0 0
      %10403 = vmatprep.subr.bf16.mxu0 0
      %10404 = vmatpush1.bf16.msra.mxu0 0
      %10405 = vmatprep.subr.bf16.mxu0 0
      %10406 = vmatpush1.bf16.msra.mxu0 0
      %10407 = vmatprep.subr.bf16.mxu0 0
      %10408 = vmatpush1.bf16.msra.mxu0 0
      %10409 = vmatprep.mubr.bf16.mxu0 0
      %10410 = vmatmul.mubr.bf16.gmra.mrb[0].mxu0 %v10315
      %v10411 = vpop.f32.mrb[0].mxu0
      %v10412 = vadd.f32 %v10306, %v10411
      %v10413 = vpop.f32.mrb[0].mxu0
      %v10414 = vpop.f32.mrb[0].mxu0
      %v10415 = vadd.f32 %v10306, %v10414
      %v10416 = vpop.f32.mrb[0].mxu0
      %10417 = vmatprep.mubr.bf16.mxu0 0
      %10418 = vmatmul.mubr.bf16.gmra.mrb[0].mxu0 %v10318
      %v10419 = vpop.f32.mrb[0].mxu0
      %v10420 = vadd.f32 %v10306, %v10419
      %v10421 = vpop.f32.mrb[0].mxu0
      %v10422 = vpop.f32.mrb[0].mxu0
      %v10423 = vadd.f32 %v10306, %v10422
      %v10424 = vpop.f32.mrb[0].mxu0
      %10425 = vmatprep.mubr.bf16.mxu0 0
      %10426 = vmatmul.mubr.bf16.gmra.mrb[0].mxu0 %v10321
      %v10427 = vpop.f32.mrb[0].mxu0
      %v10428 = vadd.f32 %v10306, %v10427
      %v10429 = vpop.f32.mrb[0].mxu0
      %v10430 = vpop.f32.mrb[0].mxu0
      %v10431 = vadd.f32 %v10306, %v10430
      %v10432 = vpop.f32.mrb[0].mxu0
      %10433 = vmatprep.mubr.bf16.mxu0 0
      %10434 = vmatmul.mubr.bf16.gmra.mrb[0].mxu0 %v10324
      %v10435 = vpop.f32.mrb[0].mxu0
      %v10436 = vadd.f32 %v10306, %v10435
      %v10437 = vpop.f32.mrb[0].mxu0
      %v10438 = vpop.f32.mrb[0].mxu0
      %v10439 = vadd.f32 %v10306, %v10438
      %v10440 = vpop.f32.mrb[0].mxu0
      %10441 = vmatprep.mubr.bf16.mxu0 0
      %10442 = vmatmul.mubr.bf16.gmra.mrb[0].mxu0 %v10327
      %v10443 = vpop.f32.mrb[0].mxu0
      %v10444 = vadd.f32 %v10306, %v10443
      %v10445 = vpop.f32.mrb[0].mxu0
      %v10446 = vpop.f32.mrb[0].mxu0
      %v10447 = vadd.f32 %v10306, %v10446
      %v10448 = vpop.f32.mrb[0].mxu0
      %10449 = vmatprep.mubr.bf16.mxu0 0
      %10450 = vmatmul.mubr.bf16.gmra.mrb[0].mxu0 %v10330
      %v10451 = vpop.f32.mrb[0].mxu0
      %v10452 = vadd.f32 %v10306, %v10451
      %v10453 = vpop.f32.mrb[0].mxu0
      %v10454 = vpop.f32.mrb[0].mxu0
      %v10455 = vadd.f32 %v10306, %v10454
      %v10456 = vpop.f32.mrb[0].mxu0
      %10457 = vmatprep.mubr.bf16.mxu0 0
      %10458 = vmatmul.mubr.bf16.gmra.mrb[0].mxu0 %v10333
      %v10459 = vpop.f32.mrb[0].mxu0
      %v10460 = vadd.f32 %v10306, %v10459
      %v10461 = vpop.f32.mrb[0].mxu0
      %v10462 = vpop.f32.mrb[0].mxu0
      %v10463 = vadd.f32 %v10306, %v10462
      %v10464 = vpop.f32.mrb[0].mxu0
      %10465 = vmatprep.mubr.bf16.mxu0 0
      %10466 = vmatmul.mubr.bf16.gmra.mrb[0].mxu0 %v10336
      %v10467 = vpop.f32.mrb[0].mxu0
      %v10468 = vadd.f32 %v10306, %v10467
      %v10469 = vpop.f32.mrb[0].mxu0
      %v10470 = vpop.f32.mrb[0].mxu0
      %v10471 = vadd.f32 %v10306, %v10470
      %v10472 = vpop.f32.mrb[0].mxu0
      %10473 = vmatprep.mubr.bf16.mxu0 0
      %10474 = vmatmul.mubr.bf16.gmra.mrb[0].mxu0 %v10339
      %v10475 = vpop.f32.mrb[0].mxu0
      %v10476 = vadd.f32 %v10306, %v10475
      %v10477 = vpop.f32.mrb[0].mxu0
      %v10478 = vpop.f32.mrb[0].mxu0
      %v10479 = vadd.f32 %v10306, %v10478
      %v10480 = vpop.f32.mrb[0].mxu0
      %10481 = vmatprep.mubr.bf16.mxu0 0
      %10482 = vmatmul.mubr.bf16.gmra.mrb[0].mxu0 %v10342
      %v10483 = vpop.f32.mrb[0].mxu0
      %v10484 = vadd.f32 %v10306, %v10483
      %v10485 = vpop.f32.mrb[0].mxu0
      %v10486 = vpop.f32.mrb[0].mxu0
      %v10487 = vadd.f32 %v10306, %v10486
      %v10488 = vpop.f32.mrb[0].mxu0
      %10489 = vmatprep.mubr.bf16.mxu0 0
      %10490 = vmatmul.mubr.bf16.gmra.mrb[0].mxu0 %v10345
      %v10491 = vpop.f32.mrb[0].mxu0
      %v10492 = vadd.f32 %v10306, %v10491
      %v10493 = vpop.f32.mrb[0].mxu0
      %v10494 = vpop.f32.mrb[0].mxu0
      %v10495 = vadd.f32 %v10306, %v10494
      %v10496 = vpop.f32.mrb[0].mxu0
      %10497 = vmatprep.mubr.bf16.mxu0 0
      %10498 = vmatmul.mubr.bf16.gmra.mrb[0].mxu0 %v10348
      %v10499 = vpop.f32.mrb[0].mxu0
      %v10500 = vadd.f32 %v10306, %v10499
      %v10501 = vpop.f32.mrb[0].mxu0
      %v10502 = vpop.f32.mrb[0].mxu0
      %v10503 = vadd.f32 %v10306, %v10502
      %v10504 = vpop.f32.mrb[0].mxu0
      %10505 = vmatprep.mubr.bf16.mxu0 0
      %10506 = vmatmul.mubr.bf16.gmra.mrb[0].mxu0 %v10351
      %v10507 = vpop.f32.mrb[0].mxu0
      %v10508 = vadd.f32 %v10306, %v10507
      %v10509 = vpop.f32.mrb[0].mxu0
      %v10510 = vpop.f32.mrb[0].mxu0
      %v10511 = vadd.f32 %v10306, %v10510
      %v10512 = vpop.f32.mrb[0].mxu0
      %10513 = vmatprep.mubr.bf16.mxu0 0
      %10514 = vmatmul.mubr.bf16.gmra.mrb[0].mxu0 %v10354
      %v10515 = vpop.f32.mrb[0].mxu0
      %v10516 = vadd.f32 %v10306, %v10515
      %v10517 = vpop.f32.mrb[0].mxu0
      %v10518 = vpop.f32.mrb[0].mxu0
      %v10519 = vadd.f32 %v10306, %v10518
      %v10520 = vpop.f32.mrb[0].mxu0
      %10521 = vmatprep.mubr.bf16.mxu0 0
      %10522 = vmatmul.mubr.bf16.gmra.mrb[0].mxu0 %v10357
      %v10523 = vpop.f32.mrb[0].mxu0
      %v10524 = vadd.f32 %v10306, %v10523
      %v10525 = vpop.f32.mrb[0].mxu0
      %v10526 = vpop.f32.mrb[0].mxu0
      %v10527 = vadd.f32 %v10306, %v10526
      %v10528 = vpop.f32.mrb[0].mxu0
      %10529 = vmatprep.mubr.bf16.mxu0 0
      %10530 = vmatmul.mubr.bf16.gmra.mrb[0].mxu0 %v10360
      %v10531 = vpop.f32.mrb[0].mxu0
      %v10532 = vadd.f32 %v10306, %v10531
      %v10533 = vpop.f32.mrb[0].mxu0
      %v10534 = vpop.f32.mrb[0].mxu0
      %v10535 = vadd.f32 %v10306, %v10534
      %v10536 = vpop.f32.mrb[0].mxu0
      %10537 = vmatprep.mubr.bf16.mxu0 0
      %10538 = vmatmul.mubr.bf16.gmra.mrb[0].mxu0 %v10363
      %v10539 = vpop.f32.mrb[0].mxu0
      %v10540 = vadd.f32 %v10306, %v10539
      %v10541 = vpop.f32.mrb[0].mxu0
      %v10542 = vpop.f32.mrb[0].mxu0
      %v10543 = vadd.f32 %v10306, %v10542
      %v10544 = vpop.f32.mrb[0].mxu0
      %10545 = vmatprep.mubr.bf16.mxu0 0
      %10546 = vmatmul.mubr.bf16.gmra.mrb[0].mxu0 %v10366
      %v10547 = vpop.f32.mrb[0].mxu0
      %v10548 = vadd.f32 %v10306, %v10547
      %v10549 = vpop.f32.mrb[0].mxu0
      %v10550 = vpop.f32.mrb[0].mxu0
      %v10551 = vadd.f32 %v10306, %v10550
      %v10552 = vpop.f32.mrb[0].mxu0
      %10553 = vmatprep.mubr.bf16.mxu0 0
      %10554 = vmatmul.mubr.bf16.gmra.mrb[0].mxu0 %v10369
      %v10555 = vpop.f32.mrb[0].mxu0
      %v10556 = vadd.f32 %v10306, %v10555
      %v10557 = vpop.f32.mrb[0].mxu0
      %v10558 = vpop.f32.mrb[0].mxu0
      %v10559 = vadd.f32 %v10306, %v10558
      %v10560 = vpop.f32.mrb[0].mxu0
      %10561 = vmatprep.mubr.bf16.mxu0 0
      %10562 = vmatmul.mubr.bf16.gmra.mrb[0].mxu0 %v10372
      %v10563 = vpop.f32.mrb[0].mxu0
      %v10564 = vadd.f32 %v10306, %v10563
      %v10565 = vpop.f32.mrb[0].mxu0
      %v10566 = vpop.f32.mrb[0].mxu0
      %v10567 = vadd.f32 %v10306, %v10566
      %v10568 = vpop.f32.mrb[0].mxu0
      %10569 = vmatprep.mubr.bf16.mxu0 0
      %10570 = vmatmul.mubr.bf16.gmra.mrb[0].mxu0 %v10375
      %v10571 = vpop.f32.mrb[0].mxu0
      %v10572 = vadd.f32 %v10306, %v10571
      %v10573 = vpop.f32.mrb[0].mxu0
      %v10574 = vpop.f32.mrb[0].mxu0
      %v10575 = vpop.f32.mrb[0].mxu0
      %10576 = vdwg.mxu0
      %v10577 = vadd.f32 %v10412, %v10237
      %v10578 = vadd.f32 %v10415, %v10238
      %v10579 = vadd.f32 %v10420, %v10239
      %v10580 = vadd.f32 %v10423, %v10240
      %v10581 = vadd.f32 %v10428, %v10241
      %v10582 = vadd.f32 %v10431, %v10242
      %v10583 = vadd.f32 %v10436, %v10243
      %v10584 = vadd.f32 %v10439, %v10244
      %v10585 = vadd.f32 %v10444, %v10245
      %v10586 = vadd.f32 %v10447, %v10246
      %v10587 = vadd.f32 %v10452, %v10247
      %v10588 = vadd.f32 %v10455, %v10248
      %v10589 = vadd.f32 %v10460, %v10249
      %v10590 = vadd.f32 %v10463, %v10250
      %v10591 = vadd.f32 %v10468, %v10251
      %v10592 = vadd.f32 %v10471, %v10252
      %v10593 = vadd.f32 %v10476, %v10253
      %v10594 = vadd.f32 %v10479, %v10254
      %v10595 = vadd.f32 %v10484, %v10255
      %v10596 = vadd.f32 %v10487, %v10256
      %v10597 = vadd.f32 %v10492, %v10257
      %v10598 = vadd.f32 %v10495, %v10258
      %v10599 = vadd.f32 %v10500, %v10259
      %v10600 = vadd.f32 %v10503, %v10260
      %v10601 = vadd.f32 %v10508, %v10261
      %v10602 = vadd.f32 %v10511, %v10262
      %v10603 = vadd.f32 %v10516, %v10263
      %v10604 = vadd.f32 %v10519, %v10264
      %v10605 = vadd.f32 %v10524, %v10265
      %v10606 = vadd.f32 %v10527, %v10266
      %v10607 = vadd.f32 %v10532, %v10267
      %v10608 = vadd.f32 %v10535, %v10268
      %v10609 = vadd.f32 %v10540, %v10269
      %v10610 = vadd.f32 %v10543, %v10270
      %v10611 = vadd.f32 %v10548, %v10271
      %v10612 = vadd.f32 %v10551, %v10272
      %v10613 = vadd.f32 %v10556, %v10273
      %v10614 = vadd.f32 %v10559, %v10274
      %v10615 = vadd.f32 %v10564, %v10275
      %v10616 = vadd.f32 %v10567, %v10276
      %v10617 = vadd.f32 %v10572, %v10277
      %10618 = vst.msk [vmem:[%s359] sm:$0xff] %vm445, %v10577
      %10619 = vst.msk [vmem:[%s359 + $0x8] sm:$0xff] %vm445, %v10578
      %10620 = vst.msk [vmem:[%s359 + $0x10] sm:$0xff] %vm445, %v10579
      %10621 = vst.msk [vmem:[%s359 + $0x18] sm:$0xff] %vm445, %v10580
      %10622 = vst.msk [vmem:[%s359 + $0x20] sm:$0xff] %vm445, %v10581
      %10623 = vst.msk [vmem:[%s359 + $0x28] sm:$0xff] %vm445, %v10582
      %10624 = vst.msk [vmem:[%s359 + $0x30] sm:$0xff] %vm445, %v10583
      %10625 = vst.msk [vmem:[%s359 + $0x38] sm:$0xff] %vm445, %v10584
      %10626 = vst.msk [vmem:[%s359 + $0x40] sm:$0xff] %vm445, %v10585
      %10627 = vst.msk [vmem:[%s359 + $0x48] sm:$0xff] %vm445, %v10586
      %10628 = vst.msk [vmem:[%s359 + $0x50] sm:$0xff] %vm445, %v10587
      %10629 = vst.msk [vmem:[%s359 + $0x58] sm:$0xff] %vm445, %v10588
      %10630 = vst.msk [vmem:[%s359 + $0x60] sm:$0xff] %vm445, %v10589
      %10631 = vst.msk [vmem:[%s359 + $0x68] sm:$0xff] %vm445, %v10590
      %10632 = vst.msk [vmem:[%s359 + $0x70] sm:$0xff] %vm445, %v10591
      %10633 = vst.msk [vmem:[%s359 + $0x78] sm:$0xff] %vm445, %v10592
      %10634 = vst.msk [vmem:[%s359 + $0x80] sm:$0xff] %vm445, %v10593
      %10635 = vst.msk [vmem:[%s359 + $0x88] sm:$0xff] %vm445, %v10594
      %10636 = vst.msk [vmem:[%s359 + $0x90] sm:$0xff] %vm445, %v10595
      %10637 = vst.msk [vmem:[%s359 + $0x98] sm:$0xff] %vm445, %v10596
      %10638 = vst.msk [vmem:[%s359 + $0xa0] sm:$0xff] %vm445, %v10597
      %10639 = vst.msk [vmem:[%s359 + $0xa8] sm:$0xff] %vm445, %v10598
      %10640 = vst.msk [vmem:[%s359 + $0xb0] sm:$0xff] %vm445, %v10599
      %10641 = vst.msk [vmem:[%s359 + $0xb8] sm:$0xff] %vm445, %v10600
      %10642 = vst.msk [vmem:[%s359 + $0xc0] sm:$0xff] %vm445, %v10601
      %10643 = vst.msk [vmem:[%s359 + $0xc8] sm:$0xff] %vm445, %v10602
      %10644 = vst.msk [vmem:[%s359 + $0xd0] sm:$0xff] %vm445, %v10603
      %10645 = vst.msk [vmem:[%s359 + $0xd8] sm:$0xff] %vm445, %v10604
      %10646 = vst.msk [vmem:[%s359 + $0xe0] sm:$0xff] %vm445, %v10605
      %10647 = vst.msk [vmem:[%s359 + $0xe8] sm:$0xff] %vm445, %v10606
      %10648 = vst.msk [vmem:[%s359 + $0xf0] sm:$0xff] %vm445, %v10607
      %10649 = vst.msk [vmem:[%s359 + $0xf8] sm:$0xff] %vm445, %v10608
      %10650 = vst.msk [vmem:[%s359 + $0x100] sm:$0xff] %vm445, %v10609
      %10651 = vst.msk [vmem:[%s359 + $0x108] sm:$0xff] %vm445, %v10610
      %10652 = vst.msk [vmem:[%s359 + $0x110] sm:$0xff] %vm445, %v10611
      %10653 = vst.msk [vmem:[%s359 + $0x118] sm:$0xff] %vm445, %v10612
      %10654 = vst.msk [vmem:[%s359 + $0x120] sm:$0xff] %vm445, %v10613
      %10655 = vst.msk [vmem:[%s359 + $0x128] sm:$0xff] %vm445, %v10614
      %10656 = vst.msk [vmem:[%s359 + $0x130] sm:$0xff] %vm445, %v10615
      %10657 = vst.msk [vmem:[%s359 + $0x138] sm:$0xff] %vm445, %v10616
      %10658 = vst.msk [vmem:[%s359 + $0x140] sm:$0xf] %vm486, %v10617
      %p10659 = scmp.lt.s32.totalorder %s21, 1
      %s10660 = scalar_select %p10659, %s21, 1
      %s10661 = smul.addr %s10660, 41
      %s10662 = smul.addr %s10661, 8
      %s10663 = scalar_lea.vmem %s10, %s10662
      // Predicated region
      $region61: #{residual_dense_block_pallas.1} parent=59 // pred_check
        %p10664 = pneg %p254
      $region62: #{residual_dense_block_pallas.1} parent=59 // pred_check_branch
        %10666 = sbr.rel (%p10664) target = $region64
      $region63: #{residual_dense_block_pallas.1} parent=59 // pred_region
        _
      $region64: #{residual_dense_block_pallas.1} parent=59 // pred_fallthru
        _
    $region60: #{residual_dense_block_pallas.1} parent=5 // pred_fallthru
      _
    %p10667 = scmp.le.s32.totalorder 2, %s16
    // Predicated region
    $region65: #{residual_dense_block_pallas.1} parent=5 // pred_check
      %p10668 = pneg %p10667
    $region66: #{residual_dense_block_pallas.1} parent=5 // pred_check_branch
      %10670 = sbr.rel (%p10668) target = $region68
    $region67: #{residual_dense_block_pallas.1} parent=5 // pred_region
      %s10671 = ssub.s32 %s16, 2
      // Predicated region
      $region69: #{residual_dense_block_pallas.1} parent=67 // pred_check
        %p10672 = pneg %p260
      $region70: #{residual_dense_block_pallas.1} parent=67 // pred_check_branch
        %10674 = sbr.rel (%p10672) target = $region72
      $region71: #{residual_dense_block_pallas.1} parent=67 // pred_region
        %p10675 = scmp.lt.s32.totalorder %s22, 1
        %s10676 = scalar_select %p10675, %s22, 1
        %s10677 = smul.addr %s10676, 41
        %s10678 = smul.addr %s10677, 8
        %s10679 = scalar_lea.vmem %s10, %s10678
      $region72: #{residual_dense_block_pallas.1} parent=67 // pred_fallthru
        _
    $region68: #{residual_dense_block_pallas.1} parent=5 // pred_fallthru
      _
  $region6: #{residual_dense_block_pallas.1} parent=0 // loop_footer
    %s20 = sadd.s32 1, %s16
  $region7: #{residual_dense_block_pallas.1} parent=0 // loop_footer_branch
    %15 = sbr.rel target = $region3
  $region8: #{residual_dense_block_pallas.1} parent=0 // loop_exit
    _

</llo_original>
